<compile_context>
chip_gen: v7x
topology: tpu7x:2x2x1
jax: 0.10.0
libtpu: 0.0.40
codegen_flags: <defaults>
</compile_context>

<pallas_src>
import functools

import jax
import jax.numpy as jnp
from jax import lax
from jax.experimental import pallas as pl
from jax.experimental.pallas import tpu as pltpu

NUM_CONV_LAYERS = 4
XDIM = 32            # data_name == 'cifar'
IN_CH = 3
NUM_CHANNELS = 32
Z_DIM = 2 * NUM_CHANNELS * 4   # 256
G_DIM = 5
O_DIM = 1
ENC_FEAT = 64                  # class-encoder output width (== required number of ways)

CONV_CH = 10
_H1 = XDIM - 2                 # 30  (conv1 output spatial)
_P1 = _H1 // 2                 # 15  (pool1)
_H2 = _P1 - 2                  # 13  (conv2 output spatial)
_P2 = _H2 // 2                 # 6   (pool2)
ENC_IN = CONV_CH * _P2 * _P2   # 360 (flattened features into the encoder FC)


# ----------------------------------------------------------------------------
# Kernel A: fused (x @ W + b) with optional ReLU — used for the conv im2col
# matmuls.  bf16 MXU operands, f32 accumulate, no HBM padding of activations
# (small K/N axes use full-array block dims, exempt from the (8,128) rule).
# ----------------------------------------------------------------------------
def _matmul_bias_kernel(x_ref, w_ref, b_ref, o_ref, *, relu):
    acc = jnp.dot(x_ref[...], w_ref[...], preferred_element_type=jnp.float32)
    acc = acc + b_ref[...]
    if relu:
        acc = jnp.maximum(acc, 0.0)
    o_ref[...] = acc


def pallas_matmul_bias(x, w, b2, relu=False):
    """x: [M, K], w: [K, Nout] ([in, out]), b2: [1, Nout] f32 -> f32 [M, Nout]."""
    M, K = x.shape
    Nout = w.shape[1]
    if M <= 4096:
        TM = M                                  # single VMEM block, no pipeline overhead
    else:
        nblk = pl.cdiv(M, 4096)
        TM = ((pl.cdiv(M, nblk) + 7) // 8) * 8  # sublane-aligned even split (7200 -> 3600)
    grid_m = pl.cdiv(M, TM)
    return pl.pallas_call(
        functools.partial(_matmul_bias_kernel, relu=relu),
        out_shape=jax.ShapeDtypeStruct((M, Nout), jnp.float32),
        grid=(grid_m,),
        in_specs=[
            pl.BlockSpec((TM, K), lambda i: (i, 0)),     # K == full dim (no padding)
            pl.BlockSpec((K, Nout), lambda i: (0, 0)),   # full dims
            pl.BlockSpec((1, Nout), lambda i: (0, 0)),
        ],
        out_specs=pl.BlockSpec((TM, Nout), lambda i: (i, 0)),
        compiler_params=pltpu.CompilerParams(
            dimension_semantics=("parallel",) if grid_m > 1 else ("arbitrary",)),
    )(x, w, b2)


# ----------------------------------------------------------------------------
# Kernel B: fused tail — encoder FC, class stats, transitions, task encoder,
# omega/gamma/zeta heads and all three KL sums in a single pallas_call.
# ----------------------------------------------------------------------------
def _tail_kernel(pooled_ref, y_ref, enc_w_ref, enc_b_ref, t1_ref,
                 task1_w_ref, task1_b_ref, task2_w_ref, task2_b_ref, t2_ref,
                 omega_w_ref, omega_b_ref, gz_w_ref, gz_b_ref,
                 heads_w_ref, heads_b_ref,
                 omega_o, heads_o, klo_o, klg_o, klz_o,
                 *, n_samples, ways, shots, g_dim):
    f32 = jnp.float32
    n = float(n_samples)

    # ---- class encoder final linear: [N, 360] @ [360, 64] + b --------------
    feat = jnp.dot(pooled_ref[...], enc_w_ref[...],
                   preferred_element_type=f32) + enc_b_ref[...]           # [N, F]

    # ---- statistics_pooling_1: per-class masked mean / unbiased var / card --
    # (faithful to the reference's mask broadcast over the FEATURE axis, which
    #  requires ways == encoder feature dim)
    y = y_ref[...]                                                        # [N, W]
    y_sum = jnp.sum(y, axis=0, keepdims=True)                             # [1, W]
    y_max = jnp.max(y, axis=0, keepdims=True)
    row = lax.broadcasted_iota(jnp.int32, y.shape, 0)
    y_arg = jnp.min(jnp.where(y == y_max, row, n_samples),
                    axis=0, keepdims=True)                                # first argmax
    cls = lax.broadcasted_iota(jnp.int32, (ways, ways), 0)                # cls[c, w] = c
    mask = jnp.logical_and(y_arg == cls, y_sum > 0).astype(f32)           # [C, W]

    mean_x = jnp.sum(feat, axis=0, keepdims=True) / n                     # [1, F]
    var_x = jnp.sum((feat - mean_x) ** 2, axis=0, keepdims=True) / (n - 1.0)
    mean_c = mask * mean_x                                                # [C, F]
    var_c = mask * var_x
    card = (jnp.sum(mask * y_sum, axis=1, keepdims=True) - 1.0) / (shots - 1.0)  # [C, 1]

    # ---- transition 1 (3 -> 4 linear + ReLU) on the VPU (no MXU) -----------
    # t1_ref rows: [w_row0, w_row1, w_row2, bias], each pre-tiled to lane layout
    # l = j*F + f (j-major).  Downstream weights were row-permuted to match.
    t1 = t1_ref[...]
    mean4 = jnp.tile(mean_c, (1, 4))
    var4 = jnp.tile(var_c, (1, 4))
    cs = jnp.maximum(mean4 * t1[0:1, :] + var4 * t1[1:2, :]
                     + card * t1[2:3, :] + t1[3:4, :], 0.0)               # [C, 4F]

    # ---- task encoder: 256 -> 128 (ReLU) -> 32 ------------------------------
    t = jnp.maximum(jnp.dot(cs, task1_w_ref[...], preferred_element_type=f32)
                    + task1_b_ref[...], 0.0)                              # [C, 128]
    t = jnp.dot(t, task2_w_ref[...], preferred_element_type=f32) + task2_b_ref[...]  # [C, 32]
    t_mean = jnp.sum(t, axis=0, keepdims=True) / ways
    t_var = jnp.sum((t - t_mean) ** 2, axis=0, keepdims=True) / (ways - 1.0)
    total_card = jnp.sum(card)

    # ---- transition 2 (3 -> 4 linear + ReLU) on the VPU ---------------------
    t2 = t2_ref[...]
    ts = jnp.maximum(jnp.tile(t_mean, (1, 4)) * t2[0:1, :]
                     + jnp.tile(t_var, (1, 4)) * t2[1:2, :]
                     + total_card * t2[2:3, :] + t2[3:4, :], 0.0)         # [1, 128]

    # ---- omega heads (use_s=True: fed with the raw class summary; the unused
    #      network_omega embedding of the reference is dead code and skipped) -
    # omega_w cols: 0 = mean head, 1 = std head, rest zero (lane padding).
    om = jnp.maximum(jnp.dot(cs, omega_w_ref[...], preferred_element_type=f32)
                     + omega_b_ref[...], 0.0)                             # [C, 128]
    omega_o[...] = om                                                     # lane-dense store

    # ---- gamma / zeta: fused shared embedding + fused mean/std heads --------
    ts8 = jnp.broadcast_to(ts, (8, ts.shape[1]))                          # keep M >= 8
    gz = jnp.maximum(jnp.dot(ts8, gz_w_ref[...], preferred_element_type=f32)
                     + gz_b_ref[...], 0.0)                                # [8, 128]
    heads = jnp.maximum(jnp.dot(gz, heads_w_ref[...], preferred_element_type=f32)
                        + heads_b_ref[...], 0.0)[0:1, :]                  # [1, 768]
    heads_o[...] = heads
    # heads layout: [0:5]=gamma_mu, [128:133]=gamma_sigma, [256:512]=zeta_mu,
    #               [512:768]=zeta_sigma  (128-aligned segments, zero elsewhere)

    # ---- KL( N(mu, softplus(sigma)) || N(0,1) ) sums -------------------------
    def kl_elem(mu, sg):
        s = sg + jnp.log1p(jnp.exp(-sg))       # softplus, stable (sg >= 0 post-ReLU)
        return -jnp.log(s) + 0.5 * (s * s + mu * mu - 1.0)

    klo_o[...] = jnp.sum(kl_elem(om[:, 0:1], om[:, 1:2]), axis=0, keepdims=True)
    klg = kl_elem(heads[:, 0:128], heads[:, 128:256])
    lane = lax.broadcasted_iota(jnp.int32, klg.shape, 1)
    klg_o[...] = jnp.sum(jnp.where(lane < g_dim, klg, 0.0), axis=1, keepdims=True)
    klz_o[...] = jnp.sum(kl_elem(heads[:, 256:512], heads[:, 512:768]),
                         axis=1, keepdims=True)


def pallas_tail(pooled, y, fp, *, ways, shots):
    assert ways == ENC_FEAT, "reference mask broadcast requires ways == encoder feature dim"
    n_samples = pooled.shape[0]
    inputs = [pooled.astype(jnp.float32), y.astype(jnp.float32),
              fp['enc_w'], fp['enc_b'], fp['t1_pack'],
              fp['task1_w'], fp['task1_b'], fp['task2_w'], fp['task2_b'], fp['t2_pack'],
              fp['omega_w'], fp['omega_b'], fp['gz_w'], fp['gz_b'],
              fp['heads_w'], fp['heads_b']]
    in_specs = [pl.BlockSpec(a.shape, lambda i: (0, 0)) for a in inputs]
    out_shape = (jax.ShapeDtypeStruct((ways, 128), jnp.float32),   # omega mu/sigma (cols 0/1)
                 jax.ShapeDtypeStruct((1, 768), jnp.float32),      # gamma/zeta fused heads
                 jax.ShapeDtypeStruct((1, 1), jnp.float32),        # omega KL
                 jax.ShapeDtypeStruct((1, 1), jnp.float32),        # gamma KL
                 jax.ShapeDtypeStruct((1, 1), jnp.float32))        # zeta KL
    out_specs = tuple(pl.BlockSpec(s.shape, lambda i: (0, 0)) for s in out_shape)
    return pl.pallas_call(
        functools.partial(_tail_kernel, n_samples=n_samples, ways=ways,
                          shots=float(shots), g_dim=G_DIM),
        out_shape=out_shape,
        grid=(1,),
        in_specs=in_specs,
        out_specs=out_specs,
        compiler_params=pltpu.CompilerParams(dimension_semantics=("arbitrary",)),
    )(*inputs)


# ----------------------------------------------------------------------------
# Conv / pool glue (NHWC layout; all conv FLOPs run in the Pallas matmul kernel).
# ----------------------------------------------------------------------------
def _im2col_3x3(x):
    """x: NHWC -> [N*Ho*Wo, 9*C] patch matrix, (ki,kj) outer / channel inner."""
    N, H, W_, C = x.shape
    Ho, Wo = H - 2, W_ - 2
    cols = [x[:, ki:ki + Ho, kj:kj + Wo, :] for ki in range(3) for kj in range(3)]
    return jnp.concatenate(cols, axis=-1).reshape(N * Ho * Wo, 9 * C)


def _maxpool2x2(x):
    N, H, W_, C = x.shape
    Ho, Wo = H // 2, W_ // 2
    x = x[:, :Ho * 2, :Wo * 2, :]
    return x.reshape(N, Ho, 2, Wo, 2, C).max(axis=(2, 4))


def conv_features(x_nchw, fp):
    """Class-encoder conv stack; returns flattened [N, 360] features in NHWC order
    (the encoder-FC weight rows were pre-permuted to match, so no per-call transpose)."""
    N = x_nchw.shape[0]
    x = jnp.transpose(x_nchw, (0, 2, 3, 1))                       # NCHW -> NHWC once at entry
    p1 = _im2col_3x3(x).astype(jnp.bfloat16)                      # [N*30*30, 27]
    h = pallas_matmul_bias(p1, fp['conv1_wm'], fp['conv1_b'], relu=True)
    h = _maxpool2x2(h.reshape(N, _H1, _H1, CONV_CH))              # [N,15,15,10]
    p2 = _im2col_3x3(h).astype(jnp.bfloat16)                      # [N*13*13, 90]
    h = pallas_matmul_bias(p2, fp['conv2_wm'], fp['conv2_b'], relu=True)
    h = _maxpool2x2(h.reshape(N, _H2, _H2, CONV_CH))              # [N,6,6,10]
    return h.reshape(N, -1)                                       # [N, 360] (h,w,c order)


# ----------------------------------------------------------------------------
# Parameters (deterministic synthetic init; dense weights stored as [in, out]).
# ----------------------------------------------------------------------------
def init_params(key):
    ks = iter(jax.random.split(key, 40))

    def nrm(shape, scale):
        return jax.random.normal(next(ks), shape, jnp.float32) * scale

    p = {}
    p['conv1_w'] = nrm((CONV_CH, IN_CH, 3, 3), 0.1);  p['conv1_b'] = nrm((CONV_CH,), 0.01)
    p['conv2_w'] = nrm((CONV_CH, CONV_CH, 3, 3), 0.1); p['conv2_b'] = nrm((CONV_CH,), 0.01)
    p['enc_fc_w'] = nrm((ENC_IN, ENC_FEAT), 0.05);    p['enc_fc_b'] = nrm((ENC_FEAT,), 0.01)
    p['trans1_w'] = nrm((3, 4), 0.5);                 p['trans1_b'] = nrm((4,), 0.01)
    p['task1_w'] = nrm((4 * ENC_FEAT, 128), 0.05);    p['task1_b'] = nrm((128,), 0.01)
    p['task2_w'] = nrm((128, 32), 0.1);               p['task2_b'] = nrm((32,), 0.01)
    p['trans2_w'] = nrm((3, 4), 0.5);                 p['trans2_b'] = nrm((4,), 0.01)
    p['omega_mean_w'] = nrm((4 * ENC_FEAT, O_DIM), 0.05); p['omega_mean_b'] = nrm((O_DIM,), 0.01)
    p['omega_std_w'] = nrm((4 * ENC_FEAT, O_DIM), 0.05);  p['omega_std_b'] = nrm((O_DIM,), 0.01)
    p['gamma_net_w'] = nrm((4 * 32, 64), 0.1);        p['gamma_net_b'] = nrm((64,), 0.01)
    p['gamma_mean_w'] = nrm((64, G_DIM), 0.1);        p['gamma_mean_b'] = nrm((G_DIM,), 0.01)
    p['gamma_std_w'] = nrm((64, G_DIM), 0.1);         p['gamma_std_b'] = nrm((G_DIM,), 0.01)
    p['zeta_net_w'] = nrm((4 * 32, 64), 0.1);         p['zeta_net_b'] = nrm((64,), 0.01)
    p['zeta_mean_w'] = nrm((64, Z_DIM), 0.1);         p['zeta_mean_b'] = nrm((Z_DIM,), 0.01)
    p['zeta_std_w'] = nrm((64, Z_DIM), 0.1);          p['zeta_std_b'] = nrm((Z_DIM,), 0.01)
    return p


def _trans_perm(f_dim):
    """Map the kernel's j-major transition layout (l = j*f_dim + f) back to torch's
    feature-major layout (l_torch = f*4 + j) so downstream weights stay equivalent."""
    l = jnp.arange(4 * f_dim)
    return (l % f_dim) * 4 + (l // f_dim)


def _hwc_to_chw_rows(C, H, W):
    """Row permutation so the encoder FC accepts an NHWC flatten instead of torch's
    (C,H,W) flatten — removes the per-call activation transpose."""
    l = jnp.arange(H * W * C)
    h = l // (W * C)
    w = (l // C) % W
    c = l % C
    return c * (H * W) + h * W + w


def prepare_fused_params(p):
    """One-time (outside the forward) fusion / layout / dtype prep of all weights."""
    f = {}
    perm1 = _trans_perm(ENC_FEAT)          # 256-d class summary
    perm2 = _trans_perm(32)                # 128-d task summary

    # conv weights in im2col-matrix form ((ki,kj) outer, channel inner), bf16 for the MXU
    f['conv1_wm'] = jnp.transpose(p['conv1_w'], (2, 3, 1, 0)).reshape(9 * IN_CH, CONV_CH
                                                                      ).astype(jnp.bfloat16)
    f['conv1_b'] = p['conv1_b'].astype(jnp.float32).reshape(1, -1)
    f['conv2_wm'] = jnp.transpose(p['conv2_w'], (2, 3, 1, 0)).reshape(9 * CONV_CH, CONV_CH
                                                                      ).astype(jnp.bfloat16)
    f['conv2_b'] = p['conv2_b'].astype(jnp.float32).reshape(1, -1)

    # encoder FC: rows permuted so it consumes the NHWC flatten directly
    f['enc_w'] = p['enc_fc_w'][_hwc_to_chw_rows(CONV_CH, _P2, _P2), :]
    f['enc_b'] = p['enc_fc_b'].reshape(1, -1)

    # transition weights pre-tiled to the kernel's j-major lane layout
    f['t1_pack'] = jnp.concatenate(
        [jnp.repeat(p['trans1_w'], ENC_FEAT, axis=1),
         jnp.repeat(p['trans1_b'], ENC_FEAT)[None, :]], axis=0)            # (4, 256)
    f['t2_pack'] = jnp.concatenate(
        [jnp.repeat(p['trans2_w'], 32, axis=1),
         jnp.repeat(p['trans2_b'], 32)[None, :]], axis=0)                  # (4, 128)

    f['task1_w'] = p['task1_w'][perm1, :]
    f['task1_b'] = p['task1_b'].reshape(1, -1)
    f['task2_w'] = p['task2_w']
    f['task2_b'] = p['task2_b'].reshape(1, -1)

    # omega mean/std fused into one matmul: cols 0 = mean, 1 = std, rest zero
    ow = jnp.zeros((4 * ENC_FEAT, 128), jnp.float32)
    ow = ow.at[:, 0:1].set(p['omega_mean_w']).at[:, 1:2].set(p['omega_std_w'])
    f['omega_w'] = ow[perm1, :]
    ob = jnp.zeros((1, 128), jnp.float32)
    f['omega_b'] = ob.at[0, 0].set(p['omega_mean_b'][0]).at[0, 1].set(p['omega_std_b'][0])

    # gamma/zeta shared embedding fused: cols 0..63 gamma_net, 64..127 zeta_net
    f['gz_w'] = jnp.concatenate([p['gamma_net_w'], p['zeta_net_w']], axis=1)[perm2, :]
    f['gz_b'] = jnp.concatenate([p['gamma_net_b'], p['zeta_net_b']])[None, :]

    # gamma/zeta mean+std heads fused into one block-structured matmul [128, 768]
    hw = jnp.zeros((128, 768), jnp.float32)
    hw = hw.at[:64, 0:G_DIM].set(p['gamma_mean_w'])
    hw = hw.at[:64, 128:128 + G_DIM].set(p['gamma_std_w'])
    hw = hw.at[64:, 256:256 + Z_DIM].set(p['zeta_mean_w'])
    hw = hw.at[64:, 512:512 + Z_DIM].set(p['zeta_std_w'])
    f['heads_w'] = hw
    hb = jnp.zeros((1, 768), jnp.float32)
    hb = hb.at[0, 0:G_DIM].set(p['gamma_mean_b'])
    hb = hb.at[0, 128:128 + G_DIM].set(p['gamma_std_b'])
    hb = hb.at[0, 256:256 + Z_DIM].set(p['zeta_mean_b'])
    hb = hb.at[0, 512:512 + Z_DIM].set(p['zeta_std_b'])
    f['heads_b'] = hb
    return f


# ----------------------------------------------------------------------------
# Full forward pass (do_sample=False path, i.e. distribution means).
# ----------------------------------------------------------------------------
def inference_network_forward(fused, x, y, *, ways, shots):
    # ---- statistics_pooling_1 / _2 + all heads (2 conv kernels + 1 fused tail kernel)
    x = x.reshape(-1, IN_CH, XDIM, XDIM)
    pooled = conv_features(x, fused)                                     # [N, 360]
    omega_out, heads, klo, klg, klz = pallas_tail(pooled, y, fused, ways=ways, shots=shots)

    omega_mu = omega_out[:, 0]                                           # [ways]
    gamma_mu = heads[0, 0:G_DIM]                                         # [5]
    zeta_mu = heads[0, 256:256 + Z_DIM]                                  # [256]
    omega_kl = klo[0, 0]
    gamma_kl = klg[0, 0]
    zeta_kl = klz[0, 0]

    # ---- forward() bookkeeping (faithful to the reference, incl. the
    #      torch.empty(0) quirk: KL stays a 0-element tensor) -----------------
    KL = jnp.zeros((0,), jnp.float32)
    # TODO(synk): do_sample=True (drawing from Normal) is not implemented; mean path only.
    KL = KL + omega_kl
    omega = omega_mu                                                     # distribution mean

    KL = KL + gamma_kl
    g = [gamma_mu[l:l + 1] for l in range(5)]
    gamma = {}
    for l in range(NUM_CONV_LAYERS):
        gamma[f'convolution_weight_{l}'] = g[l - 1]    # faithful: reference indexes g[l - 1]
        gamma[f'convolution_bias_{l}'] = g[l - 1]
    gamma[f'linear_weight_{NUM_CONV_LAYERS}'] = g[4]
    gamma[f'linear_bias_{NUM_CONV_LAYERS}'] = g[4]

    KL = KL + zeta_kl
    z = zeta_mu
    nc = NUM_CHANNELS
    z_weight = [z[i * nc:(i + 1) * nc] for i in range(4)]
    z_bias = [z[4 * nc + i * nc: 4 * nc + (i + 1) * nc] for i in range(4)]
    zeta = {}
    for l in range(NUM_CONV_LAYERS):
        zeta[f'convolution_weight_{l}'] = z_weight[l - 1][:, None, None, None]
        zeta[f'convolution_bias_{l}'] = z_bias[l - 1]

    return omega, gamma, zeta, KL


if __name__ == "__main__":
    WAYS = 64    # must equal the 64-d encoder output for the reference mask broadcast
    SHOTS = 2
    N = 8        # support examples in the episode

    key = jax.random.PRNGKey(0)
    kx, ky, kp = jax.random.split(key, 3)
    x = jax.random.normal(kx, (N, IN_CH, XDIM, XDIM), jnp.float32)
    labels = jax.random.randint(ky, (N,), 0, WAYS)
    y = jax.nn.one_hot(labels, WAYS, dtype=jnp.float32)
    params = init_params(kp)
    fused = prepare_fused_params(params)     # one-time weight fusion / layout / dtype prep

    fwd = jax.jit(functools.partial(inference_network_forward, ways=WAYS, shots=SHOTS))
    omega, gamma, zeta, KL = fwd(fused, x, y)
    jax.block_until_ready((omega, gamma, zeta, KL))
    print("KERNEL_OK")
</pallas_src>

<mosaic_0001>
module attributes {stable_mosaic.version = 11 : i64} {
  func.func @_matmul_bias_kernel(%arg0: i32, %arg1: memref<3600x27xbf16, #tpu.memory_space<vmem>>, %arg2: memref<27x10xbf16, #tpu.memory_space<vmem>>, %arg3: memref<1x10xf32, #tpu.memory_space<vmem>>, %arg4: memref<3600x10xf32, #tpu.memory_space<vmem>>) attributes {dimension_semantics = [#tpu.dimension_semantics<parallel>], iteration_bounds = array<i64: 2>, scalar_prefetch = 0 : i64, scratch_operands = 0 : i64, tpu.core_type = #tpu.core_type<tc>, window_params = [{transform_indices = @transform_0, window_bounds = array<i64: 3600, 27>}, {pipeline_mode = #tpu.pipeline_mode<synchronous>, transform_indices = @transform_1, window_bounds = array<i64: 27, 10>}, {pipeline_mode = #tpu.pipeline_mode<synchronous>, transform_indices = @transform_2, window_bounds = array<i64: 1, 10>}, {transform_indices = @transform_3, window_bounds = array<i64: 3600, 10>}]} {
    %c0 = arith.constant 0 : index
    %c0_0 = arith.constant 0 : index
    %0 = vector.load %arg1[%c0, %c0_0] : memref<3600x27xbf16, #tpu.memory_space<vmem>>, vector<3600x27xbf16>
    %c0_1 = arith.constant 0 : index
    %c0_2 = arith.constant 0 : index
    %1 = vector.load %arg2[%c0_1, %c0_2] : memref<27x10xbf16, #tpu.memory_space<vmem>>, vector<27x10xbf16>
    %cst = arith.constant dense<0.000000e+00> : vector<3600x10xf32>
    %2 = tpu.matmul %0, %1, %cst {dimension_numbers = #tpu.dot_dimension_numbers<[1], [0], [0], [1], [0, 0, 1, 1], [], []>} : vector<3600x27xbf16>, vector<27x10xbf16>, vector<3600x10xf32> -> vector<3600x10xf32>
    %c0_3 = arith.constant 0 : index
    %c0_4 = arith.constant 0 : index
    %3 = vector.load %arg3[%c0_3, %c0_4] : memref<1x10xf32, #tpu.memory_space<vmem>>, vector<1x10xf32>
    %4 = vector.broadcast %3 : vector<1x10xf32> to vector<3600x10xf32>
    %5 = arith.addf %2, %4 : vector<3600x10xf32>
    %cst_5 = arith.constant 0.000000e+00 : f32
    %6 = vector.broadcast %cst_5 : f32 to vector<3600x10xf32>
    %7 = arith.maximumf %5, %6 : vector<3600x10xf32>
    %c0_6 = arith.constant 0 : index
    %c0_7 = arith.constant 0 : index
    %8 = vector.load %arg4[%c0_6, %c0_7] : memref<3600x10xf32, #tpu.memory_space<vmem>>, vector<3600x10xf32>
    tpu.vector_store %arg4[%c0_6, %c0_7], %7 {strides = array<i32>} : memref<3600x10xf32, #tpu.memory_space<vmem>>, vector<3600x10xf32>,
    return
  }
  func.func @transform_0(%arg0: i32) -> (i32, i32) {
    %c0_i32 = arith.constant 0 : i32
    %c0_i32_0 = arith.constant 0 : i32
    return %arg0, %c0_i32 : i32, i32
  }
  func.func @transform_1(%arg0: i32) -> (i32, i32) {
    %c0_i32 = arith.constant 0 : i32
    %c0_i32_0 = arith.constant 0 : i32
    %c0_i32_1 = arith.constant 0 : i32
    return %c0_i32, %c0_i32_0 : i32, i32
  }
  func.func @transform_2(%arg0: i32) -> (i32, i32) {
    %c0_i32 = arith.constant 0 : i32
    %c0_i32_0 = arith.constant 0 : i32
    %c0_i32_1 = arith.constant 0 : i32
    return %c0_i32, %c0_i32_0 : i32, i32
  }
  func.func @transform_3(%arg0: i32) -> (i32, i32) {
    %c0_i32 = arith.constant 0 : i32
    %c0_i32_0 = arith.constant 0 : i32
    return %arg0, %c0_i32 : i32, i32
  }
}

module attributes {stable_mosaic.version = 11 : i64} {
  func.func @_matmul_bias_kernel(%arg0: i32, %arg1: memref<1352x90xbf16, #tpu.memory_space<vmem>>, %arg2: memref<90x10xbf16, #tpu.memory_space<vmem>>, %arg3: memref<1x10xf32, #tpu.memory_space<vmem>>, %arg4: memref<1352x10xf32, #tpu.memory_space<vmem>>) attributes {dimension_semantics = [#tpu.dimension_semantics<arbitrary>], iteration_bounds = array<i64: 1>, scalar_prefetch = 0 : i64, scratch_operands = 0 : i64, tpu.core_type = #tpu.core_type<tc>, window_params = [{transform_indices = @transform_0, window_bounds = array<i64: 1352, 90>}, {pipeline_mode = #tpu.pipeline_mode<synchronous>, transform_indices = @transform_1, window_bounds = array<i64: 90, 10>}, {pipeline_mode = #tpu.pipeline_mode<synchronous>, transform_indices = @transform_2, window_bounds = array<i64: 1, 10>}, {transform_indices = @transform_3, window_bounds = array<i64: 1352, 10>}]} {
    %c0 = arith.constant 0 : index
    %c0_0 = arith.constant 0 : index
    %0 = vector.load %arg1[%c0, %c0_0] : memref<1352x90xbf16, #tpu.memory_space<vmem>>, vector<1352x90xbf16>
    %c0_1 = arith.constant 0 : index
    %c0_2 = arith.constant 0 : index
    %1 = vector.load %arg2[%c0_1, %c0_2] : memref<90x10xbf16, #tpu.memory_space<vmem>>, vector<90x10xbf16>
    %cst = arith.constant dense<0.000000e+00> : vector<1352x10xf32>
    %2 = tpu.matmul %0, %1, %cst {dimension_numbers = #tpu.dot_dimension_numbers<[1], [0], [0], [1], [0, 0, 1, 1], [], []>} : vector<1352x90xbf16>, vector<90x10xbf16>, vector<1352x10xf32> -> vector<1352x10xf32>
    %c0_3 = arith.constant 0 : index
    %c0_4 = arith.constant 0 : index
    %3 = vector.load %arg3[%c0_3, %c0_4] : memref<1x10xf32, #tpu.memory_space<vmem>>, vector<1x10xf32>
    %4 = vector.broadcast %3 : vector<1x10xf32> to vector<1352x10xf32>
    %5 = arith.addf %2, %4 : vector<1352x10xf32>
    %cst_5 = arith.constant 0.000000e+00 : f32
    %6 = vector.broadcast %cst_5 : f32 to vector<1352x10xf32>
    %7 = arith.maximumf %5, %6 : vector<1352x10xf32>
    %c0_6 = arith.constant 0 : index
    %c0_7 = arith.constant 0 : index
    %8 = vector.load %arg4[%c0_6, %c0_7] : memref<1352x10xf32, #tpu.memory_space<vmem>>, vector<1352x10xf32>
    tpu.vector_store %arg4[%c0_6, %c0_7], %7 {strides = array<i32>} : memref<1352x10xf32, #tpu.memory_space<vmem>>, vector<1352x10xf32>,
    return
  }
  func.func @transform_0(%arg0: i32) -> (i32, i32) {
    %c0_i32 = arith.constant 0 : i32
    %c0_i32_0 = arith.constant 0 : i32
    return %arg0, %c0_i32 : i32, i32
  }
  func.func @transform_1(%arg0: i32) -> (i32, i32) {
    %c0_i32 = arith.constant 0 : i32
    %c0_i32_0 = arith.constant 0 : i32
    %c0_i32_1 = arith.constant 0 : i32
    return %c0_i32, %c0_i32_0 : i32, i32
  }
  func.func @transform_2(%arg0: i32) -> (i32, i32) {
    %c0_i32 = arith.constant 0 : i32
    %c0_i32_0 = arith.constant 0 : i32
    %c0_i32_1 = arith.constant 0 : i32
    return %c0_i32, %c0_i32_0 : i32, i32
  }
  func.func @transform_3(%arg0: i32) -> (i32, i32) {
    %c0_i32 = arith.constant 0 : i32
    %c0_i32_0 = arith.constant 0 : i32
    return %arg0, %c0_i32 : i32, i32
  }
}

module attributes {stable_mosaic.version = 11 : i64} {
  func.func @_tail_kernel(%arg0: i32, %arg1: memref<8x360xf32, #tpu.memory_space<vmem>>, %arg2: memref<8x64xf32, #tpu.memory_space<vmem>>, %arg3: memref<360x64xf32, #tpu.memory_space<vmem>>, %arg4: memref<1x64xf32, #tpu.memory_space<vmem>>, %arg5: memref<4x256xf32, #tpu.memory_space<vmem>>, %arg6: memref<256x128xf32, #tpu.memory_space<vmem>>, %arg7: memref<1x128xf32, #tpu.memory_space<vmem>>, %arg8: memref<128x32xf32, #tpu.memory_space<vmem>>, %arg9: memref<1x32xf32, #tpu.memory_space<vmem>>, %arg10: memref<4x128xf32, #tpu.memory_space<vmem>>, %arg11: memref<256x128xf32, #tpu.memory_space<vmem>>, %arg12: memref<1x128xf32, #tpu.memory_space<vmem>>, %arg13: memref<128x128xf32, #tpu.memory_space<vmem>>, %arg14: memref<1x128xf32, #tpu.memory_space<vmem>>, %arg15: memref<128x768xf32, #tpu.memory_space<vmem>>, %arg16: memref<1x768xf32, #tpu.memory_space<vmem>>, %arg17: memref<64x128xf32, #tpu.memory_space<vmem>>, %arg18: memref<1x768xf32, #tpu.memory_space<vmem>>, %arg19: memref<1x1xf32, #tpu.memory_space<vmem>>, %arg20: memref<1x1xf32, #tpu.memory_space<vmem>>, %arg21: memref<1x1xf32, #tpu.memory_space<vmem>>) attributes {dimension_semantics = [#tpu.dimension_semantics<arbitrary>], iteration_bounds = array<i64: 1>, scalar_prefetch = 0 : i64, scratch_operands = 0 : i64, tpu.core_type = #tpu.core_type<tc>, window_params = [{pipeline_mode = #tpu.pipeline_mode<synchronous>, transform_indices = @transform_0, window_bounds = array<i64: 8, 360>}, {pipeline_mode = #tpu.pipeline_mode<synchronous>, transform_indices = @transform_1, window_bounds = array<i64: 8, 64>}, {pipeline_mode = #tpu.pipeline_mode<synchronous>, transform_indices = @transform_2, window_bounds = array<i64: 360, 64>}, {pipeline_mode = #tpu.pipeline_mode<synchronous>, transform_indices = @transform_3, window_bounds = array<i64: 1, 64>}, {pipeline_mode = #tpu.pipeline_mode<synchronous>, transform_indices = @transform_4, window_bounds = array<i64: 4, 256>}, {pipeline_mode = #tpu.pipeline_mode<synchronous>, transform_indices = @transform_5, window_bounds = array<i64: 256, 128>}, {pipeline_mode = #tpu.pipeline_mode<synchronous>, transform_indices = @transform_6, window_bounds = array<i64: 1, 128>}, {pipeline_mode = #tpu.pipeline_mode<synchronous>, transform_indices = @transform_7, window_bounds = array<i64: 128, 32>}, {pipeline_mode = #tpu.pipeline_mode<synchronous>, transform_indices = @transform_8, window_bounds = array<i64: 1, 32>}, {pipeline_mode = #tpu.pipeline_mode<synchronous>, transform_indices = @transform_9, window_bounds = array<i64: 4, 128>}, {pipeline_mode = #tpu.pipeline_mode<synchronous>, transform_indices = @transform_10, window_bounds = array<i64: 256, 128>}, {pipeline_mode = #tpu.pipeline_mode<synchronous>, transform_indices = @transform_11, window_bounds = array<i64: 1, 128>}, {pipeline_mode = #tpu.pipeline_mode<synchronous>, transform_indices = @transform_12, window_bounds = array<i64: 128, 128>}, {pipeline_mode = #tpu.pipeline_mode<synchronous>, transform_indices = @transform_13, window_bounds = array<i64: 1, 128>}, {pipeline_mode = #tpu.pipeline_mode<synchronous>, transform_indices = @transform_14, window_bounds = array<i64: 128, 768>}, {pipeline_mode = #tpu.pipeline_mode<synchronous>, transform_indices = @transform_15, window_bounds = array<i64: 1, 768>}, {pipeline_mode = #tpu.pipeline_mode<synchronous>, transform_indices = @transform_16, window_bounds = array<i64: 64, 128>}, {pipeline_mode = #tpu.pipeline_mode<synchronous>, transform_indices = @transform_17, window_bounds = array<i64: 1, 768>}, {pipeline_mode = #tpu.pipeline_mode<synchronous>, transform_indices = @transform_18, window_bounds = array<i64: 1, 1>}, {pipeline_mode = #tpu.pipeline_mode<synchronous>, transform_indices = @transform_19, window_bounds = array<i64: 1, 1>}, {pipeline_mode = #tpu.pipeline_mode<synchronous>, transform_indices = @transform_20, window_bounds = array<i64: 1, 1>}]} {
    %c0 = arith.constant 0 : index
    %c0_0 = arith.constant 0 : index
    %0 = vector.load %arg1[%c0, %c0_0] : memref<8x360xf32, #tpu.memory_space<vmem>>, vector<8x360xf32>
    %c0_1 = arith.constant 0 : index
    %c0_2 = arith.constant 0 : index
    %1 = vector.load %arg3[%c0_1, %c0_2] : memref<360x64xf32, #tpu.memory_space<vmem>>, vector<360x64xf32>
    %cst = arith.constant dense<0.000000e+00> : vector<8x64xf32>
    %2 = tpu.matmul %0, %1, %cst {dimension_numbers = #tpu.dot_dimension_numbers<[1], [0], [0], [1], [0, 0, 1, 1], [], []>} : vector<8x360xf32>, vector<360x64xf32>, vector<8x64xf32> -> vector<8x64xf32>
    %c0_3 = arith.constant 0 : index
    %c0_4 = arith.constant 0 : index
    %3 = vector.load %arg4[%c0_3, %c0_4] : memref<1x64xf32, #tpu.memory_space<vmem>>, vector<1x64xf32>
    %4 = vector.broadcast %3 : vector<1x64xf32> to vector<8x64xf32>
    %5 = arith.addf %2, %4 : vector<8x64xf32>
    %c0_5 = arith.constant 0 : index
    %c0_6 = arith.constant 0 : index
    %6 = vector.load %arg2[%c0_5, %c0_6] : memref<8x64xf32, #tpu.memory_space<vmem>>, vector<8x64xf32>
    %cst_7 = arith.constant dense<0.000000e+00> : vector<64xf32>
    %7 = vector.multi_reduction <add>, %6, %cst_7 [0] : vector<8x64xf32> to vector<64xf32>
    %8 = vector.shape_cast %7 : vector<64xf32> to vector<1x64xf32>
    %cst_8 = arith.constant dense<0xFF800000> : vector<64xf32>
    %9 = vector.multi_reduction <maximumf>, %6, %cst_8 [0] : vector<8x64xf32> to vector<64xf32>
    %10 = vector.shape_cast %9 : vector<64xf32> to vector<1x64xf32>
    %11 = tpu.iota {dimensions = array<i32: 0>} : vector<8x64xi32>
    %12 = vector.broadcast %10 : vector<1x64xf32> to vector<8x64xf32>
    %13 = arith.cmpf oeq, %6, %12 : vector<8x64xf32>
    %c8_i32 = arith.constant 8 : i32
    %14 = vector.broadcast %c8_i32 : i32 to vector<8x64xi32>
    %15 = arith.select %13, %11, %14 : vector<8x64xi1>, vector<8x64xi32>
    %cst_9 = arith.constant dense<2147483647> : vector<64xi32>
    %16 = vector.multi_reduction <minsi>, %15, %cst_9 [0] : vector<8x64xi32> to vector<64xi32>
    %17 = vector.shape_cast %16 : vector<64xi32> to vector<1x64xi32>
    %18 = tpu.iota {dimensions = array<i32: 0>} : vector<64x64xi32>
    %19 = vector.broadcast %17 : vector<1x64xi32> to vector<64x64xi32>
    %20 = arith.cmpi eq, %19, %18 : vector<64x64xi32>
    %cst_10 = arith.constant 0.000000e+00 : f32
    %21 = vector.broadcast %cst_10 : f32 to vector<1x64xf32>
    %22 = arith.cmpf ogt, %8, %21 : vector<1x64xf32>
    %23 = vector.broadcast %22 : vector<1x64xi1> to vector<64x64xi1>
    %24 = arith.andi %20, %23 : vector<64x64xi1>
    %25 = arith.extui %24 : vector<64x64xi1> to vector<64x64xi32>
    %26 = arith.sitofp %25 : vector<64x64xi32> to vector<64x64xf32>
    %cst_11 = arith.constant dense<0.000000e+00> : vector<64xf32>
    %27 = vector.multi_reduction <add>, %5, %cst_11 [0] : vector<8x64xf32> to vector<64xf32>
    %28 = vector.shape_cast %27 : vector<64xf32> to vector<1x64xf32>
    %cst_12 = arith.constant 8.000000e+00 : f32
    %29 = vector.broadcast %cst_12 : f32 to vector<1x64xf32>
    %30 = arith.divf %28, %29 : vector<1x64xf32>
    %31 = vector.broadcast %30 : vector<1x64xf32> to vector<8x64xf32>
    %32 = arith.subf %5, %31 : vector<8x64xf32>
    %33 = arith.mulf %32, %32 : vector<8x64xf32>
    %cst_13 = arith.constant dense<0.000000e+00> : vector<64xf32>
    %34 = vector.multi_reduction <add>, %33, %cst_13 [0] : vector<8x64xf32> to vector<64xf32>
    %35 = vector.shape_cast %34 : vector<64xf32> to vector<1x64xf32>
    %cst_14 = arith.constant 7.000000e+00 : f32
    %36 = vector.broadcast %cst_14 : f32 to vector<1x64xf32>
    %37 = arith.divf %35, %36 : vector<1x64xf32>
    %38 = vector.broadcast %30 : vector<1x64xf32> to vector<64x64xf32>
    %39 = arith.mulf %26, %38 : vector<64x64xf32>
    %40 = vector.broadcast %37 : vector<1x64xf32> to vector<64x64xf32>
    %41 = arith.mulf %26, %40 : vector<64x64xf32>
    %42 = vector.broadcast %8 : vector<1x64xf32> to vector<64x64xf32>
    %43 = arith.mulf %26, %42 : vector<64x64xf32>
    %cst_15 = arith.constant dense<0.000000e+00> : vector<64xf32>
    %44 = vector.multi_reduction <add>, %43, %cst_15 [1] : vector<64x64xf32> to vector<64xf32>
    %45 = vector.shape_cast %44 : vector<64xf32> to vector<64x1xf32>
    %cst_16 = arith.constant 1.000000e+00 : f32
    %46 = vector.broadcast %cst_16 : f32 to vector<64x1xf32>
    %47 = arith.subf %45, %46 : vector<64x1xf32>
    %cst_17 = arith.constant 1.000000e+00 : f32
    %48 = vector.broadcast %cst_17 : f32 to vector<64x1xf32>
    %49 = arith.divf %47, %48 : vector<64x1xf32>
    %c0_18 = arith.constant 0 : index
    %c0_19 = arith.constant 0 : index
    %50 = vector.load %arg5[%c0_18, %c0_19] : memref<4x256xf32, #tpu.memory_space<vmem>>, vector<4x256xf32>
    %51 = tpu.concatenate %39, %39, %39, %39 in 1 : vector<64x64xf32>, vector<64x64xf32>, vector<64x64xf32>, vector<64x64xf32> -> vector<64x256xf32>
    %52 = tpu.concatenate %41, %41, %41, %41 in 1 : vector<64x64xf32>, vector<64x64xf32>, vector<64x64xf32>, vector<64x64xf32> -> vector<64x256xf32>
    %53 = vector.extract_strided_slice %50 {offsets = [0, 0], sizes = [1, 256], strides = [1, 1]} : vector<4x256xf32> to vector<1x256xf32>
    %54 = vector.broadcast %53 : vector<1x256xf32> to vector<64x256xf32>
    %55 = arith.mulf %51, %54 : vector<64x256xf32>
    %56 = vector.extract_strided_slice %50 {offsets = [1, 0], sizes = [1, 256], strides = [1, 1]} : vector<4x256xf32> to vector<1x256xf32>
    %57 = vector.broadcast %56 : vector<1x256xf32> to vector<64x256xf32>
    %58 = arith.mulf %52, %57 : vector<64x256xf32>
    %59 = arith.addf %55, %58 : vector<64x256xf32>
    %60 = vector.extract_strided_slice %50 {offsets = [2, 0], sizes = [1, 256], strides = [1, 1]} : vector<4x256xf32> to vector<1x256xf32>
    %61 = vector.broadcast %49 : vector<64x1xf32> to vector<64x256xf32>
    %62 = vector.broadcast %60 : vector<1x256xf32> to vector<64x256xf32>
    %63 = arith.mulf %61, %62 : vector<64x256xf32>
    %64 = arith.addf %59, %63 : vector<64x256xf32>
    %65 = vector.extract_strided_slice %50 {offsets = [3, 0], sizes = [1, 256], strides = [1, 1]} : vector<4x256xf32> to vector<1x256xf32>
    %66 = vector.broadcast %65 : vector<1x256xf32> to vector<64x256xf32>
    %67 = arith.addf %64, %66 : vector<64x256xf32>
    %cst_20 = arith.constant 0.000000e+00 : f32
    %68 = vector.broadcast %cst_20 : f32 to vector<64x256xf32>
    %69 = arith.maximumf %67, %68 : vector<64x256xf32>
    %c0_21 = arith.constant 0 : index
    %c0_22 = arith.constant 0 : index
    %70 = vector.load %arg6[%c0_21, %c0_22] : memref<256x128xf32, #tpu.memory_space<vmem>>, vector<256x128xf32>
    %cst_23 = arith.constant dense<0.000000e+00> : vector<64x128xf32>
    %71 = tpu.matmul %69, %70, %cst_23 {dimension_numbers = #tpu.dot_dimension_numbers<[1], [0], [0], [1], [0, 0, 1, 1], [], []>} : vector<64x256xf32>, vector<256x128xf32>, vector<64x128xf32> -> vector<64x128xf32>
    %c0_24 = arith.constant 0 : index
    %c0_25 = arith.constant 0 : index
    %72 = vector.load %arg7[%c0_24, %c0_25] : memref<1x128xf32, #tpu.memory_space<vmem>>, vector<1x128xf32>
    %73 = vector.broadcast %72 : vector<1x128xf32> to vector<64x128xf32>
    %74 = arith.addf %71, %73 : vector<64x128xf32>
    %cst_26 = arith.constant 0.000000e+00 : f32
    %75 = vector.broadcast %cst_26 : f32 to vector<64x128xf32>
    %76 = arith.maximumf %74, %75 : vector<64x128xf32>
    %c0_27 = arith.constant 0 : index
    %c0_28 = arith.constant 0 : index
    %77 = vector.load %arg8[%c0_27, %c0_28] : memref<128x32xf32, #tpu.memory_space<vmem>>, vector<128x32xf32>
    %cst_29 = arith.constant dense<0.000000e+00> : vector<64x32xf32>
    %78 = tpu.matmul %76, %77, %cst_29 {dimension_numbers = #tpu.dot_dimension_numbers<[1], [0], [0], [1], [0, 0, 1, 1], [], []>} : vector<64x128xf32>, vector<128x32xf32>, vector<64x32xf32> -> vector<64x32xf32>
    %c0_30 = arith.constant 0 : index
    %c0_31 = arith.constant 0 : index
    %79 = vector.load %arg9[%c0_30, %c0_31] : memref<1x32xf32, #tpu.memory_space<vmem>>, vector<1x32xf32>
    %80 = vector.broadcast %79 : vector<1x32xf32> to vector<64x32xf32>
    %81 = arith.addf %78, %80 : vector<64x32xf32>
    %cst_32 = arith.constant dense<0.000000e+00> : vector<32xf32>
    %82 = vector.multi_reduction <add>, %81, %cst_32 [0] : vector<64x32xf32> to vector<32xf32>
    %83 = vector.shape_cast %82 : vector<32xf32> to vector<1x32xf32>
    %cst_33 = arith.constant 6.400000e+01 : f32
    %84 = vector.broadcast %cst_33 : f32 to vector<1x32xf32>
    %85 = arith.divf %83, %84 : vector<1x32xf32>
    %86 = vector.broadcast %85 : vector<1x32xf32> to vector<64x32xf32>
    %87 = arith.subf %81, %86 : vector<64x32xf32>
    %88 = arith.mulf %87, %87 : vector<64x32xf32>
    %cst_34 = arith.constant dense<0.000000e+00> : vector<32xf32>
    %89 = vector.multi_reduction <add>, %88, %cst_34 [0] : vector<64x32xf32> to vector<32xf32>
    %90 = vector.shape_cast %89 : vector<32xf32> to vector<1x32xf32>
    %cst_35 = arith.constant 6.300000e+01 : f32
    %91 = vector.broadcast %cst_35 : f32 to vector<1x32xf32>
    %92 = arith.divf %90, %91 : vector<1x32xf32>
    %93 = vector.shape_cast %49 : vector<64x1xf32> to vector<1x64x1xf32>
    %cst_36 = arith.constant dense<0.000000e+00> : vector<1xf32>
    %94 = vector.multi_reduction <add>, %93, %cst_36 [1, 2] : vector<1x64x1xf32> to vector<1xf32>
    %95 = vector.shape_cast %94 : vector<1xf32> to vector<1x1x1xf32>
    %96 = vector.extract %95[0, 0, 0] : f32 from vector<1x1x1xf32>
    %c0_37 = arith.constant 0 : index
    %c0_38 = arith.constant 0 : index
    %97 = vector.load %arg10[%c0_37, %c0_38] : memref<4x128xf32, #tpu.memory_space<vmem>>, vector<4x128xf32>
    %98 = tpu.concatenate %85, %85, %85, %85 in 1 : vector<1x32xf32>, vector<1x32xf32>, vector<1x32xf32>, vector<1x32xf32> -> vector<1x128xf32>
    %99 = vector.extract_strided_slice %97 {offsets = [0, 0], sizes = [1, 128], strides = [1, 1]} : vector<4x128xf32> to vector<1x128xf32>
    %100 = arith.mulf %98, %99 : vector<1x128xf32>
    %101 = tpu.concatenate %92, %92, %92, %92 in 1 : vector<1x32xf32>, vector<1x32xf32>, vector<1x32xf32>, vector<1x32xf32> -> vector<1x128xf32>
    %102 = vector.extract_strided_slice %97 {offsets = [1, 0], sizes = [1, 128], strides = [1, 1]} : vector<4x128xf32> to vector<1x128xf32>
    %103 = arith.mulf %101, %102 : vector<1x128xf32>
    %104 = arith.addf %100, %103 : vector<1x128xf32>
    %105 = vector.extract_strided_slice %97 {offsets = [2, 0], sizes = [1, 128], strides = [1, 1]} : vector<4x128xf32> to vector<1x128xf32>
    %106 = vector.broadcast %96 : f32 to vector<1x128xf32>
    %107 = arith.mulf %106, %105 : vector<1x128xf32>
    %108 = arith.addf %104, %107 : vector<1x128xf32>
    %109 = vector.extract_strided_slice %97 {offsets = [3, 0], sizes = [1, 128], strides = [1, 1]} : vector<4x128xf32> to vector<1x128xf32>
    %110 = arith.addf %108, %109 : vector<1x128xf32>
    %cst_39 = arith.constant 0.000000e+00 : f32
    %111 = vector.broadcast %cst_39 : f32 to vector<1x128xf32>
    %112 = arith.maximumf %110, %111 : vector<1x128xf32>
    %c0_40 = arith.constant 0 : index
    %c0_41 = arith.constant 0 : index
    %113 = vector.load %arg11[%c0_40, %c0_41] : memref<256x128xf32, #tpu.memory_space<vmem>>, vector<256x128xf32>
    %cst_42 = arith.constant dense<0.000000e+00> : vector<64x128xf32>
    %114 = tpu.matmul %69, %113, %cst_42 {dimension_numbers = #tpu.dot_dimension_numbers<[1], [0], [0], [1], [0, 0, 1, 1], [], []>} : vector<64x256xf32>, vector<256x128xf32>, vector<64x128xf32> -> vector<64x128xf32>
    %c0_43 = arith.constant 0 : index
    %c0_44 = arith.constant 0 : index
    %115 = vector.load %arg12[%c0_43, %c0_44] : memref<1x128xf32, #tpu.memory_space<vmem>>, vector<1x128xf32>
    %116 = vector.broadcast %115 : vector<1x128xf32> to vector<64x128xf32>
    %117 = arith.addf %114, %116 : vector<64x128xf32>
    %cst_45 = arith.constant 0.000000e+00 : f32
    %118 = vector.broadcast %cst_45 : f32 to vector<64x128xf32>
    %119 = arith.maximumf %117, %118 : vector<64x128xf32>
    %c0_46 = arith.constant 0 : index
    %c0_47 = arith.constant 0 : index
    %120 = vector.load %arg17[%c0_46, %c0_47] : memref<64x128xf32, #tpu.memory_space<vmem>>, vector<64x128xf32>
    tpu.vector_store %arg17[%c0_46, %c0_47], %119 {strides = array<i32>} : memref<64x128xf32, #tpu.memory_space<vmem>>, vector<64x128xf32>,
    %121 = vector.shape_cast %112 : vector<1x128xf32> to vector<1x128xf32>
    %122 = vector.broadcast %121 : vector<1x128xf32> to vector<8x128xf32>
    %c0_48 = arith.constant 0 : index
    %c0_49 = arith.constant 0 : index
    %123 = vector.load %arg13[%c0_48, %c0_49] : memref<128x128xf32, #tpu.memory_space<vmem>>, vector<128x128xf32>
    %cst_50 = arith.constant dense<0.000000e+00> : vector<8x128xf32>
    %124 = tpu.matmul %122, %123, %cst_50 {dimension_numbers = #tpu.dot_dimension_numbers<[1], [0], [0], [1], [0, 0, 1, 1], [], []>} : vector<8x128xf32>, vector<128x128xf32>, vector<8x128xf32> -> vector<8x128xf32>
    %c0_51 = arith.constant 0 : index
    %c0_52 = arith.constant 0 : index
    %125 = vector.load %arg14[%c0_51, %c0_52] : memref<1x128xf32, #tpu.memory_space<vmem>>, vector<1x128xf32>
    %126 = vector.broadcast %125 : vector<1x128xf32> to vector<8x128xf32>
    %127 = arith.addf %124, %126 : vector<8x128xf32>
    %cst_53 = arith.constant 0.000000e+00 : f32
    %128 = vector.broadcast %cst_53 : f32 to vector<8x128xf32>
    %129 = arith.maximumf %127, %128 : vector<8x128xf32>
    %c0_54 = arith.constant 0 : index
    %c0_55 = arith.constant 0 : index
    %130 = vector.load %arg15[%c0_54, %c0_55] : memref<128x768xf32, #tpu.memory_space<vmem>>, vector<128x768xf32>
    %cst_56 = arith.constant dense<0.000000e+00> : vector<8x768xf32>
    %131 = tpu.matmul %129, %130, %cst_56 {dimension_numbers = #tpu.dot_dimension_numbers<[1], [0], [0], [1], [0, 0, 1, 1], [], []>} : vector<8x128xf32>, vector<128x768xf32>, vector<8x768xf32> -> vector<8x768xf32>
    %c0_57 = arith.constant 0 : index
    %c0_58 = arith.constant 0 : index
    %132 = vector.load %arg16[%c0_57, %c0_58] : memref<1x768xf32, #tpu.memory_space<vmem>>, vector<1x768xf32>
    %133 = vector.broadcast %132 : vector<1x768xf32> to vector<8x768xf32>
    %134 = arith.addf %131, %133 : vector<8x768xf32>
    %cst_59 = arith.constant 0.000000e+00 : f32
    %135 = vector.broadcast %cst_59 : f32 to vector<8x768xf32>
    %136 = arith.maximumf %134, %135 : vector<8x768xf32>
    %137 = vector.extract_strided_slice %136 {offsets = [0, 0], sizes = [1, 768], strides = [1, 1]} : vector<8x768xf32> to vector<1x768xf32>
    %c0_60 = arith.constant 0 : index
    %c0_61 = arith.constant 0 : index
    %138 = vector.load %arg18[%c0_60, %c0_61] : memref<1x768xf32, #tpu.memory_space<vmem>>, vector<1x768xf32>
    tpu.vector_store %arg18[%c0_60, %c0_61], %137 {strides = array<i32>} : memref<1x768xf32, #tpu.memory_space<vmem>>, vector<1x768xf32>,
    %139 = vector.extract_strided_slice %119 {offsets = [0, 0], sizes = [64, 1], strides = [1, 1]} : vector<64x128xf32> to vector<64x1xf32>
    %140 = vector.extract_strided_slice %119 {offsets = [0, 1], sizes = [64, 1], strides = [1, 1]} : vector<64x128xf32> to vector<64x1xf32>
    %cst_62 = arith.constant 0.000000e+00 : f32
    %141 = vector.broadcast %cst_62 : f32 to vector<64x1xf32>
    %142 = arith.subf %141, %140 : vector<64x1xf32>
    %143 = math.exp %142 : vector<64x1xf32>
    %144 = math.log1p %143 : vector<64x1xf32>
    %145 = arith.addf %140, %144 : vector<64x1xf32>
    %146 = math.log %145 : vector<64x1xf32>
    %cst_63 = arith.constant 0.000000e+00 : f32
    %147 = vector.broadcast %cst_63 : f32 to vector<64x1xf32>
    %148 = arith.subf %147, %146 : vector<64x1xf32>
    %149 = arith.mulf %145, %145 : vector<64x1xf32>
    %150 = arith.mulf %139, %139 : vector<64x1xf32>
    %151 = arith.addf %149, %150 : vector<64x1xf32>
    %cst_64 = arith.constant 1.000000e+00 : f32
    %152 = vector.broadcast %cst_64 : f32 to vector<64x1xf32>
    %153 = arith.subf %151, %152 : vector<64x1xf32>
    %cst_65 = arith.constant 5.000000e-01 : f32
    %154 = vector.broadcast %cst_65 : f32 to vector<64x1xf32>
    %155 = arith.mulf %154, %153 : vector<64x1xf32>
    %156 = arith.addf %148, %155 : vector<64x1xf32>
    %cst_66 = arith.constant dense<0.000000e+00> : vector<1xf32>
    %157 = vector.multi_reduction <add>, %156, %cst_66 [0] : vector<64x1xf32> to vector<1xf32>
    %158 = vector.shape_cast %157 : vector<1xf32> to vector<1x1xf32>
    %c0_67 = arith.constant 0 : index
    %c0_68 = arith.constant 0 : index
    %159 = vector.load %arg19[%c0_67, %c0_68] : memref<1x1xf32, #tpu.memory_space<vmem>>, vector<1x1xf32>
    tpu.vector_store %arg19[%c0_67, %c0_68], %158 {strides = array<i32>} : memref<1x1xf32, #tpu.memory_space<vmem>>, vector<1x1xf32>,
    %160 = vector.extract_strided_slice %137 {offsets = [0, 0], sizes = [1, 128], strides = [1, 1]} : vector<1x768xf32> to vector<1x128xf32>
    %161 = vector.extract_strided_slice %137 {offsets = [0, 128], sizes = [1, 128], strides = [1, 1]} : vector<1x768xf32> to vector<1x128xf32>
    %cst_69 = arith.constant 0.000000e+00 : f32
    %162 = vector.broadcast %cst_69 : f32 to vector<1x128xf32>
    %163 = arith.subf %162, %161 : vector<1x128xf32>
    %164 = math.exp %163 : vector<1x128xf32>
    %165 = math.log1p %164 : vector<1x128xf32>
    %166 = arith.addf %161, %165 : vector<1x128xf32>
    %167 = math.log %166 : vector<1x128xf32>
    %cst_70 = arith.constant 0.000000e+00 : f32
    %168 = vector.broadcast %cst_70 : f32 to vector<1x128xf32>
    %169 = arith.subf %168, %167 : vector<1x128xf32>
    %170 = arith.mulf %166, %166 : vector<1x128xf32>
    %171 = arith.mulf %160, %160 : vector<1x128xf32>
    %172 = arith.addf %170, %171 : vector<1x128xf32>
    %cst_71 = arith.constant 1.000000e+00 : f32
    %173 = vector.broadcast %cst_71 : f32 to vector<1x128xf32>
    %174 = arith.subf %172, %173 : vector<1x128xf32>
    %cst_72 = arith.constant 5.000000e-01 : f32
    %175 = vector.broadcast %cst_72 : f32 to vector<1x128xf32>
    %176 = arith.mulf %175, %174 : vector<1x128xf32>
    %177 = arith.addf %169, %176 : vector<1x128xf32>
    %178 = tpu.iota {dimensions = array<i32: 1>} : vector<1x128xi32>
    %c5_i32 = arith.constant 5 : i32
    %179 = vector.broadcast %c5_i32 : i32 to vector<1x128xi32>
    %180 = arith.cmpi slt, %178, %179 : vector<1x128xi32>
    %cst_73 = arith.constant 0.000000e+00 : f32
    %181 = vector.broadcast %cst_73 : f32 to vector<1x128xf32>
    %182 = arith.select %180, %177, %181 : vector<1x128xi1>, vector<1x128xf32>
    %cst_74 = arith.constant dense<0.000000e+00> : vector<1xf32>
    %183 = vector.multi_reduction <add>, %182, %cst_74 [1] : vector<1x128xf32> to vector<1xf32>
    %184 = vector.shape_cast %183 : vector<1xf32> to vector<1x1xf32>
    %c0_75 = arith.constant 0 : index
    %c0_76 = arith.constant 0 : index
    %185 = vector.load %arg20[%c0_75, %c0_76] : memref<1x1xf32, #tpu.memory_space<vmem>>, vector<1x1xf32>
    tpu.vector_store %arg20[%c0_75, %c0_76], %184 {strides = array<i32>} : memref<1x1xf32, #tpu.memory_space<vmem>>, vector<1x1xf32>,
    %186 = vector.extract_strided_slice %137 {offsets = [0, 256], sizes = [1, 256], strides = [1, 1]} : vector<1x768xf32> to vector<1x256xf32>
    %187 = vector.extract_strided_slice %137 {offsets = [0, 512], sizes = [1, 256], strides = [1, 1]} : vector<1x768xf32> to vector<1x256xf32>
    %cst_77 = arith.constant 0.000000e+00 : f32
    %188 = vector.broadcast %cst_77 : f32 to vector<1x256xf32>
    %189 = arith.subf %188, %187 : vector<1x256xf32>
    %190 = math.exp %189 : vector<1x256xf32>
    %191 = math.log1p %190 : vector<1x256xf32>
    %192 = arith.addf %187, %191 : vector<1x256xf32>
    %193 = math.log %192 : vector<1x256xf32>
    %cst_78 = arith.constant 0.000000e+00 : f32
    %194 = vector.broadcast %cst_78 : f32 to vector<1x256xf32>
    %195 = arith.subf %194, %193 : vector<1x256xf32>
    %196 = arith.mulf %192, %192 : vector<1x256xf32>
    %197 = arith.mulf %186, %186 : vector<1x256xf32>
    %198 = arith.addf %196, %197 : vector<1x256xf32>
    %cst_79 = arith.constant 1.000000e+00 : f32
    %199 = vector.broadcast %cst_79 : f32 to vector<1x256xf32>
    %200 = arith.subf %198, %199 : vector<1x256xf32>
    %cst_80 = arith.constant 5.000000e-01 : f32
    %201 = vector.broadcast %cst_80 : f32 to vector<1x256xf32>
    %202 = arith.mulf %201, %200 : vector<1x256xf32>
    %203 = arith.addf %195, %202 : vector<1x256xf32>
    %cst_81 = arith.constant dense<0.000000e+00> : vector<1xf32>
    %204 = vector.multi_reduction <add>, %203, %cst_81 [1] : vector<1x256xf32> to vector<1xf32>
    %205 = vector.shape_cast %204 : vector<1xf32> to vector<1x1xf32>
    %c0_82 = arith.constant 0 : index
    %c0_83 = arith.constant 0 : index
    %206 = vector.load %arg21[%c0_82, %c0_83] : memref<1x1xf32, #tpu.memory_space<vmem>>, vector<1x1xf32>
    tpu.vector_store %arg21[%c0_82, %c0_83], %205 {strides = array<i32>} : memref<1x1xf32, #tpu.memory_space<vmem>>, vector<1x1xf32>,
    return
  }
  func.func @transform_0(%arg0: i32) -> (i32, i32) {
    %c0_i32 = arith.constant 0 : i32
    %c0_i32_0 = arith.constant 0 : i32
    %c0_i32_1 = arith.constant 0 : i32
    return %c0_i32, %c0_i32_0 : i32, i32
  }
  func.func @transform_1(%arg0: i32) -> (i32, i32) {
    %c0_i32 = arith.constant 0 : i32
    %c0_i32_0 = arith.constant 0 : i32
    %c0_i32_1 = arith.constant 0 : i32
    return %c0_i32, %c0_i32_0 : i32, i32
  }
  func.func @transform_2(%arg0: i32) -> (i32, i32) {
    %c0_i32 = arith.constant 0 : i32
    %c0_i32_0 = arith.constant 0 : i32
    %c0_i32_1 = arith.constant 0 : i32
    return %c0_i32, %c0_i32_0 : i32, i32
  }
  func.func @transform_3(%arg0: i32) -> (i32, i32) {
    %c0_i32 = arith.constant 0 : i32
    %c0_i32_0 = arith.constant 0 : i32
    %c0_i32_1 = arith.constant 0 : i32
    return %c0_i32, %c0_i32_0 : i32, i32
  }
  func.func @transform_4(%arg0: i32) -> (i32, i32) {
    %c0_i32 = arith.constant 0 : i32
    %c0_i32_0 = arith.constant 0 : i32
    %c0_i32_1 = arith.constant 0 : i32
    return %c0_i32, %c0_i32_0 : i32, i32
  }
  func.func @transform_5(%arg0: i32) -> (i32, i32) {
    %c0_i32 = arith.constant 0 : i32
    %c0_i32_0 = arith.constant 0 : i32
    %c0_i32_1 = arith.constant 0 : i32
    return %c0_i32, %c0_i32_0 : i32, i32
  }
  func.func @transform_6(%arg0: i32) -> (i32, i32) {
    %c0_i32 = arith.constant 0 : i32
    %c0_i32_0 = arith.constant 0 : i32
    %c0_i32_1 = arith.constant 0 : i32
    return %c0_i32, %c0_i32_0 : i32, i32
  }
  func.func @transform_7(%arg0: i32) -> (i32, i32) {
    %c0_i32 = arith.constant 0 : i32
    %c0_i32_0 = arith.constant 0 : i32
    %c0_i32_1 = arith.constant 0 : i32
    return %c0_i32, %c0_i32_0 : i32, i32
  }
  func.func @transform_8(%arg0: i32) -> (i32, i32) {
    %c0_i32 = arith.constant 0 : i32
    %c0_i32_0 = arith.constant 0 : i32
    %c0_i32_1 = arith.constant 0 : i32
    return %c0_i32, %c0_i32_0 : i32, i32
  }
  func.func @transform_9(%arg0: i32) -> (i32, i32) {
    %c0_i32 = arith.constant 0 : i32
    %c0_i32_0 = arith.constant 0 : i32
    %c0_i32_1 = arith.constant 0 : i32
    return %c0_i32, %c0_i32_0 : i32, i32
  }
  func.func @transform_10(%arg0: i32) -> (i32, i32) {
    %c0_i32 = arith.constant 0 : i32
    %c0_i32_0 = arith.constant 0 : i32
    %c0_i32_1 = arith.constant 0 : i32
    return %c0_i32, %c0_i32_0 : i32, i32
  }
  func.func @transform_11(%arg0: i32) -> (i32, i32) {
    %c0_i32 = arith.constant 0 : i32
    %c0_i32_0 = arith.constant 0 : i32
    %c0_i32_1 = arith.constant 0 : i32
    return %c0_i32, %c0_i32_0 : i32, i32
  }
  func.func @transform_12(%arg0: i32) -> (i32, i32) {
    %c0_i32 = arith.constant 0 : i32
    %c0_i32_0 = arith.constant 0 : i32
    %c0_i32_1 = arith.constant 0 : i32
    return %c0_i32, %c0_i32_0 : i32, i32
  }
  func.func @transform_13(%arg0: i32) -> (i32, i32) {
    %c0_i32 = arith.constant 0 : i32
    %c0_i32_0 = arith.constant 0 : i32
    %c0_i32_1 = arith.constant 0 : i32
    return %c0_i32, %c0_i32_0 : i32, i32
  }
  func.func @transform_14(%arg0: i32) -> (i32, i32) {
    %c0_i32 = arith.constant 0 : i32
    %c0_i32_0 = arith.constant 0 : i32
    %c0_i32_1 = arith.constant 0 : i32
    return %c0_i32, %c0_i32_0 : i32, i32
  }
  func.func @transform_15(%arg0: i32) -> (i32, i32) {
    %c0_i32 = arith.constant 0 : i32
    %c0_i32_0 = arith.constant 0 : i32
    %c0_i32_1 = arith.constant 0 : i32
    return %c0_i32, %c0_i32_0 : i32, i32
  }
  func.func @transform_16(%arg0: i32) -> (i32, i32) {
    %c0_i32 = arith.constant 0 : i32
    %c0_i32_0 = arith.constant 0 : i32
    %c0_i32_1 = arith.constant 0 : i32
    return %c0_i32, %c0_i32_0 : i32, i32
  }
  func.func @transform_17(%arg0: i32) -> (i32, i32) {
    %c0_i32 = arith.constant 0 : i32
    %c0_i32_0 = arith.constant 0 : i32
    %c0_i32_1 = arith.constant 0 : i32
    return %c0_i32, %c0_i32_0 : i32, i32
  }
  func.func @transform_18(%arg0: i32) -> (i32, i32) {
    %c0_i32 = arith.constant 0 : i32
    %c0_i32_0 = arith.constant 0 : i32
    %c0_i32_1 = arith.constant 0 : i32
    return %c0_i32, %c0_i32_0 : i32, i32
  }
  func.func @transform_19(%arg0: i32) -> (i32, i32) {
    %c0_i32 = arith.constant 0 : i32
    %c0_i32_0 = arith.constant 0 : i32
    %c0_i32_1 = arith.constant 0 : i32
    return %c0_i32, %c0_i32_0 : i32, i32
  }
  func.func @transform_20(%arg0: i32) -> (i32, i32) {
    %c0_i32 = arith.constant 0 : i32
    %c0_i32_0 = arith.constant 0 : i32
    %c0_i32_1 = arith.constant 0 : i32
    return %c0_i32, %c0_i32_0 : i32, i32
  }
}

</mosaic_0001>

<llo_original>
// kernel: inference_network_forward.3
$region0: #{inference_network_forward.3}
  #allocation0 [shape = 'u32[]', space=smem, size = 0x4, offset = 0x4, fixed_abs, tag = 'smem constant byte address 0x4 - core index']
  #allocation1 [shape = 'u32[144,128]{1,0:T(1,128)}', space=vmem, size = 0x12000, scoped, tag = 'internal scratch']
  %s0 = inlined_call_operand.vmem [shape: bf16[7200,27], index: 0, kind: input, shape index: {}]
  %s1 = inlined_call_operand.vmem [shape: bf16[27,10], index: 1, kind: input, shape index: {}]
  %s2 = inlined_call_operand.vmem [shape: f32[1,10], index: 2, kind: input, shape index: {}]
  %s3 = inlined_call_operand.vmem [shape: f32[7200,10], index: 3, kind: output, shape index: {}]
  %s4 = sld [smem:[#allocation0]]
  $region45: #{inference_network_forward.3} parent=0
    _
  %s6 = ssub.s32 1, %s4
  %s7 = scalar_select 0, %s6, %s4
  loop: start=0, step=1, limit=4
  $region2: #{inference_network_forward.3} parent=0 // loop_pre_header
    _
  $region3: #{inference_network_forward.3} parent=0 // loop_header
    %s9 = sphi 0, %s13
    %p10 = scmp.ge.s32.totalorder %s9, 4
    %s19 = sphi 0, %s21
    %s22 = sphi 0, %s19
    %s23 = sphi 0, %s22
    %s39 = sphi 0, %s23
    %s43 = sphi 0, %s43
    %s45 = sphi 0, %s43
    %s46 = sphi 0, %s45
    %s60 = sphi 0, %s46
    %s64 = sphi 0, %s64
    %s66 = sphi 0, %s64
    %s67 = sphi 0, %s66
    %s81 = sphi 0, %s67
    %s87 = sphi 0, %s89
    %s90 = sphi 0, %s87
    %s91 = sphi 0, %s90
    %s107 = sphi 0, %s91
  $region4: #{inference_network_forward.3} parent=0 // loop_header_branch
    %12 = sbr.rel (%p10) target = $region8
  $region5: #{inference_network_forward.3} parent=0 // loop_body
    %s14 = ssub.s32 %s9, 1
    %s15 = ssub.s32 %s9, 2
    %s16 = sadd.s32 %s9, 1
    %s17 = ssub.s32 %s9, %s16
    %p18 = scmp.eq.s32.totalorder %s17, 0
    %s20 = sadd.s32 %s19, 1
    %s21 = scalar_select %p18, %s19, %s20
    %p24 = pneg %p18
    %p25 = scmp.eq.s32.totalorder %s9, 1
    %p26 = por %p24, %p25
    %p27 = scmp.ne.s32.totalorder %s19, %s22
    %p28 = scmp.eq.s32.totalorder %s9, 0
    %p29 = por %p27, %p28
    %p30 = scmp.ne.s32.totalorder %s19, %s22
    %p31 = scmp.eq.s32.totalorder %s14, 1
    %p32 = por %p30, %p31
    %p33 = scmp.ne.s32.totalorder %s22, %s23
    %p34 = scmp.eq.s32.totalorder %s14, 0
    %p35 = por %p33, %p34
    %p36 = scmp.ne.s32.totalorder %s22, %s23
    %p37 = scmp.eq.s32.totalorder %s15, 1
    %p38 = por %p36, %p37
    %p40 = scmp.ne.s32.totalorder %s23, %s39
    %p41 = scmp.eq.s32.totalorder %s15, 0
    %p42 = por %p40, %p41
    %s44 = sadd.s32 %s43, 1
    %p47 = scmp.eq.s32.totalorder %s9, 1
    %p48 = scmp.ne.s32.totalorder %s43, %s45
    %p49 = scmp.eq.s32.totalorder %s9, 0
    %p50 = por %p48, %p49
    %p51 = scmp.ne.s32.totalorder %s43, %s45
    %p52 = scmp.eq.s32.totalorder %s14, 1
    %p53 = por %p51, %p52
    %p54 = scmp.ne.s32.totalorder %s45, %s46
    %p55 = scmp.eq.s32.totalorder %s14, 0
    %p56 = por %p54, %p55
    %p57 = scmp.ne.s32.totalorder %s45, %s46
    %p58 = scmp.eq.s32.totalorder %s15, 1
    %p59 = por %p57, %p58
    %p61 = scmp.ne.s32.totalorder %s46, %s60
    %p62 = scmp.eq.s32.totalorder %s15, 0
    %p63 = por %p61, %p62
    %s65 = sadd.s32 %s64, 1
    %p68 = scmp.eq.s32.totalorder %s9, 1
    %p69 = scmp.ne.s32.totalorder %s64, %s66
    %p70 = scmp.eq.s32.totalorder %s9, 0
    %p71 = por %p69, %p70
    %p72 = scmp.ne.s32.totalorder %s64, %s66
    %p73 = scmp.eq.s32.totalorder %s14, 1
    %p74 = por %p72, %p73
    %p75 = scmp.ne.s32.totalorder %s66, %s67
    %p76 = scmp.eq.s32.totalorder %s14, 0
    %p77 = por %p75, %p76
    %p78 = scmp.ne.s32.totalorder %s66, %s67
    %p79 = scmp.eq.s32.totalorder %s15, 1
    %p80 = por %p78, %p79
    %p82 = scmp.ne.s32.totalorder %s67, %s81
    %p83 = scmp.eq.s32.totalorder %s15, 0
    %p84 = por %p82, %p83
    %s85 = ssub.s32 %s9, %s16
    %p86 = scmp.eq.s32.totalorder %s85, 0
    %s88 = sadd.s32 %s87, 1
    %s89 = scalar_select %p86, %s87, %s88
    %p92 = pneg %p86
    %p93 = scmp.eq.s32.totalorder %s9, 1
    %p94 = por %p92, %p93
    %p95 = scmp.ne.s32.totalorder %s87, %s90
    %p96 = scmp.eq.s32.totalorder %s9, 0
    %p97 = por %p95, %p96
    %p98 = scmp.ne.s32.totalorder %s87, %s90
    %p99 = scmp.eq.s32.totalorder %s14, 1
    %p100 = por %p98, %p99
    %p101 = scmp.ne.s32.totalorder %s90, %s91
    %p102 = scmp.eq.s32.totalorder %s14, 0
    %p103 = por %p101, %p102
    %p104 = scmp.ne.s32.totalorder %s90, %s91
    %p105 = scmp.eq.s32.totalorder %s15, 1
    %p106 = por %p104, %p105
    %p108 = scmp.ne.s32.totalorder %s91, %s107
    %p109 = scmp.eq.s32.totalorder %s15, 0
    %p110 = por %p108, %p109
    %p111 = scmp.le.s32.totalorder 1, %s9
    %p112 = scmp.lt.s32.totalorder %s9, 3
    %p113 = pnand %p111, %p112
    %p114 = pneg %p113
    // Predicated region
    $region9: #{inference_network_forward.3} parent=5 // pred_check
      _
    $region10: #{inference_network_forward.3} parent=5 // pred_check_branch
      %116 = sbr.rel (%p113) target = $region12
    $region11: #{inference_network_forward.3} parent=5 // pred_region
      %s117 = ssub.s32 %s9, 1
      // Predicated region
      $region13: #{inference_network_forward.3} parent=11 // pred_check
        %p118 = pneg %p56
      $region14: #{inference_network_forward.3} parent=11 // pred_check_branch
        %120 = sbr.rel (%p118) target = $region16
      $region15: #{inference_network_forward.3} parent=11 // pred_region
        _
      $region16: #{inference_network_forward.3} parent=11 // pred_fallthru
        _
      // Predicated region
      $region17: #{inference_network_forward.3} parent=11 // pred_check
        %p121 = pneg %p77
      $region18: #{inference_network_forward.3} parent=11 // pred_check_branch
        %123 = sbr.rel (%p121) target = $region20
      $region19: #{inference_network_forward.3} parent=11 // pred_region
        _
      $region20: #{inference_network_forward.3} parent=11 // pred_fallthru
        _
    $region12: #{inference_network_forward.3} parent=5 // pred_fallthru
      _
    %p124 = scmp.lt.s32.totalorder %s9, 2
    // Predicated region
    $region21: #{inference_network_forward.3} parent=5 // pred_check
      %p125 = pneg %p124
    $region22: #{inference_network_forward.3} parent=5 // pred_check_branch
      %127 = sbr.rel (%p125) target = $region24
    $region23: #{inference_network_forward.3} parent=5 // pred_region
      // Predicated region
      $region25: #{inference_network_forward.3} parent=23 // pred_check
        %p128 = pneg %p29
      $region26: #{inference_network_forward.3} parent=23 // pred_check_branch
        %130 = sbr.rel (%p128) target = $region28
      $region27: #{inference_network_forward.3} parent=23 // pred_region
        %s131 = smul.u32 450, %s9
        %p132 = scmp.lt.s32.totalorder %s131, 899
        %s133 = scalar_select %p132, %s131, 899
        %s134 = smul.addr %s133, 4
        %s135 = scalar_lea.vmem %s0, %s134
        %s136 = smul.u32 450, %s9
      $region28: #{inference_network_forward.3} parent=23 // pred_fallthru
        _
    $region24: #{inference_network_forward.3} parent=5 // pred_fallthru
      _
    %p137 = scmp.le.s32.totalorder 1, %s9
    %p138 = scmp.lt.s32.totalorder %s9, 3
    %p139 = pnand %p137, %p138
    %p140 = pneg %p139
    // Predicated region
    $region29: #{inference_network_forward.3} parent=5 // pred_check
      _
    $region30: #{inference_network_forward.3} parent=5 // pred_check_branch
      %142 = sbr.rel (%p139) target = $region32
    $region31: #{inference_network_forward.3} parent=5 // pred_region
      %s143 = ssub.s32 %s9, 1
      %s144 = smul.u32 450, %s14
      %p145 = scmp.lt.s32.totalorder %s144, 899
      %s146 = scalar_select %p145, %s144, 899
      %s147 = smul.addr %s146, 4
      %s148 = scalar_lea.vmem %s0, %s147
      %p149 = pneg %p35
      %p150 = pneg %p32
      %p151 = pneg %p56
      %p152 = pneg %p53
      %p153 = pneg %p77
      %p154 = pneg %p74
      %p155 = pneg %p103
      %p156 = pneg %p100
      %s157 = smul.u32 450, %s14
      %p158 = scmp.lt.s32.totalorder %s157, 899
      %s159 = scalar_select %p158, %s157, 899
      %s160 = smul.addr %s159, 8
      %s161 = scalar_lea.vmem %s3, %s160
      %s162 = smul.u32 450, %s14
      %p163 = scmp.lt.s32.totalorder %s162, 899
      %s164 = scalar_select %p163, %s162, 899
      %s165 = smul.addr %s164, 4
      %s166 = scalar_lea.vmem %s0, %s165
      %s167 = smul.u32 450, %s14
      %s168 = smul.u32 450, %s14
      %p169 = scmp.lt.s32.totalorder %s168, 899
      %s170 = scalar_select %p169, %s168, 899
      %s171 = smul.addr %s170, 8
      %s172 = scalar_lea.vmem %s3, %s171
      %s173 = smul.u32 450, %s14
      %v175 = vld [vmem:[%s166] sm:$0xf]
      %v176 = vld [vmem:[%s166 + $0x4] sm:$0xf]
      %v177 = vld [vmem:[%s166 + $0x8] sm:$0xf]
      %v178 = vld [vmem:[%s166 + $0xc] sm:$0xf]
      %v179 = vld [vmem:[%s166 + $0x10] sm:$0xf]
      %v180 = vld [vmem:[%s166 + $0x14] sm:$0xf]
      %v181 = vld [vmem:[%s166 + $0x18] sm:$0xf]
      %v182 = vld [vmem:[%s166 + $0x1c] sm:$0xf]
      %v183 = vld [vmem:[%s166 + $0x20] sm:$0xf]
      %v184 = vld [vmem:[%s166 + $0x24] sm:$0xf]
      %v185 = vld [vmem:[%s166 + $0x28] sm:$0xf]
      %v186 = vld [vmem:[%s166 + $0x2c] sm:$0xf]
      %v187 = vld [vmem:[%s166 + $0x30] sm:$0xf]
      %v188 = vld [vmem:[%s166 + $0x34] sm:$0xf]
      %v189 = vld [vmem:[%s166 + $0x38] sm:$0xf]
      %v190 = vld [vmem:[%s166 + $0x3c] sm:$0xf]
      %v191 = vld [vmem:[%s166 + $0x40] sm:$0xf]
      %v192 = vld [vmem:[%s166 + $0x44] sm:$0xf]
      %v193 = vld [vmem:[%s166 + $0x48] sm:$0xf]
      %v194 = vld [vmem:[%s166 + $0x4c] sm:$0xf]
      %v195 = vld [vmem:[%s166 + $0x50] sm:$0xf]
      %v196 = vld [vmem:[%s166 + $0x54] sm:$0xf]
      %v197 = vld [vmem:[%s166 + $0x58] sm:$0xf]
      %v198 = vld [vmem:[%s166 + $0x5c] sm:$0xf]
      %v199 = vld [vmem:[%s166 + $0x60] sm:$0xf]
      %v200 = vld [vmem:[%s166 + $0x64] sm:$0xf]
      %v201 = vld [vmem:[%s166 + $0x68] sm:$0xf]
      %v202 = vld [vmem:[%s166 + $0x6c] sm:$0xf]
      %v203 = vld [vmem:[%s166 + $0x70] sm:$0xf]
      %v204 = vld [vmem:[%s166 + $0x74] sm:$0xf]
      %v205 = vld [vmem:[%s166 + $0x78] sm:$0xf]
      %v206 = vld [vmem:[%s166 + $0x7c] sm:$0xf]
      %v207 = vld [vmem:[%s166 + $0x80] sm:$0xf]
      %v208 = vld [vmem:[%s166 + $0x84] sm:$0xf]
      %v209 = vld [vmem:[%s166 + $0x88] sm:$0xf]
      %v210 = vld [vmem:[%s166 + $0x8c] sm:$0xf]
      %v211 = vld [vmem:[%s166 + $0x90] sm:$0xf]
      %v212 = vld [vmem:[%s166 + $0x94] sm:$0xf]
      %v213 = vld [vmem:[%s166 + $0x98] sm:$0xf]
      %v214 = vld [vmem:[%s166 + $0x9c] sm:$0xf]
      %v215 = vld [vmem:[%s166 + $0xa0] sm:$0xf]
      %v216 = vld [vmem:[%s166 + $0xa4] sm:$0xf]
      %v217 = vld [vmem:[%s166 + $0xa8] sm:$0xf]
      %v218 = vld [vmem:[%s166 + $0xac] sm:$0xf]
      %v219 = vld [vmem:[%s166 + $0xb0] sm:$0xf]
      %v220 = vld [vmem:[%s166 + $0xb4] sm:$0xf]
      %v221 = vld [vmem:[%s166 + $0xb8] sm:$0xf]
      %v222 = vld [vmem:[%s166 + $0xbc] sm:$0xf]
      %v223 = vld [vmem:[%s166 + $0xc0] sm:$0xf]
      %v224 = vld [vmem:[%s166 + $0xc4] sm:$0xf]
      %v225 = vld [vmem:[%s166 + $0xc8] sm:$0xf]
      %v226 = vld [vmem:[%s166 + $0xcc] sm:$0xf]
      %v227 = vld [vmem:[%s166 + $0xd0] sm:$0xf]
      %v228 = vld [vmem:[%s166 + $0xd4] sm:$0xf]
      %v229 = vld [vmem:[%s166 + $0xd8] sm:$0xf]
      %v230 = vld [vmem:[%s166 + $0xdc] sm:$0xf]
      %v231 = vld [vmem:[%s166 + $0xe0] sm:$0xf]
      %v232 = vld [vmem:[%s166 + $0xe4] sm:$0xf]
      %v233 = vld [vmem:[%s166 + $0xe8] sm:$0xf]
      %v234 = vld [vmem:[%s166 + $0xec] sm:$0xf]
      %v235 = vld [vmem:[%s166 + $0xf0] sm:$0xf]
      %v236 = vld [vmem:[%s166 + $0xf4] sm:$0xf]
      %v237 = vld [vmem:[%s166 + $0xf8] sm:$0xf]
      %v238 = vld [vmem:[%s166 + $0xfc] sm:$0xf]
      %v239 = vld [vmem:[%s166 + $0x100] sm:$0xf]
      %v240 = vld [vmem:[%s166 + $0x104] sm:$0xf]
      %v241 = vld [vmem:[%s166 + $0x108] sm:$0xf]
      %v242 = vld [vmem:[%s166 + $0x10c] sm:$0xf]
      %v243 = vld [vmem:[%s166 + $0x110] sm:$0xf]
      %v244 = vld [vmem:[%s166 + $0x114] sm:$0xf]
      %v245 = vld [vmem:[%s166 + $0x118] sm:$0xf]
      %v246 = vld [vmem:[%s166 + $0x11c] sm:$0xf]
      %v247 = vld [vmem:[%s166 + $0x120] sm:$0xf]
      %v248 = vld [vmem:[%s166 + $0x124] sm:$0xf]
      %v249 = vld [vmem:[%s166 + $0x128] sm:$0xf]
      %v250 = vld [vmem:[%s166 + $0x12c] sm:$0xf]
      %v251 = vld [vmem:[%s166 + $0x130] sm:$0xf]
      %v252 = vld [vmem:[%s166 + $0x134] sm:$0xf]
      %v253 = vld [vmem:[%s166 + $0x138] sm:$0xf]
      %v254 = vld [vmem:[%s166 + $0x13c] sm:$0xf]
      %v255 = vld [vmem:[%s166 + $0x140] sm:$0xf]
      %v256 = vld [vmem:[%s166 + $0x144] sm:$0xf]
      %v257 = vld [vmem:[%s166 + $0x148] sm:$0xf]
      %v258 = vld [vmem:[%s166 + $0x14c] sm:$0xf]
      %v259 = vld [vmem:[%s166 + $0x150] sm:$0xf]
      %v260 = vld [vmem:[%s166 + $0x154] sm:$0xf]
      %v261 = vld [vmem:[%s166 + $0x158] sm:$0xf]
      %v262 = vld [vmem:[%s166 + $0x15c] sm:$0xf]
      %v263 = vld [vmem:[%s166 + $0x160] sm:$0xf]
      %v264 = vld [vmem:[%s166 + $0x164] sm:$0xf]
      %v265 = vld [vmem:[%s166 + $0x168] sm:$0xf]
      %v266 = vld [vmem:[%s166 + $0x16c] sm:$0xf]
      %v267 = vld [vmem:[%s166 + $0x170] sm:$0xf]
      %v268 = vld [vmem:[%s166 + $0x174] sm:$0xf]
      %v269 = vld [vmem:[%s166 + $0x178] sm:$0xf]
      %v270 = vld [vmem:[%s166 + $0x17c] sm:$0xf]
      %v271 = vld [vmem:[%s166 + $0x180] sm:$0xf]
      %v272 = vld [vmem:[%s166 + $0x184] sm:$0xf]
      %v273 = vld [vmem:[%s166 + $0x188] sm:$0xf]
      %v274 = vld [vmem:[%s166 + $0x18c] sm:$0xf]
      %v275 = vld [vmem:[%s166 + $0x190] sm:$0xf]
      %v276 = vld [vmem:[%s166 + $0x194] sm:$0xf]
      %v277 = vld [vmem:[%s166 + $0x198] sm:$0xf]
      %v278 = vld [vmem:[%s166 + $0x19c] sm:$0xf]
      %v279 = vld [vmem:[%s166 + $0x1a0] sm:$0xf]
      %v280 = vld [vmem:[%s166 + $0x1a4] sm:$0xf]
      %v281 = vld [vmem:[%s166 + $0x1a8] sm:$0xf]
      %v282 = vld [vmem:[%s166 + $0x1ac] sm:$0xf]
      %v283 = vld [vmem:[%s166 + $0x1b0] sm:$0xf]
      %v284 = vld [vmem:[%s166 + $0x1b4] sm:$0xf]
      %v285 = vld [vmem:[%s166 + $0x1b8] sm:$0xf]
      %v286 = vld [vmem:[%s166 + $0x1bc] sm:$0xf]
      %v287 = vld [vmem:[%s166 + $0x1c0] sm:$0xf]
      %v288 = vld [vmem:[%s166 + $0x1c4] sm:$0xf]
      %v289 = vld [vmem:[%s166 + $0x1c8] sm:$0xf]
      %v290 = vld [vmem:[%s166 + $0x1cc] sm:$0xf]
      %v291 = vld [vmem:[%s166 + $0x1d0] sm:$0xf]
      %v292 = vld [vmem:[%s166 + $0x1d4] sm:$0xf]
      %v293 = vld [vmem:[%s166 + $0x1d8] sm:$0xf]
      %v294 = vld [vmem:[%s166 + $0x1dc] sm:$0xf]
      %v295 = vld [vmem:[%s166 + $0x1e0] sm:$0xf]
      %v296 = vld [vmem:[%s166 + $0x1e4] sm:$0xf]
      %v297 = vld [vmem:[%s166 + $0x1e8] sm:$0xf]
      %v298 = vld [vmem:[%s166 + $0x1ec] sm:$0xf]
      %v299 = vld [vmem:[%s166 + $0x1f0] sm:$0xf]
      %v300 = vld [vmem:[%s166 + $0x1f4] sm:$0xf]
      %v301 = vld [vmem:[%s166 + $0x1f8] sm:$0xf]
      %v302 = vld [vmem:[%s166 + $0x1fc] sm:$0xf]
      %v303 = vld [vmem:[%s166 + $0x200] sm:$0xf]
      %v304 = vld [vmem:[%s166 + $0x204] sm:$0xf]
      %v305 = vld [vmem:[%s166 + $0x208] sm:$0xf]
      %v306 = vld [vmem:[%s166 + $0x20c] sm:$0xf]
      %v307 = vld [vmem:[%s166 + $0x210] sm:$0xf]
      %v308 = vld [vmem:[%s166 + $0x214] sm:$0xf]
      %v309 = vld [vmem:[%s166 + $0x218] sm:$0xf]
      %v310 = vld [vmem:[%s166 + $0x21c] sm:$0xf]
      %v311 = vld [vmem:[%s166 + $0x220] sm:$0xf]
      %v312 = vld [vmem:[%s166 + $0x224] sm:$0xf]
      %v313 = vld [vmem:[%s166 + $0x228] sm:$0xf]
      %v314 = vld [vmem:[%s166 + $0x22c] sm:$0xf]
      %v315 = vld [vmem:[%s166 + $0x230] sm:$0xf]
      %v316 = vld [vmem:[%s166 + $0x234] sm:$0xf]
      %v317 = vld [vmem:[%s166 + $0x238] sm:$0xf]
      %v318 = vld [vmem:[%s166 + $0x23c] sm:$0xf]
      %v319 = vld [vmem:[%s166 + $0x240] sm:$0xf]
      %v320 = vld [vmem:[%s166 + $0x244] sm:$0xf]
      %v321 = vld [vmem:[%s166 + $0x248] sm:$0xf]
      %v322 = vld [vmem:[%s166 + $0x24c] sm:$0xf]
      %v323 = vld [vmem:[%s166 + $0x250] sm:$0xf]
      %v324 = vld [vmem:[%s166 + $0x254] sm:$0xf]
      %v325 = vld [vmem:[%s166 + $0x258] sm:$0xf]
      %v326 = vld [vmem:[%s166 + $0x25c] sm:$0xf]
      %v327 = vld [vmem:[%s166 + $0x260] sm:$0xf]
      %v328 = vld [vmem:[%s166 + $0x264] sm:$0xf]
      %v329 = vld [vmem:[%s166 + $0x268] sm:$0xf]
      %v330 = vld [vmem:[%s166 + $0x26c] sm:$0xf]
      %v331 = vld [vmem:[%s166 + $0x270] sm:$0xf]
      %v332 = vld [vmem:[%s166 + $0x274] sm:$0xf]
      %v333 = vld [vmem:[%s166 + $0x278] sm:$0xf]
      %v334 = vld [vmem:[%s166 + $0x27c] sm:$0xf]
      %v335 = vld [vmem:[%s166 + $0x280] sm:$0xf]
      %v336 = vld [vmem:[%s166 + $0x284] sm:$0xf]
      %v337 = vld [vmem:[%s166 + $0x288] sm:$0xf]
      %v338 = vld [vmem:[%s166 + $0x28c] sm:$0xf]
      %v339 = vld [vmem:[%s166 + $0x290] sm:$0xf]
      %v340 = vld [vmem:[%s166 + $0x294] sm:$0xf]
      %v341 = vld [vmem:[%s166 + $0x298] sm:$0xf]
      %v342 = vld [vmem:[%s166 + $0x29c] sm:$0xf]
      %v343 = vld [vmem:[%s166 + $0x2a0] sm:$0xf]
      %v344 = vld [vmem:[%s166 + $0x2a4] sm:$0xf]
      %v345 = vld [vmem:[%s166 + $0x2a8] sm:$0xf]
      %v346 = vld [vmem:[%s166 + $0x2ac] sm:$0xf]
      %v347 = vld [vmem:[%s166 + $0x2b0] sm:$0xf]
      %v348 = vld [vmem:[%s166 + $0x2b4] sm:$0xf]
      %v349 = vld [vmem:[%s166 + $0x2b8] sm:$0xf]
      %v350 = vld [vmem:[%s166 + $0x2bc] sm:$0xf]
      %v351 = vld [vmem:[%s166 + $0x2c0] sm:$0xf]
      %v352 = vld [vmem:[%s166 + $0x2c4] sm:$0xf]
      %v353 = vld [vmem:[%s166 + $0x2c8] sm:$0xf]
      %v354 = vld [vmem:[%s166 + $0x2cc] sm:$0xf]
      %v355 = vld [vmem:[%s166 + $0x2d0] sm:$0xf]
      %v356 = vld [vmem:[%s166 + $0x2d4] sm:$0xf]
      %v357 = vld [vmem:[%s166 + $0x2d8] sm:$0xf]
      %v358 = vld [vmem:[%s166 + $0x2dc] sm:$0xf]
      %v359 = vld [vmem:[%s166 + $0x2e0] sm:$0xf]
      %v360 = vld [vmem:[%s166 + $0x2e4] sm:$0xf]
      %v361 = vld [vmem:[%s166 + $0x2e8] sm:$0xf]
      %v362 = vld [vmem:[%s166 + $0x2ec] sm:$0xf]
      %v363 = vld [vmem:[%s166 + $0x2f0] sm:$0xf]
      %v364 = vld [vmem:[%s166 + $0x2f4] sm:$0xf]
      %v365 = vld [vmem:[%s166 + $0x2f8] sm:$0xf]
      %v366 = vld [vmem:[%s166 + $0x2fc] sm:$0xf]
      %v367 = vld [vmem:[%s166 + $0x300] sm:$0xf]
      %v368 = vld [vmem:[%s166 + $0x304] sm:$0xf]
      %v369 = vld [vmem:[%s166 + $0x308] sm:$0xf]
      %v370 = vld [vmem:[%s166 + $0x30c] sm:$0xf]
      %v371 = vld [vmem:[%s166 + $0x310] sm:$0xf]
      %v372 = vld [vmem:[%s166 + $0x314] sm:$0xf]
      %v373 = vld [vmem:[%s166 + $0x318] sm:$0xf]
      %v374 = vld [vmem:[%s166 + $0x31c] sm:$0xf]
      %v375 = vld [vmem:[%s166 + $0x320] sm:$0xf]
      %v376 = vld [vmem:[%s166 + $0x324] sm:$0xf]
      %v377 = vld [vmem:[%s166 + $0x328] sm:$0xf]
      %v378 = vld [vmem:[%s166 + $0x32c] sm:$0xf]
      %v379 = vld [vmem:[%s166 + $0x330] sm:$0xf]
      %v380 = vld [vmem:[%s166 + $0x334] sm:$0xf]
      %v381 = vld [vmem:[%s166 + $0x338] sm:$0xf]
      %v382 = vld [vmem:[%s166 + $0x33c] sm:$0xf]
      %v383 = vld [vmem:[%s166 + $0x340] sm:$0xf]
      %v384 = vld [vmem:[%s166 + $0x344] sm:$0xf]
      %v385 = vld [vmem:[%s166 + $0x348] sm:$0xf]
      %v386 = vld [vmem:[%s166 + $0x34c] sm:$0xf]
      %v387 = vld [vmem:[%s166 + $0x350] sm:$0xf]
      %v388 = vld [vmem:[%s166 + $0x354] sm:$0xf]
      %v389 = vld [vmem:[%s166 + $0x358] sm:$0xf]
      %v390 = vld [vmem:[%s166 + $0x35c] sm:$0xf]
      %v391 = vld [vmem:[%s166 + $0x360] sm:$0xf]
      %v392 = vld [vmem:[%s166 + $0x364] sm:$0xf]
      %v393 = vld [vmem:[%s166 + $0x368] sm:$0xf]
      %v394 = vld [vmem:[%s166 + $0x36c] sm:$0xf]
      %v395 = vld [vmem:[%s166 + $0x370] sm:$0xf]
      %v396 = vld [vmem:[%s166 + $0x374] sm:$0xf]
      %v397 = vld [vmem:[%s166 + $0x378] sm:$0xf]
      %v398 = vld [vmem:[%s166 + $0x37c] sm:$0xf]
      %v399 = vld [vmem:[%s166 + $0x380] sm:$0xf]
      %v400 = vld [vmem:[%s166 + $0x384] sm:$0xf]
      %v401 = vld [vmem:[%s166 + $0x388] sm:$0xf]
      %v402 = vld [vmem:[%s166 + $0x38c] sm:$0xf]
      %v403 = vld [vmem:[%s166 + $0x390] sm:$0xf]
      %v404 = vld [vmem:[%s166 + $0x394] sm:$0xf]
      %v405 = vld [vmem:[%s166 + $0x398] sm:$0xf]
      %v406 = vld [vmem:[%s166 + $0x39c] sm:$0xf]
      %v407 = vld [vmem:[%s166 + $0x3a0] sm:$0xf]
      %v408 = vld [vmem:[%s166 + $0x3a4] sm:$0xf]
      %v409 = vld [vmem:[%s166 + $0x3a8] sm:$0xf]
      %v410 = vld [vmem:[%s166 + $0x3ac] sm:$0xf]
      %v411 = vld [vmem:[%s166 + $0x3b0] sm:$0xf]
      %v412 = vld [vmem:[%s166 + $0x3b4] sm:$0xf]
      %v413 = vld [vmem:[%s166 + $0x3b8] sm:$0xf]
      %v414 = vld [vmem:[%s166 + $0x3bc] sm:$0xf]
      %v415 = vld [vmem:[%s166 + $0x3c0] sm:$0xf]
      %v416 = vld [vmem:[%s166 + $0x3c4] sm:$0xf]
      %v417 = vld [vmem:[%s166 + $0x3c8] sm:$0xf]
      %v418 = vld [vmem:[%s166 + $0x3cc] sm:$0xf]
      %v419 = vld [vmem:[%s166 + $0x3d0] sm:$0xf]
      %v420 = vld [vmem:[%s166 + $0x3d4] sm:$0xf]
      %v421 = vld [vmem:[%s166 + $0x3d8] sm:$0xf]
      %v422 = vld [vmem:[%s166 + $0x3dc] sm:$0xf]
      %v423 = vld [vmem:[%s166 + $0x3e0] sm:$0xf]
      %v424 = vld [vmem:[%s166 + $0x3e4] sm:$0xf]
      %v425 = vld [vmem:[%s166 + $0x3e8] sm:$0xf]
      %v426 = vld [vmem:[%s166 + $0x3ec] sm:$0xf]
      %v427 = vld [vmem:[%s166 + $0x3f0] sm:$0xf]
      %v428 = vld [vmem:[%s166 + $0x3f4] sm:$0xf]
      %v429 = vld [vmem:[%s166 + $0x3f8] sm:$0xf]
      %v430 = vld [vmem:[%s166 + $0x3fc] sm:$0xf]
      %v431 = vld [vmem:[%s166 + $0x400] sm:$0xf]
      %v432 = vld [vmem:[%s166 + $0x404] sm:$0xf]
      %v433 = vld [vmem:[%s166 + $0x408] sm:$0xf]
      %v434 = vld [vmem:[%s166 + $0x40c] sm:$0xf]
      %v435 = vld [vmem:[%s166 + $0x410] sm:$0xf]
      %v436 = vld [vmem:[%s166 + $0x414] sm:$0xf]
      %v437 = vld [vmem:[%s166 + $0x418] sm:$0xf]
      %v438 = vld [vmem:[%s166 + $0x41c] sm:$0xf]
      %v439 = vld [vmem:[%s166 + $0x420] sm:$0xf]
      %v440 = vld [vmem:[%s166 + $0x424] sm:$0xf]
      %v441 = vld [vmem:[%s166 + $0x428] sm:$0xf]
      %v442 = vld [vmem:[%s166 + $0x42c] sm:$0xf]
      %v443 = vld [vmem:[%s166 + $0x430] sm:$0xf]
      %v444 = vld [vmem:[%s166 + $0x434] sm:$0xf]
      %v445 = vld [vmem:[%s166 + $0x438] sm:$0xf]
      %v446 = vld [vmem:[%s166 + $0x43c] sm:$0xf]
      %v447 = vld [vmem:[%s166 + $0x440] sm:$0xf]
      %v448 = vld [vmem:[%s166 + $0x444] sm:$0xf]
      %v449 = vld [vmem:[%s166 + $0x448] sm:$0xf]
      %v450 = vld [vmem:[%s166 + $0x44c] sm:$0xf]
      %v451 = vld [vmem:[%s166 + $0x450] sm:$0xf]
      %v452 = vld [vmem:[%s166 + $0x454] sm:$0xf]
      %v453 = vld [vmem:[%s166 + $0x458] sm:$0xf]
      %v454 = vld [vmem:[%s166 + $0x45c] sm:$0xf]
      %v455 = vld [vmem:[%s166 + $0x460] sm:$0xf]
      %v456 = vld [vmem:[%s166 + $0x464] sm:$0xf]
      %v457 = vld [vmem:[%s166 + $0x468] sm:$0xf]
      %v458 = vld [vmem:[%s166 + $0x46c] sm:$0xf]
      %v459 = vld [vmem:[%s166 + $0x470] sm:$0xf]
      %v460 = vld [vmem:[%s166 + $0x474] sm:$0xf]
      %v461 = vld [vmem:[%s166 + $0x478] sm:$0xf]
      %v462 = vld [vmem:[%s166 + $0x47c] sm:$0xf]
      %v463 = vld [vmem:[%s166 + $0x480] sm:$0xf]
      %v464 = vld [vmem:[%s166 + $0x484] sm:$0xf]
      %v465 = vld [vmem:[%s166 + $0x488] sm:$0xf]
      %v466 = vld [vmem:[%s166 + $0x48c] sm:$0xf]
      %v467 = vld [vmem:[%s166 + $0x490] sm:$0xf]
      %v468 = vld [vmem:[%s166 + $0x494] sm:$0xf]
      %v469 = vld [vmem:[%s166 + $0x498] sm:$0xf]
      %v470 = vld [vmem:[%s166 + $0x49c] sm:$0xf]
      %v471 = vld [vmem:[%s166 + $0x4a0] sm:$0xf]
      %v472 = vld [vmem:[%s166 + $0x4a4] sm:$0xf]
      %v473 = vld [vmem:[%s166 + $0x4a8] sm:$0xf]
      %v474 = vld [vmem:[%s166 + $0x4ac] sm:$0xf]
      %v475 = vld [vmem:[%s166 + $0x4b0] sm:$0xf]
      %v476 = vld [vmem:[%s166 + $0x4b4] sm:$0xf]
      %v477 = vld [vmem:[%s166 + $0x4b8] sm:$0xf]
      %v478 = vld [vmem:[%s166 + $0x4bc] sm:$0xf]
      %v479 = vld [vmem:[%s166 + $0x4c0] sm:$0xf]
      %v480 = vld [vmem:[%s166 + $0x4c4] sm:$0xf]
      %v481 = vld [vmem:[%s166 + $0x4c8] sm:$0xf]
      %v482 = vld [vmem:[%s166 + $0x4cc] sm:$0xf]
      %v483 = vld [vmem:[%s166 + $0x4d0] sm:$0xf]
      %v484 = vld [vmem:[%s166 + $0x4d4] sm:$0xf]
      %v485 = vld [vmem:[%s166 + $0x4d8] sm:$0xf]
      %v486 = vld [vmem:[%s166 + $0x4dc] sm:$0xf]
      %v487 = vld [vmem:[%s166 + $0x4e0] sm:$0xf]
      %v488 = vld [vmem:[%s166 + $0x4e4] sm:$0xf]
      %v489 = vld [vmem:[%s166 + $0x4e8] sm:$0xf]
      %v490 = vld [vmem:[%s166 + $0x4ec] sm:$0xf]
      %v491 = vld [vmem:[%s166 + $0x4f0] sm:$0xf]
      %v492 = vld [vmem:[%s166 + $0x4f4] sm:$0xf]
      %v493 = vld [vmem:[%s166 + $0x4f8] sm:$0xf]
      %v494 = vld [vmem:[%s166 + $0x4fc] sm:$0xf]
      %v495 = vld [vmem:[%s166 + $0x500] sm:$0xf]
      %v496 = vld [vmem:[%s166 + $0x504] sm:$0xf]
      %v497 = vld [vmem:[%s166 + $0x508] sm:$0xf]
      %v498 = vld [vmem:[%s166 + $0x50c] sm:$0xf]
      %v499 = vld [vmem:[%s166 + $0x510] sm:$0xf]
      %v500 = vld [vmem:[%s166 + $0x514] sm:$0xf]
      %v501 = vld [vmem:[%s166 + $0x518] sm:$0xf]
      %v502 = vld [vmem:[%s166 + $0x51c] sm:$0xf]
      %v503 = vld [vmem:[%s166 + $0x520] sm:$0xf]
      %v504 = vld [vmem:[%s166 + $0x524] sm:$0xf]
      %v505 = vld [vmem:[%s166 + $0x528] sm:$0xf]
      %v506 = vld [vmem:[%s166 + $0x52c] sm:$0xf]
      %v507 = vld [vmem:[%s166 + $0x530] sm:$0xf]
      %v508 = vld [vmem:[%s166 + $0x534] sm:$0xf]
      %v509 = vld [vmem:[%s166 + $0x538] sm:$0xf]
      %v510 = vld [vmem:[%s166 + $0x53c] sm:$0xf]
      %v511 = vld [vmem:[%s166 + $0x540] sm:$0xf]
      %v512 = vld [vmem:[%s166 + $0x544] sm:$0xf]
      %v513 = vld [vmem:[%s166 + $0x548] sm:$0xf]
      %v514 = vld [vmem:[%s166 + $0x54c] sm:$0xf]
      %v515 = vld [vmem:[%s166 + $0x550] sm:$0xf]
      %v516 = vld [vmem:[%s166 + $0x554] sm:$0xf]
      %v517 = vld [vmem:[%s166 + $0x558] sm:$0xf]
      %v518 = vld [vmem:[%s166 + $0x55c] sm:$0xf]
      %v519 = vld [vmem:[%s166 + $0x560] sm:$0xf]
      %v520 = vld [vmem:[%s166 + $0x564] sm:$0xf]
      %v521 = vld [vmem:[%s166 + $0x568] sm:$0xf]
      %v522 = vld [vmem:[%s166 + $0x56c] sm:$0xf]
      %v523 = vld [vmem:[%s166 + $0x570] sm:$0xf]
      %v524 = vld [vmem:[%s166 + $0x574] sm:$0xf]
      %v525 = vld [vmem:[%s166 + $0x578] sm:$0xf]
      %v526 = vld [vmem:[%s166 + $0x57c] sm:$0xf]
      %v527 = vld [vmem:[%s166 + $0x580] sm:$0xf]
      %v528 = vld [vmem:[%s166 + $0x584] sm:$0xf]
      %v529 = vld [vmem:[%s166 + $0x588] sm:$0xf]
      %v530 = vld [vmem:[%s166 + $0x58c] sm:$0xf]
      %v531 = vld [vmem:[%s166 + $0x590] sm:$0xf]
      %v532 = vld [vmem:[%s166 + $0x594] sm:$0xf]
      %v533 = vld [vmem:[%s166 + $0x598] sm:$0xf]
      %v534 = vld [vmem:[%s166 + $0x59c] sm:$0xf]
      %v535 = vld [vmem:[%s166 + $0x5a0] sm:$0xf]
      %v536 = vld [vmem:[%s166 + $0x5a4] sm:$0xf]
      %v537 = vld [vmem:[%s166 + $0x5a8] sm:$0xf]
      %v538 = vld [vmem:[%s166 + $0x5ac] sm:$0xf]
      %v539 = vld [vmem:[%s166 + $0x5b0] sm:$0xf]
      %v540 = vld [vmem:[%s166 + $0x5b4] sm:$0xf]
      %v541 = vld [vmem:[%s166 + $0x5b8] sm:$0xf]
      %v542 = vld [vmem:[%s166 + $0x5bc] sm:$0xf]
      %v543 = vld [vmem:[%s166 + $0x5c0] sm:$0xf]
      %v544 = vld [vmem:[%s166 + $0x5c4] sm:$0xf]
      %v545 = vld [vmem:[%s166 + $0x5c8] sm:$0xf]
      %v546 = vld [vmem:[%s166 + $0x5cc] sm:$0xf]
      %v547 = vld [vmem:[%s166 + $0x5d0] sm:$0xf]
      %v548 = vld [vmem:[%s166 + $0x5d4] sm:$0xf]
      %v549 = vld [vmem:[%s166 + $0x5d8] sm:$0xf]
      %v550 = vld [vmem:[%s166 + $0x5dc] sm:$0xf]
      %v551 = vld [vmem:[%s166 + $0x5e0] sm:$0xf]
      %v552 = vld [vmem:[%s166 + $0x5e4] sm:$0xf]
      %v553 = vld [vmem:[%s166 + $0x5e8] sm:$0xf]
      %v554 = vld [vmem:[%s166 + $0x5ec] sm:$0xf]
      %v555 = vld [vmem:[%s166 + $0x5f0] sm:$0xf]
      %v556 = vld [vmem:[%s166 + $0x5f4] sm:$0xf]
      %v557 = vld [vmem:[%s166 + $0x5f8] sm:$0xf]
      %v558 = vld [vmem:[%s166 + $0x5fc] sm:$0xf]
      %v559 = vld [vmem:[%s166 + $0x600] sm:$0xf]
      %v560 = vld [vmem:[%s166 + $0x604] sm:$0xf]
      %v561 = vld [vmem:[%s166 + $0x608] sm:$0xf]
      %v562 = vld [vmem:[%s166 + $0x60c] sm:$0xf]
      %v563 = vld [vmem:[%s166 + $0x610] sm:$0xf]
      %v564 = vld [vmem:[%s166 + $0x614] sm:$0xf]
      %v565 = vld [vmem:[%s166 + $0x618] sm:$0xf]
      %v566 = vld [vmem:[%s166 + $0x61c] sm:$0xf]
      %v567 = vld [vmem:[%s166 + $0x620] sm:$0xf]
      %v568 = vld [vmem:[%s166 + $0x624] sm:$0xf]
      %v569 = vld [vmem:[%s166 + $0x628] sm:$0xf]
      %v570 = vld [vmem:[%s166 + $0x62c] sm:$0xf]
      %v571 = vld [vmem:[%s166 + $0x630] sm:$0xf]
      %v572 = vld [vmem:[%s166 + $0x634] sm:$0xf]
      %v573 = vld [vmem:[%s166 + $0x638] sm:$0xf]
      %v574 = vld [vmem:[%s166 + $0x63c] sm:$0xf]
      %v575 = vld [vmem:[%s166 + $0x640] sm:$0xf]
      %v576 = vld [vmem:[%s166 + $0x644] sm:$0xf]
      %v577 = vld [vmem:[%s166 + $0x648] sm:$0xf]
      %v578 = vld [vmem:[%s166 + $0x64c] sm:$0xf]
      %v579 = vld [vmem:[%s166 + $0x650] sm:$0xf]
      %v580 = vld [vmem:[%s166 + $0x654] sm:$0xf]
      %v581 = vld [vmem:[%s166 + $0x658] sm:$0xf]
      %v582 = vld [vmem:[%s166 + $0x65c] sm:$0xf]
      %v583 = vld [vmem:[%s166 + $0x660] sm:$0xf]
      %v584 = vld [vmem:[%s166 + $0x664] sm:$0xf]
      %v585 = vld [vmem:[%s166 + $0x668] sm:$0xf]
      %v586 = vld [vmem:[%s166 + $0x66c] sm:$0xf]
      %v587 = vld [vmem:[%s166 + $0x670] sm:$0xf]
      %v588 = vld [vmem:[%s166 + $0x674] sm:$0xf]
      %v589 = vld [vmem:[%s166 + $0x678] sm:$0xf]
      %v590 = vld [vmem:[%s166 + $0x67c] sm:$0xf]
      %v591 = vld [vmem:[%s166 + $0x680] sm:$0xf]
      %v592 = vld [vmem:[%s166 + $0x684] sm:$0xf]
      %v593 = vld [vmem:[%s166 + $0x688] sm:$0xf]
      %v594 = vld [vmem:[%s166 + $0x68c] sm:$0xf]
      %v595 = vld [vmem:[%s166 + $0x690] sm:$0xf]
      %v596 = vld [vmem:[%s166 + $0x694] sm:$0xf]
      %v597 = vld [vmem:[%s166 + $0x698] sm:$0xf]
      %v598 = vld [vmem:[%s166 + $0x69c] sm:$0xf]
      %v599 = vld [vmem:[%s166 + $0x6a0] sm:$0xf]
      %v600 = vld [vmem:[%s166 + $0x6a4] sm:$0xf]
      %v601 = vld [vmem:[%s166 + $0x6a8] sm:$0xf]
      %v602 = vld [vmem:[%s166 + $0x6ac] sm:$0xf]
      %v603 = vld [vmem:[%s166 + $0x6b0] sm:$0xf]
      %v604 = vld [vmem:[%s166 + $0x6b4] sm:$0xf]
      %v605 = vld [vmem:[%s166 + $0x6b8] sm:$0xf]
      %v606 = vld [vmem:[%s166 + $0x6bc] sm:$0xf]
      %v607 = vld [vmem:[%s166 + $0x6c0] sm:$0xf]
      %v608 = vld [vmem:[%s166 + $0x6c4] sm:$0xf]
      %v609 = vld [vmem:[%s166 + $0x6c8] sm:$0xf]
      %v610 = vld [vmem:[%s166 + $0x6cc] sm:$0xf]
      %v611 = vld [vmem:[%s166 + $0x6d0] sm:$0xf]
      %v612 = vld [vmem:[%s166 + $0x6d4] sm:$0xf]
      %v613 = vld [vmem:[%s166 + $0x6d8] sm:$0xf]
      %v614 = vld [vmem:[%s166 + $0x6dc] sm:$0xf]
      %v615 = vld [vmem:[%s166 + $0x6e0] sm:$0xf]
      %v616 = vld [vmem:[%s166 + $0x6e4] sm:$0xf]
      %v617 = vld [vmem:[%s166 + $0x6e8] sm:$0xf]
      %v618 = vld [vmem:[%s166 + $0x6ec] sm:$0xf]
      %v619 = vld [vmem:[%s166 + $0x6f0] sm:$0xf]
      %v620 = vld [vmem:[%s166 + $0x6f4] sm:$0xf]
      %v621 = vld [vmem:[%s166 + $0x6f8] sm:$0xf]
      %v622 = vld [vmem:[%s166 + $0x6fc] sm:$0xf]
      %v623 = vld [vmem:[%s166 + $0x700] sm:$0xf]
      %v624 = vld [vmem:[%s166 + $0x704] sm:$0xf]
      %v625 = vld [vmem:[%s1] sm:$0xf]
      %v626 = vld [vmem:[%s1 + $0x4] sm:$0xf]
      %v627 = vld [vmem:[%s1 + $0x8] sm:$0xf]
      %v628 = vld [vmem:[%s1 + $0xc] sm:$0x3]
      %v629 = vld [vmem:[%s2] sm:$0x1]
      %v631 = vlaneseq
      %v632 = vshrl.u32 %v631, 7
      %v633 = vsub.s32 0, %v632
      %v634 = vrot.slane %v629, %v633
      %v1086 = vunpack.c.l.b16 %v175
      %v1087 = vunpack.c.l.b16 %v176
      %v1088 = vunpack.c.l.b16 %v177
      %v1089 = vunpack.c.l.b16 %v178
      %v1090 = vunpack.c.l.b16 %v179
      %v1091 = vunpack.c.l.b16 %v180
      %v1092 = vunpack.c.l.b16 %v181
      %v1093 = vunpack.c.l.b16 %v182
      %v1094 = vunpack.c.l.b16 %v183
      %v1095 = vunpack.c.l.b16 %v184
      %v1096 = vunpack.c.l.b16 %v185
      %v1097 = vunpack.c.l.b16 %v186
      %v1098 = vunpack.c.l.b16 %v187
      %v1099 = vunpack.c.l.b16 %v188
      %v1100 = vunpack.c.l.b16 %v189
      %v1101 = vunpack.c.l.b16 %v190
      %v1102 = vunpack.c.l.b16 %v191
      %v1103 = vunpack.c.l.b16 %v192
      %v1104 = vunpack.c.l.b16 %v193
      %v1105 = vunpack.c.l.b16 %v194
      %v1106 = vunpack.c.l.b16 %v195
      %v1107 = vunpack.c.l.b16 %v196
      %v1108 = vunpack.c.l.b16 %v197
      %v1109 = vunpack.c.l.b16 %v198
      %v1110 = vunpack.c.l.b16 %v199
      %v1111 = vunpack.c.l.b16 %v200
      %v1112 = vunpack.c.l.b16 %v201
      %v1113 = vunpack.c.l.b16 %v202
      %v1114 = vunpack.c.l.b16 %v203
      %v1115 = vunpack.c.l.b16 %v204
      %v1116 = vunpack.c.l.b16 %v205
      %v1117 = vunpack.c.l.b16 %v206
      %v1118 = vunpack.c.l.b16 %v207
      %v1119 = vunpack.c.l.b16 %v208
      %v1120 = vunpack.c.l.b16 %v209
      %v1121 = vunpack.c.l.b16 %v210
      %v1122 = vunpack.c.l.b16 %v211
      %v1123 = vunpack.c.l.b16 %v212
      %v1124 = vunpack.c.l.b16 %v213
      %v1125 = vunpack.c.l.b16 %v214
      %v1126 = vunpack.c.l.b16 %v215
      %v1127 = vunpack.c.l.b16 %v216
      %v1128 = vunpack.c.l.b16 %v217
      %v1129 = vunpack.c.l.b16 %v218
      %v1130 = vunpack.c.l.b16 %v219
      %v1131 = vunpack.c.l.b16 %v220
      %v1132 = vunpack.c.l.b16 %v221
      %v1133 = vunpack.c.l.b16 %v222
      %v1134 = vunpack.c.l.b16 %v223
      %v1135 = vunpack.c.l.b16 %v224
      %v1136 = vunpack.c.l.b16 %v225
      %v1137 = vunpack.c.l.b16 %v226
      %v1138 = vunpack.c.l.b16 %v227
      %v1139 = vunpack.c.l.b16 %v228
      %v1140 = vunpack.c.l.b16 %v229
      %v1141 = vunpack.c.l.b16 %v230
      %v1142 = vunpack.c.l.b16 %v231
      %v1143 = vunpack.c.l.b16 %v232
      %v1144 = vunpack.c.l.b16 %v233
      %v1145 = vunpack.c.l.b16 %v234
      %v1146 = vunpack.c.l.b16 %v235
      %v1147 = vunpack.c.l.b16 %v236
      %v1148 = vunpack.c.l.b16 %v237
      %v1149 = vunpack.c.l.b16 %v238
      %v1150 = vunpack.c.l.b16 %v239
      %v1151 = vunpack.c.l.b16 %v240
      %v1152 = vunpack.c.l.b16 %v241
      %v1153 = vunpack.c.l.b16 %v242
      %v1154 = vunpack.c.l.b16 %v243
      %v1155 = vunpack.c.l.b16 %v244
      %v1156 = vunpack.c.l.b16 %v245
      %v1157 = vunpack.c.l.b16 %v246
      %v1158 = vunpack.c.l.b16 %v247
      %v1159 = vunpack.c.l.b16 %v248
      %v1160 = vunpack.c.l.b16 %v249
      %v1161 = vunpack.c.l.b16 %v250
      %v1162 = vunpack.c.l.b16 %v251
      %v1163 = vunpack.c.l.b16 %v252
      %v1164 = vunpack.c.l.b16 %v253
      %v1165 = vunpack.c.l.b16 %v254
      %v1166 = vunpack.c.l.b16 %v255
      %v1167 = vunpack.c.l.b16 %v256
      %v1168 = vunpack.c.l.b16 %v257
      %v1169 = vunpack.c.l.b16 %v258
      %v1170 = vunpack.c.l.b16 %v259
      %v1171 = vunpack.c.l.b16 %v260
      %v1172 = vunpack.c.l.b16 %v261
      %v1173 = vunpack.c.l.b16 %v262
      %v1174 = vunpack.c.l.b16 %v263
      %v1175 = vunpack.c.l.b16 %v264
      %v1176 = vunpack.c.l.b16 %v265
      %v1177 = vunpack.c.l.b16 %v266
      %v1178 = vunpack.c.l.b16 %v267
      %v1179 = vunpack.c.l.b16 %v268
      %v1180 = vunpack.c.l.b16 %v269
      %v1181 = vunpack.c.l.b16 %v270
      %v1182 = vunpack.c.l.b16 %v271
      %v1183 = vunpack.c.l.b16 %v272
      %v1184 = vunpack.c.l.b16 %v273
      %v1185 = vunpack.c.l.b16 %v274
      %v1186 = vunpack.c.l.b16 %v275
      %v1187 = vunpack.c.l.b16 %v276
      %v1188 = vunpack.c.l.b16 %v277
      %v1189 = vunpack.c.l.b16 %v278
      %v1190 = vunpack.c.l.b16 %v279
      %v1191 = vunpack.c.l.b16 %v280
      %v1192 = vunpack.c.l.b16 %v281
      %v1193 = vunpack.c.l.b16 %v282
      %v1194 = vunpack.c.l.b16 %v283
      %v1195 = vunpack.c.l.b16 %v284
      %v1196 = vunpack.c.l.b16 %v285
      %v1197 = vunpack.c.l.b16 %v286
      %v1198 = vunpack.c.l.b16 %v287
      %v1199 = vunpack.c.l.b16 %v288
      %v1200 = vunpack.c.l.b16 %v289
      %v1201 = vunpack.c.l.b16 %v290
      %v1202 = vunpack.c.l.b16 %v291
      %v1203 = vunpack.c.l.b16 %v292
      %v1204 = vunpack.c.l.b16 %v293
      %v1205 = vunpack.c.l.b16 %v294
      %v1206 = vunpack.c.l.b16 %v295
      %v1207 = vunpack.c.l.b16 %v296
      %v1208 = vunpack.c.l.b16 %v297
      %v1209 = vunpack.c.l.b16 %v298
      %v1210 = vunpack.c.l.b16 %v299
      %v1211 = vunpack.c.l.b16 %v300
      %v1212 = vunpack.c.l.b16 %v301
      %v1213 = vunpack.c.l.b16 %v302
      %v1214 = vunpack.c.l.b16 %v303
      %v1215 = vunpack.c.l.b16 %v304
      %v1216 = vunpack.c.l.b16 %v305
      %v1217 = vunpack.c.l.b16 %v306
      %v1218 = vunpack.c.l.b16 %v307
      %v1219 = vunpack.c.l.b16 %v308
      %v1220 = vunpack.c.l.b16 %v309
      %v1221 = vunpack.c.l.b16 %v310
      %v1222 = vunpack.c.l.b16 %v311
      %v1223 = vunpack.c.l.b16 %v312
      %v1224 = vunpack.c.l.b16 %v313
      %v1225 = vunpack.c.l.b16 %v314
      %v1226 = vunpack.c.l.b16 %v315
      %v1227 = vunpack.c.l.b16 %v316
      %v1228 = vunpack.c.l.b16 %v317
      %v1229 = vunpack.c.l.b16 %v318
      %v1230 = vunpack.c.l.b16 %v319
      %v1231 = vunpack.c.l.b16 %v320
      %v1232 = vunpack.c.l.b16 %v321
      %v1233 = vunpack.c.l.b16 %v322
      %v1234 = vunpack.c.l.b16 %v323
      %v1235 = vunpack.c.l.b16 %v324
      %v1236 = vunpack.c.l.b16 %v325
      %v1237 = vunpack.c.l.b16 %v326
      %v1238 = vunpack.c.l.b16 %v327
      %v1239 = vunpack.c.l.b16 %v328
      %v1240 = vunpack.c.l.b16 %v329
      %v1241 = vunpack.c.l.b16 %v330
      %v1242 = vunpack.c.l.b16 %v331
      %v1243 = vunpack.c.l.b16 %v332
      %v1244 = vunpack.c.l.b16 %v333
      %v1245 = vunpack.c.l.b16 %v334
      %v1246 = vunpack.c.l.b16 %v335
      %v1247 = vunpack.c.l.b16 %v336
      %v1248 = vunpack.c.l.b16 %v337
      %v1249 = vunpack.c.l.b16 %v338
      %v1250 = vunpack.c.l.b16 %v339
      %v1251 = vunpack.c.l.b16 %v340
      %v1252 = vunpack.c.l.b16 %v341
      %v1253 = vunpack.c.l.b16 %v342
      %v1254 = vunpack.c.l.b16 %v343
      %v1255 = vunpack.c.l.b16 %v344
      %v1256 = vunpack.c.l.b16 %v345
      %v1257 = vunpack.c.l.b16 %v346
      %v1258 = vunpack.c.l.b16 %v347
      %v1259 = vunpack.c.l.b16 %v348
      %v1260 = vunpack.c.l.b16 %v349
      %v1261 = vunpack.c.l.b16 %v350
      %v1262 = vunpack.c.l.b16 %v351
      %v1263 = vunpack.c.l.b16 %v352
      %v1264 = vunpack.c.l.b16 %v353
      %v1265 = vunpack.c.l.b16 %v354
      %v1266 = vunpack.c.l.b16 %v355
      %v1267 = vunpack.c.l.b16 %v356
      %v1268 = vunpack.c.l.b16 %v357
      %v1269 = vunpack.c.l.b16 %v358
      %v1270 = vunpack.c.l.b16 %v359
      %v1271 = vunpack.c.l.b16 %v360
      %v1272 = vunpack.c.l.b16 %v361
      %v1273 = vunpack.c.l.b16 %v362
      %v1274 = vunpack.c.l.b16 %v363
      %v1275 = vunpack.c.l.b16 %v364
      %v1276 = vunpack.c.l.b16 %v365
      %v1277 = vunpack.c.l.b16 %v366
      %v1278 = vunpack.c.l.b16 %v367
      %v1279 = vunpack.c.l.b16 %v368
      %v1280 = vunpack.c.l.b16 %v369
      %v1281 = vunpack.c.l.b16 %v370
      %v1282 = vunpack.c.l.b16 %v371
      %v1283 = vunpack.c.l.b16 %v372
      %v1284 = vunpack.c.l.b16 %v373
      %v1285 = vunpack.c.l.b16 %v374
      %v1286 = vunpack.c.l.b16 %v375
      %v1287 = vunpack.c.l.b16 %v376
      %v1288 = vunpack.c.l.b16 %v377
      %v1289 = vunpack.c.l.b16 %v378
      %v1290 = vunpack.c.l.b16 %v379
      %v1291 = vunpack.c.l.b16 %v380
      %v1292 = vunpack.c.l.b16 %v381
      %v1293 = vunpack.c.l.b16 %v382
      %v1294 = vunpack.c.l.b16 %v383
      %v1295 = vunpack.c.l.b16 %v384
      %v1296 = vunpack.c.l.b16 %v385
      %v1297 = vunpack.c.l.b16 %v386
      %v1298 = vunpack.c.l.b16 %v387
      %v1299 = vunpack.c.l.b16 %v388
      %v1300 = vunpack.c.l.b16 %v389
      %v1301 = vunpack.c.l.b16 %v390
      %v1302 = vunpack.c.l.b16 %v391
      %v1303 = vunpack.c.l.b16 %v392
      %v1304 = vunpack.c.l.b16 %v393
      %v1305 = vunpack.c.l.b16 %v394
      %v1306 = vunpack.c.l.b16 %v395
      %v1307 = vunpack.c.l.b16 %v396
      %v1308 = vunpack.c.l.b16 %v397
      %v1309 = vunpack.c.l.b16 %v398
      %v1310 = vunpack.c.l.b16 %v399
      %v1311 = vunpack.c.l.b16 %v400
      %v1312 = vunpack.c.l.b16 %v401
      %v1313 = vunpack.c.l.b16 %v402
      %v1314 = vunpack.c.l.b16 %v403
      %v1315 = vunpack.c.l.b16 %v404
      %v1316 = vunpack.c.l.b16 %v405
      %v1317 = vunpack.c.l.b16 %v406
      %v1318 = vunpack.c.l.b16 %v407
      %v1319 = vunpack.c.l.b16 %v408
      %v1320 = vunpack.c.l.b16 %v409
      %v1321 = vunpack.c.l.b16 %v410
      %v1322 = vunpack.c.l.b16 %v411
      %v1323 = vunpack.c.l.b16 %v412
      %v1324 = vunpack.c.l.b16 %v413
      %v1325 = vunpack.c.l.b16 %v414
      %v1326 = vunpack.c.l.b16 %v415
      %v1327 = vunpack.c.l.b16 %v416
      %v1328 = vunpack.c.l.b16 %v417
      %v1329 = vunpack.c.l.b16 %v418
      %v1330 = vunpack.c.l.b16 %v419
      %v1331 = vunpack.c.l.b16 %v420
      %v1332 = vunpack.c.l.b16 %v421
      %v1333 = vunpack.c.l.b16 %v422
      %v1334 = vunpack.c.l.b16 %v423
      %v1335 = vunpack.c.l.b16 %v424
      %v1336 = vunpack.c.l.b16 %v425
      %v1337 = vunpack.c.l.b16 %v426
      %v1338 = vunpack.c.l.b16 %v427
      %v1339 = vunpack.c.l.b16 %v428
      %v1340 = vunpack.c.l.b16 %v429
      %v1341 = vunpack.c.l.b16 %v430
      %v1342 = vunpack.c.l.b16 %v431
      %v1343 = vunpack.c.l.b16 %v432
      %v1344 = vunpack.c.l.b16 %v433
      %v1345 = vunpack.c.l.b16 %v434
      %v1346 = vunpack.c.l.b16 %v435
      %v1347 = vunpack.c.l.b16 %v436
      %v1348 = vunpack.c.l.b16 %v437
      %v1349 = vunpack.c.l.b16 %v438
      %v1350 = vunpack.c.l.b16 %v439
      %v1351 = vunpack.c.l.b16 %v440
      %v1352 = vunpack.c.l.b16 %v441
      %v1353 = vunpack.c.l.b16 %v442
      %v1354 = vunpack.c.l.b16 %v443
      %v1355 = vunpack.c.l.b16 %v444
      %v1356 = vunpack.c.l.b16 %v445
      %v1357 = vunpack.c.l.b16 %v446
      %v1358 = vunpack.c.l.b16 %v447
      %v1359 = vunpack.c.l.b16 %v448
      %v1360 = vunpack.c.l.b16 %v449
      %v1361 = vunpack.c.l.b16 %v450
      %v1362 = vunpack.c.l.b16 %v451
      %v1363 = vunpack.c.l.b16 %v452
      %v1364 = vunpack.c.l.b16 %v453
      %v1365 = vunpack.c.l.b16 %v454
      %v1366 = vunpack.c.l.b16 %v455
      %v1367 = vunpack.c.l.b16 %v456
      %v1368 = vunpack.c.l.b16 %v457
      %v1369 = vunpack.c.l.b16 %v458
      %v1370 = vunpack.c.l.b16 %v459
      %v1371 = vunpack.c.l.b16 %v460
      %v1372 = vunpack.c.l.b16 %v461
      %v1373 = vunpack.c.l.b16 %v462
      %v1374 = vunpack.c.l.b16 %v463
      %v1375 = vunpack.c.l.b16 %v464
      %v1376 = vunpack.c.l.b16 %v465
      %v1377 = vunpack.c.l.b16 %v466
      %v1378 = vunpack.c.l.b16 %v467
      %v1379 = vunpack.c.l.b16 %v468
      %v1380 = vunpack.c.l.b16 %v469
      %v1381 = vunpack.c.l.b16 %v470
      %v1382 = vunpack.c.l.b16 %v471
      %v1383 = vunpack.c.l.b16 %v472
      %v1384 = vunpack.c.l.b16 %v473
      %v1385 = vunpack.c.l.b16 %v474
      %v1386 = vunpack.c.l.b16 %v475
      %v1387 = vunpack.c.l.b16 %v476
      %v1388 = vunpack.c.l.b16 %v477
      %v1389 = vunpack.c.l.b16 %v478
      %v1390 = vunpack.c.l.b16 %v479
      %v1391 = vunpack.c.l.b16 %v480
      %v1392 = vunpack.c.l.b16 %v481
      %v1393 = vunpack.c.l.b16 %v482
      %v1394 = vunpack.c.l.b16 %v483
      %v1395 = vunpack.c.l.b16 %v484
      %v1396 = vunpack.c.l.b16 %v485
      %v1397 = vunpack.c.l.b16 %v486
      %v1398 = vunpack.c.l.b16 %v487
      %v1399 = vunpack.c.l.b16 %v488
      %v1400 = vunpack.c.l.b16 %v489
      %v1401 = vunpack.c.l.b16 %v490
      %v1402 = vunpack.c.l.b16 %v491
      %v1403 = vunpack.c.l.b16 %v492
      %v1404 = vunpack.c.l.b16 %v493
      %v1405 = vunpack.c.l.b16 %v494
      %v1406 = vunpack.c.l.b16 %v495
      %v1407 = vunpack.c.l.b16 %v496
      %v1408 = vunpack.c.l.b16 %v497
      %v1409 = vunpack.c.l.b16 %v498
      %v1410 = vunpack.c.l.b16 %v499
      %v1411 = vunpack.c.l.b16 %v500
      %v1412 = vunpack.c.l.b16 %v501
      %v1413 = vunpack.c.l.b16 %v502
      %v1414 = vunpack.c.l.b16 %v503
      %v1415 = vunpack.c.l.b16 %v504
      %v1416 = vunpack.c.l.b16 %v505
      %v1417 = vunpack.c.l.b16 %v506
      %v1418 = vunpack.c.l.b16 %v507
      %v1419 = vunpack.c.l.b16 %v508
      %v1420 = vunpack.c.l.b16 %v509
      %v1421 = vunpack.c.l.b16 %v510
      %v1422 = vunpack.c.l.b16 %v511
      %v1423 = vunpack.c.l.b16 %v512
      %v1424 = vunpack.c.l.b16 %v513
      %v1425 = vunpack.c.l.b16 %v514
      %v1426 = vunpack.c.l.b16 %v515
      %v1427 = vunpack.c.l.b16 %v516
      %v1428 = vunpack.c.l.b16 %v517
      %v1429 = vunpack.c.l.b16 %v518
      %v1430 = vunpack.c.l.b16 %v519
      %v1431 = vunpack.c.l.b16 %v520
      %v1432 = vunpack.c.l.b16 %v521
      %v1433 = vunpack.c.l.b16 %v522
      %v1434 = vunpack.c.l.b16 %v523
      %v1435 = vunpack.c.l.b16 %v524
      %v1436 = vunpack.c.l.b16 %v525
      %v1437 = vunpack.c.l.b16 %v526
      %v1438 = vunpack.c.l.b16 %v527
      %v1439 = vunpack.c.l.b16 %v528
      %v1440 = vunpack.c.l.b16 %v529
      %v1441 = vunpack.c.l.b16 %v530
      %v1442 = vunpack.c.l.b16 %v531
      %v1443 = vunpack.c.l.b16 %v532
      %v1444 = vunpack.c.l.b16 %v533
      %v1445 = vunpack.c.l.b16 %v534
      %v1446 = vunpack.c.l.b16 %v535
      %v1447 = vunpack.c.l.b16 %v536
      %v1448 = vunpack.c.l.b16 %v537
      %v1449 = vunpack.c.l.b16 %v538
      %v1450 = vunpack.c.l.b16 %v539
      %v1451 = vunpack.c.l.b16 %v540
      %v1452 = vunpack.c.l.b16 %v541
      %v1453 = vunpack.c.l.b16 %v542
      %v1454 = vunpack.c.l.b16 %v543
      %v1455 = vunpack.c.l.b16 %v544
      %v1456 = vunpack.c.l.b16 %v545
      %v1457 = vunpack.c.l.b16 %v546
      %v1458 = vunpack.c.l.b16 %v547
      %v1459 = vunpack.c.l.b16 %v548
      %v1460 = vunpack.c.l.b16 %v549
      %v1461 = vunpack.c.l.b16 %v550
      %v1462 = vunpack.c.l.b16 %v551
      %v1463 = vunpack.c.l.b16 %v552
      %v1464 = vunpack.c.l.b16 %v553
      %v1465 = vunpack.c.l.b16 %v554
      %v1466 = vunpack.c.l.b16 %v555
      %v1467 = vunpack.c.l.b16 %v556
      %v1468 = vunpack.c.l.b16 %v557
      %v1469 = vunpack.c.l.b16 %v558
      %v1470 = vunpack.c.l.b16 %v559
      %v1471 = vunpack.c.l.b16 %v560
      %v1472 = vunpack.c.l.b16 %v561
      %v1473 = vunpack.c.l.b16 %v562
      %v1474 = vunpack.c.l.b16 %v563
      %v1475 = vunpack.c.l.b16 %v564
      %v1476 = vunpack.c.l.b16 %v565
      %v1477 = vunpack.c.l.b16 %v566
      %v1478 = vunpack.c.l.b16 %v567
      %v1479 = vunpack.c.l.b16 %v568
      %v1480 = vunpack.c.l.b16 %v569
      %v1481 = vunpack.c.l.b16 %v570
      %v1482 = vunpack.c.l.b16 %v571
      %v1483 = vunpack.c.l.b16 %v572
      %v1484 = vunpack.c.l.b16 %v573
      %v1485 = vunpack.c.l.b16 %v574
      %v1486 = vunpack.c.l.b16 %v575
      %v1487 = vunpack.c.l.b16 %v576
      %v1488 = vunpack.c.l.b16 %v577
      %v1489 = vunpack.c.l.b16 %v578
      %v1490 = vunpack.c.l.b16 %v579
      %v1491 = vunpack.c.l.b16 %v580
      %v1492 = vunpack.c.l.b16 %v581
      %v1493 = vunpack.c.l.b16 %v582
      %v1494 = vunpack.c.l.b16 %v583
      %v1495 = vunpack.c.l.b16 %v584
      %v1496 = vunpack.c.l.b16 %v585
      %v1497 = vunpack.c.l.b16 %v586
      %v1498 = vunpack.c.l.b16 %v587
      %v1499 = vunpack.c.l.b16 %v588
      %v1500 = vunpack.c.l.b16 %v589
      %v1501 = vunpack.c.l.b16 %v590
      %v1502 = vunpack.c.l.b16 %v591
      %v1503 = vunpack.c.l.b16 %v592
      %v1504 = vunpack.c.l.b16 %v593
      %v1505 = vunpack.c.l.b16 %v594
      %v1506 = vunpack.c.l.b16 %v595
      %v1507 = vunpack.c.l.b16 %v596
      %v1508 = vunpack.c.l.b16 %v597
      %v1509 = vunpack.c.l.b16 %v598
      %v1510 = vunpack.c.l.b16 %v599
      %v1511 = vunpack.c.l.b16 %v600
      %v1512 = vunpack.c.l.b16 %v601
      %v1513 = vunpack.c.l.b16 %v602
      %v1514 = vunpack.c.l.b16 %v603
      %v1515 = vunpack.c.l.b16 %v604
      %v1516 = vunpack.c.l.b16 %v605
      %v1517 = vunpack.c.l.b16 %v606
      %v1518 = vunpack.c.l.b16 %v607
      %v1519 = vunpack.c.l.b16 %v608
      %v1520 = vunpack.c.l.b16 %v609
      %v1521 = vunpack.c.l.b16 %v610
      %v1522 = vunpack.c.l.b16 %v611
      %v1523 = vunpack.c.l.b16 %v612
      %v1524 = vunpack.c.l.b16 %v613
      %v1525 = vunpack.c.l.b16 %v614
      %v1526 = vunpack.c.l.b16 %v615
      %v1527 = vunpack.c.l.b16 %v616
      %v1528 = vunpack.c.l.b16 %v617
      %v1529 = vunpack.c.l.b16 %v618
      %v1530 = vunpack.c.l.b16 %v619
      %v1531 = vunpack.c.l.b16 %v620
      %v1532 = vunpack.c.l.b16 %v621
      %v1533 = vunpack.c.l.b16 %v622
      %v1534 = vunpack.c.l.b16 %v623
      %v1535 = vunpack.c.l.b16 %v624
      %v1536 = vpack.c.b16 %v1087, %v1086
      %v1537 = vpack.c.b16 %v1089, %v1088
      %v1538 = vpack.c.b16 %v1091, %v1090
      %v1539 = vpack.c.b16 %v1093, %v1092
      %v1540 = vpack.c.b16 %v1095, %v1094
      %v1541 = vpack.c.b16 %v1097, %v1096
      %v1542 = vpack.c.b16 %v1099, %v1098
      %v1543 = vpack.c.b16 %v1101, %v1100
      %v1544 = vpack.c.b16 %v1103, %v1102
      %v1545 = vpack.c.b16 %v1105, %v1104
      %v1546 = vpack.c.b16 %v1107, %v1106
      %v1547 = vpack.c.b16 %v1109, %v1108
      %v1548 = vpack.c.b16 %v1111, %v1110
      %v1549 = vpack.c.b16 %v1113, %v1112
      %v1550 = vpack.c.b16 %v1115, %v1114
      %v1551 = vpack.c.b16 %v1117, %v1116
      %v1552 = vpack.c.b16 %v1119, %v1118
      %v1553 = vpack.c.b16 %v1121, %v1120
      %v1554 = vpack.c.b16 %v1123, %v1122
      %v1555 = vpack.c.b16 %v1125, %v1124
      %v1556 = vpack.c.b16 %v1127, %v1126
      %v1557 = vpack.c.b16 %v1129, %v1128
      %v1558 = vpack.c.b16 %v1131, %v1130
      %v1559 = vpack.c.b16 %v1133, %v1132
      %v1560 = vpack.c.b16 %v1135, %v1134
      %v1561 = vpack.c.b16 %v1137, %v1136
      %v1562 = vpack.c.b16 %v1139, %v1138
      %v1563 = vpack.c.b16 %v1141, %v1140
      %v1564 = vpack.c.b16 %v1143, %v1142
      %v1565 = vpack.c.b16 %v1145, %v1144
      %v1566 = vpack.c.b16 %v1147, %v1146
      %v1567 = vpack.c.b16 %v1149, %v1148
      %v1568 = vpack.c.b16 %v1151, %v1150
      %v1569 = vpack.c.b16 %v1153, %v1152
      %v1570 = vpack.c.b16 %v1155, %v1154
      %v1571 = vpack.c.b16 %v1157, %v1156
      %v1572 = vpack.c.b16 %v1159, %v1158
      %v1573 = vpack.c.b16 %v1161, %v1160
      %v1574 = vpack.c.b16 %v1163, %v1162
      %v1575 = vpack.c.b16 %v1165, %v1164
      %v1576 = vpack.c.b16 %v1167, %v1166
      %v1577 = vpack.c.b16 %v1169, %v1168
      %v1578 = vpack.c.b16 %v1171, %v1170
      %v1579 = vpack.c.b16 %v1173, %v1172
      %v1580 = vpack.c.b16 %v1175, %v1174
      %v1581 = vpack.c.b16 %v1177, %v1176
      %v1582 = vpack.c.b16 %v1179, %v1178
      %v1583 = vpack.c.b16 %v1181, %v1180
      %v1584 = vpack.c.b16 %v1183, %v1182
      %v1585 = vpack.c.b16 %v1185, %v1184
      %v1586 = vpack.c.b16 %v1187, %v1186
      %v1587 = vpack.c.b16 %v1189, %v1188
      %v1588 = vpack.c.b16 %v1191, %v1190
      %v1589 = vpack.c.b16 %v1193, %v1192
      %v1590 = vpack.c.b16 %v1195, %v1194
      %v1591 = vpack.c.b16 %v1197, %v1196
      %v1592 = vpack.c.b16 %v1199, %v1198
      %v1593 = vpack.c.b16 %v1201, %v1200
      %v1594 = vpack.c.b16 %v1203, %v1202
      %v1595 = vpack.c.b16 %v1205, %v1204
      %v1596 = vpack.c.b16 %v1207, %v1206
      %v1597 = vpack.c.b16 %v1209, %v1208
      %v1598 = vpack.c.b16 %v1211, %v1210
      %v1599 = vpack.c.b16 %v1213, %v1212
      %v1600 = vpack.c.b16 %v1215, %v1214
      %v1601 = vpack.c.b16 %v1217, %v1216
      %v1602 = vpack.c.b16 %v1219, %v1218
      %v1603 = vpack.c.b16 %v1221, %v1220
      %v1604 = vpack.c.b16 %v1223, %v1222
      %v1605 = vpack.c.b16 %v1225, %v1224
      %v1606 = vpack.c.b16 %v1227, %v1226
      %v1607 = vpack.c.b16 %v1229, %v1228
      %v1608 = vpack.c.b16 %v1231, %v1230
      %v1609 = vpack.c.b16 %v1233, %v1232
      %v1610 = vpack.c.b16 %v1235, %v1234
      %v1611 = vpack.c.b16 %v1237, %v1236
      %v1612 = vpack.c.b16 %v1239, %v1238
      %v1613 = vpack.c.b16 %v1241, %v1240
      %v1614 = vpack.c.b16 %v1243, %v1242
      %v1615 = vpack.c.b16 %v1245, %v1244
      %v1616 = vpack.c.b16 %v1247, %v1246
      %v1617 = vpack.c.b16 %v1249, %v1248
      %v1618 = vpack.c.b16 %v1251, %v1250
      %v1619 = vpack.c.b16 %v1253, %v1252
      %v1620 = vpack.c.b16 %v1255, %v1254
      %v1621 = vpack.c.b16 %v1257, %v1256
      %v1622 = vpack.c.b16 %v1259, %v1258
      %v1623 = vpack.c.b16 %v1261, %v1260
      %v1624 = vpack.c.b16 %v1263, %v1262
      %v1625 = vpack.c.b16 %v1265, %v1264
      %v1626 = vpack.c.b16 %v1267, %v1266
      %v1627 = vpack.c.b16 %v1269, %v1268
      %v1628 = vpack.c.b16 %v1271, %v1270
      %v1629 = vpack.c.b16 %v1273, %v1272
      %v1630 = vpack.c.b16 %v1275, %v1274
      %v1631 = vpack.c.b16 %v1277, %v1276
      %v1632 = vpack.c.b16 %v1279, %v1278
      %v1633 = vpack.c.b16 %v1281, %v1280
      %v1634 = vpack.c.b16 %v1283, %v1282
      %v1635 = vpack.c.b16 %v1285, %v1284
      %v1636 = vpack.c.b16 %v1287, %v1286
      %v1637 = vpack.c.b16 %v1289, %v1288
      %v1638 = vpack.c.b16 %v1291, %v1290
      %v1639 = vpack.c.b16 %v1293, %v1292
      %v1640 = vpack.c.b16 %v1295, %v1294
      %v1641 = vpack.c.b16 %v1297, %v1296
      %v1642 = vpack.c.b16 %v1299, %v1298
      %v1643 = vpack.c.b16 %v1301, %v1300
      %v1644 = vpack.c.b16 %v1303, %v1302
      %v1645 = vpack.c.b16 %v1305, %v1304
      %v1646 = vpack.c.b16 %v1307, %v1306
      %v1647 = vpack.c.b16 %v1309, %v1308
      %v1648 = vpack.c.b16 %v1311, %v1310
      %v1649 = vpack.c.b16 %v1313, %v1312
      %v1650 = vpack.c.b16 %v1315, %v1314
      %v1651 = vpack.c.b16 %v1317, %v1316
      %v1652 = vpack.c.b16 %v1319, %v1318
      %v1653 = vpack.c.b16 %v1321, %v1320
      %v1654 = vpack.c.b16 %v1323, %v1322
      %v1655 = vpack.c.b16 %v1325, %v1324
      %v1656 = vpack.c.b16 %v1327, %v1326
      %v1657 = vpack.c.b16 %v1329, %v1328
      %v1658 = vpack.c.b16 %v1331, %v1330
      %v1659 = vpack.c.b16 %v1333, %v1332
      %v1660 = vpack.c.b16 %v1335, %v1334
      %v1661 = vpack.c.b16 %v1337, %v1336
      %v1662 = vpack.c.b16 %v1339, %v1338
      %v1663 = vpack.c.b16 %v1341, %v1340
      %v1664 = vpack.c.b16 %v1343, %v1342
      %v1665 = vpack.c.b16 %v1345, %v1344
      %v1666 = vpack.c.b16 %v1347, %v1346
      %v1667 = vpack.c.b16 %v1349, %v1348
      %v1668 = vpack.c.b16 %v1351, %v1350
      %v1669 = vpack.c.b16 %v1353, %v1352
      %v1670 = vpack.c.b16 %v1355, %v1354
      %v1671 = vpack.c.b16 %v1357, %v1356
      %v1672 = vpack.c.b16 %v1359, %v1358
      %v1673 = vpack.c.b16 %v1361, %v1360
      %v1674 = vpack.c.b16 %v1363, %v1362
      %v1675 = vpack.c.b16 %v1365, %v1364
      %v1676 = vpack.c.b16 %v1367, %v1366
      %v1677 = vpack.c.b16 %v1369, %v1368
      %v1678 = vpack.c.b16 %v1371, %v1370
      %v1679 = vpack.c.b16 %v1373, %v1372
      %v1680 = vpack.c.b16 %v1375, %v1374
      %v1681 = vpack.c.b16 %v1377, %v1376
      %v1682 = vpack.c.b16 %v1379, %v1378
      %v1683 = vpack.c.b16 %v1381, %v1380
      %v1684 = vpack.c.b16 %v1383, %v1382
      %v1685 = vpack.c.b16 %v1385, %v1384
      %v1686 = vpack.c.b16 %v1387, %v1386
      %v1687 = vpack.c.b16 %v1389, %v1388
      %v1688 = vpack.c.b16 %v1391, %v1390
      %v1689 = vpack.c.b16 %v1393, %v1392
      %v1690 = vpack.c.b16 %v1395, %v1394
      %v1691 = vpack.c.b16 %v1397, %v1396
      %v1692 = vpack.c.b16 %v1399, %v1398
      %v1693 = vpack.c.b16 %v1401, %v1400
      %v1694 = vpack.c.b16 %v1403, %v1402
      %v1695 = vpack.c.b16 %v1405, %v1404
      %v1696 = vpack.c.b16 %v1407, %v1406
      %v1697 = vpack.c.b16 %v1409, %v1408
      %v1698 = vpack.c.b16 %v1411, %v1410
      %v1699 = vpack.c.b16 %v1413, %v1412
      %v1700 = vpack.c.b16 %v1415, %v1414
      %v1701 = vpack.c.b16 %v1417, %v1416
      %v1702 = vpack.c.b16 %v1419, %v1418
      %v1703 = vpack.c.b16 %v1421, %v1420
      %v1704 = vpack.c.b16 %v1423, %v1422
      %v1705 = vpack.c.b16 %v1425, %v1424
      %v1706 = vpack.c.b16 %v1427, %v1426
      %v1707 = vpack.c.b16 %v1429, %v1428
      %v1708 = vpack.c.b16 %v1431, %v1430
      %v1709 = vpack.c.b16 %v1433, %v1432
      %v1710 = vpack.c.b16 %v1435, %v1434
      %v1711 = vpack.c.b16 %v1437, %v1436
      %v1712 = vpack.c.b16 %v1439, %v1438
      %v1713 = vpack.c.b16 %v1441, %v1440
      %v1714 = vpack.c.b16 %v1443, %v1442
      %v1715 = vpack.c.b16 %v1445, %v1444
      %v1716 = vpack.c.b16 %v1447, %v1446
      %v1717 = vpack.c.b16 %v1449, %v1448
      %v1718 = vpack.c.b16 %v1451, %v1450
      %v1719 = vpack.c.b16 %v1453, %v1452
      %v1720 = vpack.c.b16 %v1455, %v1454
      %v1721 = vpack.c.b16 %v1457, %v1456
      %v1722 = vpack.c.b16 %v1459, %v1458
      %v1723 = vpack.c.b16 %v1461, %v1460
      %v1724 = vpack.c.b16 %v1463, %v1462
      %v1725 = vpack.c.b16 %v1465, %v1464
      %v1726 = vpack.c.b16 %v1467, %v1466
      %v1727 = vpack.c.b16 %v1469, %v1468
      %v1728 = vpack.c.b16 %v1471, %v1470
      %v1729 = vpack.c.b16 %v1473, %v1472
      %v1730 = vpack.c.b16 %v1475, %v1474
      %v1731 = vpack.c.b16 %v1477, %v1476
      %v1732 = vpack.c.b16 %v1479, %v1478
      %v1733 = vpack.c.b16 %v1481, %v1480
      %v1734 = vpack.c.b16 %v1483, %v1482
      %v1735 = vpack.c.b16 %v1485, %v1484
      %v1736 = vpack.c.b16 %v1487, %v1486
      %v1737 = vpack.c.b16 %v1489, %v1488
      %v1738 = vpack.c.b16 %v1491, %v1490
      %v1739 = vpack.c.b16 %v1493, %v1492
      %v1740 = vpack.c.b16 %v1495, %v1494
      %v1741 = vpack.c.b16 %v1497, %v1496
      %v1742 = vpack.c.b16 %v1499, %v1498
      %v1743 = vpack.c.b16 %v1501, %v1500
      %v1744 = vpack.c.b16 %v1503, %v1502
      %v1745 = vpack.c.b16 %v1505, %v1504
      %v1746 = vpack.c.b16 %v1507, %v1506
      %v1747 = vpack.c.b16 %v1509, %v1508
      %v1748 = vpack.c.b16 %v1511, %v1510
      %v1749 = vpack.c.b16 %v1513, %v1512
      %v1750 = vpack.c.b16 %v1515, %v1514
      %v1751 = vpack.c.b16 %v1517, %v1516
      %v1752 = vpack.c.b16 %v1519, %v1518
      %v1753 = vpack.c.b16 %v1521, %v1520
      %v1754 = vpack.c.b16 %v1523, %v1522
      %v1755 = vpack.c.b16 %v1525, %v1524
      %v1756 = vpack.c.b16 %v1527, %v1526
      %v1757 = vpack.c.b16 %v1529, %v1528
      %v1758 = vpack.c.b16 %v1531, %v1530
      %v1759 = vpack.c.b16 %v1533, %v1532
      %v1760 = vpack.c.b16 %v1535, %v1534
      %v1765 = vunpack.c.l.b16 %v625
      %v1766 = vunpack.c.l.b16 %v626
      %v1767 = vunpack.c.l.b16 %v627
      %v1768 = vunpack.c.l.b16 %v628
      %v1769 = vpack.c.b16 %v1766, %v1765
      %v1770 = vpack.c.b16 %v1768, %v1767
      %vm1772 = vcmask 220160
      %v1774 = vsel %vm1772, %v1536, 0
      %v1777 = vsel %vm1772, %v1537, 0
      %v1780 = vsel %vm1772, %v1538, 0
      %v1783 = vsel %vm1772, %v1539, 0
      %v1786 = vsel %vm1772, %v1540, 0
      %v1789 = vsel %vm1772, %v1541, 0
      %v1792 = vsel %vm1772, %v1542, 0
      %v1795 = vsel %vm1772, %v1543, 0
      %v1798 = vsel %vm1772, %v1544, 0
      %v1801 = vsel %vm1772, %v1545, 0
      %v1804 = vsel %vm1772, %v1546, 0
      %v1807 = vsel %vm1772, %v1547, 0
      %v1810 = vsel %vm1772, %v1548, 0
      %v1813 = vsel %vm1772, %v1549, 0
      %v1816 = vsel %vm1772, %v1550, 0
      %v1819 = vsel %vm1772, %v1551, 0
      %v1822 = vsel %vm1772, %v1552, 0
      %v1825 = vsel %vm1772, %v1553, 0
      %v1828 = vsel %vm1772, %v1554, 0
      %v1831 = vsel %vm1772, %v1555, 0
      %v1834 = vsel %vm1772, %v1556, 0
      %v1837 = vsel %vm1772, %v1557, 0
      %v1840 = vsel %vm1772, %v1558, 0
      %v1843 = vsel %vm1772, %v1559, 0
      %v1846 = vsel %vm1772, %v1560, 0
      %v1849 = vsel %vm1772, %v1561, 0
      %v1852 = vsel %vm1772, %v1562, 0
      %v1855 = vsel %vm1772, %v1563, 0
      %v1858 = vsel %vm1772, %v1564, 0
      %v1861 = vsel %vm1772, %v1565, 0
      %v1864 = vsel %vm1772, %v1566, 0
      %v1867 = vsel %vm1772, %v1567, 0
      %v1870 = vsel %vm1772, %v1568, 0
      %v1873 = vsel %vm1772, %v1569, 0
      %v1876 = vsel %vm1772, %v1570, 0
      %v1879 = vsel %vm1772, %v1571, 0
      %v1882 = vsel %vm1772, %v1572, 0
      %v1885 = vsel %vm1772, %v1573, 0
      %v1888 = vsel %vm1772, %v1574, 0
      %v1891 = vsel %vm1772, %v1575, 0
      %v1894 = vsel %vm1772, %v1576, 0
      %v1897 = vsel %vm1772, %v1577, 0
      %v1900 = vsel %vm1772, %v1578, 0
      %v1903 = vsel %vm1772, %v1579, 0
      %v1906 = vsel %vm1772, %v1580, 0
      %v1909 = vsel %vm1772, %v1581, 0
      %v1912 = vsel %vm1772, %v1582, 0
      %v1915 = vsel %vm1772, %v1583, 0
      %v1918 = vsel %vm1772, %v1584, 0
      %v1921 = vsel %vm1772, %v1585, 0
      %v1924 = vsel %vm1772, %v1586, 0
      %v1927 = vsel %vm1772, %v1587, 0
      %v1930 = vsel %vm1772, %v1588, 0
      %v1933 = vsel %vm1772, %v1589, 0
      %v1936 = vsel %vm1772, %v1590, 0
      %v1939 = vsel %vm1772, %v1591, 0
      %v1942 = vsel %vm1772, %v1592, 0
      %v1945 = vsel %vm1772, %v1593, 0
      %v1948 = vsel %vm1772, %v1594, 0
      %v1951 = vsel %vm1772, %v1595, 0
      %v1954 = vsel %vm1772, %v1596, 0
      %v1957 = vsel %vm1772, %v1597, 0
      %v1960 = vsel %vm1772, %v1598, 0
      %v1963 = vsel %vm1772, %v1599, 0
      %v1966 = vsel %vm1772, %v1600, 0
      %v1969 = vsel %vm1772, %v1601, 0
      %v1972 = vsel %vm1772, %v1602, 0
      %v1975 = vsel %vm1772, %v1603, 0
      %v1978 = vsel %vm1772, %v1604, 0
      %v1981 = vsel %vm1772, %v1605, 0
      %v1984 = vsel %vm1772, %v1606, 0
      %v1987 = vsel %vm1772, %v1607, 0
      %v1990 = vsel %vm1772, %v1608, 0
      %v1993 = vsel %vm1772, %v1609, 0
      %v1996 = vsel %vm1772, %v1610, 0
      %v1999 = vsel %vm1772, %v1611, 0
      %v2002 = vsel %vm1772, %v1612, 0
      %v2005 = vsel %vm1772, %v1613, 0
      %v2008 = vsel %vm1772, %v1614, 0
      %v2011 = vsel %vm1772, %v1615, 0
      %v2014 = vsel %vm1772, %v1616, 0
      %v2017 = vsel %vm1772, %v1617, 0
      %v2020 = vsel %vm1772, %v1618, 0
      %v2023 = vsel %vm1772, %v1619, 0
      %v2026 = vsel %vm1772, %v1620, 0
      %v2029 = vsel %vm1772, %v1621, 0
      %v2032 = vsel %vm1772, %v1622, 0
      %v2035 = vsel %vm1772, %v1623, 0
      %v2038 = vsel %vm1772, %v1624, 0
      %v2041 = vsel %vm1772, %v1625, 0
      %v2044 = vsel %vm1772, %v1626, 0
      %v2047 = vsel %vm1772, %v1627, 0
      %v2050 = vsel %vm1772, %v1628, 0
      %v2053 = vsel %vm1772, %v1629, 0
      %v2056 = vsel %vm1772, %v1630, 0
      %v2059 = vsel %vm1772, %v1631, 0
      %v2062 = vsel %vm1772, %v1632, 0
      %v2065 = vsel %vm1772, %v1633, 0
      %v2068 = vsel %vm1772, %v1634, 0
      %v2071 = vsel %vm1772, %v1635, 0
      %v2074 = vsel %vm1772, %v1636, 0
      %v2077 = vsel %vm1772, %v1637, 0
      %v2080 = vsel %vm1772, %v1638, 0
      %v2083 = vsel %vm1772, %v1639, 0
      %v2086 = vsel %vm1772, %v1640, 0
      %v2089 = vsel %vm1772, %v1641, 0
      %v2092 = vsel %vm1772, %v1642, 0
      %v2095 = vsel %vm1772, %v1643, 0
      %v2098 = vsel %vm1772, %v1644, 0
      %v2101 = vsel %vm1772, %v1645, 0
      %v2104 = vsel %vm1772, %v1646, 0
      %v2107 = vsel %vm1772, %v1647, 0
      %v2110 = vsel %vm1772, %v1648, 0
      %v2113 = vsel %vm1772, %v1649, 0
      %v2116 = vsel %vm1772, %v1650, 0
      %v2119 = vsel %vm1772, %v1651, 0
      %v2122 = vsel %vm1772, %v1652, 0
      %v2125 = vsel %vm1772, %v1653, 0
      %v2128 = vsel %vm1772, %v1654, 0
      %v2131 = vsel %vm1772, %v1655, 0
      %v2134 = vsel %vm1772, %v1656, 0
      %v2137 = vsel %vm1772, %v1657, 0
      %v2140 = vsel %vm1772, %v1658, 0
      %v2143 = vsel %vm1772, %v1659, 0
      %v2146 = vsel %vm1772, %v1660, 0
      %v2149 = vsel %vm1772, %v1661, 0
      %v2152 = vsel %vm1772, %v1662, 0
      %v2155 = vsel %vm1772, %v1663, 0
      %v2158 = vsel %vm1772, %v1664, 0
      %v2161 = vsel %vm1772, %v1665, 0
      %v2164 = vsel %vm1772, %v1666, 0
      %v2167 = vsel %vm1772, %v1667, 0
      %v2170 = vsel %vm1772, %v1668, 0
      %v2173 = vsel %vm1772, %v1669, 0
      %v2176 = vsel %vm1772, %v1670, 0
      %v2179 = vsel %vm1772, %v1671, 0
      %v2182 = vsel %vm1772, %v1672, 0
      %v2185 = vsel %vm1772, %v1673, 0
      %v2188 = vsel %vm1772, %v1674, 0
      %v2191 = vsel %vm1772, %v1675, 0
      %v2194 = vsel %vm1772, %v1676, 0
      %v2197 = vsel %vm1772, %v1677, 0
      %v2200 = vsel %vm1772, %v1678, 0
      %v2203 = vsel %vm1772, %v1679, 0
      %v2206 = vsel %vm1772, %v1680, 0
      %v2209 = vsel %vm1772, %v1681, 0
      %v2212 = vsel %vm1772, %v1682, 0
      %v2215 = vsel %vm1772, %v1683, 0
      %v2218 = vsel %vm1772, %v1684, 0
      %v2221 = vsel %vm1772, %v1685, 0
      %v2224 = vsel %vm1772, %v1686, 0
      %v2227 = vsel %vm1772, %v1687, 0
      %v2230 = vsel %vm1772, %v1688, 0
      %v2233 = vsel %vm1772, %v1689, 0
      %v2236 = vsel %vm1772, %v1690, 0
      %v2239 = vsel %vm1772, %v1691, 0
      %v2242 = vsel %vm1772, %v1692, 0
      %v2245 = vsel %vm1772, %v1693, 0
      %v2248 = vsel %vm1772, %v1694, 0
      %v2251 = vsel %vm1772, %v1695, 0
      %v2254 = vsel %vm1772, %v1696, 0
      %v2257 = vsel %vm1772, %v1697, 0
      %v2260 = vsel %vm1772, %v1698, 0
      %v2263 = vsel %vm1772, %v1699, 0
      %v2266 = vsel %vm1772, %v1700, 0
      %v2269 = vsel %vm1772, %v1701, 0
      %v2272 = vsel %vm1772, %v1702, 0
      %v2275 = vsel %vm1772, %v1703, 0
      %v2278 = vsel %vm1772, %v1704, 0
      %v2281 = vsel %vm1772, %v1705, 0
      %v2284 = vsel %vm1772, %v1706, 0
      %v2287 = vsel %vm1772, %v1707, 0
      %v2290 = vsel %vm1772, %v1708, 0
      %v2293 = vsel %vm1772, %v1709, 0
      %v2296 = vsel %vm1772, %v1710, 0
      %v2299 = vsel %vm1772, %v1711, 0
      %v2302 = vsel %vm1772, %v1712, 0
      %v2305 = vsel %vm1772, %v1713, 0
      %v2308 = vsel %vm1772, %v1714, 0
      %v2311 = vsel %vm1772, %v1715, 0
      %v2314 = vsel %vm1772, %v1716, 0
      %v2317 = vsel %vm1772, %v1717, 0
      %v2320 = vsel %vm1772, %v1718, 0
      %v2323 = vsel %vm1772, %v1719, 0
      %v2326 = vsel %vm1772, %v1720, 0
      %v2329 = vsel %vm1772, %v1721, 0
      %v2332 = vsel %vm1772, %v1722, 0
      %v2335 = vsel %vm1772, %v1723, 0
      %v2338 = vsel %vm1772, %v1724, 0
      %v2341 = vsel %vm1772, %v1725, 0
      %v2344 = vsel %vm1772, %v1726, 0
      %v2347 = vsel %vm1772, %v1727, 0
      %v2350 = vsel %vm1772, %v1728, 0
      %v2353 = vsel %vm1772, %v1729, 0
      %v2356 = vsel %vm1772, %v1730, 0
      %v2359 = vsel %vm1772, %v1731, 0
      %v2362 = vsel %vm1772, %v1732, 0
      %v2365 = vsel %vm1772, %v1733, 0
      %v2368 = vsel %vm1772, %v1734, 0
      %v2371 = vsel %vm1772, %v1735, 0
      %v2374 = vsel %vm1772, %v1736, 0
      %v2377 = vsel %vm1772, %v1737, 0
      %v2380 = vsel %vm1772, %v1738, 0
      %v2383 = vsel %vm1772, %v1739, 0
      %v2386 = vsel %vm1772, %v1740, 0
      %v2389 = vsel %vm1772, %v1741, 0
      %v2392 = vsel %vm1772, %v1742, 0
      %v2395 = vsel %vm1772, %v1743, 0
      %v2398 = vsel %vm1772, %v1744, 0
      %v2401 = vsel %vm1772, %v1745, 0
      %v2404 = vsel %vm1772, %v1746, 0
      %v2407 = vsel %vm1772, %v1747, 0
      %v2410 = vsel %vm1772, %v1748, 0
      %v2413 = vsel %vm1772, %v1749, 0
      %v2416 = vsel %vm1772, %v1750, 0
      %v2419 = vsel %vm1772, %v1751, 0
      %v2422 = vsel %vm1772, %v1752, 0
      %v2425 = vsel %vm1772, %v1753, 0
      %v2428 = vsel %vm1772, %v1754, 0
      %v2431 = vsel %vm1772, %v1755, 0
      %v2434 = vsel %vm1772, %v1756, 0
      %v2437 = vsel %vm1772, %v1757, 0
      %v2440 = vsel %vm1772, %v1758, 0
      %v2443 = vsel %vm1772, %v1759, 0
      %v2446 = vsel %vm1772, %v1760, 0
      %vm2448 = vcmask 1044480
      %vm2449 = vcmask 1045504
      %v2450 = vsel %vm2448, 4294967295, 65535
      %v2451 = vsel %vm2449, %v2450, 0
      %v2453 = vand.u32 %v1770, %v2451
      %2455 = vmatprep.subr.bf16.mxu0 0
      %2456 = vmatpush1.bf16.msra.mxu0 %v1769
      %2457 = vmatprep.subr.bf16.mxu0 0
      %2458 = vmatpush1.bf16.msra.mxu0 %v2453
      %2459 = vmatprep.subr.bf16.mxu0 0
      %2460 = vmatpush1.bf16.msra.mxu0 0
      %2461 = vmatprep.subr.bf16.mxu0 0
      %2462 = vmatpush1.bf16.msra.mxu0 0
      %2463 = vmatprep.subr.bf16.mxu0 0
      %2464 = vmatpush1.bf16.msra.mxu0 0
      %2465 = vmatprep.subr.bf16.mxu0 0
      %2466 = vmatpush1.bf16.msra.mxu0 0
      %2467 = vmatprep.subr.bf16.mxu0 0
      %2468 = vmatpush1.bf16.msra.mxu0 0
      %2469 = vmatprep.subr.bf16.mxu0 0
      %2470 = vmatpush1.bf16.msra.mxu0 0
      %2471 = vmatprep.subr.bf16.mxu0 0
      %2472 = vmatpush1.bf16.msra.mxu0 0
      %2473 = vmatprep.subr.bf16.mxu0 0
      %2474 = vmatpush1.bf16.msra.mxu0 0
      %2475 = vmatprep.subr.bf16.mxu0 0
      %2476 = vmatpush1.bf16.msra.mxu0 0
      %2477 = vmatprep.subr.bf16.mxu0 0
      %2478 = vmatpush1.bf16.msra.mxu0 0
      %2479 = vmatprep.subr.bf16.mxu0 0
      %2480 = vmatpush1.bf16.msra.mxu0 0
      %2481 = vmatprep.subr.bf16.mxu0 0
      %2482 = vmatpush1.bf16.msra.mxu0 0
      %2483 = vmatprep.subr.bf16.mxu0 0
      %2484 = vmatpush1.bf16.msra.mxu0 0
      %2485 = vmatprep.subr.bf16.mxu0 0
      %2486 = vmatpush1.bf16.msra.mxu0 0
      %2487 = vmatprep.mubr.bf16.mxu0 0
      %2488 = vmatmul.mubr.bf16.gmra.mrb[0].mxu0 %v1774
      %v2489 = vpop.f32.mrb[0].mxu0
      %v2490 = vadd.f32 %v634, %v2489
      %v2491 = vpop.f32.mrb[0].mxu0
      %v2492 = vpop.f32.mrb[0].mxu0
      %v2493 = vadd.f32 %v634, %v2492
      %v2494 = vpop.f32.mrb[0].mxu0
      %2495 = vmatprep.mubr.bf16.mxu0 0
      %2496 = vmatmul.mubr.bf16.gmra.mrb[0].mxu0 %v1777
      %v2497 = vpop.f32.mrb[0].mxu0
      %v2498 = vadd.f32 %v634, %v2497
      %v2499 = vpop.f32.mrb[0].mxu0
      %v2500 = vpop.f32.mrb[0].mxu0
      %v2501 = vadd.f32 %v634, %v2500
      %v2502 = vpop.f32.mrb[0].mxu0
      %2503 = vmatprep.mubr.bf16.mxu0 0
      %2504 = vmatmul.mubr.bf16.gmra.mrb[0].mxu0 %v1780
      %v2505 = vpop.f32.mrb[0].mxu0
      %v2506 = vadd.f32 %v634, %v2505
      %v2507 = vpop.f32.mrb[0].mxu0
      %v2508 = vpop.f32.mrb[0].mxu0
      %v2509 = vadd.f32 %v634, %v2508
      %v2510 = vpop.f32.mrb[0].mxu0
      %2511 = vmatprep.mubr.bf16.mxu0 0
      %2512 = vmatmul.mubr.bf16.gmra.mrb[0].mxu0 %v1783
      %v2513 = vpop.f32.mrb[0].mxu0
      %v2514 = vadd.f32 %v634, %v2513
      %v2515 = vpop.f32.mrb[0].mxu0
      %v2516 = vpop.f32.mrb[0].mxu0
      %v2517 = vadd.f32 %v634, %v2516
      %v2518 = vpop.f32.mrb[0].mxu0
      %2519 = vmatprep.mubr.bf16.mxu0 0
      %2520 = vmatmul.mubr.bf16.gmra.mrb[0].mxu0 %v1786
      %v2521 = vpop.f32.mrb[0].mxu0
      %v2522 = vadd.f32 %v634, %v2521
      %v2523 = vpop.f32.mrb[0].mxu0
      %v2524 = vpop.f32.mrb[0].mxu0
      %v2525 = vadd.f32 %v634, %v2524
      %v2526 = vpop.f32.mrb[0].mxu0
      %2527 = vmatprep.mubr.bf16.mxu0 0
      %2528 = vmatmul.mubr.bf16.gmra.mrb[0].mxu0 %v1789
      %v2529 = vpop.f32.mrb[0].mxu0
      %v2530 = vadd.f32 %v634, %v2529
      %v2531 = vpop.f32.mrb[0].mxu0
      %v2532 = vpop.f32.mrb[0].mxu0
      %v2533 = vadd.f32 %v634, %v2532
      %v2534 = vpop.f32.mrb[0].mxu0
      %2535 = vmatprep.mubr.bf16.mxu0 0
      %2536 = vmatmul.mubr.bf16.gmra.mrb[0].mxu0 %v1792
      %v2537 = vpop.f32.mrb[0].mxu0
      %v2538 = vadd.f32 %v634, %v2537
      %v2539 = vpop.f32.mrb[0].mxu0
      %v2540 = vpop.f32.mrb[0].mxu0
      %v2541 = vadd.f32 %v634, %v2540
      %v2542 = vpop.f32.mrb[0].mxu0
      %2543 = vmatprep.mubr.bf16.mxu0 0
      %2544 = vmatmul.mubr.bf16.gmra.mrb[0].mxu0 %v1795
      %v2545 = vpop.f32.mrb[0].mxu0
      %v2546 = vadd.f32 %v634, %v2545
      %v2547 = vpop.f32.mrb[0].mxu0
      %v2548 = vpop.f32.mrb[0].mxu0
      %v2549 = vadd.f32 %v634, %v2548
      %v2550 = vpop.f32.mrb[0].mxu0
      %2551 = vmatprep.mubr.bf16.mxu0 0
      %2552 = vmatmul.mubr.bf16.gmra.mrb[0].mxu0 %v1798
      %v2553 = vpop.f32.mrb[0].mxu0
      %v2554 = vadd.f32 %v634, %v2553
      %v2555 = vpop.f32.mrb[0].mxu0
      %v2556 = vpop.f32.mrb[0].mxu0
      %v2557 = vadd.f32 %v634, %v2556
      %v2558 = vpop.f32.mrb[0].mxu0
      %2559 = vmatprep.mubr.bf16.mxu0 0
      %2560 = vmatmul.mubr.bf16.gmra.mrb[0].mxu0 %v1801
      %v2561 = vpop.f32.mrb[0].mxu0
      %v2562 = vadd.f32 %v634, %v2561
      %v2563 = vpop.f32.mrb[0].mxu0
      %v2564 = vpop.f32.mrb[0].mxu0
      %v2565 = vadd.f32 %v634, %v2564
      %v2566 = vpop.f32.mrb[0].mxu0
      %2567 = vmatprep.mubr.bf16.mxu0 0
      %2568 = vmatmul.mubr.bf16.gmra.mrb[0].mxu0 %v1804
      %v2569 = vpop.f32.mrb[0].mxu0
      %v2570 = vadd.f32 %v634, %v2569
      %v2571 = vpop.f32.mrb[0].mxu0
      %v2572 = vpop.f32.mrb[0].mxu0
      %v2573 = vadd.f32 %v634, %v2572
      %v2574 = vpop.f32.mrb[0].mxu0
      %2575 = vmatprep.mubr.bf16.mxu0 0
      %2576 = vmatmul.mubr.bf16.gmra.mrb[0].mxu0 %v1807
      %v2577 = vpop.f32.mrb[0].mxu0
      %v2578 = vadd.f32 %v634, %v2577
      %v2579 = vpop.f32.mrb[0].mxu0
      %v2580 = vpop.f32.mrb[0].mxu0
      %v2581 = vadd.f32 %v634, %v2580
      %v2582 = vpop.f32.mrb[0].mxu0
      %2583 = vmatprep.mubr.bf16.mxu0 0
      %2584 = vmatmul.mubr.bf16.gmra.mrb[0].mxu0 %v1810
      %v2585 = vpop.f32.mrb[0].mxu0
      %v2586 = vadd.f32 %v634, %v2585
      %v2587 = vpop.f32.mrb[0].mxu0
      %v2588 = vpop.f32.mrb[0].mxu0
      %v2589 = vadd.f32 %v634, %v2588
      %v2590 = vpop.f32.mrb[0].mxu0
      %2591 = vmatprep.mubr.bf16.mxu0 0
      %2592 = vmatmul.mubr.bf16.gmra.mrb[0].mxu0 %v1813
      %v2593 = vpop.f32.mrb[0].mxu0
      %v2594 = vadd.f32 %v634, %v2593
      %v2595 = vpop.f32.mrb[0].mxu0
      %v2596 = vpop.f32.mrb[0].mxu0
      %v2597 = vadd.f32 %v634, %v2596
      %v2598 = vpop.f32.mrb[0].mxu0
      %2599 = vmatprep.mubr.bf16.mxu0 0
      %2600 = vmatmul.mubr.bf16.gmra.mrb[0].mxu0 %v1816
      %v2601 = vpop.f32.mrb[0].mxu0
      %v2602 = vadd.f32 %v634, %v2601
      %v2603 = vpop.f32.mrb[0].mxu0
      %v2604 = vpop.f32.mrb[0].mxu0
      %v2605 = vadd.f32 %v634, %v2604
      %v2606 = vpop.f32.mrb[0].mxu0
      %2607 = vmatprep.mubr.bf16.mxu0 0
      %2608 = vmatmul.mubr.bf16.gmra.mrb[0].mxu0 %v1819
      %v2609 = vpop.f32.mrb[0].mxu0
      %v2610 = vadd.f32 %v634, %v2609
      %v2611 = vpop.f32.mrb[0].mxu0
      %v2612 = vpop.f32.mrb[0].mxu0
      %v2613 = vadd.f32 %v634, %v2612
      %v2614 = vpop.f32.mrb[0].mxu0
      %2615 = vmatprep.mubr.bf16.mxu0 0
      %2616 = vmatmul.mubr.bf16.gmra.mrb[0].mxu0 %v1822
      %v2617 = vpop.f32.mrb[0].mxu0
      %v2618 = vadd.f32 %v634, %v2617
      %v2619 = vpop.f32.mrb[0].mxu0
      %v2620 = vpop.f32.mrb[0].mxu0
      %v2621 = vadd.f32 %v634, %v2620
      %v2622 = vpop.f32.mrb[0].mxu0
      %2623 = vmatprep.mubr.bf16.mxu0 0
      %2624 = vmatmul.mubr.bf16.gmra.mrb[0].mxu0 %v1825
      %v2625 = vpop.f32.mrb[0].mxu0
      %v2626 = vadd.f32 %v634, %v2625
      %v2627 = vpop.f32.mrb[0].mxu0
      %v2628 = vpop.f32.mrb[0].mxu0
      %v2629 = vadd.f32 %v634, %v2628
      %v2630 = vpop.f32.mrb[0].mxu0
      %2631 = vmatprep.mubr.bf16.mxu0 0
      %2632 = vmatmul.mubr.bf16.gmra.mrb[0].mxu0 %v1828
      %v2633 = vpop.f32.mrb[0].mxu0
      %v2634 = vadd.f32 %v634, %v2633
      %v2635 = vpop.f32.mrb[0].mxu0
      %v2636 = vpop.f32.mrb[0].mxu0
      %v2637 = vadd.f32 %v634, %v2636
      %v2638 = vpop.f32.mrb[0].mxu0
      %2639 = vmatprep.mubr.bf16.mxu0 0
      %2640 = vmatmul.mubr.bf16.gmra.mrb[0].mxu0 %v1831
      %v2641 = vpop.f32.mrb[0].mxu0
      %v2642 = vadd.f32 %v634, %v2641
      %v2643 = vpop.f32.mrb[0].mxu0
      %v2644 = vpop.f32.mrb[0].mxu0
      %v2645 = vadd.f32 %v634, %v2644
      %v2646 = vpop.f32.mrb[0].mxu0
      %2647 = vmatprep.mubr.bf16.mxu0 0
      %2648 = vmatmul.mubr.bf16.gmra.mrb[0].mxu0 %v1834
      %v2649 = vpop.f32.mrb[0].mxu0
      %v2650 = vadd.f32 %v634, %v2649
      %v2651 = vpop.f32.mrb[0].mxu0
      %v2652 = vpop.f32.mrb[0].mxu0
      %v2653 = vadd.f32 %v634, %v2652
      %v2654 = vpop.f32.mrb[0].mxu0
      %2655 = vmatprep.mubr.bf16.mxu0 0
      %2656 = vmatmul.mubr.bf16.gmra.mrb[0].mxu0 %v1837
      %v2657 = vpop.f32.mrb[0].mxu0
      %v2658 = vadd.f32 %v634, %v2657
      %v2659 = vpop.f32.mrb[0].mxu0
      %v2660 = vpop.f32.mrb[0].mxu0
      %v2661 = vadd.f32 %v634, %v2660
      %v2662 = vpop.f32.mrb[0].mxu0
      %2663 = vmatprep.mubr.bf16.mxu0 0
      %2664 = vmatmul.mubr.bf16.gmra.mrb[0].mxu0 %v1840
      %v2665 = vpop.f32.mrb[0].mxu0
      %v2666 = vadd.f32 %v634, %v2665
      %v2667 = vpop.f32.mrb[0].mxu0
      %v2668 = vpop.f32.mrb[0].mxu0
      %v2669 = vadd.f32 %v634, %v2668
      %v2670 = vpop.f32.mrb[0].mxu0
      %2671 = vmatprep.mubr.bf16.mxu0 0
      %2672 = vmatmul.mubr.bf16.gmra.mrb[0].mxu0 %v1843
      %v2673 = vpop.f32.mrb[0].mxu0
      %v2674 = vadd.f32 %v634, %v2673
      %v2675 = vpop.f32.mrb[0].mxu0
      %v2676 = vpop.f32.mrb[0].mxu0
      %v2677 = vadd.f32 %v634, %v2676
      %v2678 = vpop.f32.mrb[0].mxu0
      %2679 = vmatprep.mubr.bf16.mxu0 0
      %2680 = vmatmul.mubr.bf16.gmra.mrb[0].mxu0 %v1846
      %v2681 = vpop.f32.mrb[0].mxu0
      %v2682 = vadd.f32 %v634, %v2681
      %v2683 = vpop.f32.mrb[0].mxu0
      %v2684 = vpop.f32.mrb[0].mxu0
      %v2685 = vadd.f32 %v634, %v2684
      %v2686 = vpop.f32.mrb[0].mxu0
      %2687 = vmatprep.mubr.bf16.mxu0 0
      %2688 = vmatmul.mubr.bf16.gmra.mrb[0].mxu0 %v1849
      %v2689 = vpop.f32.mrb[0].mxu0
      %v2690 = vadd.f32 %v634, %v2689
      %v2691 = vpop.f32.mrb[0].mxu0
      %v2692 = vpop.f32.mrb[0].mxu0
      %v2693 = vadd.f32 %v634, %v2692
      %v2694 = vpop.f32.mrb[0].mxu0
      %2695 = vmatprep.mubr.bf16.mxu0 0
      %2696 = vmatmul.mubr.bf16.gmra.mrb[0].mxu0 %v1852
      %v2697 = vpop.f32.mrb[0].mxu0
      %v2698 = vadd.f32 %v634, %v2697
      %v2699 = vpop.f32.mrb[0].mxu0
      %v2700 = vpop.f32.mrb[0].mxu0
      %v2701 = vadd.f32 %v634, %v2700
      %v2702 = vpop.f32.mrb[0].mxu0
      %2703 = vmatprep.mubr.bf16.mxu0 0
      %2704 = vmatmul.mubr.bf16.gmra.mrb[0].mxu0 %v1855
      %v2705 = vpop.f32.mrb[0].mxu0
      %v2706 = vadd.f32 %v634, %v2705
      %v2707 = vpop.f32.mrb[0].mxu0
      %v2708 = vpop.f32.mrb[0].mxu0
      %v2709 = vadd.f32 %v634, %v2708
      %v2710 = vpop.f32.mrb[0].mxu0
      %2711 = vmatprep.mubr.bf16.mxu0 0
      %2712 = vmatmul.mubr.bf16.gmra.mrb[0].mxu0 %v1858
      %v2713 = vpop.f32.mrb[0].mxu0
      %v2714 = vadd.f32 %v634, %v2713
      %v2715 = vpop.f32.mrb[0].mxu0
      %v2716 = vpop.f32.mrb[0].mxu0
      %v2717 = vadd.f32 %v634, %v2716
      %v2718 = vpop.f32.mrb[0].mxu0
      %2719 = vmatprep.mubr.bf16.mxu0 0
      %2720 = vmatmul.mubr.bf16.gmra.mrb[0].mxu0 %v1861
      %v2721 = vpop.f32.mrb[0].mxu0
      %v2722 = vadd.f32 %v634, %v2721
      %v2723 = vpop.f32.mrb[0].mxu0
      %v2724 = vpop.f32.mrb[0].mxu0
      %v2725 = vadd.f32 %v634, %v2724
      %v2726 = vpop.f32.mrb[0].mxu0
      %2727 = vmatprep.mubr.bf16.mxu0 0
      %2728 = vmatmul.mubr.bf16.gmra.mrb[0].mxu0 %v1864
      %v2729 = vpop.f32.mrb[0].mxu0
      %v2730 = vadd.f32 %v634, %v2729
      %v2731 = vpop.f32.mrb[0].mxu0
      %v2732 = vpop.f32.mrb[0].mxu0
      %v2733 = vadd.f32 %v634, %v2732
      %v2734 = vpop.f32.mrb[0].mxu0
      %2735 = vmatprep.mubr.bf16.mxu0 0
      %2736 = vmatmul.mubr.bf16.gmra.mrb[0].mxu0 %v1867
      %v2737 = vpop.f32.mrb[0].mxu0
      %v2738 = vadd.f32 %v634, %v2737
      %v2739 = vpop.f32.mrb[0].mxu0
      %v2740 = vpop.f32.mrb[0].mxu0
      %v2741 = vadd.f32 %v634, %v2740
      %v2742 = vpop.f32.mrb[0].mxu0
      %2743 = vmatprep.mubr.bf16.mxu0 0
      %2744 = vmatmul.mubr.bf16.gmra.mrb[0].mxu0 %v1870
      %v2745 = vpop.f32.mrb[0].mxu0
      %v2746 = vadd.f32 %v634, %v2745
      %v2747 = vpop.f32.mrb[0].mxu0
      %v2748 = vpop.f32.mrb[0].mxu0
      %v2749 = vadd.f32 %v634, %v2748
      %v2750 = vpop.f32.mrb[0].mxu0
      %2751 = vmatprep.mubr.bf16.mxu0 0
      %2752 = vmatmul.mubr.bf16.gmra.mrb[0].mxu0 %v1873
      %v2753 = vpop.f32.mrb[0].mxu0
      %v2754 = vadd.f32 %v634, %v2753
      %v2755 = vpop.f32.mrb[0].mxu0
      %v2756 = vpop.f32.mrb[0].mxu0
      %v2757 = vadd.f32 %v634, %v2756
      %v2758 = vpop.f32.mrb[0].mxu0
      %2759 = vmatprep.mubr.bf16.mxu0 0
      %2760 = vmatmul.mubr.bf16.gmra.mrb[0].mxu0 %v1876
      %v2761 = vpop.f32.mrb[0].mxu0
      %v2762 = vadd.f32 %v634, %v2761
      %v2763 = vpop.f32.mrb[0].mxu0
      %v2764 = vpop.f32.mrb[0].mxu0
      %v2765 = vadd.f32 %v634, %v2764
      %v2766 = vpop.f32.mrb[0].mxu0
      %2767 = vmatprep.mubr.bf16.mxu0 0
      %2768 = vmatmul.mubr.bf16.gmra.mrb[0].mxu0 %v1879
      %v2769 = vpop.f32.mrb[0].mxu0
      %v2770 = vadd.f32 %v634, %v2769
      %v2771 = vpop.f32.mrb[0].mxu0
      %v2772 = vpop.f32.mrb[0].mxu0
      %v2773 = vadd.f32 %v634, %v2772
      %v2774 = vpop.f32.mrb[0].mxu0
      %2775 = vmatprep.mubr.bf16.mxu0 0
      %2776 = vmatmul.mubr.bf16.gmra.mrb[0].mxu0 %v1882
      %v2777 = vpop.f32.mrb[0].mxu0
      %v2778 = vadd.f32 %v634, %v2777
      %v2779 = vpop.f32.mrb[0].mxu0
      %v2780 = vpop.f32.mrb[0].mxu0
      %v2781 = vadd.f32 %v634, %v2780
      %v2782 = vpop.f32.mrb[0].mxu0
      %2783 = vmatprep.mubr.bf16.mxu0 0
      %2784 = vmatmul.mubr.bf16.gmra.mrb[0].mxu0 %v1885
      %v2785 = vpop.f32.mrb[0].mxu0
      %v2786 = vadd.f32 %v634, %v2785
      %v2787 = vpop.f32.mrb[0].mxu0
      %v2788 = vpop.f32.mrb[0].mxu0
      %v2789 = vadd.f32 %v634, %v2788
      %v2790 = vpop.f32.mrb[0].mxu0
      %2791 = vmatprep.mubr.bf16.mxu0 0
      %2792 = vmatmul.mubr.bf16.gmra.mrb[0].mxu0 %v1888
      %v2793 = vpop.f32.mrb[0].mxu0
      %v2794 = vadd.f32 %v634, %v2793
      %v2795 = vpop.f32.mrb[0].mxu0
      %v2796 = vpop.f32.mrb[0].mxu0
      %v2797 = vadd.f32 %v634, %v2796
      %v2798 = vpop.f32.mrb[0].mxu0
      %2799 = vmatprep.mubr.bf16.mxu0 0
      %2800 = vmatmul.mubr.bf16.gmra.mrb[0].mxu0 %v1891
      %v2801 = vpop.f32.mrb[0].mxu0
      %v2802 = vadd.f32 %v634, %v2801
      %v2803 = vpop.f32.mrb[0].mxu0
      %v2804 = vpop.f32.mrb[0].mxu0
      %v2805 = vadd.f32 %v634, %v2804
      %v2806 = vpop.f32.mrb[0].mxu0
      %2807 = vmatprep.mubr.bf16.mxu0 0
      %2808 = vmatmul.mubr.bf16.gmra.mrb[0].mxu0 %v1894
      %v2809 = vpop.f32.mrb[0].mxu0
      %v2810 = vadd.f32 %v634, %v2809
      %v2811 = vpop.f32.mrb[0].mxu0
      %v2812 = vpop.f32.mrb[0].mxu0
      %v2813 = vadd.f32 %v634, %v2812
      %v2814 = vpop.f32.mrb[0].mxu0
      %2815 = vmatprep.mubr.bf16.mxu0 0
      %2816 = vmatmul.mubr.bf16.gmra.mrb[0].mxu0 %v1897
      %v2817 = vpop.f32.mrb[0].mxu0
      %v2818 = vadd.f32 %v634, %v2817
      %v2819 = vpop.f32.mrb[0].mxu0
      %v2820 = vpop.f32.mrb[0].mxu0
      %v2821 = vadd.f32 %v634, %v2820
      %v2822 = vpop.f32.mrb[0].mxu0
      %2823 = vmatprep.mubr.bf16.mxu0 0
      %2824 = vmatmul.mubr.bf16.gmra.mrb[0].mxu0 %v1900
      %v2825 = vpop.f32.mrb[0].mxu0
      %v2826 = vadd.f32 %v634, %v2825
      %v2827 = vpop.f32.mrb[0].mxu0
      %v2828 = vpop.f32.mrb[0].mxu0
      %v2829 = vadd.f32 %v634, %v2828
      %v2830 = vpop.f32.mrb[0].mxu0
      %2831 = vmatprep.mubr.bf16.mxu0 0
      %2832 = vmatmul.mubr.bf16.gmra.mrb[0].mxu0 %v1903
      %v2833 = vpop.f32.mrb[0].mxu0
      %v2834 = vadd.f32 %v634, %v2833
      %v2835 = vpop.f32.mrb[0].mxu0
      %v2836 = vpop.f32.mrb[0].mxu0
      %v2837 = vadd.f32 %v634, %v2836
      %v2838 = vpop.f32.mrb[0].mxu0
      %2839 = vmatprep.mubr.bf16.mxu0 0
      %2840 = vmatmul.mubr.bf16.gmra.mrb[0].mxu0 %v1906
      %v2841 = vpop.f32.mrb[0].mxu0
      %v2842 = vadd.f32 %v634, %v2841
      %v2843 = vpop.f32.mrb[0].mxu0
      %v2844 = vpop.f32.mrb[0].mxu0
      %v2845 = vadd.f32 %v634, %v2844
      %v2846 = vpop.f32.mrb[0].mxu0
      %2847 = vmatprep.mubr.bf16.mxu0 0
      %2848 = vmatmul.mubr.bf16.gmra.mrb[0].mxu0 %v1909
      %v2849 = vpop.f32.mrb[0].mxu0
      %v2850 = vadd.f32 %v634, %v2849
      %v2851 = vpop.f32.mrb[0].mxu0
      %v2852 = vpop.f32.mrb[0].mxu0
      %v2853 = vadd.f32 %v634, %v2852
      %v2854 = vpop.f32.mrb[0].mxu0
      %2855 = vmatprep.mubr.bf16.mxu0 0
      %2856 = vmatmul.mubr.bf16.gmra.mrb[0].mxu0 %v1912
      %v2857 = vpop.f32.mrb[0].mxu0
      %v2858 = vadd.f32 %v634, %v2857
      %v2859 = vpop.f32.mrb[0].mxu0
      %v2860 = vpop.f32.mrb[0].mxu0
      %v2861 = vadd.f32 %v634, %v2860
      %v2862 = vpop.f32.mrb[0].mxu0
      %2863 = vmatprep.mubr.bf16.mxu0 0
      %2864 = vmatmul.mubr.bf16.gmra.mrb[0].mxu0 %v1915
      %v2865 = vpop.f32.mrb[0].mxu0
      %v2866 = vadd.f32 %v634, %v2865
      %v2867 = vpop.f32.mrb[0].mxu0
      %v2868 = vpop.f32.mrb[0].mxu0
      %v2869 = vadd.f32 %v634, %v2868
      %v2870 = vpop.f32.mrb[0].mxu0
      %2871 = vmatprep.mubr.bf16.mxu0 0
      %2872 = vmatmul.mubr.bf16.gmra.mrb[0].mxu0 %v1918
      %v2873 = vpop.f32.mrb[0].mxu0
      %v2874 = vadd.f32 %v634, %v2873
      %v2875 = vpop.f32.mrb[0].mxu0
      %v2876 = vpop.f32.mrb[0].mxu0
      %v2877 = vadd.f32 %v634, %v2876
      %v2878 = vpop.f32.mrb[0].mxu0
      %2879 = vmatprep.mubr.bf16.mxu0 0
      %2880 = vmatmul.mubr.bf16.gmra.mrb[0].mxu0 %v1921
      %v2881 = vpop.f32.mrb[0].mxu0
      %v2882 = vadd.f32 %v634, %v2881
      %v2883 = vpop.f32.mrb[0].mxu0
      %v2884 = vpop.f32.mrb[0].mxu0
      %v2885 = vadd.f32 %v634, %v2884
      %v2886 = vpop.f32.mrb[0].mxu0
      %2887 = vmatprep.mubr.bf16.mxu0 0
      %2888 = vmatmul.mubr.bf16.gmra.mrb[0].mxu0 %v1924
      %v2889 = vpop.f32.mrb[0].mxu0
      %v2890 = vadd.f32 %v634, %v2889
      %v2891 = vpop.f32.mrb[0].mxu0
      %v2892 = vpop.f32.mrb[0].mxu0
      %v2893 = vadd.f32 %v634, %v2892
      %v2894 = vpop.f32.mrb[0].mxu0
      %2895 = vmatprep.mubr.bf16.mxu0 0
      %2896 = vmatmul.mubr.bf16.gmra.mrb[0].mxu0 %v1927
      %v2897 = vpop.f32.mrb[0].mxu0
      %v2898 = vadd.f32 %v634, %v2897
      %v2899 = vpop.f32.mrb[0].mxu0
      %v2900 = vpop.f32.mrb[0].mxu0
      %v2901 = vadd.f32 %v634, %v2900
      %v2902 = vpop.f32.mrb[0].mxu0
      %2903 = vmatprep.mubr.bf16.mxu0 0
      %2904 = vmatmul.mubr.bf16.gmra.mrb[0].mxu0 %v1930
      %v2905 = vpop.f32.mrb[0].mxu0
      %v2906 = vadd.f32 %v634, %v2905
      %v2907 = vpop.f32.mrb[0].mxu0
      %v2908 = vpop.f32.mrb[0].mxu0
      %v2909 = vadd.f32 %v634, %v2908
      %v2910 = vpop.f32.mrb[0].mxu0
      %2911 = vmatprep.mubr.bf16.mxu0 0
      %2912 = vmatmul.mubr.bf16.gmra.mrb[0].mxu0 %v1933
      %v2913 = vpop.f32.mrb[0].mxu0
      %v2914 = vadd.f32 %v634, %v2913
      %v2915 = vpop.f32.mrb[0].mxu0
      %v2916 = vpop.f32.mrb[0].mxu0
      %v2917 = vadd.f32 %v634, %v2916
      %v2918 = vpop.f32.mrb[0].mxu0
      %2919 = vmatprep.mubr.bf16.mxu0 0
      %2920 = vmatmul.mubr.bf16.gmra.mrb[0].mxu0 %v1936
      %v2921 = vpop.f32.mrb[0].mxu0
      %v2922 = vadd.f32 %v634, %v2921
      %v2923 = vpop.f32.mrb[0].mxu0
      %v2924 = vpop.f32.mrb[0].mxu0
      %v2925 = vadd.f32 %v634, %v2924
      %v2926 = vpop.f32.mrb[0].mxu0
      %2927 = vmatprep.mubr.bf16.mxu0 0
      %2928 = vmatmul.mubr.bf16.gmra.mrb[0].mxu0 %v1939
      %v2929 = vpop.f32.mrb[0].mxu0
      %v2930 = vadd.f32 %v634, %v2929
      %v2931 = vpop.f32.mrb[0].mxu0
      %v2932 = vpop.f32.mrb[0].mxu0
      %v2933 = vadd.f32 %v634, %v2932
      %v2934 = vpop.f32.mrb[0].mxu0
      %2935 = vmatprep.mubr.bf16.mxu0 0
      %2936 = vmatmul.mubr.bf16.gmra.mrb[0].mxu0 %v1942
      %v2937 = vpop.f32.mrb[0].mxu0
      %v2938 = vadd.f32 %v634, %v2937
      %v2939 = vpop.f32.mrb[0].mxu0
      %v2940 = vpop.f32.mrb[0].mxu0
      %v2941 = vadd.f32 %v634, %v2940
      %v2942 = vpop.f32.mrb[0].mxu0
      %2943 = vmatprep.mubr.bf16.mxu0 0
      %2944 = vmatmul.mubr.bf16.gmra.mrb[0].mxu0 %v1945
      %v2945 = vpop.f32.mrb[0].mxu0
      %v2946 = vadd.f32 %v634, %v2945
      %v2947 = vpop.f32.mrb[0].mxu0
      %v2948 = vpop.f32.mrb[0].mxu0
      %v2949 = vadd.f32 %v634, %v2948
      %v2950 = vpop.f32.mrb[0].mxu0
      %2951 = vmatprep.mubr.bf16.mxu0 0
      %2952 = vmatmul.mubr.bf16.gmra.mrb[0].mxu0 %v1948
      %v2953 = vpop.f32.mrb[0].mxu0
      %v2954 = vadd.f32 %v634, %v2953
      %v2955 = vpop.f32.mrb[0].mxu0
      %v2956 = vpop.f32.mrb[0].mxu0
      %v2957 = vadd.f32 %v634, %v2956
      %v2958 = vpop.f32.mrb[0].mxu0
      %2959 = vmatprep.mubr.bf16.mxu0 0
      %2960 = vmatmul.mubr.bf16.gmra.mrb[0].mxu0 %v1951
      %v2961 = vpop.f32.mrb[0].mxu0
      %v2962 = vadd.f32 %v634, %v2961
      %v2963 = vpop.f32.mrb[0].mxu0
      %v2964 = vpop.f32.mrb[0].mxu0
      %v2965 = vadd.f32 %v634, %v2964
      %v2966 = vpop.f32.mrb[0].mxu0
      %2967 = vmatprep.mubr.bf16.mxu0 0
      %2968 = vmatmul.mubr.bf16.gmra.mrb[0].mxu0 %v1954
      %v2969 = vpop.f32.mrb[0].mxu0
      %v2970 = vadd.f32 %v634, %v2969
      %v2971 = vpop.f32.mrb[0].mxu0
      %v2972 = vpop.f32.mrb[0].mxu0
      %v2973 = vadd.f32 %v634, %v2972
      %v2974 = vpop.f32.mrb[0].mxu0
      %2975 = vmatprep.mubr.bf16.mxu0 0
      %2976 = vmatmul.mubr.bf16.gmra.mrb[0].mxu0 %v1957
      %v2977 = vpop.f32.mrb[0].mxu0
      %v2978 = vadd.f32 %v634, %v2977
      %v2979 = vpop.f32.mrb[0].mxu0
      %v2980 = vpop.f32.mrb[0].mxu0
      %v2981 = vadd.f32 %v634, %v2980
      %v2982 = vpop.f32.mrb[0].mxu0
      %2983 = vmatprep.mubr.bf16.mxu0 0
      %2984 = vmatmul.mubr.bf16.gmra.mrb[0].mxu0 %v1960
      %v2985 = vpop.f32.mrb[0].mxu0
      %v2986 = vadd.f32 %v634, %v2985
      %v2987 = vpop.f32.mrb[0].mxu0
      %v2988 = vpop.f32.mrb[0].mxu0
      %v2989 = vadd.f32 %v634, %v2988
      %v2990 = vpop.f32.mrb[0].mxu0
      %2991 = vmatprep.mubr.bf16.mxu0 0
      %2992 = vmatmul.mubr.bf16.gmra.mrb[0].mxu0 %v1963
      %v2993 = vpop.f32.mrb[0].mxu0
      %v2994 = vadd.f32 %v634, %v2993
      %v2995 = vpop.f32.mrb[0].mxu0
      %v2996 = vpop.f32.mrb[0].mxu0
      %v2997 = vadd.f32 %v634, %v2996
      %v2998 = vpop.f32.mrb[0].mxu0
      %2999 = vmatprep.mubr.bf16.mxu0 0
      %3000 = vmatmul.mubr.bf16.gmra.mrb[0].mxu0 %v1966
      %v3001 = vpop.f32.mrb[0].mxu0
      %v3002 = vadd.f32 %v634, %v3001
      %v3003 = vpop.f32.mrb[0].mxu0
      %v3004 = vpop.f32.mrb[0].mxu0
      %v3005 = vadd.f32 %v634, %v3004
      %v3006 = vpop.f32.mrb[0].mxu0
      %3007 = vmatprep.mubr.bf16.mxu0 0
      %3008 = vmatmul.mubr.bf16.gmra.mrb[0].mxu0 %v1969
      %v3009 = vpop.f32.mrb[0].mxu0
      %v3010 = vadd.f32 %v634, %v3009
      %v3011 = vpop.f32.mrb[0].mxu0
      %v3012 = vpop.f32.mrb[0].mxu0
      %v3013 = vadd.f32 %v634, %v3012
      %v3014 = vpop.f32.mrb[0].mxu0
      %3015 = vmatprep.mubr.bf16.mxu0 0
      %3016 = vmatmul.mubr.bf16.gmra.mrb[0].mxu0 %v1972
      %v3017 = vpop.f32.mrb[0].mxu0
      %v3018 = vadd.f32 %v634, %v3017
      %v3019 = vpop.f32.mrb[0].mxu0
      %v3020 = vpop.f32.mrb[0].mxu0
      %v3021 = vadd.f32 %v634, %v3020
      %v3022 = vpop.f32.mrb[0].mxu0
      %3023 = vmatprep.mubr.bf16.mxu0 0
      %3024 = vmatmul.mubr.bf16.gmra.mrb[0].mxu0 %v1975
      %v3025 = vpop.f32.mrb[0].mxu0
      %v3026 = vadd.f32 %v634, %v3025
      %v3027 = vpop.f32.mrb[0].mxu0
      %v3028 = vpop.f32.mrb[0].mxu0
      %v3029 = vadd.f32 %v634, %v3028
      %v3030 = vpop.f32.mrb[0].mxu0
      %3031 = vmatprep.mubr.bf16.mxu0 0
      %3032 = vmatmul.mubr.bf16.gmra.mrb[0].mxu0 %v1978
      %v3033 = vpop.f32.mrb[0].mxu0
      %v3034 = vadd.f32 %v634, %v3033
      %v3035 = vpop.f32.mrb[0].mxu0
      %v3036 = vpop.f32.mrb[0].mxu0
      %v3037 = vadd.f32 %v634, %v3036
      %v3038 = vpop.f32.mrb[0].mxu0
      %3039 = vmatprep.mubr.bf16.mxu0 0
      %3040 = vmatmul.mubr.bf16.gmra.mrb[0].mxu0 %v1981
      %v3041 = vpop.f32.mrb[0].mxu0
      %v3042 = vadd.f32 %v634, %v3041
      %v3043 = vpop.f32.mrb[0].mxu0
      %v3044 = vpop.f32.mrb[0].mxu0
      %v3045 = vadd.f32 %v634, %v3044
      %v3046 = vpop.f32.mrb[0].mxu0
      %3047 = vmatprep.mubr.bf16.mxu0 0
      %3048 = vmatmul.mubr.bf16.gmra.mrb[0].mxu0 %v1984
      %v3049 = vpop.f32.mrb[0].mxu0
      %v3050 = vadd.f32 %v634, %v3049
      %v3051 = vpop.f32.mrb[0].mxu0
      %v3052 = vpop.f32.mrb[0].mxu0
      %v3053 = vadd.f32 %v634, %v3052
      %v3054 = vpop.f32.mrb[0].mxu0
      %3055 = vmatprep.mubr.bf16.mxu0 0
      %3056 = vmatmul.mubr.bf16.gmra.mrb[0].mxu0 %v1987
      %v3057 = vpop.f32.mrb[0].mxu0
      %v3058 = vadd.f32 %v634, %v3057
      %v3059 = vpop.f32.mrb[0].mxu0
      %v3060 = vpop.f32.mrb[0].mxu0
      %v3061 = vadd.f32 %v634, %v3060
      %v3062 = vpop.f32.mrb[0].mxu0
      %3063 = vmatprep.mubr.bf16.mxu0 0
      %3064 = vmatmul.mubr.bf16.gmra.mrb[0].mxu0 %v1990
      %v3065 = vpop.f32.mrb[0].mxu0
      %v3066 = vadd.f32 %v634, %v3065
      %v3067 = vpop.f32.mrb[0].mxu0
      %v3068 = vpop.f32.mrb[0].mxu0
      %v3069 = vadd.f32 %v634, %v3068
      %v3070 = vpop.f32.mrb[0].mxu0
      %3071 = vmatprep.mubr.bf16.mxu0 0
      %3072 = vmatmul.mubr.bf16.gmra.mrb[0].mxu0 %v1993
      %v3073 = vpop.f32.mrb[0].mxu0
      %v3074 = vadd.f32 %v634, %v3073
      %v3075 = vpop.f32.mrb[0].mxu0
      %v3076 = vpop.f32.mrb[0].mxu0
      %v3077 = vadd.f32 %v634, %v3076
      %v3078 = vpop.f32.mrb[0].mxu0
      %3079 = vmatprep.mubr.bf16.mxu0 0
      %3080 = vmatmul.mubr.bf16.gmra.mrb[0].mxu0 %v1996
      %v3081 = vpop.f32.mrb[0].mxu0
      %v3082 = vadd.f32 %v634, %v3081
      %v3083 = vpop.f32.mrb[0].mxu0
      %v3084 = vpop.f32.mrb[0].mxu0
      %v3085 = vadd.f32 %v634, %v3084
      %v3086 = vpop.f32.mrb[0].mxu0
      %3087 = vmatprep.mubr.bf16.mxu0 0
      %3088 = vmatmul.mubr.bf16.gmra.mrb[0].mxu0 %v1999
      %v3089 = vpop.f32.mrb[0].mxu0
      %v3090 = vadd.f32 %v634, %v3089
      %v3091 = vpop.f32.mrb[0].mxu0
      %v3092 = vpop.f32.mrb[0].mxu0
      %v3093 = vadd.f32 %v634, %v3092
      %v3094 = vpop.f32.mrb[0].mxu0
      %3095 = vmatprep.mubr.bf16.mxu0 0
      %3096 = vmatmul.mubr.bf16.gmra.mrb[0].mxu0 %v2002
      %v3097 = vpop.f32.mrb[0].mxu0
      %v3098 = vadd.f32 %v634, %v3097
      %v3099 = vpop.f32.mrb[0].mxu0
      %v3100 = vpop.f32.mrb[0].mxu0
      %v3101 = vadd.f32 %v634, %v3100
      %v3102 = vpop.f32.mrb[0].mxu0
      %3103 = vmatprep.mubr.bf16.mxu0 0
      %3104 = vmatmul.mubr.bf16.gmra.mrb[0].mxu0 %v2005
      %v3105 = vpop.f32.mrb[0].mxu0
      %v3106 = vadd.f32 %v634, %v3105
      %v3107 = vpop.f32.mrb[0].mxu0
      %v3108 = vpop.f32.mrb[0].mxu0
      %v3109 = vadd.f32 %v634, %v3108
      %v3110 = vpop.f32.mrb[0].mxu0
      %3111 = vmatprep.mubr.bf16.mxu0 0
      %3112 = vmatmul.mubr.bf16.gmra.mrb[0].mxu0 %v2008
      %v3113 = vpop.f32.mrb[0].mxu0
      %v3114 = vadd.f32 %v634, %v3113
      %v3115 = vpop.f32.mrb[0].mxu0
      %v3116 = vpop.f32.mrb[0].mxu0
      %v3117 = vadd.f32 %v634, %v3116
      %v3118 = vpop.f32.mrb[0].mxu0
      %3119 = vmatprep.mubr.bf16.mxu0 0
      %3120 = vmatmul.mubr.bf16.gmra.mrb[0].mxu0 %v2011
      %v3121 = vpop.f32.mrb[0].mxu0
      %v3122 = vadd.f32 %v634, %v3121
      %v3123 = vpop.f32.mrb[0].mxu0
      %v3124 = vpop.f32.mrb[0].mxu0
      %v3125 = vadd.f32 %v634, %v3124
      %v3126 = vpop.f32.mrb[0].mxu0
      %3127 = vmatprep.mubr.bf16.mxu0 0
      %3128 = vmatmul.mubr.bf16.gmra.mrb[0].mxu0 %v2014
      %v3129 = vpop.f32.mrb[0].mxu0
      %v3130 = vadd.f32 %v634, %v3129
      %v3131 = vpop.f32.mrb[0].mxu0
      %v3132 = vpop.f32.mrb[0].mxu0
      %v3133 = vadd.f32 %v634, %v3132
      %v3134 = vpop.f32.mrb[0].mxu0
      %3135 = vmatprep.mubr.bf16.mxu0 0
      %3136 = vmatmul.mubr.bf16.gmra.mrb[0].mxu0 %v2017
      %v3137 = vpop.f32.mrb[0].mxu0
      %v3138 = vadd.f32 %v634, %v3137
      %v3139 = vpop.f32.mrb[0].mxu0
      %v3140 = vpop.f32.mrb[0].mxu0
      %v3141 = vadd.f32 %v634, %v3140
      %v3142 = vpop.f32.mrb[0].mxu0
      %3143 = vmatprep.mubr.bf16.mxu0 0
      %3144 = vmatmul.mubr.bf16.gmra.mrb[0].mxu0 %v2020
      %v3145 = vpop.f32.mrb[0].mxu0
      %v3146 = vadd.f32 %v634, %v3145
      %v3147 = vpop.f32.mrb[0].mxu0
      %v3148 = vpop.f32.mrb[0].mxu0
      %v3149 = vadd.f32 %v634, %v3148
      %v3150 = vpop.f32.mrb[0].mxu0
      %3151 = vmatprep.mubr.bf16.mxu0 0
      %3152 = vmatmul.mubr.bf16.gmra.mrb[0].mxu0 %v2023
      %v3153 = vpop.f32.mrb[0].mxu0
      %v3154 = vadd.f32 %v634, %v3153
      %v3155 = vpop.f32.mrb[0].mxu0
      %v3156 = vpop.f32.mrb[0].mxu0
      %v3157 = vadd.f32 %v634, %v3156
      %v3158 = vpop.f32.mrb[0].mxu0
      %3159 = vmatprep.mubr.bf16.mxu0 0
      %3160 = vmatmul.mubr.bf16.gmra.mrb[0].mxu0 %v2026
      %v3161 = vpop.f32.mrb[0].mxu0
      %v3162 = vadd.f32 %v634, %v3161
      %v3163 = vpop.f32.mrb[0].mxu0
      %v3164 = vpop.f32.mrb[0].mxu0
      %v3165 = vadd.f32 %v634, %v3164
      %v3166 = vpop.f32.mrb[0].mxu0
      %3167 = vmatprep.mubr.bf16.mxu0 0
      %3168 = vmatmul.mubr.bf16.gmra.mrb[0].mxu0 %v2029
      %v3169 = vpop.f32.mrb[0].mxu0
      %v3170 = vadd.f32 %v634, %v3169
      %v3171 = vpop.f32.mrb[0].mxu0
      %v3172 = vpop.f32.mrb[0].mxu0
      %v3173 = vadd.f32 %v634, %v3172
      %v3174 = vpop.f32.mrb[0].mxu0
      %3175 = vmatprep.mubr.bf16.mxu0 0
      %3176 = vmatmul.mubr.bf16.gmra.mrb[0].mxu0 %v2032
      %v3177 = vpop.f32.mrb[0].mxu0
      %v3178 = vadd.f32 %v634, %v3177
      %v3179 = vpop.f32.mrb[0].mxu0
      %v3180 = vpop.f32.mrb[0].mxu0
      %v3181 = vadd.f32 %v634, %v3180
      %v3182 = vpop.f32.mrb[0].mxu0
      %3183 = vmatprep.mubr.bf16.mxu0 0
      %3184 = vmatmul.mubr.bf16.gmra.mrb[0].mxu0 %v2035
      %v3185 = vpop.f32.mrb[0].mxu0
      %v3186 = vadd.f32 %v634, %v3185
      %v3187 = vpop.f32.mrb[0].mxu0
      %v3188 = vpop.f32.mrb[0].mxu0
      %v3189 = vadd.f32 %v634, %v3188
      %v3190 = vpop.f32.mrb[0].mxu0
      %3191 = vmatprep.mubr.bf16.mxu0 0
      %3192 = vmatmul.mubr.bf16.gmra.mrb[0].mxu0 %v2038
      %v3193 = vpop.f32.mrb[0].mxu0
      %v3194 = vadd.f32 %v634, %v3193
      %v3195 = vpop.f32.mrb[0].mxu0
      %v3196 = vpop.f32.mrb[0].mxu0
      %v3197 = vadd.f32 %v634, %v3196
      %v3198 = vpop.f32.mrb[0].mxu0
      %3199 = vmatprep.mubr.bf16.mxu0 0
      %3200 = vmatmul.mubr.bf16.gmra.mrb[0].mxu0 %v2041
      %v3201 = vpop.f32.mrb[0].mxu0
      %v3202 = vadd.f32 %v634, %v3201
      %v3203 = vpop.f32.mrb[0].mxu0
      %v3204 = vpop.f32.mrb[0].mxu0
      %v3205 = vadd.f32 %v634, %v3204
      %v3206 = vpop.f32.mrb[0].mxu0
      %3207 = vmatprep.mubr.bf16.mxu0 0
      %3208 = vmatmul.mubr.bf16.gmra.mrb[0].mxu0 %v2044
      %v3209 = vpop.f32.mrb[0].mxu0
      %v3210 = vadd.f32 %v634, %v3209
      %v3211 = vpop.f32.mrb[0].mxu0
      %v3212 = vpop.f32.mrb[0].mxu0
      %v3213 = vadd.f32 %v634, %v3212
      %v3214 = vpop.f32.mrb[0].mxu0
      %3215 = vmatprep.mubr.bf16.mxu0 0
      %3216 = vmatmul.mubr.bf16.gmra.mrb[0].mxu0 %v2047
      %v3217 = vpop.f32.mrb[0].mxu0
      %v3218 = vadd.f32 %v634, %v3217
      %v3219 = vpop.f32.mrb[0].mxu0
      %v3220 = vpop.f32.mrb[0].mxu0
      %v3221 = vadd.f32 %v634, %v3220
      %v3222 = vpop.f32.mrb[0].mxu0
      %3223 = vmatprep.mubr.bf16.mxu0 0
      %3224 = vmatmul.mubr.bf16.gmra.mrb[0].mxu0 %v2050
      %v3225 = vpop.f32.mrb[0].mxu0
      %v3226 = vadd.f32 %v634, %v3225
      %v3227 = vpop.f32.mrb[0].mxu0
      %v3228 = vpop.f32.mrb[0].mxu0
      %v3229 = vadd.f32 %v634, %v3228
      %v3230 = vpop.f32.mrb[0].mxu0
      %3231 = vmatprep.mubr.bf16.mxu0 0
      %3232 = vmatmul.mubr.bf16.gmra.mrb[0].mxu0 %v2053
      %v3233 = vpop.f32.mrb[0].mxu0
      %v3234 = vadd.f32 %v634, %v3233
      %v3235 = vpop.f32.mrb[0].mxu0
      %v3236 = vpop.f32.mrb[0].mxu0
      %v3237 = vadd.f32 %v634, %v3236
      %v3238 = vpop.f32.mrb[0].mxu0
      %3239 = vmatprep.mubr.bf16.mxu0 0
      %3240 = vmatmul.mubr.bf16.gmra.mrb[0].mxu0 %v2056
      %v3241 = vpop.f32.mrb[0].mxu0
      %v3242 = vadd.f32 %v634, %v3241
      %v3243 = vpop.f32.mrb[0].mxu0
      %v3244 = vpop.f32.mrb[0].mxu0
      %v3245 = vadd.f32 %v634, %v3244
      %v3246 = vpop.f32.mrb[0].mxu0
      %3247 = vmatprep.mubr.bf16.mxu0 0
      %3248 = vmatmul.mubr.bf16.gmra.mrb[0].mxu0 %v2059
      %v3249 = vpop.f32.mrb[0].mxu0
      %v3250 = vadd.f32 %v634, %v3249
      %v3251 = vpop.f32.mrb[0].mxu0
      %v3252 = vpop.f32.mrb[0].mxu0
      %v3253 = vadd.f32 %v634, %v3252
      %v3254 = vpop.f32.mrb[0].mxu0
      %3255 = vmatprep.mubr.bf16.mxu0 0
      %3256 = vmatmul.mubr.bf16.gmra.mrb[0].mxu0 %v2062
      %v3257 = vpop.f32.mrb[0].mxu0
      %v3258 = vadd.f32 %v634, %v3257
      %v3259 = vpop.f32.mrb[0].mxu0
      %v3260 = vpop.f32.mrb[0].mxu0
      %v3261 = vadd.f32 %v634, %v3260
      %v3262 = vpop.f32.mrb[0].mxu0
      %3263 = vmatprep.mubr.bf16.mxu0 0
      %3264 = vmatmul.mubr.bf16.gmra.mrb[0].mxu0 %v2065
      %v3265 = vpop.f32.mrb[0].mxu0
      %v3266 = vadd.f32 %v634, %v3265
      %v3267 = vpop.f32.mrb[0].mxu0
      %v3268 = vpop.f32.mrb[0].mxu0
      %v3269 = vadd.f32 %v634, %v3268
      %v3270 = vpop.f32.mrb[0].mxu0
      %3271 = vmatprep.mubr.bf16.mxu0 0
      %3272 = vmatmul.mubr.bf16.gmra.mrb[0].mxu0 %v2068
      %v3273 = vpop.f32.mrb[0].mxu0
      %v3274 = vadd.f32 %v634, %v3273
      %v3275 = vpop.f32.mrb[0].mxu0
      %v3276 = vpop.f32.mrb[0].mxu0
      %v3277 = vadd.f32 %v634, %v3276
      %v3278 = vpop.f32.mrb[0].mxu0
      %3279 = vmatprep.mubr.bf16.mxu0 0
      %3280 = vmatmul.mubr.bf16.gmra.mrb[0].mxu0 %v2071
      %v3281 = vpop.f32.mrb[0].mxu0
      %v3282 = vadd.f32 %v634, %v3281
      %v3283 = vpop.f32.mrb[0].mxu0
      %v3284 = vpop.f32.mrb[0].mxu0
      %v3285 = vadd.f32 %v634, %v3284
      %v3286 = vpop.f32.mrb[0].mxu0
      %3287 = vmatprep.mubr.bf16.mxu0 0
      %3288 = vmatmul.mubr.bf16.gmra.mrb[0].mxu0 %v2074
      %v3289 = vpop.f32.mrb[0].mxu0
      %v3290 = vadd.f32 %v634, %v3289
      %v3291 = vpop.f32.mrb[0].mxu0
      %v3292 = vpop.f32.mrb[0].mxu0
      %v3293 = vadd.f32 %v634, %v3292
      %v3294 = vpop.f32.mrb[0].mxu0
      %3295 = vmatprep.mubr.bf16.mxu0 0
      %3296 = vmatmul.mubr.bf16.gmra.mrb[0].mxu0 %v2077
      %v3297 = vpop.f32.mrb[0].mxu0
      %v3298 = vadd.f32 %v634, %v3297
      %v3299 = vpop.f32.mrb[0].mxu0
      %v3300 = vpop.f32.mrb[0].mxu0
      %v3301 = vadd.f32 %v634, %v3300
      %v3302 = vpop.f32.mrb[0].mxu0
      %3303 = vmatprep.mubr.bf16.mxu0 0
      %3304 = vmatmul.mubr.bf16.gmra.mrb[0].mxu0 %v2080
      %v3305 = vpop.f32.mrb[0].mxu0
      %v3306 = vadd.f32 %v634, %v3305
      %v3307 = vpop.f32.mrb[0].mxu0
      %v3308 = vpop.f32.mrb[0].mxu0
      %v3309 = vadd.f32 %v634, %v3308
      %v3310 = vpop.f32.mrb[0].mxu0
      %3311 = vmatprep.mubr.bf16.mxu0 0
      %3312 = vmatmul.mubr.bf16.gmra.mrb[0].mxu0 %v2083
      %v3313 = vpop.f32.mrb[0].mxu0
      %v3314 = vadd.f32 %v634, %v3313
      %v3315 = vpop.f32.mrb[0].mxu0
      %v3316 = vpop.f32.mrb[0].mxu0
      %v3317 = vadd.f32 %v634, %v3316
      %v3318 = vpop.f32.mrb[0].mxu0
      %3319 = vmatprep.mubr.bf16.mxu0 0
      %3320 = vmatmul.mubr.bf16.gmra.mrb[0].mxu0 %v2086
      %v3321 = vpop.f32.mrb[0].mxu0
      %v3322 = vadd.f32 %v634, %v3321
      %v3323 = vpop.f32.mrb[0].mxu0
      %v3324 = vpop.f32.mrb[0].mxu0
      %v3325 = vadd.f32 %v634, %v3324
      %v3326 = vpop.f32.mrb[0].mxu0
      %3327 = vmatprep.mubr.bf16.mxu0 0
      %3328 = vmatmul.mubr.bf16.gmra.mrb[0].mxu0 %v2089
      %v3329 = vpop.f32.mrb[0].mxu0
      %v3330 = vadd.f32 %v634, %v3329
      %v3331 = vpop.f32.mrb[0].mxu0
      %v3332 = vpop.f32.mrb[0].mxu0
      %v3333 = vadd.f32 %v634, %v3332
      %v3334 = vpop.f32.mrb[0].mxu0
      %3335 = vmatprep.mubr.bf16.mxu0 0
      %3336 = vmatmul.mubr.bf16.gmra.mrb[0].mxu0 %v2092
      %v3337 = vpop.f32.mrb[0].mxu0
      %v3338 = vadd.f32 %v634, %v3337
      %v3339 = vpop.f32.mrb[0].mxu0
      %v3340 = vpop.f32.mrb[0].mxu0
      %v3341 = vadd.f32 %v634, %v3340
      %v3342 = vpop.f32.mrb[0].mxu0
      %3343 = vmatprep.mubr.bf16.mxu0 0
      %3344 = vmatmul.mubr.bf16.gmra.mrb[0].mxu0 %v2095
      %v3345 = vpop.f32.mrb[0].mxu0
      %v3346 = vadd.f32 %v634, %v3345
      %v3347 = vpop.f32.mrb[0].mxu0
      %v3348 = vpop.f32.mrb[0].mxu0
      %v3349 = vadd.f32 %v634, %v3348
      %v3350 = vpop.f32.mrb[0].mxu0
      %3351 = vmatprep.mubr.bf16.mxu0 0
      %3352 = vmatmul.mubr.bf16.gmra.mrb[0].mxu0 %v2098
      %v3353 = vpop.f32.mrb[0].mxu0
      %v3354 = vadd.f32 %v634, %v3353
      %v3355 = vpop.f32.mrb[0].mxu0
      %v3356 = vpop.f32.mrb[0].mxu0
      %v3357 = vadd.f32 %v634, %v3356
      %v3358 = vpop.f32.mrb[0].mxu0
      %3359 = vmatprep.mubr.bf16.mxu0 0
      %3360 = vmatmul.mubr.bf16.gmra.mrb[0].mxu0 %v2101
      %v3361 = vpop.f32.mrb[0].mxu0
      %v3362 = vadd.f32 %v634, %v3361
      %v3363 = vpop.f32.mrb[0].mxu0
      %v3364 = vpop.f32.mrb[0].mxu0
      %v3365 = vadd.f32 %v634, %v3364
      %v3366 = vpop.f32.mrb[0].mxu0
      %3367 = vmatprep.mubr.bf16.mxu0 0
      %3368 = vmatmul.mubr.bf16.gmra.mrb[0].mxu0 %v2104
      %v3369 = vpop.f32.mrb[0].mxu0
      %v3370 = vadd.f32 %v634, %v3369
      %v3371 = vpop.f32.mrb[0].mxu0
      %v3372 = vpop.f32.mrb[0].mxu0
      %v3373 = vadd.f32 %v634, %v3372
      %v3374 = vpop.f32.mrb[0].mxu0
      %3375 = vmatprep.mubr.bf16.mxu0 0
      %3376 = vmatmul.mubr.bf16.gmra.mrb[0].mxu0 %v2107
      %v3377 = vpop.f32.mrb[0].mxu0
      %v3378 = vadd.f32 %v634, %v3377
      %v3379 = vpop.f32.mrb[0].mxu0
      %v3380 = vpop.f32.mrb[0].mxu0
      %v3381 = vadd.f32 %v634, %v3380
      %v3382 = vpop.f32.mrb[0].mxu0
      %3383 = vmatprep.mubr.bf16.mxu0 0
      %3384 = vmatmul.mubr.bf16.gmra.mrb[0].mxu0 %v2110
      %v3385 = vpop.f32.mrb[0].mxu0
      %v3386 = vadd.f32 %v634, %v3385
      %v3387 = vpop.f32.mrb[0].mxu0
      %v3388 = vpop.f32.mrb[0].mxu0
      %v3389 = vadd.f32 %v634, %v3388
      %v3390 = vpop.f32.mrb[0].mxu0
      %3391 = vmatprep.mubr.bf16.mxu0 0
      %3392 = vmatmul.mubr.bf16.gmra.mrb[0].mxu0 %v2113
      %v3393 = vpop.f32.mrb[0].mxu0
      %v3394 = vadd.f32 %v634, %v3393
      %v3395 = vpop.f32.mrb[0].mxu0
      %v3396 = vpop.f32.mrb[0].mxu0
      %v3397 = vadd.f32 %v634, %v3396
      %v3398 = vpop.f32.mrb[0].mxu0
      %3399 = vmatprep.mubr.bf16.mxu0 0
      %3400 = vmatmul.mubr.bf16.gmra.mrb[0].mxu0 %v2116
      %v3401 = vpop.f32.mrb[0].mxu0
      %v3402 = vadd.f32 %v634, %v3401
      %v3403 = vpop.f32.mrb[0].mxu0
      %v3404 = vpop.f32.mrb[0].mxu0
      %v3405 = vadd.f32 %v634, %v3404
      %v3406 = vpop.f32.mrb[0].mxu0
      %3407 = vmatprep.mubr.bf16.mxu0 0
      %3408 = vmatmul.mubr.bf16.gmra.mrb[0].mxu0 %v2119
      %v3409 = vpop.f32.mrb[0].mxu0
      %v3410 = vadd.f32 %v634, %v3409
      %v3411 = vpop.f32.mrb[0].mxu0
      %v3412 = vpop.f32.mrb[0].mxu0
      %v3413 = vadd.f32 %v634, %v3412
      %v3414 = vpop.f32.mrb[0].mxu0
      %3415 = vmatprep.mubr.bf16.mxu0 0
      %3416 = vmatmul.mubr.bf16.gmra.mrb[0].mxu0 %v2122
      %v3417 = vpop.f32.mrb[0].mxu0
      %v3418 = vadd.f32 %v634, %v3417
      %v3419 = vpop.f32.mrb[0].mxu0
      %v3420 = vpop.f32.mrb[0].mxu0
      %v3421 = vadd.f32 %v634, %v3420
      %v3422 = vpop.f32.mrb[0].mxu0
      %3423 = vmatprep.mubr.bf16.mxu0 0
      %3424 = vmatmul.mubr.bf16.gmra.mrb[0].mxu0 %v2125
      %v3425 = vpop.f32.mrb[0].mxu0
      %v3426 = vadd.f32 %v634, %v3425
      %v3427 = vpop.f32.mrb[0].mxu0
      %v3428 = vpop.f32.mrb[0].mxu0
      %v3429 = vadd.f32 %v634, %v3428
      %v3430 = vpop.f32.mrb[0].mxu0
      %3431 = vmatprep.mubr.bf16.mxu0 0
      %3432 = vmatmul.mubr.bf16.gmra.mrb[0].mxu0 %v2128
      %v3433 = vpop.f32.mrb[0].mxu0
      %v3434 = vadd.f32 %v634, %v3433
      %v3435 = vpop.f32.mrb[0].mxu0
      %v3436 = vpop.f32.mrb[0].mxu0
      %v3437 = vadd.f32 %v634, %v3436
      %v3438 = vpop.f32.mrb[0].mxu0
      %3439 = vmatprep.mubr.bf16.mxu0 0
      %3440 = vmatmul.mubr.bf16.gmra.mrb[0].mxu0 %v2131
      %v3441 = vpop.f32.mrb[0].mxu0
      %v3442 = vadd.f32 %v634, %v3441
      %v3443 = vpop.f32.mrb[0].mxu0
      %v3444 = vpop.f32.mrb[0].mxu0
      %v3445 = vadd.f32 %v634, %v3444
      %v3446 = vpop.f32.mrb[0].mxu0
      %3447 = vmatprep.mubr.bf16.mxu0 0
      %3448 = vmatmul.mubr.bf16.gmra.mrb[0].mxu0 %v2134
      %v3449 = vpop.f32.mrb[0].mxu0
      %v3450 = vadd.f32 %v634, %v3449
      %v3451 = vpop.f32.mrb[0].mxu0
      %v3452 = vpop.f32.mrb[0].mxu0
      %v3453 = vadd.f32 %v634, %v3452
      %v3454 = vpop.f32.mrb[0].mxu0
      %3455 = vmatprep.mubr.bf16.mxu0 0
      %3456 = vmatmul.mubr.bf16.gmra.mrb[0].mxu0 %v2137
      %v3457 = vpop.f32.mrb[0].mxu0
      %v3458 = vadd.f32 %v634, %v3457
      %v3459 = vpop.f32.mrb[0].mxu0
      %v3460 = vpop.f32.mrb[0].mxu0
      %v3461 = vadd.f32 %v634, %v3460
      %v3462 = vpop.f32.mrb[0].mxu0
      %3463 = vmatprep.mubr.bf16.mxu0 0
      %3464 = vmatmul.mubr.bf16.gmra.mrb[0].mxu0 %v2140
      %v3465 = vpop.f32.mrb[0].mxu0
      %v3466 = vadd.f32 %v634, %v3465
      %v3467 = vpop.f32.mrb[0].mxu0
      %v3468 = vpop.f32.mrb[0].mxu0
      %v3469 = vadd.f32 %v634, %v3468
      %v3470 = vpop.f32.mrb[0].mxu0
      %3471 = vmatprep.mubr.bf16.mxu0 0
      %3472 = vmatmul.mubr.bf16.gmra.mrb[0].mxu0 %v2143
      %v3473 = vpop.f32.mrb[0].mxu0
      %v3474 = vadd.f32 %v634, %v3473
      %v3475 = vpop.f32.mrb[0].mxu0
      %v3476 = vpop.f32.mrb[0].mxu0
      %v3477 = vadd.f32 %v634, %v3476
      %v3478 = vpop.f32.mrb[0].mxu0
      %3479 = vmatprep.mubr.bf16.mxu0 0
      %3480 = vmatmul.mubr.bf16.gmra.mrb[0].mxu0 %v2146
      %v3481 = vpop.f32.mrb[0].mxu0
      %v3482 = vadd.f32 %v634, %v3481
      %v3483 = vpop.f32.mrb[0].mxu0
      %v3484 = vpop.f32.mrb[0].mxu0
      %v3485 = vadd.f32 %v634, %v3484
      %v3486 = vpop.f32.mrb[0].mxu0
      %3487 = vmatprep.mubr.bf16.mxu0 0
      %3488 = vmatmul.mubr.bf16.gmra.mrb[0].mxu0 %v2149
      %v3489 = vpop.f32.mrb[0].mxu0
      %v3490 = vadd.f32 %v634, %v3489
      %v3491 = vpop.f32.mrb[0].mxu0
      %v3492 = vpop.f32.mrb[0].mxu0
      %v3493 = vadd.f32 %v634, %v3492
      %v3494 = vpop.f32.mrb[0].mxu0
      %3495 = vmatprep.mubr.bf16.mxu0 0
      %3496 = vmatmul.mubr.bf16.gmra.mrb[0].mxu0 %v2152
      %v3497 = vpop.f32.mrb[0].mxu0
      %v3498 = vadd.f32 %v634, %v3497
      %v3499 = vpop.f32.mrb[0].mxu0
      %v3500 = vpop.f32.mrb[0].mxu0
      %v3501 = vadd.f32 %v634, %v3500
      %v3502 = vpop.f32.mrb[0].mxu0
      %3503 = vmatprep.mubr.bf16.mxu0 0
      %3504 = vmatmul.mubr.bf16.gmra.mrb[0].mxu0 %v2155
      %v3505 = vpop.f32.mrb[0].mxu0
      %v3506 = vadd.f32 %v634, %v3505
      %v3507 = vpop.f32.mrb[0].mxu0
      %v3508 = vpop.f32.mrb[0].mxu0
      %v3509 = vadd.f32 %v634, %v3508
      %v3510 = vpop.f32.mrb[0].mxu0
      %3511 = vmatprep.mubr.bf16.mxu0 0
      %3512 = vmatmul.mubr.bf16.gmra.mrb[0].mxu0 %v2158
      %v3513 = vpop.f32.mrb[0].mxu0
      %v3514 = vadd.f32 %v634, %v3513
      %v3515 = vpop.f32.mrb[0].mxu0
      %v3516 = vpop.f32.mrb[0].mxu0
      %v3517 = vadd.f32 %v634, %v3516
      %v3518 = vpop.f32.mrb[0].mxu0
      %3519 = vmatprep.mubr.bf16.mxu0 0
      %3520 = vmatmul.mubr.bf16.gmra.mrb[0].mxu0 %v2161
      %v3521 = vpop.f32.mrb[0].mxu0
      %v3522 = vadd.f32 %v634, %v3521
      %v3523 = vpop.f32.mrb[0].mxu0
      %v3524 = vpop.f32.mrb[0].mxu0
      %v3525 = vadd.f32 %v634, %v3524
      %v3526 = vpop.f32.mrb[0].mxu0
      %3527 = vmatprep.mubr.bf16.mxu0 0
      %3528 = vmatmul.mubr.bf16.gmra.mrb[0].mxu0 %v2164
      %v3529 = vpop.f32.mrb[0].mxu0
      %v3530 = vadd.f32 %v634, %v3529
      %v3531 = vpop.f32.mrb[0].mxu0
      %v3532 = vpop.f32.mrb[0].mxu0
      %v3533 = vadd.f32 %v634, %v3532
      %v3534 = vpop.f32.mrb[0].mxu0
      %3535 = vmatprep.mubr.bf16.mxu0 0
      %3536 = vmatmul.mubr.bf16.gmra.mrb[0].mxu0 %v2167
      %v3537 = vpop.f32.mrb[0].mxu0
      %v3538 = vadd.f32 %v634, %v3537
      %v3539 = vpop.f32.mrb[0].mxu0
      %v3540 = vpop.f32.mrb[0].mxu0
      %v3541 = vadd.f32 %v634, %v3540
      %v3542 = vpop.f32.mrb[0].mxu0
      %3543 = vmatprep.mubr.bf16.mxu0 0
      %3544 = vmatmul.mubr.bf16.gmra.mrb[0].mxu0 %v2170
      %v3545 = vpop.f32.mrb[0].mxu0
      %v3546 = vadd.f32 %v634, %v3545
      %v3547 = vpop.f32.mrb[0].mxu0
      %v3548 = vpop.f32.mrb[0].mxu0
      %v3549 = vadd.f32 %v634, %v3548
      %v3550 = vpop.f32.mrb[0].mxu0
      %3551 = vmatprep.mubr.bf16.mxu0 0
      %3552 = vmatmul.mubr.bf16.gmra.mrb[0].mxu0 %v2173
      %v3553 = vpop.f32.mrb[0].mxu0
      %v3554 = vadd.f32 %v634, %v3553
      %v3555 = vpop.f32.mrb[0].mxu0
      %v3556 = vpop.f32.mrb[0].mxu0
      %v3557 = vadd.f32 %v634, %v3556
      %v3558 = vpop.f32.mrb[0].mxu0
      %3559 = vmatprep.mubr.bf16.mxu0 0
      %3560 = vmatmul.mubr.bf16.gmra.mrb[0].mxu0 %v2176
      %v3561 = vpop.f32.mrb[0].mxu0
      %v3562 = vadd.f32 %v634, %v3561
      %v3563 = vpop.f32.mrb[0].mxu0
      %v3564 = vpop.f32.mrb[0].mxu0
      %v3565 = vadd.f32 %v634, %v3564
      %v3566 = vpop.f32.mrb[0].mxu0
      %3567 = vmatprep.mubr.bf16.mxu0 0
      %3568 = vmatmul.mubr.bf16.gmra.mrb[0].mxu0 %v2179
      %v3569 = vpop.f32.mrb[0].mxu0
      %v3570 = vadd.f32 %v634, %v3569
      %v3571 = vpop.f32.mrb[0].mxu0
      %v3572 = vpop.f32.mrb[0].mxu0
      %v3573 = vadd.f32 %v634, %v3572
      %v3574 = vpop.f32.mrb[0].mxu0
      %3575 = vmatprep.mubr.bf16.mxu0 0
      %3576 = vmatmul.mubr.bf16.gmra.mrb[0].mxu0 %v2182
      %v3577 = vpop.f32.mrb[0].mxu0
      %v3578 = vadd.f32 %v634, %v3577
      %v3579 = vpop.f32.mrb[0].mxu0
      %v3580 = vpop.f32.mrb[0].mxu0
      %v3581 = vadd.f32 %v634, %v3580
      %v3582 = vpop.f32.mrb[0].mxu0
      %3583 = vmatprep.mubr.bf16.mxu0 0
      %3584 = vmatmul.mubr.bf16.gmra.mrb[0].mxu0 %v2185
      %v3585 = vpop.f32.mrb[0].mxu0
      %v3586 = vadd.f32 %v634, %v3585
      %v3587 = vpop.f32.mrb[0].mxu0
      %v3588 = vpop.f32.mrb[0].mxu0
      %v3589 = vadd.f32 %v634, %v3588
      %v3590 = vpop.f32.mrb[0].mxu0
      %3591 = vmatprep.mubr.bf16.mxu0 0
      %3592 = vmatmul.mubr.bf16.gmra.mrb[0].mxu0 %v2188
      %v3593 = vpop.f32.mrb[0].mxu0
      %v3594 = vadd.f32 %v634, %v3593
      %v3595 = vpop.f32.mrb[0].mxu0
      %v3596 = vpop.f32.mrb[0].mxu0
      %v3597 = vadd.f32 %v634, %v3596
      %v3598 = vpop.f32.mrb[0].mxu0
      %3599 = vmatprep.mubr.bf16.mxu0 0
      %3600 = vmatmul.mubr.bf16.gmra.mrb[0].mxu0 %v2191
      %v3601 = vpop.f32.mrb[0].mxu0
      %v3602 = vadd.f32 %v634, %v3601
      %v3603 = vpop.f32.mrb[0].mxu0
      %v3604 = vpop.f32.mrb[0].mxu0
      %v3605 = vadd.f32 %v634, %v3604
      %v3606 = vpop.f32.mrb[0].mxu0
      %3607 = vmatprep.mubr.bf16.mxu0 0
      %3608 = vmatmul.mubr.bf16.gmra.mrb[0].mxu0 %v2194
      %v3609 = vpop.f32.mrb[0].mxu0
      %v3610 = vadd.f32 %v634, %v3609
      %v3611 = vpop.f32.mrb[0].mxu0
      %v3612 = vpop.f32.mrb[0].mxu0
      %v3613 = vadd.f32 %v634, %v3612
      %v3614 = vpop.f32.mrb[0].mxu0
      %3615 = vmatprep.mubr.bf16.mxu0 0
      %3616 = vmatmul.mubr.bf16.gmra.mrb[0].mxu0 %v2197
      %v3617 = vpop.f32.mrb[0].mxu0
      %v3618 = vadd.f32 %v634, %v3617
      %v3619 = vpop.f32.mrb[0].mxu0
      %v3620 = vpop.f32.mrb[0].mxu0
      %v3621 = vadd.f32 %v634, %v3620
      %v3622 = vpop.f32.mrb[0].mxu0
      %3623 = vmatprep.mubr.bf16.mxu0 0
      %3624 = vmatmul.mubr.bf16.gmra.mrb[0].mxu0 %v2200
      %v3625 = vpop.f32.mrb[0].mxu0
      %v3626 = vadd.f32 %v634, %v3625
      %v3627 = vpop.f32.mrb[0].mxu0
      %v3628 = vpop.f32.mrb[0].mxu0
      %v3629 = vadd.f32 %v634, %v3628
      %v3630 = vpop.f32.mrb[0].mxu0
      %3631 = vmatprep.mubr.bf16.mxu0 0
      %3632 = vmatmul.mubr.bf16.gmra.mrb[0].mxu0 %v2203
      %v3633 = vpop.f32.mrb[0].mxu0
      %v3634 = vadd.f32 %v634, %v3633
      %v3635 = vpop.f32.mrb[0].mxu0
      %v3636 = vpop.f32.mrb[0].mxu0
      %v3637 = vadd.f32 %v634, %v3636
      %v3638 = vpop.f32.mrb[0].mxu0
      %3639 = vmatprep.mubr.bf16.mxu0 0
      %3640 = vmatmul.mubr.bf16.gmra.mrb[0].mxu0 %v2206
      %v3641 = vpop.f32.mrb[0].mxu0
      %v3642 = vadd.f32 %v634, %v3641
      %v3643 = vpop.f32.mrb[0].mxu0
      %v3644 = vpop.f32.mrb[0].mxu0
      %v3645 = vadd.f32 %v634, %v3644
      %v3646 = vpop.f32.mrb[0].mxu0
      %3647 = vmatprep.mubr.bf16.mxu0 0
      %3648 = vmatmul.mubr.bf16.gmra.mrb[0].mxu0 %v2209
      %v3649 = vpop.f32.mrb[0].mxu0
      %v3650 = vadd.f32 %v634, %v3649
      %v3651 = vpop.f32.mrb[0].mxu0
      %v3652 = vpop.f32.mrb[0].mxu0
      %v3653 = vadd.f32 %v634, %v3652
      %v3654 = vpop.f32.mrb[0].mxu0
      %3655 = vmatprep.mubr.bf16.mxu0 0
      %3656 = vmatmul.mubr.bf16.gmra.mrb[0].mxu0 %v2212
      %v3657 = vpop.f32.mrb[0].mxu0
      %v3658 = vadd.f32 %v634, %v3657
      %v3659 = vpop.f32.mrb[0].mxu0
      %v3660 = vpop.f32.mrb[0].mxu0
      %v3661 = vadd.f32 %v634, %v3660
      %v3662 = vpop.f32.mrb[0].mxu0
      %3663 = vmatprep.mubr.bf16.mxu0 0
      %3664 = vmatmul.mubr.bf16.gmra.mrb[0].mxu0 %v2215
      %v3665 = vpop.f32.mrb[0].mxu0
      %v3666 = vadd.f32 %v634, %v3665
      %v3667 = vpop.f32.mrb[0].mxu0
      %v3668 = vpop.f32.mrb[0].mxu0
      %v3669 = vadd.f32 %v634, %v3668
      %v3670 = vpop.f32.mrb[0].mxu0
      %3671 = vmatprep.mubr.bf16.mxu0 0
      %3672 = vmatmul.mubr.bf16.gmra.mrb[0].mxu0 %v2218
      %v3673 = vpop.f32.mrb[0].mxu0
      %v3674 = vadd.f32 %v634, %v3673
      %v3675 = vpop.f32.mrb[0].mxu0
      %v3676 = vpop.f32.mrb[0].mxu0
      %v3677 = vadd.f32 %v634, %v3676
      %v3678 = vpop.f32.mrb[0].mxu0
      %3679 = vmatprep.mubr.bf16.mxu0 0
      %3680 = vmatmul.mubr.bf16.gmra.mrb[0].mxu0 %v2221
      %v3681 = vpop.f32.mrb[0].mxu0
      %v3682 = vadd.f32 %v634, %v3681
      %v3683 = vpop.f32.mrb[0].mxu0
      %v3684 = vpop.f32.mrb[0].mxu0
      %v3685 = vadd.f32 %v634, %v3684
      %v3686 = vpop.f32.mrb[0].mxu0
      %3687 = vmatprep.mubr.bf16.mxu0 0
      %3688 = vmatmul.mubr.bf16.gmra.mrb[0].mxu0 %v2224
      %v3689 = vpop.f32.mrb[0].mxu0
      %v3690 = vadd.f32 %v634, %v3689
      %v3691 = vpop.f32.mrb[0].mxu0
      %v3692 = vpop.f32.mrb[0].mxu0
      %v3693 = vadd.f32 %v634, %v3692
      %v3694 = vpop.f32.mrb[0].mxu0
      %3695 = vmatprep.mubr.bf16.mxu0 0
      %3696 = vmatmul.mubr.bf16.gmra.mrb[0].mxu0 %v2227
      %v3697 = vpop.f32.mrb[0].mxu0
      %v3698 = vadd.f32 %v634, %v3697
      %v3699 = vpop.f32.mrb[0].mxu0
      %v3700 = vpop.f32.mrb[0].mxu0
      %v3701 = vadd.f32 %v634, %v3700
      %v3702 = vpop.f32.mrb[0].mxu0
      %3703 = vmatprep.mubr.bf16.mxu0 0
      %3704 = vmatmul.mubr.bf16.gmra.mrb[0].mxu0 %v2230
      %v3705 = vpop.f32.mrb[0].mxu0
      %v3706 = vadd.f32 %v634, %v3705
      %v3707 = vpop.f32.mrb[0].mxu0
      %v3708 = vpop.f32.mrb[0].mxu0
      %v3709 = vadd.f32 %v634, %v3708
      %v3710 = vpop.f32.mrb[0].mxu0
      %3711 = vmatprep.mubr.bf16.mxu0 0
      %3712 = vmatmul.mubr.bf16.gmra.mrb[0].mxu0 %v2233
      %v3713 = vpop.f32.mrb[0].mxu0
      %v3714 = vadd.f32 %v634, %v3713
      %v3715 = vpop.f32.mrb[0].mxu0
      %v3716 = vpop.f32.mrb[0].mxu0
      %v3717 = vadd.f32 %v634, %v3716
      %v3718 = vpop.f32.mrb[0].mxu0
      %3719 = vmatprep.mubr.bf16.mxu0 0
      %3720 = vmatmul.mubr.bf16.gmra.mrb[0].mxu0 %v2236
      %v3721 = vpop.f32.mrb[0].mxu0
      %v3722 = vadd.f32 %v634, %v3721
      %v3723 = vpop.f32.mrb[0].mxu0
      %v3724 = vpop.f32.mrb[0].mxu0
      %v3725 = vadd.f32 %v634, %v3724
      %v3726 = vpop.f32.mrb[0].mxu0
      %3727 = vmatprep.mubr.bf16.mxu0 0
      %3728 = vmatmul.mubr.bf16.gmra.mrb[0].mxu0 %v2239
      %v3729 = vpop.f32.mrb[0].mxu0
      %v3730 = vadd.f32 %v634, %v3729
      %v3731 = vpop.f32.mrb[0].mxu0
      %v3732 = vpop.f32.mrb[0].mxu0
      %v3733 = vadd.f32 %v634, %v3732
      %v3734 = vpop.f32.mrb[0].mxu0
      %3735 = vmatprep.mubr.bf16.mxu0 0
      %3736 = vmatmul.mubr.bf16.gmra.mrb[0].mxu0 %v2242
      %v3737 = vpop.f32.mrb[0].mxu0
      %v3738 = vadd.f32 %v634, %v3737
      %v3739 = vpop.f32.mrb[0].mxu0
      %v3740 = vpop.f32.mrb[0].mxu0
      %v3741 = vadd.f32 %v634, %v3740
      %v3742 = vpop.f32.mrb[0].mxu0
      %3743 = vmatprep.mubr.bf16.mxu0 0
      %3744 = vmatmul.mubr.bf16.gmra.mrb[0].mxu0 %v2245
      %v3745 = vpop.f32.mrb[0].mxu0
      %v3746 = vadd.f32 %v634, %v3745
      %v3747 = vpop.f32.mrb[0].mxu0
      %v3748 = vpop.f32.mrb[0].mxu0
      %v3749 = vadd.f32 %v634, %v3748
      %v3750 = vpop.f32.mrb[0].mxu0
      %3751 = vmatprep.mubr.bf16.mxu0 0
      %3752 = vmatmul.mubr.bf16.gmra.mrb[0].mxu0 %v2248
      %v3753 = vpop.f32.mrb[0].mxu0
      %v3754 = vadd.f32 %v634, %v3753
      %v3755 = vpop.f32.mrb[0].mxu0
      %v3756 = vpop.f32.mrb[0].mxu0
      %v3757 = vadd.f32 %v634, %v3756
      %v3758 = vpop.f32.mrb[0].mxu0
      %3759 = vmatprep.mubr.bf16.mxu0 0
      %3760 = vmatmul.mubr.bf16.gmra.mrb[0].mxu0 %v2251
      %v3761 = vpop.f32.mrb[0].mxu0
      %v3762 = vadd.f32 %v634, %v3761
      %v3763 = vpop.f32.mrb[0].mxu0
      %v3764 = vpop.f32.mrb[0].mxu0
      %v3765 = vadd.f32 %v634, %v3764
      %v3766 = vpop.f32.mrb[0].mxu0
      %3767 = vmatprep.mubr.bf16.mxu0 0
      %3768 = vmatmul.mubr.bf16.gmra.mrb[0].mxu0 %v2254
      %v3769 = vpop.f32.mrb[0].mxu0
      %v3770 = vadd.f32 %v634, %v3769
      %v3771 = vpop.f32.mrb[0].mxu0
      %v3772 = vpop.f32.mrb[0].mxu0
      %v3773 = vadd.f32 %v634, %v3772
      %v3774 = vpop.f32.mrb[0].mxu0
      %3775 = vmatprep.mubr.bf16.mxu0 0
      %3776 = vmatmul.mubr.bf16.gmra.mrb[0].mxu0 %v2257
      %v3777 = vpop.f32.mrb[0].mxu0
      %v3778 = vadd.f32 %v634, %v3777
      %v3779 = vpop.f32.mrb[0].mxu0
      %v3780 = vpop.f32.mrb[0].mxu0
      %v3781 = vadd.f32 %v634, %v3780
      %v3782 = vpop.f32.mrb[0].mxu0
      %3783 = vmatprep.mubr.bf16.mxu0 0
      %3784 = vmatmul.mubr.bf16.gmra.mrb[0].mxu0 %v2260
      %v3785 = vpop.f32.mrb[0].mxu0
      %v3786 = vadd.f32 %v634, %v3785
      %v3787 = vpop.f32.mrb[0].mxu0
      %v3788 = vpop.f32.mrb[0].mxu0
      %v3789 = vadd.f32 %v634, %v3788
      %v3790 = vpop.f32.mrb[0].mxu0
      %3791 = vmatprep.mubr.bf16.mxu0 0
      %3792 = vmatmul.mubr.bf16.gmra.mrb[0].mxu0 %v2263
      %v3793 = vpop.f32.mrb[0].mxu0
      %v3794 = vadd.f32 %v634, %v3793
      %v3795 = vpop.f32.mrb[0].mxu0
      %v3796 = vpop.f32.mrb[0].mxu0
      %v3797 = vadd.f32 %v634, %v3796
      %v3798 = vpop.f32.mrb[0].mxu0
      %3799 = vmatprep.mubr.bf16.mxu0 0
      %3800 = vmatmul.mubr.bf16.gmra.mrb[0].mxu0 %v2266
      %v3801 = vpop.f32.mrb[0].mxu0
      %v3802 = vadd.f32 %v634, %v3801
      %v3803 = vpop.f32.mrb[0].mxu0
      %v3804 = vpop.f32.mrb[0].mxu0
      %v3805 = vadd.f32 %v634, %v3804
      %v3806 = vpop.f32.mrb[0].mxu0
      %3807 = vmatprep.mubr.bf16.mxu0 0
      %3808 = vmatmul.mubr.bf16.gmra.mrb[0].mxu0 %v2269
      %v3809 = vpop.f32.mrb[0].mxu0
      %v3810 = vadd.f32 %v634, %v3809
      %v3811 = vpop.f32.mrb[0].mxu0
      %v3812 = vpop.f32.mrb[0].mxu0
      %v3813 = vadd.f32 %v634, %v3812
      %v3814 = vpop.f32.mrb[0].mxu0
      %3815 = vmatprep.mubr.bf16.mxu0 0
      %3816 = vmatmul.mubr.bf16.gmra.mrb[0].mxu0 %v2272
      %v3817 = vpop.f32.mrb[0].mxu0
      %v3818 = vadd.f32 %v634, %v3817
      %v3819 = vpop.f32.mrb[0].mxu0
      %v3820 = vpop.f32.mrb[0].mxu0
      %v3821 = vadd.f32 %v634, %v3820
      %v3822 = vpop.f32.mrb[0].mxu0
      %3823 = vmatprep.mubr.bf16.mxu0 0
      %3824 = vmatmul.mubr.bf16.gmra.mrb[0].mxu0 %v2275
      %v3825 = vpop.f32.mrb[0].mxu0
      %v3826 = vadd.f32 %v634, %v3825
      %v3827 = vpop.f32.mrb[0].mxu0
      %v3828 = vpop.f32.mrb[0].mxu0
      %v3829 = vadd.f32 %v634, %v3828
      %v3830 = vpop.f32.mrb[0].mxu0
      %3831 = vmatprep.mubr.bf16.mxu0 0
      %3832 = vmatmul.mubr.bf16.gmra.mrb[0].mxu0 %v2278
      %v3833 = vpop.f32.mrb[0].mxu0
      %v3834 = vadd.f32 %v634, %v3833
      %v3835 = vpop.f32.mrb[0].mxu0
      %v3836 = vpop.f32.mrb[0].mxu0
      %v3837 = vadd.f32 %v634, %v3836
      %v3838 = vpop.f32.mrb[0].mxu0
      %3839 = vmatprep.mubr.bf16.mxu0 0
      %3840 = vmatmul.mubr.bf16.gmra.mrb[0].mxu0 %v2281
      %v3841 = vpop.f32.mrb[0].mxu0
      %v3842 = vadd.f32 %v634, %v3841
      %v3843 = vpop.f32.mrb[0].mxu0
      %v3844 = vpop.f32.mrb[0].mxu0
      %v3845 = vadd.f32 %v634, %v3844
      %v3846 = vpop.f32.mrb[0].mxu0
      %3847 = vmatprep.mubr.bf16.mxu0 0
      %3848 = vmatmul.mubr.bf16.gmra.mrb[0].mxu0 %v2284
      %v3849 = vpop.f32.mrb[0].mxu0
      %v3850 = vadd.f32 %v634, %v3849
      %v3851 = vpop.f32.mrb[0].mxu0
      %v3852 = vpop.f32.mrb[0].mxu0
      %v3853 = vadd.f32 %v634, %v3852
      %v3854 = vpop.f32.mrb[0].mxu0
      %3855 = vmatprep.mubr.bf16.mxu0 0
      %3856 = vmatmul.mubr.bf16.gmra.mrb[0].mxu0 %v2287
      %v3857 = vpop.f32.mrb[0].mxu0
      %v3858 = vadd.f32 %v634, %v3857
      %v3859 = vpop.f32.mrb[0].mxu0
      %v3860 = vpop.f32.mrb[0].mxu0
      %v3861 = vadd.f32 %v634, %v3860
      %v3862 = vpop.f32.mrb[0].mxu0
      %3863 = vmatprep.mubr.bf16.mxu0 0
      %3864 = vmatmul.mubr.bf16.gmra.mrb[0].mxu0 %v2290
      %v3865 = vpop.f32.mrb[0].mxu0
      %v3866 = vadd.f32 %v634, %v3865
      %v3867 = vpop.f32.mrb[0].mxu0
      %v3868 = vpop.f32.mrb[0].mxu0
      %v3869 = vadd.f32 %v634, %v3868
      %v3870 = vpop.f32.mrb[0].mxu0
      %3871 = vmatprep.mubr.bf16.mxu0 0
      %3872 = vmatmul.mubr.bf16.gmra.mrb[0].mxu0 %v2293
      %v3873 = vpop.f32.mrb[0].mxu0
      %v3874 = vadd.f32 %v634, %v3873
      %v3875 = vpop.f32.mrb[0].mxu0
      %v3876 = vpop.f32.mrb[0].mxu0
      %v3877 = vadd.f32 %v634, %v3876
      %v3878 = vpop.f32.mrb[0].mxu0
      %3879 = vmatprep.mubr.bf16.mxu0 0
      %3880 = vmatmul.mubr.bf16.gmra.mrb[0].mxu0 %v2296
      %v3881 = vpop.f32.mrb[0].mxu0
      %v3882 = vadd.f32 %v634, %v3881
      %v3883 = vpop.f32.mrb[0].mxu0
      %v3884 = vpop.f32.mrb[0].mxu0
      %v3885 = vadd.f32 %v634, %v3884
      %v3886 = vpop.f32.mrb[0].mxu0
      %3887 = vmatprep.mubr.bf16.mxu0 0
      %3888 = vmatmul.mubr.bf16.gmra.mrb[0].mxu0 %v2299
      %v3889 = vpop.f32.mrb[0].mxu0
      %v3890 = vadd.f32 %v634, %v3889
      %v3891 = vpop.f32.mrb[0].mxu0
      %v3892 = vpop.f32.mrb[0].mxu0
      %v3893 = vadd.f32 %v634, %v3892
      %v3894 = vpop.f32.mrb[0].mxu0
      %3895 = vmatprep.mubr.bf16.mxu0 0
      %3896 = vmatmul.mubr.bf16.gmra.mrb[0].mxu0 %v2302
      %v3897 = vpop.f32.mrb[0].mxu0
      %v3898 = vadd.f32 %v634, %v3897
      %v3899 = vpop.f32.mrb[0].mxu0
      %v3900 = vpop.f32.mrb[0].mxu0
      %v3901 = vadd.f32 %v634, %v3900
      %v3902 = vpop.f32.mrb[0].mxu0
      %3903 = vmatprep.mubr.bf16.mxu0 0
      %3904 = vmatmul.mubr.bf16.gmra.mrb[0].mxu0 %v2305
      %v3905 = vpop.f32.mrb[0].mxu0
      %v3906 = vadd.f32 %v634, %v3905
      %v3907 = vpop.f32.mrb[0].mxu0
      %v3908 = vpop.f32.mrb[0].mxu0
      %v3909 = vadd.f32 %v634, %v3908
      %v3910 = vpop.f32.mrb[0].mxu0
      %3911 = vmatprep.mubr.bf16.mxu0 0
      %3912 = vmatmul.mubr.bf16.gmra.mrb[0].mxu0 %v2308
      %v3913 = vpop.f32.mrb[0].mxu0
      %v3914 = vadd.f32 %v634, %v3913
      %v3915 = vpop.f32.mrb[0].mxu0
      %v3916 = vpop.f32.mrb[0].mxu0
      %v3917 = vadd.f32 %v634, %v3916
      %v3918 = vpop.f32.mrb[0].mxu0
      %3919 = vmatprep.mubr.bf16.mxu0 0
      %3920 = vmatmul.mubr.bf16.gmra.mrb[0].mxu0 %v2311
      %v3921 = vpop.f32.mrb[0].mxu0
      %v3922 = vadd.f32 %v634, %v3921
      %v3923 = vpop.f32.mrb[0].mxu0
      %v3924 = vpop.f32.mrb[0].mxu0
      %v3925 = vadd.f32 %v634, %v3924
      %v3926 = vpop.f32.mrb[0].mxu0
      %3927 = vmatprep.mubr.bf16.mxu0 0
      %3928 = vmatmul.mubr.bf16.gmra.mrb[0].mxu0 %v2314
      %v3929 = vpop.f32.mrb[0].mxu0
      %v3930 = vadd.f32 %v634, %v3929
      %v3931 = vpop.f32.mrb[0].mxu0
      %v3932 = vpop.f32.mrb[0].mxu0
      %v3933 = vadd.f32 %v634, %v3932
      %v3934 = vpop.f32.mrb[0].mxu0
      %3935 = vmatprep.mubr.bf16.mxu0 0
      %3936 = vmatmul.mubr.bf16.gmra.mrb[0].mxu0 %v2317
      %v3937 = vpop.f32.mrb[0].mxu0
      %v3938 = vadd.f32 %v634, %v3937
      %v3939 = vpop.f32.mrb[0].mxu0
      %v3940 = vpop.f32.mrb[0].mxu0
      %v3941 = vadd.f32 %v634, %v3940
      %v3942 = vpop.f32.mrb[0].mxu0
      %3943 = vmatprep.mubr.bf16.mxu0 0
      %3944 = vmatmul.mubr.bf16.gmra.mrb[0].mxu0 %v2320
      %v3945 = vpop.f32.mrb[0].mxu0
      %v3946 = vadd.f32 %v634, %v3945
      %v3947 = vpop.f32.mrb[0].mxu0
      %v3948 = vpop.f32.mrb[0].mxu0
      %v3949 = vadd.f32 %v634, %v3948
      %v3950 = vpop.f32.mrb[0].mxu0
      %3951 = vmatprep.mubr.bf16.mxu0 0
      %3952 = vmatmul.mubr.bf16.gmra.mrb[0].mxu0 %v2323
      %v3953 = vpop.f32.mrb[0].mxu0
      %v3954 = vadd.f32 %v634, %v3953
      %v3955 = vpop.f32.mrb[0].mxu0
      %v3956 = vpop.f32.mrb[0].mxu0
      %v3957 = vadd.f32 %v634, %v3956
      %v3958 = vpop.f32.mrb[0].mxu0
      %3959 = vmatprep.mubr.bf16.mxu0 0
      %3960 = vmatmul.mubr.bf16.gmra.mrb[0].mxu0 %v2326
      %v3961 = vpop.f32.mrb[0].mxu0
      %v3962 = vadd.f32 %v634, %v3961
      %v3963 = vpop.f32.mrb[0].mxu0
      %v3964 = vpop.f32.mrb[0].mxu0
      %v3965 = vadd.f32 %v634, %v3964
      %v3966 = vpop.f32.mrb[0].mxu0
      %3967 = vmatprep.mubr.bf16.mxu0 0
      %3968 = vmatmul.mubr.bf16.gmra.mrb[0].mxu0 %v2329
      %v3969 = vpop.f32.mrb[0].mxu0
      %v3970 = vadd.f32 %v634, %v3969
      %v3971 = vpop.f32.mrb[0].mxu0
      %v3972 = vpop.f32.mrb[0].mxu0
      %v3973 = vadd.f32 %v634, %v3972
      %v3974 = vpop.f32.mrb[0].mxu0
      %3975 = vmatprep.mubr.bf16.mxu0 0
      %3976 = vmatmul.mubr.bf16.gmra.mrb[0].mxu0 %v2332
      %v3977 = vpop.f32.mrb[0].mxu0
      %v3978 = vadd.f32 %v634, %v3977
      %v3979 = vpop.f32.mrb[0].mxu0
      %v3980 = vpop.f32.mrb[0].mxu0
      %v3981 = vadd.f32 %v634, %v3980
      %v3982 = vpop.f32.mrb[0].mxu0
      %3983 = vmatprep.mubr.bf16.mxu0 0
      %3984 = vmatmul.mubr.bf16.gmra.mrb[0].mxu0 %v2335
      %v3985 = vpop.f32.mrb[0].mxu0
      %v3986 = vadd.f32 %v634, %v3985
      %v3987 = vpop.f32.mrb[0].mxu0
      %v3988 = vpop.f32.mrb[0].mxu0
      %v3989 = vadd.f32 %v634, %v3988
      %v3990 = vpop.f32.mrb[0].mxu0
      %3991 = vmatprep.mubr.bf16.mxu0 0
      %3992 = vmatmul.mubr.bf16.gmra.mrb[0].mxu0 %v2338
      %v3993 = vpop.f32.mrb[0].mxu0
      %v3994 = vadd.f32 %v634, %v3993
      %v3995 = vpop.f32.mrb[0].mxu0
      %v3996 = vpop.f32.mrb[0].mxu0
      %v3997 = vadd.f32 %v634, %v3996
      %v3998 = vpop.f32.mrb[0].mxu0
      %3999 = vmatprep.mubr.bf16.mxu0 0
      %4000 = vmatmul.mubr.bf16.gmra.mrb[0].mxu0 %v2341
      %v4001 = vpop.f32.mrb[0].mxu0
      %v4002 = vadd.f32 %v634, %v4001
      %v4003 = vpop.f32.mrb[0].mxu0
      %v4004 = vpop.f32.mrb[0].mxu0
      %v4005 = vadd.f32 %v634, %v4004
      %v4006 = vpop.f32.mrb[0].mxu0
      %4007 = vmatprep.mubr.bf16.mxu0 0
      %4008 = vmatmul.mubr.bf16.gmra.mrb[0].mxu0 %v2344
      %v4009 = vpop.f32.mrb[0].mxu0
      %v4010 = vadd.f32 %v634, %v4009
      %v4011 = vpop.f32.mrb[0].mxu0
      %v4012 = vpop.f32.mrb[0].mxu0
      %v4013 = vadd.f32 %v634, %v4012
      %v4014 = vpop.f32.mrb[0].mxu0
      %4015 = vmatprep.mubr.bf16.mxu0 0
      %4016 = vmatmul.mubr.bf16.gmra.mrb[0].mxu0 %v2347
      %v4017 = vpop.f32.mrb[0].mxu0
      %v4018 = vadd.f32 %v634, %v4017
      %v4019 = vpop.f32.mrb[0].mxu0
      %v4020 = vpop.f32.mrb[0].mxu0
      %v4021 = vadd.f32 %v634, %v4020
      %v4022 = vpop.f32.mrb[0].mxu0
      %4023 = vmatprep.mubr.bf16.mxu0 0
      %4024 = vmatmul.mubr.bf16.gmra.mrb[0].mxu0 %v2350
      %v4025 = vpop.f32.mrb[0].mxu0
      %v4026 = vadd.f32 %v634, %v4025
      %v4027 = vpop.f32.mrb[0].mxu0
      %v4028 = vpop.f32.mrb[0].mxu0
      %v4029 = vadd.f32 %v634, %v4028
      %v4030 = vpop.f32.mrb[0].mxu0
      %4031 = vmatprep.mubr.bf16.mxu0 0
      %4032 = vmatmul.mubr.bf16.gmra.mrb[0].mxu0 %v2353
      %v4033 = vpop.f32.mrb[0].mxu0
      %v4034 = vadd.f32 %v634, %v4033
      %v4035 = vpop.f32.mrb[0].mxu0
      %v4036 = vpop.f32.mrb[0].mxu0
      %v4037 = vadd.f32 %v634, %v4036
      %v4038 = vpop.f32.mrb[0].mxu0
      %4039 = vmatprep.mubr.bf16.mxu0 0
      %4040 = vmatmul.mubr.bf16.gmra.mrb[0].mxu0 %v2356
      %v4041 = vpop.f32.mrb[0].mxu0
      %v4042 = vadd.f32 %v634, %v4041
      %v4043 = vpop.f32.mrb[0].mxu0
      %v4044 = vpop.f32.mrb[0].mxu0
      %v4045 = vadd.f32 %v634, %v4044
      %v4046 = vpop.f32.mrb[0].mxu0
      %4047 = vmatprep.mubr.bf16.mxu0 0
      %4048 = vmatmul.mubr.bf16.gmra.mrb[0].mxu0 %v2359
      %v4049 = vpop.f32.mrb[0].mxu0
      %v4050 = vadd.f32 %v634, %v4049
      %v4051 = vpop.f32.mrb[0].mxu0
      %v4052 = vpop.f32.mrb[0].mxu0
      %v4053 = vadd.f32 %v634, %v4052
      %v4054 = vpop.f32.mrb[0].mxu0
      %4055 = vmatprep.mubr.bf16.mxu0 0
      %4056 = vmatmul.mubr.bf16.gmra.mrb[0].mxu0 %v2362
      %v4057 = vpop.f32.mrb[0].mxu0
      %v4058 = vadd.f32 %v634, %v4057
      %v4059 = vpop.f32.mrb[0].mxu0
      %v4060 = vpop.f32.mrb[0].mxu0
      %v4061 = vadd.f32 %v634, %v4060
      %v4062 = vpop.f32.mrb[0].mxu0
      %4063 = vmatprep.mubr.bf16.mxu0 0
      %4064 = vmatmul.mubr.bf16.gmra.mrb[0].mxu0 %v2365
      %v4065 = vpop.f32.mrb[0].mxu0
      %v4066 = vadd.f32 %v634, %v4065
      %v4067 = vpop.f32.mrb[0].mxu0
      %v4068 = vpop.f32.mrb[0].mxu0
      %v4069 = vadd.f32 %v634, %v4068
      %v4070 = vpop.f32.mrb[0].mxu0
      %4071 = vmatprep.mubr.bf16.mxu0 0
      %4072 = vmatmul.mubr.bf16.gmra.mrb[0].mxu0 %v2368
      %v4073 = vpop.f32.mrb[0].mxu0
      %v4074 = vadd.f32 %v634, %v4073
      %v4075 = vpop.f32.mrb[0].mxu0
      %v4076 = vpop.f32.mrb[0].mxu0
      %v4077 = vadd.f32 %v634, %v4076
      %v4078 = vpop.f32.mrb[0].mxu0
      %4079 = vmatprep.mubr.bf16.mxu0 0
      %4080 = vmatmul.mubr.bf16.gmra.mrb[0].mxu0 %v2371
      %v4081 = vpop.f32.mrb[0].mxu0
      %v4082 = vadd.f32 %v634, %v4081
      %v4083 = vpop.f32.mrb[0].mxu0
      %v4084 = vpop.f32.mrb[0].mxu0
      %v4085 = vadd.f32 %v634, %v4084
      %v4086 = vpop.f32.mrb[0].mxu0
      %4087 = vmatprep.mubr.bf16.mxu0 0
      %4088 = vmatmul.mubr.bf16.gmra.mrb[0].mxu0 %v2374
      %v4089 = vpop.f32.mrb[0].mxu0
      %v4090 = vadd.f32 %v634, %v4089
      %v4091 = vpop.f32.mrb[0].mxu0
      %v4092 = vpop.f32.mrb[0].mxu0
      %v4093 = vadd.f32 %v634, %v4092
      %v4094 = vpop.f32.mrb[0].mxu0
      %4095 = vmatprep.mubr.bf16.mxu0 0
      %4096 = vmatmul.mubr.bf16.gmra.mrb[0].mxu0 %v2377
      %v4097 = vpop.f32.mrb[0].mxu0
      %v4098 = vadd.f32 %v634, %v4097
      %v4099 = vpop.f32.mrb[0].mxu0
      %v4100 = vpop.f32.mrb[0].mxu0
      %v4101 = vadd.f32 %v634, %v4100
      %v4102 = vpop.f32.mrb[0].mxu0
      %4103 = vmatprep.mubr.bf16.mxu0 0
      %4104 = vmatmul.mubr.bf16.gmra.mrb[0].mxu0 %v2380
      %v4105 = vpop.f32.mrb[0].mxu0
      %v4106 = vadd.f32 %v634, %v4105
      %v4107 = vpop.f32.mrb[0].mxu0
      %v4108 = vpop.f32.mrb[0].mxu0
      %v4109 = vadd.f32 %v634, %v4108
      %v4110 = vpop.f32.mrb[0].mxu0
      %4111 = vmatprep.mubr.bf16.mxu0 0
      %4112 = vmatmul.mubr.bf16.gmra.mrb[0].mxu0 %v2383
      %v4113 = vpop.f32.mrb[0].mxu0
      %v4114 = vadd.f32 %v634, %v4113
      %v4115 = vpop.f32.mrb[0].mxu0
      %v4116 = vpop.f32.mrb[0].mxu0
      %v4117 = vadd.f32 %v634, %v4116
      %v4118 = vpop.f32.mrb[0].mxu0
      %4119 = vmatprep.mubr.bf16.mxu0 0
      %4120 = vmatmul.mubr.bf16.gmra.mrb[0].mxu0 %v2386
      %v4121 = vpop.f32.mrb[0].mxu0
      %v4122 = vadd.f32 %v634, %v4121
      %v4123 = vpop.f32.mrb[0].mxu0
      %v4124 = vpop.f32.mrb[0].mxu0
      %v4125 = vadd.f32 %v634, %v4124
      %v4126 = vpop.f32.mrb[0].mxu0
      %4127 = vmatprep.mubr.bf16.mxu0 0
      %4128 = vmatmul.mubr.bf16.gmra.mrb[0].mxu0 %v2389
      %v4129 = vpop.f32.mrb[0].mxu0
      %v4130 = vadd.f32 %v634, %v4129
      %v4131 = vpop.f32.mrb[0].mxu0
      %v4132 = vpop.f32.mrb[0].mxu0
      %v4133 = vadd.f32 %v634, %v4132
      %v4134 = vpop.f32.mrb[0].mxu0
      %4135 = vmatprep.mubr.bf16.mxu0 0
      %4136 = vmatmul.mubr.bf16.gmra.mrb[0].mxu0 %v2392
      %v4137 = vpop.f32.mrb[0].mxu0
      %v4138 = vadd.f32 %v634, %v4137
      %v4139 = vpop.f32.mrb[0].mxu0
      %v4140 = vpop.f32.mrb[0].mxu0
      %v4141 = vadd.f32 %v634, %v4140
      %v4142 = vpop.f32.mrb[0].mxu0
      %4143 = vmatprep.mubr.bf16.mxu0 0
      %4144 = vmatmul.mubr.bf16.gmra.mrb[0].mxu0 %v2395
      %v4145 = vpop.f32.mrb[0].mxu0
      %v4146 = vadd.f32 %v634, %v4145
      %v4147 = vpop.f32.mrb[0].mxu0
      %v4148 = vpop.f32.mrb[0].mxu0
      %v4149 = vadd.f32 %v634, %v4148
      %v4150 = vpop.f32.mrb[0].mxu0
      %4151 = vmatprep.mubr.bf16.mxu0 0
      %4152 = vmatmul.mubr.bf16.gmra.mrb[0].mxu0 %v2398
      %v4153 = vpop.f32.mrb[0].mxu0
      %v4154 = vadd.f32 %v634, %v4153
      %v4155 = vpop.f32.mrb[0].mxu0
      %v4156 = vpop.f32.mrb[0].mxu0
      %v4157 = vadd.f32 %v634, %v4156
      %v4158 = vpop.f32.mrb[0].mxu0
      %4159 = vmatprep.mubr.bf16.mxu0 0
      %4160 = vmatmul.mubr.bf16.gmra.mrb[0].mxu0 %v2401
      %v4161 = vpop.f32.mrb[0].mxu0
      %v4162 = vadd.f32 %v634, %v4161
      %v4163 = vpop.f32.mrb[0].mxu0
      %v4164 = vpop.f32.mrb[0].mxu0
      %v4165 = vadd.f32 %v634, %v4164
      %v4166 = vpop.f32.mrb[0].mxu0
      %4167 = vmatprep.mubr.bf16.mxu0 0
      %4168 = vmatmul.mubr.bf16.gmra.mrb[0].mxu0 %v2404
      %v4169 = vpop.f32.mrb[0].mxu0
      %v4170 = vadd.f32 %v634, %v4169
      %v4171 = vpop.f32.mrb[0].mxu0
      %v4172 = vpop.f32.mrb[0].mxu0
      %v4173 = vadd.f32 %v634, %v4172
      %v4174 = vpop.f32.mrb[0].mxu0
      %4175 = vmatprep.mubr.bf16.mxu0 0
      %4176 = vmatmul.mubr.bf16.gmra.mrb[0].mxu0 %v2407
      %v4177 = vpop.f32.mrb[0].mxu0
      %v4178 = vadd.f32 %v634, %v4177
      %v4179 = vpop.f32.mrb[0].mxu0
      %v4180 = vpop.f32.mrb[0].mxu0
      %v4181 = vadd.f32 %v634, %v4180
      %v4182 = vpop.f32.mrb[0].mxu0
      %4183 = vmatprep.mubr.bf16.mxu0 0
      %4184 = vmatmul.mubr.bf16.gmra.mrb[0].mxu0 %v2410
      %v4185 = vpop.f32.mrb[0].mxu0
      %v4186 = vadd.f32 %v634, %v4185
      %v4187 = vpop.f32.mrb[0].mxu0
      %v4188 = vpop.f32.mrb[0].mxu0
      %v4189 = vadd.f32 %v634, %v4188
      %v4190 = vpop.f32.mrb[0].mxu0
      %4191 = vmatprep.mubr.bf16.mxu0 0
      %4192 = vmatmul.mubr.bf16.gmra.mrb[0].mxu0 %v2413
      %v4193 = vpop.f32.mrb[0].mxu0
      %v4194 = vadd.f32 %v634, %v4193
      %v4195 = vpop.f32.mrb[0].mxu0
      %v4196 = vpop.f32.mrb[0].mxu0
      %v4197 = vadd.f32 %v634, %v4196
      %v4198 = vpop.f32.mrb[0].mxu0
      %4199 = vmatprep.mubr.bf16.mxu0 0
      %4200 = vmatmul.mubr.bf16.gmra.mrb[0].mxu0 %v2416
      %v4201 = vpop.f32.mrb[0].mxu0
      %v4202 = vadd.f32 %v634, %v4201
      %v4203 = vpop.f32.mrb[0].mxu0
      %v4204 = vpop.f32.mrb[0].mxu0
      %v4205 = vadd.f32 %v634, %v4204
      %v4206 = vpop.f32.mrb[0].mxu0
      %4207 = vmatprep.mubr.bf16.mxu0 0
      %4208 = vmatmul.mubr.bf16.gmra.mrb[0].mxu0 %v2419
      %v4209 = vpop.f32.mrb[0].mxu0
      %v4210 = vadd.f32 %v634, %v4209
      %v4211 = vpop.f32.mrb[0].mxu0
      %v4212 = vpop.f32.mrb[0].mxu0
      %v4213 = vadd.f32 %v634, %v4212
      %v4214 = vpop.f32.mrb[0].mxu0
      %4215 = vmatprep.mubr.bf16.mxu0 0
      %4216 = vmatmul.mubr.bf16.gmra.mrb[0].mxu0 %v2422
      %v4217 = vpop.f32.mrb[0].mxu0
      %v4218 = vadd.f32 %v634, %v4217
      %v4219 = vpop.f32.mrb[0].mxu0
      %v4220 = vpop.f32.mrb[0].mxu0
      %v4221 = vadd.f32 %v634, %v4220
      %v4222 = vpop.f32.mrb[0].mxu0
      %4223 = vmatprep.mubr.bf16.mxu0 0
      %4224 = vmatmul.mubr.bf16.gmra.mrb[0].mxu0 %v2425
      %v4225 = vpop.f32.mrb[0].mxu0
      %v4226 = vadd.f32 %v634, %v4225
      %v4227 = vpop.f32.mrb[0].mxu0
      %v4228 = vpop.f32.mrb[0].mxu0
      %v4229 = vadd.f32 %v634, %v4228
      %v4230 = vpop.f32.mrb[0].mxu0
      %4231 = vmatprep.mubr.bf16.mxu0 0
      %4232 = vmatmul.mubr.bf16.gmra.mrb[0].mxu0 %v2428
      %v4233 = vpop.f32.mrb[0].mxu0
      %v4234 = vadd.f32 %v634, %v4233
      %v4235 = vpop.f32.mrb[0].mxu0
      %v4236 = vpop.f32.mrb[0].mxu0
      %v4237 = vadd.f32 %v634, %v4236
      %v4238 = vpop.f32.mrb[0].mxu0
      %4239 = vmatprep.mubr.bf16.mxu0 0
      %4240 = vmatmul.mubr.bf16.gmra.mrb[0].mxu0 %v2431
      %v4241 = vpop.f32.mrb[0].mxu0
      %v4242 = vadd.f32 %v634, %v4241
      %v4243 = vpop.f32.mrb[0].mxu0
      %v4244 = vpop.f32.mrb[0].mxu0
      %v4245 = vadd.f32 %v634, %v4244
      %v4246 = vpop.f32.mrb[0].mxu0
      %4247 = vmatprep.mubr.bf16.mxu0 0
      %4248 = vmatmul.mubr.bf16.gmra.mrb[0].mxu0 %v2434
      %v4249 = vpop.f32.mrb[0].mxu0
      %v4250 = vadd.f32 %v634, %v4249
      %v4251 = vpop.f32.mrb[0].mxu0
      %v4252 = vpop.f32.mrb[0].mxu0
      %v4253 = vadd.f32 %v634, %v4252
      %v4254 = vpop.f32.mrb[0].mxu0
      %4255 = vmatprep.mubr.bf16.mxu0 0
      %4256 = vmatmul.mubr.bf16.gmra.mrb[0].mxu0 %v2437
      %v4257 = vpop.f32.mrb[0].mxu0
      %v4258 = vadd.f32 %v634, %v4257
      %v4259 = vpop.f32.mrb[0].mxu0
      %v4260 = vpop.f32.mrb[0].mxu0
      %v4261 = vadd.f32 %v634, %v4260
      %v4262 = vpop.f32.mrb[0].mxu0
      %4263 = vmatprep.mubr.bf16.mxu0 0
      %4264 = vmatmul.mubr.bf16.gmra.mrb[0].mxu0 %v2440
      %v4265 = vpop.f32.mrb[0].mxu0
      %v4266 = vadd.f32 %v634, %v4265
      %v4267 = vpop.f32.mrb[0].mxu0
      %v4268 = vpop.f32.mrb[0].mxu0
      %v4269 = vadd.f32 %v634, %v4268
      %v4270 = vpop.f32.mrb[0].mxu0
      %4271 = vmatprep.mubr.bf16.mxu0 0
      %4272 = vmatmul.mubr.bf16.gmra.mrb[0].mxu0 %v2443
      %v4273 = vpop.f32.mrb[0].mxu0
      %v4274 = vadd.f32 %v634, %v4273
      %v4275 = vpop.f32.mrb[0].mxu0
      %v4276 = vpop.f32.mrb[0].mxu0
      %v4277 = vadd.f32 %v634, %v4276
      %v4278 = vpop.f32.mrb[0].mxu0
      %4279 = vmatprep.mubr.bf16.mxu0 0
      %4280 = vmatmul.mubr.bf16.gmra.mrb[0].mxu0 %v2446
      %v4281 = vpop.f32.mrb[0].mxu0
      %v4282 = vadd.f32 %v634, %v4281
      %v4283 = vpop.f32.mrb[0].mxu0
      %v4284 = vpop.f32.mrb[0].mxu0
      %v4285 = vadd.f32 %v634, %v4284
      %v4286 = vpop.f32.mrb[0].mxu0
      %4287 = vdwg.mxu0
      %v4288 = vmax.f32 %v2490, 0.0
      %v4289 = vmax.f32 %v2493, 0.0
      %v4290 = vmax.f32 %v2498, 0.0
      %v4291 = vmax.f32 %v2501, 0.0
      %v4292 = vmax.f32 %v2506, 0.0
      %v4293 = vmax.f32 %v2509, 0.0
      %v4294 = vmax.f32 %v2514, 0.0
      %v4295 = vmax.f32 %v2517, 0.0
      %v4296 = vmax.f32 %v2522, 0.0
      %v4297 = vmax.f32 %v2525, 0.0
      %v4298 = vmax.f32 %v2530, 0.0
      %v4299 = vmax.f32 %v2533, 0.0
      %v4300 = vmax.f32 %v2538, 0.0
      %v4301 = vmax.f32 %v2541, 0.0
      %v4302 = vmax.f32 %v2546, 0.0
      %v4303 = vmax.f32 %v2549, 0.0
      %v4304 = vmax.f32 %v2554, 0.0
      %v4305 = vmax.f32 %v2557, 0.0
      %v4306 = vmax.f32 %v2562, 0.0
      %v4307 = vmax.f32 %v2565, 0.0
      %v4308 = vmax.f32 %v2570, 0.0
      %v4309 = vmax.f32 %v2573, 0.0
      %v4310 = vmax.f32 %v2578, 0.0
      %v4311 = vmax.f32 %v2581, 0.0
      %v4312 = vmax.f32 %v2586, 0.0
      %v4313 = vmax.f32 %v2589, 0.0
      %v4314 = vmax.f32 %v2594, 0.0
      %v4315 = vmax.f32 %v2597, 0.0
      %v4316 = vmax.f32 %v2602, 0.0
      %v4317 = vmax.f32 %v2605, 0.0
      %v4318 = vmax.f32 %v2610, 0.0
      %v4319 = vmax.f32 %v2613, 0.0
      %v4320 = vmax.f32 %v2618, 0.0
      %v4321 = vmax.f32 %v2621, 0.0
      %v4322 = vmax.f32 %v2626, 0.0
      %v4323 = vmax.f32 %v2629, 0.0
      %v4324 = vmax.f32 %v2634, 0.0
      %v4325 = vmax.f32 %v2637, 0.0
      %v4326 = vmax.f32 %v2642, 0.0
      %v4327 = vmax.f32 %v2645, 0.0
      %v4328 = vmax.f32 %v2650, 0.0
      %v4329 = vmax.f32 %v2653, 0.0
      %v4330 = vmax.f32 %v2658, 0.0
      %v4331 = vmax.f32 %v2661, 0.0
      %v4332 = vmax.f32 %v2666, 0.0
      %v4333 = vmax.f32 %v2669, 0.0
      %v4334 = vmax.f32 %v2674, 0.0
      %v4335 = vmax.f32 %v2677, 0.0
      %v4336 = vmax.f32 %v2682, 0.0
      %v4337 = vmax.f32 %v2685, 0.0
      %v4338 = vmax.f32 %v2690, 0.0
      %v4339 = vmax.f32 %v2693, 0.0
      %v4340 = vmax.f32 %v2698, 0.0
      %v4341 = vmax.f32 %v2701, 0.0
      %v4342 = vmax.f32 %v2706, 0.0
      %v4343 = vmax.f32 %v2709, 0.0
      %v4344 = vmax.f32 %v2714, 0.0
      %v4345 = vmax.f32 %v2717, 0.0
      %v4346 = vmax.f32 %v2722, 0.0
      %v4347 = vmax.f32 %v2725, 0.0
      %v4348 = vmax.f32 %v2730, 0.0
      %v4349 = vmax.f32 %v2733, 0.0
      %v4350 = vmax.f32 %v2738, 0.0
      %v4351 = vmax.f32 %v2741, 0.0
      %v4352 = vmax.f32 %v2746, 0.0
      %v4353 = vmax.f32 %v2749, 0.0
      %v4354 = vmax.f32 %v2754, 0.0
      %v4355 = vmax.f32 %v2757, 0.0
      %v4356 = vmax.f32 %v2762, 0.0
      %v4357 = vmax.f32 %v2765, 0.0
      %v4358 = vmax.f32 %v2770, 0.0
      %v4359 = vmax.f32 %v2773, 0.0
      %v4360 = vmax.f32 %v2778, 0.0
      %v4361 = vmax.f32 %v2781, 0.0
      %v4362 = vmax.f32 %v2786, 0.0
      %v4363 = vmax.f32 %v2789, 0.0
      %v4364 = vmax.f32 %v2794, 0.0
      %v4365 = vmax.f32 %v2797, 0.0
      %v4366 = vmax.f32 %v2802, 0.0
      %v4367 = vmax.f32 %v2805, 0.0
      %v4368 = vmax.f32 %v2810, 0.0
      %v4369 = vmax.f32 %v2813, 0.0
      %v4370 = vmax.f32 %v2818, 0.0
      %v4371 = vmax.f32 %v2821, 0.0
      %v4372 = vmax.f32 %v2826, 0.0
      %v4373 = vmax.f32 %v2829, 0.0
      %v4374 = vmax.f32 %v2834, 0.0
      %v4375 = vmax.f32 %v2837, 0.0
      %v4376 = vmax.f32 %v2842, 0.0
      %v4377 = vmax.f32 %v2845, 0.0
      %v4378 = vmax.f32 %v2850, 0.0
      %v4379 = vmax.f32 %v2853, 0.0
      %v4380 = vmax.f32 %v2858, 0.0
      %v4381 = vmax.f32 %v2861, 0.0
      %v4382 = vmax.f32 %v2866, 0.0
      %v4383 = vmax.f32 %v2869, 0.0
      %v4384 = vmax.f32 %v2874, 0.0
      %v4385 = vmax.f32 %v2877, 0.0
      %v4386 = vmax.f32 %v2882, 0.0
      %v4387 = vmax.f32 %v2885, 0.0
      %v4388 = vmax.f32 %v2890, 0.0
      %v4389 = vmax.f32 %v2893, 0.0
      %v4390 = vmax.f32 %v2898, 0.0
      %v4391 = vmax.f32 %v2901, 0.0
      %v4392 = vmax.f32 %v2906, 0.0
      %v4393 = vmax.f32 %v2909, 0.0
      %v4394 = vmax.f32 %v2914, 0.0
      %v4395 = vmax.f32 %v2917, 0.0
      %v4396 = vmax.f32 %v2922, 0.0
      %v4397 = vmax.f32 %v2925, 0.0
      %v4398 = vmax.f32 %v2930, 0.0
      %v4399 = vmax.f32 %v2933, 0.0
      %v4400 = vmax.f32 %v2938, 0.0
      %v4401 = vmax.f32 %v2941, 0.0
      %v4402 = vmax.f32 %v2946, 0.0
      %v4403 = vmax.f32 %v2949, 0.0
      %v4404 = vmax.f32 %v2954, 0.0
      %v4405 = vmax.f32 %v2957, 0.0
      %v4406 = vmax.f32 %v2962, 0.0
      %v4407 = vmax.f32 %v2965, 0.0
      %v4408 = vmax.f32 %v2970, 0.0
      %v4409 = vmax.f32 %v2973, 0.0
      %v4410 = vmax.f32 %v2978, 0.0
      %v4411 = vmax.f32 %v2981, 0.0
      %v4412 = vmax.f32 %v2986, 0.0
      %v4413 = vmax.f32 %v2989, 0.0
      %v4414 = vmax.f32 %v2994, 0.0
      %v4415 = vmax.f32 %v2997, 0.0
      %v4416 = vmax.f32 %v3002, 0.0
      %v4417 = vmax.f32 %v3005, 0.0
      %v4418 = vmax.f32 %v3010, 0.0
      %v4419 = vmax.f32 %v3013, 0.0
      %v4420 = vmax.f32 %v3018, 0.0
      %v4421 = vmax.f32 %v3021, 0.0
      %v4422 = vmax.f32 %v3026, 0.0
      %v4423 = vmax.f32 %v3029, 0.0
      %v4424 = vmax.f32 %v3034, 0.0
      %v4425 = vmax.f32 %v3037, 0.0
      %v4426 = vmax.f32 %v3042, 0.0
      %v4427 = vmax.f32 %v3045, 0.0
      %v4428 = vmax.f32 %v3050, 0.0
      %v4429 = vmax.f32 %v3053, 0.0
      %v4430 = vmax.f32 %v3058, 0.0
      %v4431 = vmax.f32 %v3061, 0.0
      %v4432 = vmax.f32 %v3066, 0.0
      %v4433 = vmax.f32 %v3069, 0.0
      %v4434 = vmax.f32 %v3074, 0.0
      %v4435 = vmax.f32 %v3077, 0.0
      %v4436 = vmax.f32 %v3082, 0.0
      %v4437 = vmax.f32 %v3085, 0.0
      %v4438 = vmax.f32 %v3090, 0.0
      %v4439 = vmax.f32 %v3093, 0.0
      %v4440 = vmax.f32 %v3098, 0.0
      %v4441 = vmax.f32 %v3101, 0.0
      %v4442 = vmax.f32 %v3106, 0.0
      %v4443 = vmax.f32 %v3109, 0.0
      %v4444 = vmax.f32 %v3114, 0.0
      %v4445 = vmax.f32 %v3117, 0.0
      %v4446 = vmax.f32 %v3122, 0.0
      %v4447 = vmax.f32 %v3125, 0.0
      %v4448 = vmax.f32 %v3130, 0.0
      %v4449 = vmax.f32 %v3133, 0.0
      %v4450 = vmax.f32 %v3138, 0.0
      %v4451 = vmax.f32 %v3141, 0.0
      %v4452 = vmax.f32 %v3146, 0.0
      %v4453 = vmax.f32 %v3149, 0.0
      %v4454 = vmax.f32 %v3154, 0.0
      %v4455 = vmax.f32 %v3157, 0.0
      %v4456 = vmax.f32 %v3162, 0.0
      %v4457 = vmax.f32 %v3165, 0.0
      %v4458 = vmax.f32 %v3170, 0.0
      %v4459 = vmax.f32 %v3173, 0.0
      %v4460 = vmax.f32 %v3178, 0.0
      %v4461 = vmax.f32 %v3181, 0.0
      %v4462 = vmax.f32 %v3186, 0.0
      %v4463 = vmax.f32 %v3189, 0.0
      %v4464 = vmax.f32 %v3194, 0.0
      %v4465 = vmax.f32 %v3197, 0.0
      %v4466 = vmax.f32 %v3202, 0.0
      %v4467 = vmax.f32 %v3205, 0.0
      %v4468 = vmax.f32 %v3210, 0.0
      %v4469 = vmax.f32 %v3213, 0.0
      %v4470 = vmax.f32 %v3218, 0.0
      %v4471 = vmax.f32 %v3221, 0.0
      %v4472 = vmax.f32 %v3226, 0.0
      %v4473 = vmax.f32 %v3229, 0.0
      %v4474 = vmax.f32 %v3234, 0.0
      %v4475 = vmax.f32 %v3237, 0.0
      %v4476 = vmax.f32 %v3242, 0.0
      %v4477 = vmax.f32 %v3245, 0.0
      %v4478 = vmax.f32 %v3250, 0.0
      %v4479 = vmax.f32 %v3253, 0.0
      %v4480 = vmax.f32 %v3258, 0.0
      %v4481 = vmax.f32 %v3261, 0.0
      %v4482 = vmax.f32 %v3266, 0.0
      %v4483 = vmax.f32 %v3269, 0.0
      %v4484 = vmax.f32 %v3274, 0.0
      %v4485 = vmax.f32 %v3277, 0.0
      %v4486 = vmax.f32 %v3282, 0.0
      %v4487 = vmax.f32 %v3285, 0.0
      %v4488 = vmax.f32 %v3290, 0.0
      %v4489 = vmax.f32 %v3293, 0.0
      %v4490 = vmax.f32 %v3298, 0.0
      %v4491 = vmax.f32 %v3301, 0.0
      %v4492 = vmax.f32 %v3306, 0.0
      %v4493 = vmax.f32 %v3309, 0.0
      %v4494 = vmax.f32 %v3314, 0.0
      %v4495 = vmax.f32 %v3317, 0.0
      %v4496 = vmax.f32 %v3322, 0.0
      %v4497 = vmax.f32 %v3325, 0.0
      %v4498 = vmax.f32 %v3330, 0.0
      %v4499 = vmax.f32 %v3333, 0.0
      %v4500 = vmax.f32 %v3338, 0.0
      %v4501 = vmax.f32 %v3341, 0.0
      %v4502 = vmax.f32 %v3346, 0.0
      %v4503 = vmax.f32 %v3349, 0.0
      %v4504 = vmax.f32 %v3354, 0.0
      %v4505 = vmax.f32 %v3357, 0.0
      %v4506 = vmax.f32 %v3362, 0.0
      %v4507 = vmax.f32 %v3365, 0.0
      %v4508 = vmax.f32 %v3370, 0.0
      %v4509 = vmax.f32 %v3373, 0.0
      %v4510 = vmax.f32 %v3378, 0.0
      %v4511 = vmax.f32 %v3381, 0.0
      %v4512 = vmax.f32 %v3386, 0.0
      %v4513 = vmax.f32 %v3389, 0.0
      %v4514 = vmax.f32 %v3394, 0.0
      %v4515 = vmax.f32 %v3397, 0.0
      %v4516 = vmax.f32 %v3402, 0.0
      %v4517 = vmax.f32 %v3405, 0.0
      %v4518 = vmax.f32 %v3410, 0.0
      %v4519 = vmax.f32 %v3413, 0.0
      %v4520 = vmax.f32 %v3418, 0.0
      %v4521 = vmax.f32 %v3421, 0.0
      %v4522 = vmax.f32 %v3426, 0.0
      %v4523 = vmax.f32 %v3429, 0.0
      %v4524 = vmax.f32 %v3434, 0.0
      %v4525 = vmax.f32 %v3437, 0.0
      %v4526 = vmax.f32 %v3442, 0.0
      %v4527 = vmax.f32 %v3445, 0.0
      %v4528 = vmax.f32 %v3450, 0.0
      %v4529 = vmax.f32 %v3453, 0.0
      %v4530 = vmax.f32 %v3458, 0.0
      %v4531 = vmax.f32 %v3461, 0.0
      %v4532 = vmax.f32 %v3466, 0.0
      %v4533 = vmax.f32 %v3469, 0.0
      %v4534 = vmax.f32 %v3474, 0.0
      %v4535 = vmax.f32 %v3477, 0.0
      %v4536 = vmax.f32 %v3482, 0.0
      %v4537 = vmax.f32 %v3485, 0.0
      %v4538 = vmax.f32 %v3490, 0.0
      %v4539 = vmax.f32 %v3493, 0.0
      %v4540 = vmax.f32 %v3498, 0.0
      %v4541 = vmax.f32 %v3501, 0.0
      %v4542 = vmax.f32 %v3506, 0.0
      %v4543 = vmax.f32 %v3509, 0.0
      %v4544 = vmax.f32 %v3514, 0.0
      %v4545 = vmax.f32 %v3517, 0.0
      %v4546 = vmax.f32 %v3522, 0.0
      %v4547 = vmax.f32 %v3525, 0.0
      %v4548 = vmax.f32 %v3530, 0.0
      %v4549 = vmax.f32 %v3533, 0.0
      %v4550 = vmax.f32 %v3538, 0.0
      %v4551 = vmax.f32 %v3541, 0.0
      %v4552 = vmax.f32 %v3546, 0.0
      %v4553 = vmax.f32 %v3549, 0.0
      %v4554 = vmax.f32 %v3554, 0.0
      %v4555 = vmax.f32 %v3557, 0.0
      %v4556 = vmax.f32 %v3562, 0.0
      %v4557 = vmax.f32 %v3565, 0.0
      %v4558 = vmax.f32 %v3570, 0.0
      %v4559 = vmax.f32 %v3573, 0.0
      %v4560 = vmax.f32 %v3578, 0.0
      %v4561 = vmax.f32 %v3581, 0.0
      %v4562 = vmax.f32 %v3586, 0.0
      %v4563 = vmax.f32 %v3589, 0.0
      %v4564 = vmax.f32 %v3594, 0.0
      %v4565 = vmax.f32 %v3597, 0.0
      %v4566 = vmax.f32 %v3602, 0.0
      %v4567 = vmax.f32 %v3605, 0.0
      %v4568 = vmax.f32 %v3610, 0.0
      %v4569 = vmax.f32 %v3613, 0.0
      %v4570 = vmax.f32 %v3618, 0.0
      %v4571 = vmax.f32 %v3621, 0.0
      %v4572 = vmax.f32 %v3626, 0.0
      %v4573 = vmax.f32 %v3629, 0.0
      %v4574 = vmax.f32 %v3634, 0.0
      %v4575 = vmax.f32 %v3637, 0.0
      %v4576 = vmax.f32 %v3642, 0.0
      %v4577 = vmax.f32 %v3645, 0.0
      %v4578 = vmax.f32 %v3650, 0.0
      %v4579 = vmax.f32 %v3653, 0.0
      %v4580 = vmax.f32 %v3658, 0.0
      %v4581 = vmax.f32 %v3661, 0.0
      %v4582 = vmax.f32 %v3666, 0.0
      %v4583 = vmax.f32 %v3669, 0.0
      %v4584 = vmax.f32 %v3674, 0.0
      %v4585 = vmax.f32 %v3677, 0.0
      %v4586 = vmax.f32 %v3682, 0.0
      %v4587 = vmax.f32 %v3685, 0.0
      %v4588 = vmax.f32 %v3690, 0.0
      %v4589 = vmax.f32 %v3693, 0.0
      %v4590 = vmax.f32 %v3698, 0.0
      %v4591 = vmax.f32 %v3701, 0.0
      %v4592 = vmax.f32 %v3706, 0.0
      %v4593 = vmax.f32 %v3709, 0.0
      %v4594 = vmax.f32 %v3714, 0.0
      %v4595 = vmax.f32 %v3717, 0.0
      %v4596 = vmax.f32 %v3722, 0.0
      %v4597 = vmax.f32 %v3725, 0.0
      %v4598 = vmax.f32 %v3730, 0.0
      %v4599 = vmax.f32 %v3733, 0.0
      %v4600 = vmax.f32 %v3738, 0.0
      %v4601 = vmax.f32 %v3741, 0.0
      %v4602 = vmax.f32 %v3746, 0.0
      %v4603 = vmax.f32 %v3749, 0.0
      %v4604 = vmax.f32 %v3754, 0.0
      %v4605 = vmax.f32 %v3757, 0.0
      %v4606 = vmax.f32 %v3762, 0.0
      %v4607 = vmax.f32 %v3765, 0.0
      %v4608 = vmax.f32 %v3770, 0.0
      %v4609 = vmax.f32 %v3773, 0.0
      %v4610 = vmax.f32 %v3778, 0.0
      %v4611 = vmax.f32 %v3781, 0.0
      %v4612 = vmax.f32 %v3786, 0.0
      %v4613 = vmax.f32 %v3789, 0.0
      %v4614 = vmax.f32 %v3794, 0.0
      %v4615 = vmax.f32 %v3797, 0.0
      %v4616 = vmax.f32 %v3802, 0.0
      %v4617 = vmax.f32 %v3805, 0.0
      %v4618 = vmax.f32 %v3810, 0.0
      %v4619 = vmax.f32 %v3813, 0.0
      %v4620 = vmax.f32 %v3818, 0.0
      %v4621 = vmax.f32 %v3821, 0.0
      %v4622 = vmax.f32 %v3826, 0.0
      %v4623 = vmax.f32 %v3829, 0.0
      %v4624 = vmax.f32 %v3834, 0.0
      %v4625 = vmax.f32 %v3837, 0.0
      %v4626 = vmax.f32 %v3842, 0.0
      %v4627 = vmax.f32 %v3845, 0.0
      %v4628 = vmax.f32 %v3850, 0.0
      %v4629 = vmax.f32 %v3853, 0.0
      %v4630 = vmax.f32 %v3858, 0.0
      %v4631 = vmax.f32 %v3861, 0.0
      %v4632 = vmax.f32 %v3866, 0.0
      %v4633 = vmax.f32 %v3869, 0.0
      %v4634 = vmax.f32 %v3874, 0.0
      %v4635 = vmax.f32 %v3877, 0.0
      %v4636 = vmax.f32 %v3882, 0.0
      %v4637 = vmax.f32 %v3885, 0.0
      %v4638 = vmax.f32 %v3890, 0.0
      %v4639 = vmax.f32 %v3893, 0.0
      %v4640 = vmax.f32 %v3898, 0.0
      %v4641 = vmax.f32 %v3901, 0.0
      %v4642 = vmax.f32 %v3906, 0.0
      %v4643 = vmax.f32 %v3909, 0.0
      %v4644 = vmax.f32 %v3914, 0.0
      %v4645 = vmax.f32 %v3917, 0.0
      %v4646 = vmax.f32 %v3922, 0.0
      %v4647 = vmax.f32 %v3925, 0.0
      %v4648 = vmax.f32 %v3930, 0.0
      %v4649 = vmax.f32 %v3933, 0.0
      %v4650 = vmax.f32 %v3938, 0.0
      %v4651 = vmax.f32 %v3941, 0.0
      %v4652 = vmax.f32 %v3946, 0.0
      %v4653 = vmax.f32 %v3949, 0.0
      %v4654 = vmax.f32 %v3954, 0.0
      %v4655 = vmax.f32 %v3957, 0.0
      %v4656 = vmax.f32 %v3962, 0.0
      %v4657 = vmax.f32 %v3965, 0.0
      %v4658 = vmax.f32 %v3970, 0.0
      %v4659 = vmax.f32 %v3973, 0.0
      %v4660 = vmax.f32 %v3978, 0.0
      %v4661 = vmax.f32 %v3981, 0.0
      %v4662 = vmax.f32 %v3986, 0.0
      %v4663 = vmax.f32 %v3989, 0.0
      %v4664 = vmax.f32 %v3994, 0.0
      %v4665 = vmax.f32 %v3997, 0.0
      %v4666 = vmax.f32 %v4002, 0.0
      %v4667 = vmax.f32 %v4005, 0.0
      %v4668 = vmax.f32 %v4010, 0.0
      %v4669 = vmax.f32 %v4013, 0.0
      %v4670 = vmax.f32 %v4018, 0.0
      %v4671 = vmax.f32 %v4021, 0.0
      %v4672 = vmax.f32 %v4026, 0.0
      %v4673 = vmax.f32 %v4029, 0.0
      %v4674 = vmax.f32 %v4034, 0.0
      %v4675 = vmax.f32 %v4037, 0.0
      %v4676 = vmax.f32 %v4042, 0.0
      %v4677 = vmax.f32 %v4045, 0.0
      %v4678 = vmax.f32 %v4050, 0.0
      %v4679 = vmax.f32 %v4053, 0.0
      %v4680 = vmax.f32 %v4058, 0.0
      %v4681 = vmax.f32 %v4061, 0.0
      %v4682 = vmax.f32 %v4066, 0.0
      %v4683 = vmax.f32 %v4069, 0.0
      %v4684 = vmax.f32 %v4074, 0.0
      %v4685 = vmax.f32 %v4077, 0.0
      %v4686 = vmax.f32 %v4082, 0.0
      %v4687 = vmax.f32 %v4085, 0.0
      %v4688 = vmax.f32 %v4090, 0.0
      %v4689 = vmax.f32 %v4093, 0.0
      %v4690 = vmax.f32 %v4098, 0.0
      %v4691 = vmax.f32 %v4101, 0.0
      %v4692 = vmax.f32 %v4106, 0.0
      %v4693 = vmax.f32 %v4109, 0.0
      %v4694 = vmax.f32 %v4114, 0.0
      %v4695 = vmax.f32 %v4117, 0.0
      %v4696 = vmax.f32 %v4122, 0.0
      %v4697 = vmax.f32 %v4125, 0.0
      %v4698 = vmax.f32 %v4130, 0.0
      %v4699 = vmax.f32 %v4133, 0.0
      %v4700 = vmax.f32 %v4138, 0.0
      %v4701 = vmax.f32 %v4141, 0.0
      %v4702 = vmax.f32 %v4146, 0.0
      %v4703 = vmax.f32 %v4149, 0.0
      %v4704 = vmax.f32 %v4154, 0.0
      %v4705 = vmax.f32 %v4157, 0.0
      %v4706 = vmax.f32 %v4162, 0.0
      %v4707 = vmax.f32 %v4165, 0.0
      %v4708 = vmax.f32 %v4170, 0.0
      %v4709 = vmax.f32 %v4173, 0.0
      %v4710 = vmax.f32 %v4178, 0.0
      %v4711 = vmax.f32 %v4181, 0.0
      %v4712 = vmax.f32 %v4186, 0.0
      %v4713 = vmax.f32 %v4189, 0.0
      %v4714 = vmax.f32 %v4194, 0.0
      %v4715 = vmax.f32 %v4197, 0.0
      %v4716 = vmax.f32 %v4202, 0.0
      %v4717 = vmax.f32 %v4205, 0.0
      %v4718 = vmax.f32 %v4210, 0.0
      %v4719 = vmax.f32 %v4213, 0.0
      %v4720 = vmax.f32 %v4218, 0.0
      %v4721 = vmax.f32 %v4221, 0.0
      %v4722 = vmax.f32 %v4226, 0.0
      %v4723 = vmax.f32 %v4229, 0.0
      %v4724 = vmax.f32 %v4234, 0.0
      %v4725 = vmax.f32 %v4237, 0.0
      %v4726 = vmax.f32 %v4242, 0.0
      %v4727 = vmax.f32 %v4245, 0.0
      %v4728 = vmax.f32 %v4250, 0.0
      %v4729 = vmax.f32 %v4253, 0.0
      %v4730 = vmax.f32 %v4258, 0.0
      %v4731 = vmax.f32 %v4261, 0.0
      %v4732 = vmax.f32 %v4266, 0.0
      %v4733 = vmax.f32 %v4269, 0.0
      %v4734 = vmax.f32 %v4274, 0.0
      %v4735 = vmax.f32 %v4277, 0.0
      %v4736 = vmax.f32 %v4282, 0.0
      %v4737 = vmax.f32 %v4285, 0.0
      %vm4738 = vcmask 80896
      %4739 = vst.msk [vmem:[%s172] sm:$0xff] %vm4738, %v4288
      %4740 = vst.msk [vmem:[%s172 + $0x8] sm:$0xff] %vm4738, %v4289
      %4741 = vst.msk [vmem:[%s172 + $0x10] sm:$0xff] %vm4738, %v4290
      %4742 = vst.msk [vmem:[%s172 + $0x18] sm:$0xff] %vm4738, %v4291
      %4743 = vst.msk [vmem:[%s172 + $0x20] sm:$0xff] %vm4738, %v4292
      %4744 = vst.msk [vmem:[%s172 + $0x28] sm:$0xff] %vm4738, %v4293
      %4745 = vst.msk [vmem:[%s172 + $0x30] sm:$0xff] %vm4738, %v4294
      %4746 = vst.msk [vmem:[%s172 + $0x38] sm:$0xff] %vm4738, %v4295
      %4747 = vst.msk [vmem:[%s172 + $0x40] sm:$0xff] %vm4738, %v4296
      %4748 = vst.msk [vmem:[%s172 + $0x48] sm:$0xff] %vm4738, %v4297
      %4749 = vst.msk [vmem:[%s172 + $0x50] sm:$0xff] %vm4738, %v4298
      %4750 = vst.msk [vmem:[%s172 + $0x58] sm:$0xff] %vm4738, %v4299
      %4751 = vst.msk [vmem:[%s172 + $0x60] sm:$0xff] %vm4738, %v4300
      %4752 = vst.msk [vmem:[%s172 + $0x68] sm:$0xff] %vm4738, %v4301
      %4753 = vst.msk [vmem:[%s172 + $0x70] sm:$0xff] %vm4738, %v4302
      %4754 = vst.msk [vmem:[%s172 + $0x78] sm:$0xff] %vm4738, %v4303
      %4755 = vst.msk [vmem:[%s172 + $0x80] sm:$0xff] %vm4738, %v4304
      %4756 = vst.msk [vmem:[%s172 + $0x88] sm:$0xff] %vm4738, %v4305
      %4757 = vst.msk [vmem:[%s172 + $0x90] sm:$0xff] %vm4738, %v4306
      %4758 = vst.msk [vmem:[%s172 + $0x98] sm:$0xff] %vm4738, %v4307
      %4759 = vst.msk [vmem:[%s172 + $0xa0] sm:$0xff] %vm4738, %v4308
      %4760 = vst.msk [vmem:[%s172 + $0xa8] sm:$0xff] %vm4738, %v4309
      %4761 = vst.msk [vmem:[%s172 + $0xb0] sm:$0xff] %vm4738, %v4310
      %4762 = vst.msk [vmem:[%s172 + $0xb8] sm:$0xff] %vm4738, %v4311
      %4763 = vst.msk [vmem:[%s172 + $0xc0] sm:$0xff] %vm4738, %v4312
      %4764 = vst.msk [vmem:[%s172 + $0xc8] sm:$0xff] %vm4738, %v4313
      %4765 = vst.msk [vmem:[%s172 + $0xd0] sm:$0xff] %vm4738, %v4314
      %4766 = vst.msk [vmem:[%s172 + $0xd8] sm:$0xff] %vm4738, %v4315
      %4767 = vst.msk [vmem:[%s172 + $0xe0] sm:$0xff] %vm4738, %v4316
      %4768 = vst.msk [vmem:[%s172 + $0xe8] sm:$0xff] %vm4738, %v4317
      %4769 = vst.msk [vmem:[%s172 + $0xf0] sm:$0xff] %vm4738, %v4318
      %4770 = vst.msk [vmem:[%s172 + $0xf8] sm:$0xff] %vm4738, %v4319
      %4771 = vst.msk [vmem:[%s172 + $0x100] sm:$0xff] %vm4738, %v4320
      %4772 = vst.msk [vmem:[%s172 + $0x108] sm:$0xff] %vm4738, %v4321
      %4773 = vst.msk [vmem:[%s172 + $0x110] sm:$0xff] %vm4738, %v4322
      %4774 = vst.msk [vmem:[%s172 + $0x118] sm:$0xff] %vm4738, %v4323
      %4775 = vst.msk [vmem:[%s172 + $0x120] sm:$0xff] %vm4738, %v4324
      %4776 = vst.msk [vmem:[%s172 + $0x128] sm:$0xff] %vm4738, %v4325
      %4777 = vst.msk [vmem:[%s172 + $0x130] sm:$0xff] %vm4738, %v4326
      %4778 = vst.msk [vmem:[%s172 + $0x138] sm:$0xff] %vm4738, %v4327
      %4779 = vst.msk [vmem:[%s172 + $0x140] sm:$0xff] %vm4738, %v4328
      %4780 = vst.msk [vmem:[%s172 + $0x148] sm:$0xff] %vm4738, %v4329
      %4781 = vst.msk [vmem:[%s172 + $0x150] sm:$0xff] %vm4738, %v4330
      %4782 = vst.msk [vmem:[%s172 + $0x158] sm:$0xff] %vm4738, %v4331
      %4783 = vst.msk [vmem:[%s172 + $0x160] sm:$0xff] %vm4738, %v4332
      %4784 = vst.msk [vmem:[%s172 + $0x168] sm:$0xff] %vm4738, %v4333
      %4785 = vst.msk [vmem:[%s172 + $0x170] sm:$0xff] %vm4738, %v4334
      %4786 = vst.msk [vmem:[%s172 + $0x178] sm:$0xff] %vm4738, %v4335
      %4787 = vst.msk [vmem:[%s172 + $0x180] sm:$0xff] %vm4738, %v4336
      %4788 = vst.msk [vmem:[%s172 + $0x188] sm:$0xff] %vm4738, %v4337
      %4789 = vst.msk [vmem:[%s172 + $0x190] sm:$0xff] %vm4738, %v4338
      %4790 = vst.msk [vmem:[%s172 + $0x198] sm:$0xff] %vm4738, %v4339
      %4791 = vst.msk [vmem:[%s172 + $0x1a0] sm:$0xff] %vm4738, %v4340
      %4792 = vst.msk [vmem:[%s172 + $0x1a8] sm:$0xff] %vm4738, %v4341
      %4793 = vst.msk [vmem:[%s172 + $0x1b0] sm:$0xff] %vm4738, %v4342
      %4794 = vst.msk [vmem:[%s172 + $0x1b8] sm:$0xff] %vm4738, %v4343
      %4795 = vst.msk [vmem:[%s172 + $0x1c0] sm:$0xff] %vm4738, %v4344
      %4796 = vst.msk [vmem:[%s172 + $0x1c8] sm:$0xff] %vm4738, %v4345
      %4797 = vst.msk [vmem:[%s172 + $0x1d0] sm:$0xff] %vm4738, %v4346
      %4798 = vst.msk [vmem:[%s172 + $0x1d8] sm:$0xff] %vm4738, %v4347
      %4799 = vst.msk [vmem:[%s172 + $0x1e0] sm:$0xff] %vm4738, %v4348
      %4800 = vst.msk [vmem:[%s172 + $0x1e8] sm:$0xff] %vm4738, %v4349
      %4801 = vst.msk [vmem:[%s172 + $0x1f0] sm:$0xff] %vm4738, %v4350
      %4802 = vst.msk [vmem:[%s172 + $0x1f8] sm:$0xff] %vm4738, %v4351
      %4803 = vst.msk [vmem:[%s172 + $0x200] sm:$0xff] %vm4738, %v4352
      %4804 = vst.msk [vmem:[%s172 + $0x208] sm:$0xff] %vm4738, %v4353
      %4805 = vst.msk [vmem:[%s172 + $0x210] sm:$0xff] %vm4738, %v4354
      %4806 = vst.msk [vmem:[%s172 + $0x218] sm:$0xff] %vm4738, %v4355
      %4807 = vst.msk [vmem:[%s172 + $0x220] sm:$0xff] %vm4738, %v4356
      %4808 = vst.msk [vmem:[%s172 + $0x228] sm:$0xff] %vm4738, %v4357
      %4809 = vst.msk [vmem:[%s172 + $0x230] sm:$0xff] %vm4738, %v4358
      %4810 = vst.msk [vmem:[%s172 + $0x238] sm:$0xff] %vm4738, %v4359
      %4811 = vst.msk [vmem:[%s172 + $0x240] sm:$0xff] %vm4738, %v4360
      %4812 = vst.msk [vmem:[%s172 + $0x248] sm:$0xff] %vm4738, %v4361
      %4813 = vst.msk [vmem:[%s172 + $0x250] sm:$0xff] %vm4738, %v4362
      %4814 = vst.msk [vmem:[%s172 + $0x258] sm:$0xff] %vm4738, %v4363
      %4815 = vst.msk [vmem:[%s172 + $0x260] sm:$0xff] %vm4738, %v4364
      %4816 = vst.msk [vmem:[%s172 + $0x268] sm:$0xff] %vm4738, %v4365
      %4817 = vst.msk [vmem:[%s172 + $0x270] sm:$0xff] %vm4738, %v4366
      %4818 = vst.msk [vmem:[%s172 + $0x278] sm:$0xff] %vm4738, %v4367
      %4819 = vst.msk [vmem:[%s172 + $0x280] sm:$0xff] %vm4738, %v4368
      %4820 = vst.msk [vmem:[%s172 + $0x288] sm:$0xff] %vm4738, %v4369
      %4821 = vst.msk [vmem:[%s172 + $0x290] sm:$0xff] %vm4738, %v4370
      %4822 = vst.msk [vmem:[%s172 + $0x298] sm:$0xff] %vm4738, %v4371
      %4823 = vst.msk [vmem:[%s172 + $0x2a0] sm:$0xff] %vm4738, %v4372
      %4824 = vst.msk [vmem:[%s172 + $0x2a8] sm:$0xff] %vm4738, %v4373
      %4825 = vst.msk [vmem:[%s172 + $0x2b0] sm:$0xff] %vm4738, %v4374
      %4826 = vst.msk [vmem:[%s172 + $0x2b8] sm:$0xff] %vm4738, %v4375
      %4827 = vst.msk [vmem:[%s172 + $0x2c0] sm:$0xff] %vm4738, %v4376
      %4828 = vst.msk [vmem:[%s172 + $0x2c8] sm:$0xff] %vm4738, %v4377
      %4829 = vst.msk [vmem:[%s172 + $0x2d0] sm:$0xff] %vm4738, %v4378
      %4830 = vst.msk [vmem:[%s172 + $0x2d8] sm:$0xff] %vm4738, %v4379
      %4831 = vst.msk [vmem:[%s172 + $0x2e0] sm:$0xff] %vm4738, %v4380
      %4832 = vst.msk [vmem:[%s172 + $0x2e8] sm:$0xff] %vm4738, %v4381
      %4833 = vst.msk [vmem:[%s172 + $0x2f0] sm:$0xff] %vm4738, %v4382
      %4834 = vst.msk [vmem:[%s172 + $0x2f8] sm:$0xff] %vm4738, %v4383
      %4835 = vst.msk [vmem:[%s172 + $0x300] sm:$0xff] %vm4738, %v4384
      %4836 = vst.msk [vmem:[%s172 + $0x308] sm:$0xff] %vm4738, %v4385
      %4837 = vst.msk [vmem:[%s172 + $0x310] sm:$0xff] %vm4738, %v4386
      %4838 = vst.msk [vmem:[%s172 + $0x318] sm:$0xff] %vm4738, %v4387
      %4839 = vst.msk [vmem:[%s172 + $0x320] sm:$0xff] %vm4738, %v4388
      %4840 = vst.msk [vmem:[%s172 + $0x328] sm:$0xff] %vm4738, %v4389
      %4841 = vst.msk [vmem:[%s172 + $0x330] sm:$0xff] %vm4738, %v4390
      %4842 = vst.msk [vmem:[%s172 + $0x338] sm:$0xff] %vm4738, %v4391
      %4843 = vst.msk [vmem:[%s172 + $0x340] sm:$0xff] %vm4738, %v4392
      %4844 = vst.msk [vmem:[%s172 + $0x348] sm:$0xff] %vm4738, %v4393
      %4845 = vst.msk [vmem:[%s172 + $0x350] sm:$0xff] %vm4738, %v4394
      %4846 = vst.msk [vmem:[%s172 + $0x358] sm:$0xff] %vm4738, %v4395
      %4847 = vst.msk [vmem:[%s172 + $0x360] sm:$0xff] %vm4738, %v4396
      %4848 = vst.msk [vmem:[%s172 + $0x368] sm:$0xff] %vm4738, %v4397
      %4849 = vst.msk [vmem:[%s172 + $0x370] sm:$0xff] %vm4738, %v4398
      %4850 = vst.msk [vmem:[%s172 + $0x378] sm:$0xff] %vm4738, %v4399
      %4851 = vst.msk [vmem:[%s172 + $0x380] sm:$0xff] %vm4738, %v4400
      %4852 = vst.msk [vmem:[%s172 + $0x388] sm:$0xff] %vm4738, %v4401
      %4853 = vst.msk [vmem:[%s172 + $0x390] sm:$0xff] %vm4738, %v4402
      %4854 = vst.msk [vmem:[%s172 + $0x398] sm:$0xff] %vm4738, %v4403
      %4855 = vst.msk [vmem:[%s172 + $0x3a0] sm:$0xff] %vm4738, %v4404
      %4856 = vst.msk [vmem:[%s172 + $0x3a8] sm:$0xff] %vm4738, %v4405
      %4857 = vst.msk [vmem:[%s172 + $0x3b0] sm:$0xff] %vm4738, %v4406
      %4858 = vst.msk [vmem:[%s172 + $0x3b8] sm:$0xff] %vm4738, %v4407
      %4859 = vst.msk [vmem:[%s172 + $0x3c0] sm:$0xff] %vm4738, %v4408
      %4860 = vst.msk [vmem:[%s172 + $0x3c8] sm:$0xff] %vm4738, %v4409
      %4861 = vst.msk [vmem:[%s172 + $0x3d0] sm:$0xff] %vm4738, %v4410
      %4862 = vst.msk [vmem:[%s172 + $0x3d8] sm:$0xff] %vm4738, %v4411
      %4863 = vst.msk [vmem:[%s172 + $0x3e0] sm:$0xff] %vm4738, %v4412
      %4864 = vst.msk [vmem:[%s172 + $0x3e8] sm:$0xff] %vm4738, %v4413
      %4865 = vst.msk [vmem:[%s172 + $0x3f0] sm:$0xff] %vm4738, %v4414
      %4866 = vst.msk [vmem:[%s172 + $0x3f8] sm:$0xff] %vm4738, %v4415
      %4867 = vst.msk [vmem:[%s172 + $0x400] sm:$0xff] %vm4738, %v4416
      %4868 = vst.msk [vmem:[%s172 + $0x408] sm:$0xff] %vm4738, %v4417
      %4869 = vst.msk [vmem:[%s172 + $0x410] sm:$0xff] %vm4738, %v4418
      %4870 = vst.msk [vmem:[%s172 + $0x418] sm:$0xff] %vm4738, %v4419
      %4871 = vst.msk [vmem:[%s172 + $0x420] sm:$0xff] %vm4738, %v4420
      %4872 = vst.msk [vmem:[%s172 + $0x428] sm:$0xff] %vm4738, %v4421
      %4873 = vst.msk [vmem:[%s172 + $0x430] sm:$0xff] %vm4738, %v4422
      %4874 = vst.msk [vmem:[%s172 + $0x438] sm:$0xff] %vm4738, %v4423
      %4875 = vst.msk [vmem:[%s172 + $0x440] sm:$0xff] %vm4738, %v4424
      %4876 = vst.msk [vmem:[%s172 + $0x448] sm:$0xff] %vm4738, %v4425
      %4877 = vst.msk [vmem:[%s172 + $0x450] sm:$0xff] %vm4738, %v4426
      %4878 = vst.msk [vmem:[%s172 + $0x458] sm:$0xff] %vm4738, %v4427
      %4879 = vst.msk [vmem:[%s172 + $0x460] sm:$0xff] %vm4738, %v4428
      %4880 = vst.msk [vmem:[%s172 + $0x468] sm:$0xff] %vm4738, %v4429
      %4881 = vst.msk [vmem:[%s172 + $0x470] sm:$0xff] %vm4738, %v4430
      %4882 = vst.msk [vmem:[%s172 + $0x478] sm:$0xff] %vm4738, %v4431
      %4883 = vst.msk [vmem:[%s172 + $0x480] sm:$0xff] %vm4738, %v4432
      %4884 = vst.msk [vmem:[%s172 + $0x488] sm:$0xff] %vm4738, %v4433
      %4885 = vst.msk [vmem:[%s172 + $0x490] sm:$0xff] %vm4738, %v4434
      %4886 = vst.msk [vmem:[%s172 + $0x498] sm:$0xff] %vm4738, %v4435
      %4887 = vst.msk [vmem:[%s172 + $0x4a0] sm:$0xff] %vm4738, %v4436
      %4888 = vst.msk [vmem:[%s172 + $0x4a8] sm:$0xff] %vm4738, %v4437
      %4889 = vst.msk [vmem:[%s172 + $0x4b0] sm:$0xff] %vm4738, %v4438
      %4890 = vst.msk [vmem:[%s172 + $0x4b8] sm:$0xff] %vm4738, %v4439
      %4891 = vst.msk [vmem:[%s172 + $0x4c0] sm:$0xff] %vm4738, %v4440
      %4892 = vst.msk [vmem:[%s172 + $0x4c8] sm:$0xff] %vm4738, %v4441
      %4893 = vst.msk [vmem:[%s172 + $0x4d0] sm:$0xff] %vm4738, %v4442
      %4894 = vst.msk [vmem:[%s172 + $0x4d8] sm:$0xff] %vm4738, %v4443
      %4895 = vst.msk [vmem:[%s172 + $0x4e0] sm:$0xff] %vm4738, %v4444
      %4896 = vst.msk [vmem:[%s172 + $0x4e8] sm:$0xff] %vm4738, %v4445
      %4897 = vst.msk [vmem:[%s172 + $0x4f0] sm:$0xff] %vm4738, %v4446
      %4898 = vst.msk [vmem:[%s172 + $0x4f8] sm:$0xff] %vm4738, %v4447
      %4899 = vst.msk [vmem:[%s172 + $0x500] sm:$0xff] %vm4738, %v4448
      %4900 = vst.msk [vmem:[%s172 + $0x508] sm:$0xff] %vm4738, %v4449
      %4901 = vst.msk [vmem:[%s172 + $0x510] sm:$0xff] %vm4738, %v4450
      %4902 = vst.msk [vmem:[%s172 + $0x518] sm:$0xff] %vm4738, %v4451
      %4903 = vst.msk [vmem:[%s172 + $0x520] sm:$0xff] %vm4738, %v4452
      %4904 = vst.msk [vmem:[%s172 + $0x528] sm:$0xff] %vm4738, %v4453
      %4905 = vst.msk [vmem:[%s172 + $0x530] sm:$0xff] %vm4738, %v4454
      %4906 = vst.msk [vmem:[%s172 + $0x538] sm:$0xff] %vm4738, %v4455
      %4907 = vst.msk [vmem:[%s172 + $0x540] sm:$0xff] %vm4738, %v4456
      %4908 = vst.msk [vmem:[%s172 + $0x548] sm:$0xff] %vm4738, %v4457
      %4909 = vst.msk [vmem:[%s172 + $0x550] sm:$0xff] %vm4738, %v4458
      %4910 = vst.msk [vmem:[%s172 + $0x558] sm:$0xff] %vm4738, %v4459
      %4911 = vst.msk [vmem:[%s172 + $0x560] sm:$0xff] %vm4738, %v4460
      %4912 = vst.msk [vmem:[%s172 + $0x568] sm:$0xff] %vm4738, %v4461
      %4913 = vst.msk [vmem:[%s172 + $0x570] sm:$0xff] %vm4738, %v4462
      %4914 = vst.msk [vmem:[%s172 + $0x578] sm:$0xff] %vm4738, %v4463
      %4915 = vst.msk [vmem:[%s172 + $0x580] sm:$0xff] %vm4738, %v4464
      %4916 = vst.msk [vmem:[%s172 + $0x588] sm:$0xff] %vm4738, %v4465
      %4917 = vst.msk [vmem:[%s172 + $0x590] sm:$0xff] %vm4738, %v4466
      %4918 = vst.msk [vmem:[%s172 + $0x598] sm:$0xff] %vm4738, %v4467
      %4919 = vst.msk [vmem:[%s172 + $0x5a0] sm:$0xff] %vm4738, %v4468
      %4920 = vst.msk [vmem:[%s172 + $0x5a8] sm:$0xff] %vm4738, %v4469
      %4921 = vst.msk [vmem:[%s172 + $0x5b0] sm:$0xff] %vm4738, %v4470
      %4922 = vst.msk [vmem:[%s172 + $0x5b8] sm:$0xff] %vm4738, %v4471
      %4923 = vst.msk [vmem:[%s172 + $0x5c0] sm:$0xff] %vm4738, %v4472
      %4924 = vst.msk [vmem:[%s172 + $0x5c8] sm:$0xff] %vm4738, %v4473
      %4925 = vst.msk [vmem:[%s172 + $0x5d0] sm:$0xff] %vm4738, %v4474
      %4926 = vst.msk [vmem:[%s172 + $0x5d8] sm:$0xff] %vm4738, %v4475
      %4927 = vst.msk [vmem:[%s172 + $0x5e0] sm:$0xff] %vm4738, %v4476
      %4928 = vst.msk [vmem:[%s172 + $0x5e8] sm:$0xff] %vm4738, %v4477
      %4929 = vst.msk [vmem:[%s172 + $0x5f0] sm:$0xff] %vm4738, %v4478
      %4930 = vst.msk [vmem:[%s172 + $0x5f8] sm:$0xff] %vm4738, %v4479
      %4931 = vst.msk [vmem:[%s172 + $0x600] sm:$0xff] %vm4738, %v4480
      %4932 = vst.msk [vmem:[%s172 + $0x608] sm:$0xff] %vm4738, %v4481
      %4933 = vst.msk [vmem:[%s172 + $0x610] sm:$0xff] %vm4738, %v4482
      %4934 = vst.msk [vmem:[%s172 + $0x618] sm:$0xff] %vm4738, %v4483
      %4935 = vst.msk [vmem:[%s172 + $0x620] sm:$0xff] %vm4738, %v4484
      %4936 = vst.msk [vmem:[%s172 + $0x628] sm:$0xff] %vm4738, %v4485
      %4937 = vst.msk [vmem:[%s172 + $0x630] sm:$0xff] %vm4738, %v4486
      %4938 = vst.msk [vmem:[%s172 + $0x638] sm:$0xff] %vm4738, %v4487
      %4939 = vst.msk [vmem:[%s172 + $0x640] sm:$0xff] %vm4738, %v4488
      %4940 = vst.msk [vmem:[%s172 + $0x648] sm:$0xff] %vm4738, %v4489
      %4941 = vst.msk [vmem:[%s172 + $0x650] sm:$0xff] %vm4738, %v4490
      %4942 = vst.msk [vmem:[%s172 + $0x658] sm:$0xff] %vm4738, %v4491
      %4943 = vst.msk [vmem:[%s172 + $0x660] sm:$0xff] %vm4738, %v4492
      %4944 = vst.msk [vmem:[%s172 + $0x668] sm:$0xff] %vm4738, %v4493
      %4945 = vst.msk [vmem:[%s172 + $0x670] sm:$0xff] %vm4738, %v4494
      %4946 = vst.msk [vmem:[%s172 + $0x678] sm:$0xff] %vm4738, %v4495
      %4947 = vst.msk [vmem:[%s172 + $0x680] sm:$0xff] %vm4738, %v4496
      %4948 = vst.msk [vmem:[%s172 + $0x688] sm:$0xff] %vm4738, %v4497
      %4949 = vst.msk [vmem:[%s172 + $0x690] sm:$0xff] %vm4738, %v4498
      %4950 = vst.msk [vmem:[%s172 + $0x698] sm:$0xff] %vm4738, %v4499
      %4951 = vst.msk [vmem:[%s172 + $0x6a0] sm:$0xff] %vm4738, %v4500
      %4952 = vst.msk [vmem:[%s172 + $0x6a8] sm:$0xff] %vm4738, %v4501
      %4953 = vst.msk [vmem:[%s172 + $0x6b0] sm:$0xff] %vm4738, %v4502
      %4954 = vst.msk [vmem:[%s172 + $0x6b8] sm:$0xff] %vm4738, %v4503
      %4955 = vst.msk [vmem:[%s172 + $0x6c0] sm:$0xff] %vm4738, %v4504
      %4956 = vst.msk [vmem:[%s172 + $0x6c8] sm:$0xff] %vm4738, %v4505
      %4957 = vst.msk [vmem:[%s172 + $0x6d0] sm:$0xff] %vm4738, %v4506
      %4958 = vst.msk [vmem:[%s172 + $0x6d8] sm:$0xff] %vm4738, %v4507
      %4959 = vst.msk [vmem:[%s172 + $0x6e0] sm:$0xff] %vm4738, %v4508
      %4960 = vst.msk [vmem:[%s172 + $0x6e8] sm:$0xff] %vm4738, %v4509
      %4961 = vst.msk [vmem:[%s172 + $0x6f0] sm:$0xff] %vm4738, %v4510
      %4962 = vst.msk [vmem:[%s172 + $0x6f8] sm:$0xff] %vm4738, %v4511
      %4963 = vst.msk [vmem:[%s172 + $0x700] sm:$0xff] %vm4738, %v4512
      %4964 = vst.msk [vmem:[%s172 + $0x708] sm:$0xff] %vm4738, %v4513
      %4965 = vst.msk [vmem:[%s172 + $0x710] sm:$0xff] %vm4738, %v4514
      %4966 = vst.msk [vmem:[%s172 + $0x718] sm:$0xff] %vm4738, %v4515
      %4967 = vst.msk [vmem:[%s172 + $0x720] sm:$0xff] %vm4738, %v4516
      %4968 = vst.msk [vmem:[%s172 + $0x728] sm:$0xff] %vm4738, %v4517
      %4969 = vst.msk [vmem:[%s172 + $0x730] sm:$0xff] %vm4738, %v4518
      %4970 = vst.msk [vmem:[%s172 + $0x738] sm:$0xff] %vm4738, %v4519
      %4971 = vst.msk [vmem:[%s172 + $0x740] sm:$0xff] %vm4738, %v4520
      %4972 = vst.msk [vmem:[%s172 + $0x748] sm:$0xff] %vm4738, %v4521
      %4973 = vst.msk [vmem:[%s172 + $0x750] sm:$0xff] %vm4738, %v4522
      %4974 = vst.msk [vmem:[%s172 + $0x758] sm:$0xff] %vm4738, %v4523
      %4975 = vst.msk [vmem:[%s172 + $0x760] sm:$0xff] %vm4738, %v4524
      %4976 = vst.msk [vmem:[%s172 + $0x768] sm:$0xff] %vm4738, %v4525
      %4977 = vst.msk [vmem:[%s172 + $0x770] sm:$0xff] %vm4738, %v4526
      %4978 = vst.msk [vmem:[%s172 + $0x778] sm:$0xff] %vm4738, %v4527
      %4979 = vst.msk [vmem:[%s172 + $0x780] sm:$0xff] %vm4738, %v4528
      %4980 = vst.msk [vmem:[%s172 + $0x788] sm:$0xff] %vm4738, %v4529
      %4981 = vst.msk [vmem:[%s172 + $0x790] sm:$0xff] %vm4738, %v4530
      %4982 = vst.msk [vmem:[%s172 + $0x798] sm:$0xff] %vm4738, %v4531
      %4983 = vst.msk [vmem:[%s172 + $0x7a0] sm:$0xff] %vm4738, %v4532
      %4984 = vst.msk [vmem:[%s172 + $0x7a8] sm:$0xff] %vm4738, %v4533
      %4985 = vst.msk [vmem:[%s172 + $0x7b0] sm:$0xff] %vm4738, %v4534
      %4986 = vst.msk [vmem:[%s172 + $0x7b8] sm:$0xff] %vm4738, %v4535
      %4987 = vst.msk [vmem:[%s172 + $0x7c0] sm:$0xff] %vm4738, %v4536
      %4988 = vst.msk [vmem:[%s172 + $0x7c8] sm:$0xff] %vm4738, %v4537
      %4989 = vst.msk [vmem:[%s172 + $0x7d0] sm:$0xff] %vm4738, %v4538
      %4990 = vst.msk [vmem:[%s172 + $0x7d8] sm:$0xff] %vm4738, %v4539
      %4991 = vst.msk [vmem:[%s172 + $0x7e0] sm:$0xff] %vm4738, %v4540
      %4992 = vst.msk [vmem:[%s172 + $0x7e8] sm:$0xff] %vm4738, %v4541
      %4993 = vst.msk [vmem:[%s172 + $0x7f0] sm:$0xff] %vm4738, %v4542
      %4994 = vst.msk [vmem:[%s172 + $0x7f8] sm:$0xff] %vm4738, %v4543
      %4995 = vst.msk [vmem:[%s172 + $0x800] sm:$0xff] %vm4738, %v4544
      %4996 = vst.msk [vmem:[%s172 + $0x808] sm:$0xff] %vm4738, %v4545
      %4997 = vst.msk [vmem:[%s172 + $0x810] sm:$0xff] %vm4738, %v4546
      %4998 = vst.msk [vmem:[%s172 + $0x818] sm:$0xff] %vm4738, %v4547
      %4999 = vst.msk [vmem:[%s172 + $0x820] sm:$0xff] %vm4738, %v4548
      %5000 = vst.msk [vmem:[%s172 + $0x828] sm:$0xff] %vm4738, %v4549
      %5001 = vst.msk [vmem:[%s172 + $0x830] sm:$0xff] %vm4738, %v4550
      %5002 = vst.msk [vmem:[%s172 + $0x838] sm:$0xff] %vm4738, %v4551
      %5003 = vst.msk [vmem:[%s172 + $0x840] sm:$0xff] %vm4738, %v4552
      %5004 = vst.msk [vmem:[%s172 + $0x848] sm:$0xff] %vm4738, %v4553
      %5005 = vst.msk [vmem:[%s172 + $0x850] sm:$0xff] %vm4738, %v4554
      %5006 = vst.msk [vmem:[%s172 + $0x858] sm:$0xff] %vm4738, %v4555
      %5007 = vst.msk [vmem:[%s172 + $0x860] sm:$0xff] %vm4738, %v4556
      %5008 = vst.msk [vmem:[%s172 + $0x868] sm:$0xff] %vm4738, %v4557
      %5009 = vst.msk [vmem:[%s172 + $0x870] sm:$0xff] %vm4738, %v4558
      %5010 = vst.msk [vmem:[%s172 + $0x878] sm:$0xff] %vm4738, %v4559
      %5011 = vst.msk [vmem:[%s172 + $0x880] sm:$0xff] %vm4738, %v4560
      %5012 = vst.msk [vmem:[%s172 + $0x888] sm:$0xff] %vm4738, %v4561
      %5013 = vst.msk [vmem:[%s172 + $0x890] sm:$0xff] %vm4738, %v4562
      %5014 = vst.msk [vmem:[%s172 + $0x898] sm:$0xff] %vm4738, %v4563
      %5015 = vst.msk [vmem:[%s172 + $0x8a0] sm:$0xff] %vm4738, %v4564
      %5016 = vst.msk [vmem:[%s172 + $0x8a8] sm:$0xff] %vm4738, %v4565
      %5017 = vst.msk [vmem:[%s172 + $0x8b0] sm:$0xff] %vm4738, %v4566
      %5018 = vst.msk [vmem:[%s172 + $0x8b8] sm:$0xff] %vm4738, %v4567
      %5019 = vst.msk [vmem:[%s172 + $0x8c0] sm:$0xff] %vm4738, %v4568
      %5020 = vst.msk [vmem:[%s172 + $0x8c8] sm:$0xff] %vm4738, %v4569
      %5021 = vst.msk [vmem:[%s172 + $0x8d0] sm:$0xff] %vm4738, %v4570
      %5022 = vst.msk [vmem:[%s172 + $0x8d8] sm:$0xff] %vm4738, %v4571
      %5023 = vst.msk [vmem:[%s172 + $0x8e0] sm:$0xff] %vm4738, %v4572
      %5024 = vst.msk [vmem:[%s172 + $0x8e8] sm:$0xff] %vm4738, %v4573
      %5025 = vst.msk [vmem:[%s172 + $0x8f0] sm:$0xff] %vm4738, %v4574
      %5026 = vst.msk [vmem:[%s172 + $0x8f8] sm:$0xff] %vm4738, %v4575
      %5027 = vst.msk [vmem:[%s172 + $0x900] sm:$0xff] %vm4738, %v4576
      %5028 = vst.msk [vmem:[%s172 + $0x908] sm:$0xff] %vm4738, %v4577
      %5029 = vst.msk [vmem:[%s172 + $0x910] sm:$0xff] %vm4738, %v4578
      %5030 = vst.msk [vmem:[%s172 + $0x918] sm:$0xff] %vm4738, %v4579
      %5031 = vst.msk [vmem:[%s172 + $0x920] sm:$0xff] %vm4738, %v4580
      %5032 = vst.msk [vmem:[%s172 + $0x928] sm:$0xff] %vm4738, %v4581
      %5033 = vst.msk [vmem:[%s172 + $0x930] sm:$0xff] %vm4738, %v4582
      %5034 = vst.msk [vmem:[%s172 + $0x938] sm:$0xff] %vm4738, %v4583
      %5035 = vst.msk [vmem:[%s172 + $0x940] sm:$0xff] %vm4738, %v4584
      %5036 = vst.msk [vmem:[%s172 + $0x948] sm:$0xff] %vm4738, %v4585
      %5037 = vst.msk [vmem:[%s172 + $0x950] sm:$0xff] %vm4738, %v4586
      %5038 = vst.msk [vmem:[%s172 + $0x958] sm:$0xff] %vm4738, %v4587
      %5039 = vst.msk [vmem:[%s172 + $0x960] sm:$0xff] %vm4738, %v4588
      %5040 = vst.msk [vmem:[%s172 + $0x968] sm:$0xff] %vm4738, %v4589
      %5041 = vst.msk [vmem:[%s172 + $0x970] sm:$0xff] %vm4738, %v4590
      %5042 = vst.msk [vmem:[%s172 + $0x978] sm:$0xff] %vm4738, %v4591
      %5043 = vst.msk [vmem:[%s172 + $0x980] sm:$0xff] %vm4738, %v4592
      %5044 = vst.msk [vmem:[%s172 + $0x988] sm:$0xff] %vm4738, %v4593
      %5045 = vst.msk [vmem:[%s172 + $0x990] sm:$0xff] %vm4738, %v4594
      %5046 = vst.msk [vmem:[%s172 + $0x998] sm:$0xff] %vm4738, %v4595
      %5047 = vst.msk [vmem:[%s172 + $0x9a0] sm:$0xff] %vm4738, %v4596
      %5048 = vst.msk [vmem:[%s172 + $0x9a8] sm:$0xff] %vm4738, %v4597
      %5049 = vst.msk [vmem:[%s172 + $0x9b0] sm:$0xff] %vm4738, %v4598
      %5050 = vst.msk [vmem:[%s172 + $0x9b8] sm:$0xff] %vm4738, %v4599
      %5051 = vst.msk [vmem:[%s172 + $0x9c0] sm:$0xff] %vm4738, %v4600
      %5052 = vst.msk [vmem:[%s172 + $0x9c8] sm:$0xff] %vm4738, %v4601
      %5053 = vst.msk [vmem:[%s172 + $0x9d0] sm:$0xff] %vm4738, %v4602
      %5054 = vst.msk [vmem:[%s172 + $0x9d8] sm:$0xff] %vm4738, %v4603
      %5055 = vst.msk [vmem:[%s172 + $0x9e0] sm:$0xff] %vm4738, %v4604
      %5056 = vst.msk [vmem:[%s172 + $0x9e8] sm:$0xff] %vm4738, %v4605
      %5057 = vst.msk [vmem:[%s172 + $0x9f0] sm:$0xff] %vm4738, %v4606
      %5058 = vst.msk [vmem:[%s172 + $0x9f8] sm:$0xff] %vm4738, %v4607
      %5059 = vst.msk [vmem:[%s172 + $0xa00] sm:$0xff] %vm4738, %v4608
      %5060 = vst.msk [vmem:[%s172 + $0xa08] sm:$0xff] %vm4738, %v4609
      %5061 = vst.msk [vmem:[%s172 + $0xa10] sm:$0xff] %vm4738, %v4610
      %5062 = vst.msk [vmem:[%s172 + $0xa18] sm:$0xff] %vm4738, %v4611
      %5063 = vst.msk [vmem:[%s172 + $0xa20] sm:$0xff] %vm4738, %v4612
      %5064 = vst.msk [vmem:[%s172 + $0xa28] sm:$0xff] %vm4738, %v4613
      %5065 = vst.msk [vmem:[%s172 + $0xa30] sm:$0xff] %vm4738, %v4614
      %5066 = vst.msk [vmem:[%s172 + $0xa38] sm:$0xff] %vm4738, %v4615
      %5067 = vst.msk [vmem:[%s172 + $0xa40] sm:$0xff] %vm4738, %v4616
      %5068 = vst.msk [vmem:[%s172 + $0xa48] sm:$0xff] %vm4738, %v4617
      %5069 = vst.msk [vmem:[%s172 + $0xa50] sm:$0xff] %vm4738, %v4618
      %5070 = vst.msk [vmem:[%s172 + $0xa58] sm:$0xff] %vm4738, %v4619
      %5071 = vst.msk [vmem:[%s172 + $0xa60] sm:$0xff] %vm4738, %v4620
      %5072 = vst.msk [vmem:[%s172 + $0xa68] sm:$0xff] %vm4738, %v4621
      %5073 = vst.msk [vmem:[%s172 + $0xa70] sm:$0xff] %vm4738, %v4622
      %5074 = vst.msk [vmem:[%s172 + $0xa78] sm:$0xff] %vm4738, %v4623
      %5075 = vst.msk [vmem:[%s172 + $0xa80] sm:$0xff] %vm4738, %v4624
      %5076 = vst.msk [vmem:[%s172 + $0xa88] sm:$0xff] %vm4738, %v4625
      %5077 = vst.msk [vmem:[%s172 + $0xa90] sm:$0xff] %vm4738, %v4626
      %5078 = vst.msk [vmem:[%s172 + $0xa98] sm:$0xff] %vm4738, %v4627
      %5079 = vst.msk [vmem:[%s172 + $0xaa0] sm:$0xff] %vm4738, %v4628
      %5080 = vst.msk [vmem:[%s172 + $0xaa8] sm:$0xff] %vm4738, %v4629
      %5081 = vst.msk [vmem:[%s172 + $0xab0] sm:$0xff] %vm4738, %v4630
      %5082 = vst.msk [vmem:[%s172 + $0xab8] sm:$0xff] %vm4738, %v4631
      %5083 = vst.msk [vmem:[%s172 + $0xac0] sm:$0xff] %vm4738, %v4632
      %5084 = vst.msk [vmem:[%s172 + $0xac8] sm:$0xff] %vm4738, %v4633
      %5085 = vst.msk [vmem:[%s172 + $0xad0] sm:$0xff] %vm4738, %v4634
      %5086 = vst.msk [vmem:[%s172 + $0xad8] sm:$0xff] %vm4738, %v4635
      %5087 = vst.msk [vmem:[%s172 + $0xae0] sm:$0xff] %vm4738, %v4636
      %5088 = vst.msk [vmem:[%s172 + $0xae8] sm:$0xff] %vm4738, %v4637
      %5089 = vst.msk [vmem:[%s172 + $0xaf0] sm:$0xff] %vm4738, %v4638
      %5090 = vst.msk [vmem:[%s172 + $0xaf8] sm:$0xff] %vm4738, %v4639
      %5091 = vst.msk [vmem:[%s172 + $0xb00] sm:$0xff] %vm4738, %v4640
      %5092 = vst.msk [vmem:[%s172 + $0xb08] sm:$0xff] %vm4738, %v4641
      %5093 = vst.msk [vmem:[%s172 + $0xb10] sm:$0xff] %vm4738, %v4642
      %5094 = vst.msk [vmem:[%s172 + $0xb18] sm:$0xff] %vm4738, %v4643
      %5095 = vst.msk [vmem:[%s172 + $0xb20] sm:$0xff] %vm4738, %v4644
      %5096 = vst.msk [vmem:[%s172 + $0xb28] sm:$0xff] %vm4738, %v4645
      %5097 = vst.msk [vmem:[%s172 + $0xb30] sm:$0xff] %vm4738, %v4646
      %5098 = vst.msk [vmem:[%s172 + $0xb38] sm:$0xff] %vm4738, %v4647
      %5099 = vst.msk [vmem:[%s172 + $0xb40] sm:$0xff] %vm4738, %v4648
      %5100 = vst.msk [vmem:[%s172 + $0xb48] sm:$0xff] %vm4738, %v4649
      %5101 = vst.msk [vmem:[%s172 + $0xb50] sm:$0xff] %vm4738, %v4650
      %5102 = vst.msk [vmem:[%s172 + $0xb58] sm:$0xff] %vm4738, %v4651
      %5103 = vst.msk [vmem:[%s172 + $0xb60] sm:$0xff] %vm4738, %v4652
      %5104 = vst.msk [vmem:[%s172 + $0xb68] sm:$0xff] %vm4738, %v4653
      %5105 = vst.msk [vmem:[%s172 + $0xb70] sm:$0xff] %vm4738, %v4654
      %5106 = vst.msk [vmem:[%s172 + $0xb78] sm:$0xff] %vm4738, %v4655
      %5107 = vst.msk [vmem:[%s172 + $0xb80] sm:$0xff] %vm4738, %v4656
      %5108 = vst.msk [vmem:[%s172 + $0xb88] sm:$0xff] %vm4738, %v4657
      %5109 = vst.msk [vmem:[%s172 + $0xb90] sm:$0xff] %vm4738, %v4658
      %5110 = vst.msk [vmem:[%s172 + $0xb98] sm:$0xff] %vm4738, %v4659
      %5111 = vst.msk [vmem:[%s172 + $0xba0] sm:$0xff] %vm4738, %v4660
      %5112 = vst.msk [vmem:[%s172 + $0xba8] sm:$0xff] %vm4738, %v4661
      %5113 = vst.msk [vmem:[%s172 + $0xbb0] sm:$0xff] %vm4738, %v4662
      %5114 = vst.msk [vmem:[%s172 + $0xbb8] sm:$0xff] %vm4738, %v4663
      %5115 = vst.msk [vmem:[%s172 + $0xbc0] sm:$0xff] %vm4738, %v4664
      %5116 = vst.msk [vmem:[%s172 + $0xbc8] sm:$0xff] %vm4738, %v4665
      %5117 = vst.msk [vmem:[%s172 + $0xbd0] sm:$0xff] %vm4738, %v4666
      %5118 = vst.msk [vmem:[%s172 + $0xbd8] sm:$0xff] %vm4738, %v4667
      %5119 = vst.msk [vmem:[%s172 + $0xbe0] sm:$0xff] %vm4738, %v4668
      %5120 = vst.msk [vmem:[%s172 + $0xbe8] sm:$0xff] %vm4738, %v4669
      %5121 = vst.msk [vmem:[%s172 + $0xbf0] sm:$0xff] %vm4738, %v4670
      %5122 = vst.msk [vmem:[%s172 + $0xbf8] sm:$0xff] %vm4738, %v4671
      %5123 = vst.msk [vmem:[%s172 + $0xc00] sm:$0xff] %vm4738, %v4672
      %5124 = vst.msk [vmem:[%s172 + $0xc08] sm:$0xff] %vm4738, %v4673
      %5125 = vst.msk [vmem:[%s172 + $0xc10] sm:$0xff] %vm4738, %v4674
      %5126 = vst.msk [vmem:[%s172 + $0xc18] sm:$0xff] %vm4738, %v4675
      %5127 = vst.msk [vmem:[%s172 + $0xc20] sm:$0xff] %vm4738, %v4676
      %5128 = vst.msk [vmem:[%s172 + $0xc28] sm:$0xff] %vm4738, %v4677
      %5129 = vst.msk [vmem:[%s172 + $0xc30] sm:$0xff] %vm4738, %v4678
      %5130 = vst.msk [vmem:[%s172 + $0xc38] sm:$0xff] %vm4738, %v4679
      %5131 = vst.msk [vmem:[%s172 + $0xc40] sm:$0xff] %vm4738, %v4680
      %5132 = vst.msk [vmem:[%s172 + $0xc48] sm:$0xff] %vm4738, %v4681
      %5133 = vst.msk [vmem:[%s172 + $0xc50] sm:$0xff] %vm4738, %v4682
      %5134 = vst.msk [vmem:[%s172 + $0xc58] sm:$0xff] %vm4738, %v4683
      %5135 = vst.msk [vmem:[%s172 + $0xc60] sm:$0xff] %vm4738, %v4684
      %5136 = vst.msk [vmem:[%s172 + $0xc68] sm:$0xff] %vm4738, %v4685
      %5137 = vst.msk [vmem:[%s172 + $0xc70] sm:$0xff] %vm4738, %v4686
      %5138 = vst.msk [vmem:[%s172 + $0xc78] sm:$0xff] %vm4738, %v4687
      %5139 = vst.msk [vmem:[%s172 + $0xc80] sm:$0xff] %vm4738, %v4688
      %5140 = vst.msk [vmem:[%s172 + $0xc88] sm:$0xff] %vm4738, %v4689
      %5141 = vst.msk [vmem:[%s172 + $0xc90] sm:$0xff] %vm4738, %v4690
      %5142 = vst.msk [vmem:[%s172 + $0xc98] sm:$0xff] %vm4738, %v4691
      %5143 = vst.msk [vmem:[%s172 + $0xca0] sm:$0xff] %vm4738, %v4692
      %5144 = vst.msk [vmem:[%s172 + $0xca8] sm:$0xff] %vm4738, %v4693
      %5145 = vst.msk [vmem:[%s172 + $0xcb0] sm:$0xff] %vm4738, %v4694
      %5146 = vst.msk [vmem:[%s172 + $0xcb8] sm:$0xff] %vm4738, %v4695
      %5147 = vst.msk [vmem:[%s172 + $0xcc0] sm:$0xff] %vm4738, %v4696
      %5148 = vst.msk [vmem:[%s172 + $0xcc8] sm:$0xff] %vm4738, %v4697
      %5149 = vst.msk [vmem:[%s172 + $0xcd0] sm:$0xff] %vm4738, %v4698
      %5150 = vst.msk [vmem:[%s172 + $0xcd8] sm:$0xff] %vm4738, %v4699
      %5151 = vst.msk [vmem:[%s172 + $0xce0] sm:$0xff] %vm4738, %v4700
      %5152 = vst.msk [vmem:[%s172 + $0xce8] sm:$0xff] %vm4738, %v4701
      %5153 = vst.msk [vmem:[%s172 + $0xcf0] sm:$0xff] %vm4738, %v4702
      %5154 = vst.msk [vmem:[%s172 + $0xcf8] sm:$0xff] %vm4738, %v4703
      %5155 = vst.msk [vmem:[%s172 + $0xd00] sm:$0xff] %vm4738, %v4704
      %5156 = vst.msk [vmem:[%s172 + $0xd08] sm:$0xff] %vm4738, %v4705
      %5157 = vst.msk [vmem:[%s172 + $0xd10] sm:$0xff] %vm4738, %v4706
      %5158 = vst.msk [vmem:[%s172 + $0xd18] sm:$0xff] %vm4738, %v4707
      %5159 = vst.msk [vmem:[%s172 + $0xd20] sm:$0xff] %vm4738, %v4708
      %5160 = vst.msk [vmem:[%s172 + $0xd28] sm:$0xff] %vm4738, %v4709
      %5161 = vst.msk [vmem:[%s172 + $0xd30] sm:$0xff] %vm4738, %v4710
      %5162 = vst.msk [vmem:[%s172 + $0xd38] sm:$0xff] %vm4738, %v4711
      %5163 = vst.msk [vmem:[%s172 + $0xd40] sm:$0xff] %vm4738, %v4712
      %5164 = vst.msk [vmem:[%s172 + $0xd48] sm:$0xff] %vm4738, %v4713
      %5165 = vst.msk [vmem:[%s172 + $0xd50] sm:$0xff] %vm4738, %v4714
      %5166 = vst.msk [vmem:[%s172 + $0xd58] sm:$0xff] %vm4738, %v4715
      %5167 = vst.msk [vmem:[%s172 + $0xd60] sm:$0xff] %vm4738, %v4716
      %5168 = vst.msk [vmem:[%s172 + $0xd68] sm:$0xff] %vm4738, %v4717
      %5169 = vst.msk [vmem:[%s172 + $0xd70] sm:$0xff] %vm4738, %v4718
      %5170 = vst.msk [vmem:[%s172 + $0xd78] sm:$0xff] %vm4738, %v4719
      %5171 = vst.msk [vmem:[%s172 + $0xd80] sm:$0xff] %vm4738, %v4720
      %5172 = vst.msk [vmem:[%s172 + $0xd88] sm:$0xff] %vm4738, %v4721
      %5173 = vst.msk [vmem:[%s172 + $0xd90] sm:$0xff] %vm4738, %v4722
      %5174 = vst.msk [vmem:[%s172 + $0xd98] sm:$0xff] %vm4738, %v4723
      %5175 = vst.msk [vmem:[%s172 + $0xda0] sm:$0xff] %vm4738, %v4724
      %5176 = vst.msk [vmem:[%s172 + $0xda8] sm:$0xff] %vm4738, %v4725
      %5177 = vst.msk [vmem:[%s172 + $0xdb0] sm:$0xff] %vm4738, %v4726
      %5178 = vst.msk [vmem:[%s172 + $0xdb8] sm:$0xff] %vm4738, %v4727
      %5179 = vst.msk [vmem:[%s172 + $0xdc0] sm:$0xff] %vm4738, %v4728
      %5180 = vst.msk [vmem:[%s172 + $0xdc8] sm:$0xff] %vm4738, %v4729
      %5181 = vst.msk [vmem:[%s172 + $0xdd0] sm:$0xff] %vm4738, %v4730
      %5182 = vst.msk [vmem:[%s172 + $0xdd8] sm:$0xff] %vm4738, %v4731
      %5183 = vst.msk [vmem:[%s172 + $0xde0] sm:$0xff] %vm4738, %v4732
      %5184 = vst.msk [vmem:[%s172 + $0xde8] sm:$0xff] %vm4738, %v4733
      %5185 = vst.msk [vmem:[%s172 + $0xdf0] sm:$0xff] %vm4738, %v4734
      %5186 = vst.msk [vmem:[%s172 + $0xdf8] sm:$0xff] %vm4738, %v4735
      %5187 = vst.msk [vmem:[%s172 + $0xe00] sm:$0xff] %vm4738, %v4736
      %5188 = vst.msk [vmem:[%s172 + $0xe08] sm:$0xff] %vm4738, %v4737
      %s5189 = smul.u32 450, %s14
      %p5190 = scmp.lt.s32.totalorder %s5189, 899
      %s5191 = scalar_select %p5190, %s5189, 899
      %s5192 = smul.addr %s5191, 8
      %s5193 = scalar_lea.vmem %s3, %s5192
      // Predicated region
      $region33: #{inference_network_forward.3} parent=31 // pred_check
        %p5194 = pneg %p100
      $region34: #{inference_network_forward.3} parent=31 // pred_check_branch
        %5196 = sbr.rel (%p5194) target = $region36
      $region35: #{inference_network_forward.3} parent=31 // pred_region
        %s5197 = smul.u32 450, %s14
      $region36: #{inference_network_forward.3} parent=31 // pred_fallthru
        _
    $region32: #{inference_network_forward.3} parent=5 // pred_fallthru
      _
    %p5198 = scmp.le.s32.totalorder 2, %s9
    // Predicated region
    $region37: #{inference_network_forward.3} parent=5 // pred_check
      %p5199 = pneg %p5198
    $region38: #{inference_network_forward.3} parent=5 // pred_check_branch
      %5201 = sbr.rel (%p5199) target = $region40
    $region39: #{inference_network_forward.3} parent=5 // pred_region
      %s5202 = ssub.s32 %s9, 2
      // Predicated region
      $region41: #{inference_network_forward.3} parent=39 // pred_check
        %p5203 = pneg %p106
      $region42: #{inference_network_forward.3} parent=39 // pred_check_branch
        %5205 = sbr.rel (%p5203) target = $region44
      $region43: #{inference_network_forward.3} parent=39 // pred_region
        %s5206 = smul.u32 450, %s15
        %p5207 = scmp.lt.s32.totalorder %s5206, 899
        %s5208 = scalar_select %p5207, %s5206, 899
        %s5209 = smul.addr %s5208, 8
        %s5210 = scalar_lea.vmem %s3, %s5209
      $region44: #{inference_network_forward.3} parent=39 // pred_fallthru
        _
    $region40: #{inference_network_forward.3} parent=5 // pred_fallthru
      _
  $region6: #{inference_network_forward.3} parent=0 // loop_footer
    %s13 = sadd.s32 1, %s9
  $region7: #{inference_network_forward.3} parent=0 // loop_footer_branch
    %8 = sbr.rel target = $region3
  $region8: #{inference_network_forward.3} parent=0 // loop_exit
    _

// kernel: inference_network_forward.4
$region0: #{inference_network_forward.4}
  #allocation0 [shape = 'u32[]', space=smem, size = 0x4, offset = 0x4, fixed_abs, tag = 'smem constant byte address 0x4 - core index']
  #allocation1 [shape = 'u32[144,128]{1,0:T(1,128)}', space=vmem, size = 0x12000, scoped, tag = 'internal scratch']
  %s0 = inlined_call_operand.vmem [shape: bf16[1352,90], index: 0, kind: input, shape index: {}]
  %s1 = inlined_call_operand.vmem [shape: bf16[90,10], index: 1, kind: input, shape index: {}]
  %s2 = inlined_call_operand.vmem [shape: f32[1,10], index: 2, kind: input, shape index: {}]
  %s3 = inlined_call_operand.vmem [shape: f32[1352,10], index: 3, kind: output, shape index: {}]
  %s4 = sld [smem:[#allocation0]]
  $region22: #{inference_network_forward.4} parent=0
    _
  %s6 = ssub.s32 1, %s4
  %s7 = scalar_select 0, %s6, %s4
  // Predicated region
  $region2: #{inference_network_forward.4} parent=0 // pred_check
    _
  $region3: #{inference_network_forward.4} parent=0 // pred_check_branch
    %9 = sbr.rel (0) target = $region5
  $region4: #{inference_network_forward.4} parent=0 // pred_region
    _
  $region5: #{inference_network_forward.4} parent=0 // pred_fallthru
    _
  // Predicated region
  $region6: #{inference_network_forward.4} parent=0 // pred_check
    _
  $region7: #{inference_network_forward.4} parent=0 // pred_check_branch
    %11 = sbr.rel (0) target = $region9
  $region8: #{inference_network_forward.4} parent=0 // pred_region
    _
  $region9: #{inference_network_forward.4} parent=0 // pred_fallthru
    _
  // Predicated region
  $region10: #{inference_network_forward.4} parent=0 // pred_check
    _
  $region11: #{inference_network_forward.4} parent=0 // pred_check_branch
    %13 = sbr.rel (0) target = $region13
  $region12: #{inference_network_forward.4} parent=0 // pred_region
    _
  $region13: #{inference_network_forward.4} parent=0 // pred_fallthru
    _
  %v15 = vld [vmem:[%s0] sm:$0xf]
  %v16 = vld [vmem:[%s0 + $0x4] sm:$0xf]
  %v17 = vld [vmem:[%s0 + $0x8] sm:$0xf]
  %v18 = vld [vmem:[%s0 + $0xc] sm:$0xf]
  %v19 = vld [vmem:[%s0 + $0x10] sm:$0xf]
  %v20 = vld [vmem:[%s0 + $0x14] sm:$0xf]
  %v21 = vld [vmem:[%s0 + $0x18] sm:$0xf]
  %v22 = vld [vmem:[%s0 + $0x1c] sm:$0xf]
  %v23 = vld [vmem:[%s0 + $0x20] sm:$0xf]
  %v24 = vld [vmem:[%s0 + $0x24] sm:$0xf]
  %v25 = vld [vmem:[%s0 + $0x28] sm:$0xf]
  %v26 = vld [vmem:[%s0 + $0x2c] sm:$0xf]
  %v27 = vld [vmem:[%s0 + $0x30] sm:$0xf]
  %v28 = vld [vmem:[%s0 + $0x34] sm:$0xf]
  %v29 = vld [vmem:[%s0 + $0x38] sm:$0xf]
  %v30 = vld [vmem:[%s0 + $0x3c] sm:$0xf]
  %v31 = vld [vmem:[%s0 + $0x40] sm:$0xf]
  %v32 = vld [vmem:[%s0 + $0x44] sm:$0xf]
  %v33 = vld [vmem:[%s0 + $0x48] sm:$0xf]
  %v34 = vld [vmem:[%s0 + $0x4c] sm:$0xf]
  %v35 = vld [vmem:[%s0 + $0x50] sm:$0xf]
  %v36 = vld [vmem:[%s0 + $0x54] sm:$0xf]
  %v37 = vld [vmem:[%s0 + $0x58] sm:$0xf]
  %v38 = vld [vmem:[%s0 + $0x5c] sm:$0xf]
  %v39 = vld [vmem:[%s0 + $0x60] sm:$0xf]
  %v40 = vld [vmem:[%s0 + $0x64] sm:$0xf]
  %v41 = vld [vmem:[%s0 + $0x68] sm:$0xf]
  %v42 = vld [vmem:[%s0 + $0x6c] sm:$0xf]
  %v43 = vld [vmem:[%s0 + $0x70] sm:$0xf]
  %v44 = vld [vmem:[%s0 + $0x74] sm:$0xf]
  %v45 = vld [vmem:[%s0 + $0x78] sm:$0xf]
  %v46 = vld [vmem:[%s0 + $0x7c] sm:$0xf]
  %v47 = vld [vmem:[%s0 + $0x80] sm:$0xf]
  %v48 = vld [vmem:[%s0 + $0x84] sm:$0xf]
  %v49 = vld [vmem:[%s0 + $0x88] sm:$0xf]
  %v50 = vld [vmem:[%s0 + $0x8c] sm:$0xf]
  %v51 = vld [vmem:[%s0 + $0x90] sm:$0xf]
  %v52 = vld [vmem:[%s0 + $0x94] sm:$0xf]
  %v53 = vld [vmem:[%s0 + $0x98] sm:$0xf]
  %v54 = vld [vmem:[%s0 + $0x9c] sm:$0xf]
  %v55 = vld [vmem:[%s0 + $0xa0] sm:$0xf]
  %v56 = vld [vmem:[%s0 + $0xa4] sm:$0xf]
  %v57 = vld [vmem:[%s0 + $0xa8] sm:$0xf]
  %v58 = vld [vmem:[%s0 + $0xac] sm:$0xf]
  %v59 = vld [vmem:[%s0 + $0xb0] sm:$0xf]
  %v60 = vld [vmem:[%s0 + $0xb4] sm:$0xf]
  %v61 = vld [vmem:[%s0 + $0xb8] sm:$0xf]
  %v62 = vld [vmem:[%s0 + $0xbc] sm:$0xf]
  %v63 = vld [vmem:[%s0 + $0xc0] sm:$0xf]
  %v64 = vld [vmem:[%s0 + $0xc4] sm:$0xf]
  %v65 = vld [vmem:[%s0 + $0xc8] sm:$0xf]
  %v66 = vld [vmem:[%s0 + $0xcc] sm:$0xf]
  %v67 = vld [vmem:[%s0 + $0xd0] sm:$0xf]
  %v68 = vld [vmem:[%s0 + $0xd4] sm:$0xf]
  %v69 = vld [vmem:[%s0 + $0xd8] sm:$0xf]
  %v70 = vld [vmem:[%s0 + $0xdc] sm:$0xf]
  %v71 = vld [vmem:[%s0 + $0xe0] sm:$0xf]
  %v72 = vld [vmem:[%s0 + $0xe4] sm:$0xf]
  %v73 = vld [vmem:[%s0 + $0xe8] sm:$0xf]
  %v74 = vld [vmem:[%s0 + $0xec] sm:$0xf]
  %v75 = vld [vmem:[%s0 + $0xf0] sm:$0xf]
  %v76 = vld [vmem:[%s0 + $0xf4] sm:$0xf]
  %v77 = vld [vmem:[%s0 + $0xf8] sm:$0xf]
  %v78 = vld [vmem:[%s0 + $0xfc] sm:$0xf]
  %v79 = vld [vmem:[%s0 + $0x100] sm:$0xf]
  %v80 = vld [vmem:[%s0 + $0x104] sm:$0xf]
  %v81 = vld [vmem:[%s0 + $0x108] sm:$0xf]
  %v82 = vld [vmem:[%s0 + $0x10c] sm:$0xf]
  %v83 = vld [vmem:[%s0 + $0x110] sm:$0xf]
  %v84 = vld [vmem:[%s0 + $0x114] sm:$0xf]
  %v85 = vld [vmem:[%s0 + $0x118] sm:$0xf]
  %v86 = vld [vmem:[%s0 + $0x11c] sm:$0xf]
  %v87 = vld [vmem:[%s0 + $0x120] sm:$0xf]
  %v88 = vld [vmem:[%s0 + $0x124] sm:$0xf]
  %v89 = vld [vmem:[%s0 + $0x128] sm:$0xf]
  %v90 = vld [vmem:[%s0 + $0x12c] sm:$0xf]
  %v91 = vld [vmem:[%s0 + $0x130] sm:$0xf]
  %v92 = vld [vmem:[%s0 + $0x134] sm:$0xf]
  %v93 = vld [vmem:[%s0 + $0x138] sm:$0xf]
  %v94 = vld [vmem:[%s0 + $0x13c] sm:$0xf]
  %v95 = vld [vmem:[%s0 + $0x140] sm:$0xf]
  %v96 = vld [vmem:[%s0 + $0x144] sm:$0xf]
  %v97 = vld [vmem:[%s0 + $0x148] sm:$0xf]
  %v98 = vld [vmem:[%s0 + $0x14c] sm:$0xf]
  %v99 = vld [vmem:[%s0 + $0x150] sm:$0xf]
  %v100 = vld [vmem:[%s0 + $0x154] sm:$0xf]
  %v101 = vld [vmem:[%s0 + $0x158] sm:$0xf]
  %v102 = vld [vmem:[%s0 + $0x15c] sm:$0xf]
  %v103 = vld [vmem:[%s0 + $0x160] sm:$0xf]
  %v104 = vld [vmem:[%s0 + $0x164] sm:$0xf]
  %v105 = vld [vmem:[%s0 + $0x168] sm:$0xf]
  %v106 = vld [vmem:[%s0 + $0x16c] sm:$0xf]
  %v107 = vld [vmem:[%s0 + $0x170] sm:$0xf]
  %v108 = vld [vmem:[%s0 + $0x174] sm:$0xf]
  %v109 = vld [vmem:[%s0 + $0x178] sm:$0xf]
  %v110 = vld [vmem:[%s0 + $0x17c] sm:$0xf]
  %v111 = vld [vmem:[%s0 + $0x180] sm:$0xf]
  %v112 = vld [vmem:[%s0 + $0x184] sm:$0xf]
  %v113 = vld [vmem:[%s0 + $0x188] sm:$0xf]
  %v114 = vld [vmem:[%s0 + $0x18c] sm:$0xf]
  %v115 = vld [vmem:[%s0 + $0x190] sm:$0xf]
  %v116 = vld [vmem:[%s0 + $0x194] sm:$0xf]
  %v117 = vld [vmem:[%s0 + $0x198] sm:$0xf]
  %v118 = vld [vmem:[%s0 + $0x19c] sm:$0xf]
  %v119 = vld [vmem:[%s0 + $0x1a0] sm:$0xf]
  %v120 = vld [vmem:[%s0 + $0x1a4] sm:$0xf]
  %v121 = vld [vmem:[%s0 + $0x1a8] sm:$0xf]
  %v122 = vld [vmem:[%s0 + $0x1ac] sm:$0xf]
  %v123 = vld [vmem:[%s0 + $0x1b0] sm:$0xf]
  %v124 = vld [vmem:[%s0 + $0x1b4] sm:$0xf]
  %v125 = vld [vmem:[%s0 + $0x1b8] sm:$0xf]
  %v126 = vld [vmem:[%s0 + $0x1bc] sm:$0xf]
  %v127 = vld [vmem:[%s0 + $0x1c0] sm:$0xf]
  %v128 = vld [vmem:[%s0 + $0x1c4] sm:$0xf]
  %v129 = vld [vmem:[%s0 + $0x1c8] sm:$0xf]
  %v130 = vld [vmem:[%s0 + $0x1cc] sm:$0xf]
  %v131 = vld [vmem:[%s0 + $0x1d0] sm:$0xf]
  %v132 = vld [vmem:[%s0 + $0x1d4] sm:$0xf]
  %v133 = vld [vmem:[%s0 + $0x1d8] sm:$0xf]
  %v134 = vld [vmem:[%s0 + $0x1dc] sm:$0xf]
  %v135 = vld [vmem:[%s0 + $0x1e0] sm:$0xf]
  %v136 = vld [vmem:[%s0 + $0x1e4] sm:$0xf]
  %v137 = vld [vmem:[%s0 + $0x1e8] sm:$0xf]
  %v138 = vld [vmem:[%s0 + $0x1ec] sm:$0xf]
  %v139 = vld [vmem:[%s0 + $0x1f0] sm:$0xf]
  %v140 = vld [vmem:[%s0 + $0x1f4] sm:$0xf]
  %v141 = vld [vmem:[%s0 + $0x1f8] sm:$0xf]
  %v142 = vld [vmem:[%s0 + $0x1fc] sm:$0xf]
  %v143 = vld [vmem:[%s0 + $0x200] sm:$0xf]
  %v144 = vld [vmem:[%s0 + $0x204] sm:$0xf]
  %v145 = vld [vmem:[%s0 + $0x208] sm:$0xf]
  %v146 = vld [vmem:[%s0 + $0x20c] sm:$0xf]
  %v147 = vld [vmem:[%s0 + $0x210] sm:$0xf]
  %v148 = vld [vmem:[%s0 + $0x214] sm:$0xf]
  %v149 = vld [vmem:[%s0 + $0x218] sm:$0xf]
  %v150 = vld [vmem:[%s0 + $0x21c] sm:$0xf]
  %v151 = vld [vmem:[%s0 + $0x220] sm:$0xf]
  %v152 = vld [vmem:[%s0 + $0x224] sm:$0xf]
  %v153 = vld [vmem:[%s0 + $0x228] sm:$0xf]
  %v154 = vld [vmem:[%s0 + $0x22c] sm:$0xf]
  %v155 = vld [vmem:[%s0 + $0x230] sm:$0xf]
  %v156 = vld [vmem:[%s0 + $0x234] sm:$0xf]
  %v157 = vld [vmem:[%s0 + $0x238] sm:$0xf]
  %v158 = vld [vmem:[%s0 + $0x23c] sm:$0xf]
  %v159 = vld [vmem:[%s0 + $0x240] sm:$0xf]
  %v160 = vld [vmem:[%s0 + $0x244] sm:$0xf]
  %v161 = vld [vmem:[%s0 + $0x248] sm:$0xf]
  %v162 = vld [vmem:[%s0 + $0x24c] sm:$0xf]
  %v163 = vld [vmem:[%s0 + $0x250] sm:$0xf]
  %v164 = vld [vmem:[%s0 + $0x254] sm:$0xf]
  %v165 = vld [vmem:[%s0 + $0x258] sm:$0xf]
  %v166 = vld [vmem:[%s0 + $0x25c] sm:$0xf]
  %v167 = vld [vmem:[%s0 + $0x260] sm:$0xf]
  %v168 = vld [vmem:[%s0 + $0x264] sm:$0xf]
  %v169 = vld [vmem:[%s0 + $0x268] sm:$0xf]
  %v170 = vld [vmem:[%s0 + $0x26c] sm:$0xf]
  %v171 = vld [vmem:[%s0 + $0x270] sm:$0xf]
  %v172 = vld [vmem:[%s0 + $0x274] sm:$0xf]
  %v173 = vld [vmem:[%s0 + $0x278] sm:$0xf]
  %v174 = vld [vmem:[%s0 + $0x27c] sm:$0xf]
  %v175 = vld [vmem:[%s0 + $0x280] sm:$0xf]
  %v176 = vld [vmem:[%s0 + $0x284] sm:$0xf]
  %v177 = vld [vmem:[%s0 + $0x288] sm:$0xf]
  %v178 = vld [vmem:[%s0 + $0x28c] sm:$0xf]
  %v179 = vld [vmem:[%s0 + $0x290] sm:$0xf]
  %v180 = vld [vmem:[%s0 + $0x294] sm:$0xf]
  %v181 = vld [vmem:[%s0 + $0x298] sm:$0xf]
  %v182 = vld [vmem:[%s0 + $0x29c] sm:$0xf]
  %v183 = vld [vmem:[%s0 + $0x2a0] sm:$0xf]
  %v184 = vld [vmem:[%s1] sm:$0xf]
  %v185 = vld [vmem:[%s1 + $0x4] sm:$0xf]
  %v186 = vld [vmem:[%s1 + $0x8] sm:$0xf]
  %v187 = vld [vmem:[%s1 + $0xc] sm:$0xf]
  %v188 = vld [vmem:[%s1 + $0x10] sm:$0xf]
  %v189 = vld [vmem:[%s1 + $0x14] sm:$0xf]
  %v190 = vld [vmem:[%s1 + $0x18] sm:$0xf]
  %v191 = vld [vmem:[%s1 + $0x1c] sm:$0xf]
  %v192 = vld [vmem:[%s1 + $0x20] sm:$0xf]
  %v193 = vld [vmem:[%s1 + $0x24] sm:$0xf]
  %v194 = vld [vmem:[%s1 + $0x28] sm:$0xf]
  %v195 = vld [vmem:[%s1 + $0x2c] sm:$0x1]
  %v196 = vld [vmem:[%s2] sm:$0x1]
  %v198 = vlaneseq
  %v199 = vshrl.u32 %v198, 7
  %v200 = vsub.s32 0, %v199
  %v201 = vrot.slane %v196, %v200
  %v372 = vunpack.c.l.b16 %v15
  %v373 = vunpack.c.l.b16 %v16
  %v374 = vunpack.c.l.b16 %v17
  %v375 = vunpack.c.l.b16 %v18
  %v376 = vunpack.c.l.b16 %v19
  %v377 = vunpack.c.l.b16 %v20
  %v378 = vunpack.c.l.b16 %v21
  %v379 = vunpack.c.l.b16 %v22
  %v380 = vunpack.c.l.b16 %v23
  %v381 = vunpack.c.l.b16 %v24
  %v382 = vunpack.c.l.b16 %v25
  %v383 = vunpack.c.l.b16 %v26
  %v384 = vunpack.c.l.b16 %v27
  %v385 = vunpack.c.l.b16 %v28
  %v386 = vunpack.c.l.b16 %v29
  %v387 = vunpack.c.l.b16 %v30
  %v388 = vunpack.c.l.b16 %v31
  %v389 = vunpack.c.l.b16 %v32
  %v390 = vunpack.c.l.b16 %v33
  %v391 = vunpack.c.l.b16 %v34
  %v392 = vunpack.c.l.b16 %v35
  %v393 = vunpack.c.l.b16 %v36
  %v394 = vunpack.c.l.b16 %v37
  %v395 = vunpack.c.l.b16 %v38
  %v396 = vunpack.c.l.b16 %v39
  %v397 = vunpack.c.l.b16 %v40
  %v398 = vunpack.c.l.b16 %v41
  %v399 = vunpack.c.l.b16 %v42
  %v400 = vunpack.c.l.b16 %v43
  %v401 = vunpack.c.l.b16 %v44
  %v402 = vunpack.c.l.b16 %v45
  %v403 = vunpack.c.l.b16 %v46
  %v404 = vunpack.c.l.b16 %v47
  %v405 = vunpack.c.l.b16 %v48
  %v406 = vunpack.c.l.b16 %v49
  %v407 = vunpack.c.l.b16 %v50
  %v408 = vunpack.c.l.b16 %v51
  %v409 = vunpack.c.l.b16 %v52
  %v410 = vunpack.c.l.b16 %v53
  %v411 = vunpack.c.l.b16 %v54
  %v412 = vunpack.c.l.b16 %v55
  %v413 = vunpack.c.l.b16 %v56
  %v414 = vunpack.c.l.b16 %v57
  %v415 = vunpack.c.l.b16 %v58
  %v416 = vunpack.c.l.b16 %v59
  %v417 = vunpack.c.l.b16 %v60
  %v418 = vunpack.c.l.b16 %v61
  %v419 = vunpack.c.l.b16 %v62
  %v420 = vunpack.c.l.b16 %v63
  %v421 = vunpack.c.l.b16 %v64
  %v422 = vunpack.c.l.b16 %v65
  %v423 = vunpack.c.l.b16 %v66
  %v424 = vunpack.c.l.b16 %v67
  %v425 = vunpack.c.l.b16 %v68
  %v426 = vunpack.c.l.b16 %v69
  %v427 = vunpack.c.l.b16 %v70
  %v428 = vunpack.c.l.b16 %v71
  %v429 = vunpack.c.l.b16 %v72
  %v430 = vunpack.c.l.b16 %v73
  %v431 = vunpack.c.l.b16 %v74
  %v432 = vunpack.c.l.b16 %v75
  %v433 = vunpack.c.l.b16 %v76
  %v434 = vunpack.c.l.b16 %v77
  %v435 = vunpack.c.l.b16 %v78
  %v436 = vunpack.c.l.b16 %v79
  %v437 = vunpack.c.l.b16 %v80
  %v438 = vunpack.c.l.b16 %v81
  %v439 = vunpack.c.l.b16 %v82
  %v440 = vunpack.c.l.b16 %v83
  %v441 = vunpack.c.l.b16 %v84
  %v442 = vunpack.c.l.b16 %v85
  %v443 = vunpack.c.l.b16 %v86
  %v444 = vunpack.c.l.b16 %v87
  %v445 = vunpack.c.l.b16 %v88
  %v446 = vunpack.c.l.b16 %v89
  %v447 = vunpack.c.l.b16 %v90
  %v448 = vunpack.c.l.b16 %v91
  %v449 = vunpack.c.l.b16 %v92
  %v450 = vunpack.c.l.b16 %v93
  %v451 = vunpack.c.l.b16 %v94
  %v452 = vunpack.c.l.b16 %v95
  %v453 = vunpack.c.l.b16 %v96
  %v454 = vunpack.c.l.b16 %v97
  %v455 = vunpack.c.l.b16 %v98
  %v456 = vunpack.c.l.b16 %v99
  %v457 = vunpack.c.l.b16 %v100
  %v458 = vunpack.c.l.b16 %v101
  %v459 = vunpack.c.l.b16 %v102
  %v460 = vunpack.c.l.b16 %v103
  %v461 = vunpack.c.l.b16 %v104
  %v462 = vunpack.c.l.b16 %v105
  %v463 = vunpack.c.l.b16 %v106
  %v464 = vunpack.c.l.b16 %v107
  %v465 = vunpack.c.l.b16 %v108
  %v466 = vunpack.c.l.b16 %v109
  %v467 = vunpack.c.l.b16 %v110
  %v468 = vunpack.c.l.b16 %v111
  %v469 = vunpack.c.l.b16 %v112
  %v470 = vunpack.c.l.b16 %v113
  %v471 = vunpack.c.l.b16 %v114
  %v472 = vunpack.c.l.b16 %v115
  %v473 = vunpack.c.l.b16 %v116
  %v474 = vunpack.c.l.b16 %v117
  %v475 = vunpack.c.l.b16 %v118
  %v476 = vunpack.c.l.b16 %v119
  %v477 = vunpack.c.l.b16 %v120
  %v478 = vunpack.c.l.b16 %v121
  %v479 = vunpack.c.l.b16 %v122
  %v480 = vunpack.c.l.b16 %v123
  %v481 = vunpack.c.l.b16 %v124
  %v482 = vunpack.c.l.b16 %v125
  %v483 = vunpack.c.l.b16 %v126
  %v484 = vunpack.c.l.b16 %v127
  %v485 = vunpack.c.l.b16 %v128
  %v486 = vunpack.c.l.b16 %v129
  %v487 = vunpack.c.l.b16 %v130
  %v488 = vunpack.c.l.b16 %v131
  %v489 = vunpack.c.l.b16 %v132
  %v490 = vunpack.c.l.b16 %v133
  %v491 = vunpack.c.l.b16 %v134
  %v492 = vunpack.c.l.b16 %v135
  %v493 = vunpack.c.l.b16 %v136
  %v494 = vunpack.c.l.b16 %v137
  %v495 = vunpack.c.l.b16 %v138
  %v496 = vunpack.c.l.b16 %v139
  %v497 = vunpack.c.l.b16 %v140
  %v498 = vunpack.c.l.b16 %v141
  %v499 = vunpack.c.l.b16 %v142
  %v500 = vunpack.c.l.b16 %v143
  %v501 = vunpack.c.l.b16 %v144
  %v502 = vunpack.c.l.b16 %v145
  %v503 = vunpack.c.l.b16 %v146
  %v504 = vunpack.c.l.b16 %v147
  %v505 = vunpack.c.l.b16 %v148
  %v506 = vunpack.c.l.b16 %v149
  %v507 = vunpack.c.l.b16 %v150
  %v508 = vunpack.c.l.b16 %v151
  %v509 = vunpack.c.l.b16 %v152
  %v510 = vunpack.c.l.b16 %v153
  %v511 = vunpack.c.l.b16 %v154
  %v512 = vunpack.c.l.b16 %v155
  %v513 = vunpack.c.l.b16 %v156
  %v514 = vunpack.c.l.b16 %v157
  %v515 = vunpack.c.l.b16 %v158
  %v516 = vunpack.c.l.b16 %v159
  %v517 = vunpack.c.l.b16 %v160
  %v518 = vunpack.c.l.b16 %v161
  %v519 = vunpack.c.l.b16 %v162
  %v520 = vunpack.c.l.b16 %v163
  %v521 = vunpack.c.l.b16 %v164
  %v522 = vunpack.c.l.b16 %v165
  %v523 = vunpack.c.l.b16 %v166
  %v524 = vunpack.c.l.b16 %v167
  %v525 = vunpack.c.l.b16 %v168
  %v526 = vunpack.c.l.b16 %v169
  %v527 = vunpack.c.l.b16 %v170
  %v528 = vunpack.c.l.b16 %v171
  %v529 = vunpack.c.l.b16 %v172
  %v530 = vunpack.c.l.b16 %v173
  %v531 = vunpack.c.l.b16 %v174
  %v532 = vunpack.c.l.b16 %v175
  %v533 = vunpack.c.l.b16 %v176
  %v534 = vunpack.c.l.b16 %v177
  %v535 = vunpack.c.l.b16 %v178
  %v536 = vunpack.c.l.b16 %v179
  %v537 = vunpack.c.l.b16 %v180
  %v538 = vunpack.c.l.b16 %v181
  %v539 = vunpack.c.l.b16 %v182
  %v540 = vunpack.c.l.b16 %v183
  %v541 = vpack.c.b16 %v373, %v372
  %v542 = vpack.c.b16 %v375, %v374
  %v543 = vpack.c.b16 %v377, %v376
  %v544 = vpack.c.b16 %v379, %v378
  %v545 = vpack.c.b16 %v381, %v380
  %v546 = vpack.c.b16 %v383, %v382
  %v547 = vpack.c.b16 %v385, %v384
  %v548 = vpack.c.b16 %v387, %v386
  %v549 = vpack.c.b16 %v389, %v388
  %v550 = vpack.c.b16 %v391, %v390
  %v551 = vpack.c.b16 %v393, %v392
  %v552 = vpack.c.b16 %v395, %v394
  %v553 = vpack.c.b16 %v397, %v396
  %v554 = vpack.c.b16 %v399, %v398
  %v555 = vpack.c.b16 %v401, %v400
  %v556 = vpack.c.b16 %v403, %v402
  %v557 = vpack.c.b16 %v405, %v404
  %v558 = vpack.c.b16 %v407, %v406
  %v559 = vpack.c.b16 %v409, %v408
  %v560 = vpack.c.b16 %v411, %v410
  %v561 = vpack.c.b16 %v413, %v412
  %v562 = vpack.c.b16 %v415, %v414
  %v563 = vpack.c.b16 %v417, %v416
  %v564 = vpack.c.b16 %v419, %v418
  %v565 = vpack.c.b16 %v421, %v420
  %v566 = vpack.c.b16 %v423, %v422
  %v567 = vpack.c.b16 %v425, %v424
  %v568 = vpack.c.b16 %v427, %v426
  %v569 = vpack.c.b16 %v429, %v428
  %v570 = vpack.c.b16 %v431, %v430
  %v571 = vpack.c.b16 %v433, %v432
  %v572 = vpack.c.b16 %v435, %v434
  %v573 = vpack.c.b16 %v437, %v436
  %v574 = vpack.c.b16 %v439, %v438
  %v575 = vpack.c.b16 %v441, %v440
  %v576 = vpack.c.b16 %v443, %v442
  %v577 = vpack.c.b16 %v445, %v444
  %v578 = vpack.c.b16 %v447, %v446
  %v579 = vpack.c.b16 %v449, %v448
  %v580 = vpack.c.b16 %v451, %v450
  %v581 = vpack.c.b16 %v453, %v452
  %v582 = vpack.c.b16 %v455, %v454
  %v583 = vpack.c.b16 %v457, %v456
  %v584 = vpack.c.b16 %v459, %v458
  %v585 = vpack.c.b16 %v461, %v460
  %v586 = vpack.c.b16 %v463, %v462
  %v587 = vpack.c.b16 %v465, %v464
  %v588 = vpack.c.b16 %v467, %v466
  %v589 = vpack.c.b16 %v469, %v468
  %v590 = vpack.c.b16 %v471, %v470
  %v591 = vpack.c.b16 %v473, %v472
  %v592 = vpack.c.b16 %v475, %v474
  %v593 = vpack.c.b16 %v477, %v476
  %v594 = vpack.c.b16 %v479, %v478
  %v595 = vpack.c.b16 %v481, %v480
  %v596 = vpack.c.b16 %v483, %v482
  %v597 = vpack.c.b16 %v485, %v484
  %v598 = vpack.c.b16 %v487, %v486
  %v599 = vpack.c.b16 %v489, %v488
  %v600 = vpack.c.b16 %v491, %v490
  %v601 = vpack.c.b16 %v493, %v492
  %v602 = vpack.c.b16 %v495, %v494
  %v603 = vpack.c.b16 %v497, %v496
  %v604 = vpack.c.b16 %v499, %v498
  %v605 = vpack.c.b16 %v501, %v500
  %v606 = vpack.c.b16 %v503, %v502
  %v607 = vpack.c.b16 %v505, %v504
  %v608 = vpack.c.b16 %v507, %v506
  %v609 = vpack.c.b16 %v509, %v508
  %v610 = vpack.c.b16 %v511, %v510
  %v611 = vpack.c.b16 %v513, %v512
  %v612 = vpack.c.b16 %v515, %v514
  %v613 = vpack.c.b16 %v517, %v516
  %v614 = vpack.c.b16 %v519, %v518
  %v615 = vpack.c.b16 %v521, %v520
  %v616 = vpack.c.b16 %v523, %v522
  %v617 = vpack.c.b16 %v525, %v524
  %v618 = vpack.c.b16 %v527, %v526
  %v619 = vpack.c.b16 %v529, %v528
  %v620 = vpack.c.b16 %v531, %v530
  %v621 = vpack.c.b16 %v533, %v532
  %v622 = vpack.c.b16 %v535, %v534
  %v623 = vpack.c.b16 %v537, %v536
  %v624 = vpack.c.b16 %v539, %v538
  %v625 = vpack.c.b16 %v540, %v540
  %v638 = vunpack.c.l.b16 %v184
  %v639 = vunpack.c.l.b16 %v185
  %v640 = vunpack.c.l.b16 %v186
  %v641 = vunpack.c.l.b16 %v187
  %v642 = vunpack.c.l.b16 %v188
  %v643 = vunpack.c.l.b16 %v189
  %v644 = vunpack.c.l.b16 %v190
  %v645 = vunpack.c.l.b16 %v191
  %v646 = vunpack.c.l.b16 %v192
  %v647 = vunpack.c.l.b16 %v193
  %v648 = vunpack.c.l.b16 %v194
  %v649 = vunpack.c.l.b16 %v195
  %v650 = vpack.c.b16 %v639, %v638
  %v651 = vpack.c.b16 %v641, %v640
  %v652 = vpack.c.b16 %v643, %v642
  %v653 = vpack.c.b16 %v645, %v644
  %v654 = vpack.c.b16 %v647, %v646
  %v655 = vpack.c.b16 %v649, %v648
  %vm661 = vcmask 736256
  %v663 = vsel %vm661, %v541, 0
  %v666 = vsel %vm661, %v542, 0
  %v669 = vsel %vm661, %v543, 0
  %v672 = vsel %vm661, %v544, 0
  %v675 = vsel %vm661, %v545, 0
  %v678 = vsel %vm661, %v546, 0
  %v681 = vsel %vm661, %v547, 0
  %v684 = vsel %vm661, %v548, 0
  %v687 = vsel %vm661, %v549, 0
  %v690 = vsel %vm661, %v550, 0
  %v693 = vsel %vm661, %v551, 0
  %v696 = vsel %vm661, %v552, 0
  %v699 = vsel %vm661, %v553, 0
  %v702 = vsel %vm661, %v554, 0
  %v705 = vsel %vm661, %v555, 0
  %v708 = vsel %vm661, %v556, 0
  %v711 = vsel %vm661, %v557, 0
  %v714 = vsel %vm661, %v558, 0
  %v717 = vsel %vm661, %v559, 0
  %v720 = vsel %vm661, %v560, 0
  %v723 = vsel %vm661, %v561, 0
  %v726 = vsel %vm661, %v562, 0
  %v729 = vsel %vm661, %v563, 0
  %v732 = vsel %vm661, %v564, 0
  %v735 = vsel %vm661, %v565, 0
  %v738 = vsel %vm661, %v566, 0
  %v741 = vsel %vm661, %v567, 0
  %v744 = vsel %vm661, %v568, 0
  %v747 = vsel %vm661, %v569, 0
  %v750 = vsel %vm661, %v570, 0
  %v753 = vsel %vm661, %v571, 0
  %v756 = vsel %vm661, %v572, 0
  %v759 = vsel %vm661, %v573, 0
  %v762 = vsel %vm661, %v574, 0
  %v765 = vsel %vm661, %v575, 0
  %v768 = vsel %vm661, %v576, 0
  %v771 = vsel %vm661, %v577, 0
  %v774 = vsel %vm661, %v578, 0
  %v777 = vsel %vm661, %v579, 0
  %v780 = vsel %vm661, %v580, 0
  %v783 = vsel %vm661, %v581, 0
  %v786 = vsel %vm661, %v582, 0
  %v789 = vsel %vm661, %v583, 0
  %v792 = vsel %vm661, %v584, 0
  %v795 = vsel %vm661, %v585, 0
  %v798 = vsel %vm661, %v586, 0
  %v801 = vsel %vm661, %v587, 0
  %v804 = vsel %vm661, %v588, 0
  %v807 = vsel %vm661, %v589, 0
  %v810 = vsel %vm661, %v590, 0
  %v813 = vsel %vm661, %v591, 0
  %v816 = vsel %vm661, %v592, 0
  %v819 = vsel %vm661, %v593, 0
  %v822 = vsel %vm661, %v594, 0
  %v825 = vsel %vm661, %v595, 0
  %v828 = vsel %vm661, %v596, 0
  %v831 = vsel %vm661, %v597, 0
  %v834 = vsel %vm661, %v598, 0
  %v837 = vsel %vm661, %v599, 0
  %v840 = vsel %vm661, %v600, 0
  %v843 = vsel %vm661, %v601, 0
  %v846 = vsel %vm661, %v602, 0
  %v849 = vsel %vm661, %v603, 0
  %v852 = vsel %vm661, %v604, 0
  %v855 = vsel %vm661, %v605, 0
  %v858 = vsel %vm661, %v606, 0
  %v861 = vsel %vm661, %v607, 0
  %v864 = vsel %vm661, %v608, 0
  %v867 = vsel %vm661, %v609, 0
  %v870 = vsel %vm661, %v610, 0
  %v873 = vsel %vm661, %v611, 0
  %v876 = vsel %vm661, %v612, 0
  %v879 = vsel %vm661, %v613, 0
  %v882 = vsel %vm661, %v614, 0
  %v885 = vsel %vm661, %v615, 0
  %v888 = vsel %vm661, %v616, 0
  %v891 = vsel %vm661, %v617, 0
  %v894 = vsel %vm661, %v618, 0
  %v897 = vsel %vm661, %v619, 0
  %v900 = vsel %vm661, %v620, 0
  %v903 = vsel %vm661, %v621, 0
  %v906 = vsel %vm661, %v622, 0
  %v909 = vsel %vm661, %v623, 0
  %v912 = vsel %vm661, %v624, 0
  %v915 = vsel %vm661, %v625, 0
  %vm917 = vcmask 1044480
  %v919 = vsel %vm917, %v655, 0
  %921 = vmatprep.subr.bf16.mxu0 0
  %922 = vmatpush1.bf16.msra.mxu0 %v650
  %923 = vmatprep.subr.bf16.mxu0 0
  %924 = vmatpush1.bf16.msra.mxu0 %v651
  %925 = vmatprep.subr.bf16.mxu0 0
  %926 = vmatpush1.bf16.msra.mxu0 %v652
  %927 = vmatprep.subr.bf16.mxu0 0
  %928 = vmatpush1.bf16.msra.mxu0 %v653
  %929 = vmatprep.subr.bf16.mxu0 0
  %930 = vmatpush1.bf16.msra.mxu0 %v654
  %931 = vmatprep.subr.bf16.mxu0 0
  %932 = vmatpush1.bf16.msra.mxu0 %v919
  %933 = vmatprep.subr.bf16.mxu0 0
  %934 = vmatpush1.bf16.msra.mxu0 0
  %935 = vmatprep.subr.bf16.mxu0 0
  %936 = vmatpush1.bf16.msra.mxu0 0
  %937 = vmatprep.subr.bf16.mxu0 0
  %938 = vmatpush1.bf16.msra.mxu0 0
  %939 = vmatprep.subr.bf16.mxu0 0
  %940 = vmatpush1.bf16.msra.mxu0 0
  %941 = vmatprep.subr.bf16.mxu0 0
  %942 = vmatpush1.bf16.msra.mxu0 0
  %943 = vmatprep.subr.bf16.mxu0 0
  %944 = vmatpush1.bf16.msra.mxu0 0
  %945 = vmatprep.subr.bf16.mxu0 0
  %946 = vmatpush1.bf16.msra.mxu0 0
  %947 = vmatprep.subr.bf16.mxu0 0
  %948 = vmatpush1.bf16.msra.mxu0 0
  %949 = vmatprep.subr.bf16.mxu0 0
  %950 = vmatpush1.bf16.msra.mxu0 0
  %951 = vmatprep.subr.bf16.mxu0 0
  %952 = vmatpush1.bf16.msra.mxu0 0
  %953 = vmatprep.mubr.bf16.mxu0 0
  %954 = vmatmul.mubr.bf16.gmra.mrb[0].mxu0 %v663
  %v955 = vpop.f32.mrb[0].mxu0
  %v956 = vadd.f32 %v201, %v955
  %v957 = vpop.f32.mrb[0].mxu0
  %v958 = vpop.f32.mrb[0].mxu0
  %v959 = vadd.f32 %v201, %v958
  %v960 = vpop.f32.mrb[0].mxu0
  %961 = vmatprep.mubr.bf16.mxu0 0
  %962 = vmatmul.mubr.bf16.gmra.mrb[0].mxu0 %v666
  %v963 = vpop.f32.mrb[0].mxu0
  %v964 = vadd.f32 %v201, %v963
  %v965 = vpop.f32.mrb[0].mxu0
  %v966 = vpop.f32.mrb[0].mxu0
  %v967 = vadd.f32 %v201, %v966
  %v968 = vpop.f32.mrb[0].mxu0
  %969 = vmatprep.mubr.bf16.mxu0 0
  %970 = vmatmul.mubr.bf16.gmra.mrb[0].mxu0 %v669
  %v971 = vpop.f32.mrb[0].mxu0
  %v972 = vadd.f32 %v201, %v971
  %v973 = vpop.f32.mrb[0].mxu0
  %v974 = vpop.f32.mrb[0].mxu0
  %v975 = vadd.f32 %v201, %v974
  %v976 = vpop.f32.mrb[0].mxu0
  %977 = vmatprep.mubr.bf16.mxu0 0
  %978 = vmatmul.mubr.bf16.gmra.mrb[0].mxu0 %v672
  %v979 = vpop.f32.mrb[0].mxu0
  %v980 = vadd.f32 %v201, %v979
  %v981 = vpop.f32.mrb[0].mxu0
  %v982 = vpop.f32.mrb[0].mxu0
  %v983 = vadd.f32 %v201, %v982
  %v984 = vpop.f32.mrb[0].mxu0
  %985 = vmatprep.mubr.bf16.mxu0 0
  %986 = vmatmul.mubr.bf16.gmra.mrb[0].mxu0 %v675
  %v987 = vpop.f32.mrb[0].mxu0
  %v988 = vadd.f32 %v201, %v987
  %v989 = vpop.f32.mrb[0].mxu0
  %v990 = vpop.f32.mrb[0].mxu0
  %v991 = vadd.f32 %v201, %v990
  %v992 = vpop.f32.mrb[0].mxu0
  %993 = vmatprep.mubr.bf16.mxu0 0
  %994 = vmatmul.mubr.bf16.gmra.mrb[0].mxu0 %v678
  %v995 = vpop.f32.mrb[0].mxu0
  %v996 = vadd.f32 %v201, %v995
  %v997 = vpop.f32.mrb[0].mxu0
  %v998 = vpop.f32.mrb[0].mxu0
  %v999 = vadd.f32 %v201, %v998
  %v1000 = vpop.f32.mrb[0].mxu0
  %1001 = vmatprep.mubr.bf16.mxu0 0
  %1002 = vmatmul.mubr.bf16.gmra.mrb[0].mxu0 %v681
  %v1003 = vpop.f32.mrb[0].mxu0
  %v1004 = vadd.f32 %v201, %v1003
  %v1005 = vpop.f32.mrb[0].mxu0
  %v1006 = vpop.f32.mrb[0].mxu0
  %v1007 = vadd.f32 %v201, %v1006
  %v1008 = vpop.f32.mrb[0].mxu0
  %1009 = vmatprep.mubr.bf16.mxu0 0
  %1010 = vmatmul.mubr.bf16.gmra.mrb[0].mxu0 %v684
  %v1011 = vpop.f32.mrb[0].mxu0
  %v1012 = vadd.f32 %v201, %v1011
  %v1013 = vpop.f32.mrb[0].mxu0
  %v1014 = vpop.f32.mrb[0].mxu0
  %v1015 = vadd.f32 %v201, %v1014
  %v1016 = vpop.f32.mrb[0].mxu0
  %1017 = vmatprep.mubr.bf16.mxu0 0
  %1018 = vmatmul.mubr.bf16.gmra.mrb[0].mxu0 %v687
  %v1019 = vpop.f32.mrb[0].mxu0
  %v1020 = vadd.f32 %v201, %v1019
  %v1021 = vpop.f32.mrb[0].mxu0
  %v1022 = vpop.f32.mrb[0].mxu0
  %v1023 = vadd.f32 %v201, %v1022
  %v1024 = vpop.f32.mrb[0].mxu0
  %1025 = vmatprep.mubr.bf16.mxu0 0
  %1026 = vmatmul.mubr.bf16.gmra.mrb[0].mxu0 %v690
  %v1027 = vpop.f32.mrb[0].mxu0
  %v1028 = vadd.f32 %v201, %v1027
  %v1029 = vpop.f32.mrb[0].mxu0
  %v1030 = vpop.f32.mrb[0].mxu0
  %v1031 = vadd.f32 %v201, %v1030
  %v1032 = vpop.f32.mrb[0].mxu0
  %1033 = vmatprep.mubr.bf16.mxu0 0
  %1034 = vmatmul.mubr.bf16.gmra.mrb[0].mxu0 %v693
  %v1035 = vpop.f32.mrb[0].mxu0
  %v1036 = vadd.f32 %v201, %v1035
  %v1037 = vpop.f32.mrb[0].mxu0
  %v1038 = vpop.f32.mrb[0].mxu0
  %v1039 = vadd.f32 %v201, %v1038
  %v1040 = vpop.f32.mrb[0].mxu0
  %1041 = vmatprep.mubr.bf16.mxu0 0
  %1042 = vmatmul.mubr.bf16.gmra.mrb[0].mxu0 %v696
  %v1043 = vpop.f32.mrb[0].mxu0
  %v1044 = vadd.f32 %v201, %v1043
  %v1045 = vpop.f32.mrb[0].mxu0
  %v1046 = vpop.f32.mrb[0].mxu0
  %v1047 = vadd.f32 %v201, %v1046
  %v1048 = vpop.f32.mrb[0].mxu0
  %1049 = vmatprep.mubr.bf16.mxu0 0
  %1050 = vmatmul.mubr.bf16.gmra.mrb[0].mxu0 %v699
  %v1051 = vpop.f32.mrb[0].mxu0
  %v1052 = vadd.f32 %v201, %v1051
  %v1053 = vpop.f32.mrb[0].mxu0
  %v1054 = vpop.f32.mrb[0].mxu0
  %v1055 = vadd.f32 %v201, %v1054
  %v1056 = vpop.f32.mrb[0].mxu0
  %1057 = vmatprep.mubr.bf16.mxu0 0
  %1058 = vmatmul.mubr.bf16.gmra.mrb[0].mxu0 %v702
  %v1059 = vpop.f32.mrb[0].mxu0
  %v1060 = vadd.f32 %v201, %v1059
  %v1061 = vpop.f32.mrb[0].mxu0
  %v1062 = vpop.f32.mrb[0].mxu0
  %v1063 = vadd.f32 %v201, %v1062
  %v1064 = vpop.f32.mrb[0].mxu0
  %1065 = vmatprep.mubr.bf16.mxu0 0
  %1066 = vmatmul.mubr.bf16.gmra.mrb[0].mxu0 %v705
  %v1067 = vpop.f32.mrb[0].mxu0
  %v1068 = vadd.f32 %v201, %v1067
  %v1069 = vpop.f32.mrb[0].mxu0
  %v1070 = vpop.f32.mrb[0].mxu0
  %v1071 = vadd.f32 %v201, %v1070
  %v1072 = vpop.f32.mrb[0].mxu0
  %1073 = vmatprep.mubr.bf16.mxu0 0
  %1074 = vmatmul.mubr.bf16.gmra.mrb[0].mxu0 %v708
  %v1075 = vpop.f32.mrb[0].mxu0
  %v1076 = vadd.f32 %v201, %v1075
  %v1077 = vpop.f32.mrb[0].mxu0
  %v1078 = vpop.f32.mrb[0].mxu0
  %v1079 = vadd.f32 %v201, %v1078
  %v1080 = vpop.f32.mrb[0].mxu0
  %1081 = vmatprep.mubr.bf16.mxu0 0
  %1082 = vmatmul.mubr.bf16.gmra.mrb[0].mxu0 %v711
  %v1083 = vpop.f32.mrb[0].mxu0
  %v1084 = vadd.f32 %v201, %v1083
  %v1085 = vpop.f32.mrb[0].mxu0
  %v1086 = vpop.f32.mrb[0].mxu0
  %v1087 = vadd.f32 %v201, %v1086
  %v1088 = vpop.f32.mrb[0].mxu0
  %1089 = vmatprep.mubr.bf16.mxu0 0
  %1090 = vmatmul.mubr.bf16.gmra.mrb[0].mxu0 %v714
  %v1091 = vpop.f32.mrb[0].mxu0
  %v1092 = vadd.f32 %v201, %v1091
  %v1093 = vpop.f32.mrb[0].mxu0
  %v1094 = vpop.f32.mrb[0].mxu0
  %v1095 = vadd.f32 %v201, %v1094
  %v1096 = vpop.f32.mrb[0].mxu0
  %1097 = vmatprep.mubr.bf16.mxu0 0
  %1098 = vmatmul.mubr.bf16.gmra.mrb[0].mxu0 %v717
  %v1099 = vpop.f32.mrb[0].mxu0
  %v1100 = vadd.f32 %v201, %v1099
  %v1101 = vpop.f32.mrb[0].mxu0
  %v1102 = vpop.f32.mrb[0].mxu0
  %v1103 = vadd.f32 %v201, %v1102
  %v1104 = vpop.f32.mrb[0].mxu0
  %1105 = vmatprep.mubr.bf16.mxu0 0
  %1106 = vmatmul.mubr.bf16.gmra.mrb[0].mxu0 %v720
  %v1107 = vpop.f32.mrb[0].mxu0
  %v1108 = vadd.f32 %v201, %v1107
  %v1109 = vpop.f32.mrb[0].mxu0
  %v1110 = vpop.f32.mrb[0].mxu0
  %v1111 = vadd.f32 %v201, %v1110
  %v1112 = vpop.f32.mrb[0].mxu0
  %1113 = vmatprep.mubr.bf16.mxu0 0
  %1114 = vmatmul.mubr.bf16.gmra.mrb[0].mxu0 %v723
  %v1115 = vpop.f32.mrb[0].mxu0
  %v1116 = vadd.f32 %v201, %v1115
  %v1117 = vpop.f32.mrb[0].mxu0
  %v1118 = vpop.f32.mrb[0].mxu0
  %v1119 = vadd.f32 %v201, %v1118
  %v1120 = vpop.f32.mrb[0].mxu0
  %1121 = vmatprep.mubr.bf16.mxu0 0
  %1122 = vmatmul.mubr.bf16.gmra.mrb[0].mxu0 %v726
  %v1123 = vpop.f32.mrb[0].mxu0
  %v1124 = vadd.f32 %v201, %v1123
  %v1125 = vpop.f32.mrb[0].mxu0
  %v1126 = vpop.f32.mrb[0].mxu0
  %v1127 = vadd.f32 %v201, %v1126
  %v1128 = vpop.f32.mrb[0].mxu0
  %1129 = vmatprep.mubr.bf16.mxu0 0
  %1130 = vmatmul.mubr.bf16.gmra.mrb[0].mxu0 %v729
  %v1131 = vpop.f32.mrb[0].mxu0
  %v1132 = vadd.f32 %v201, %v1131
  %v1133 = vpop.f32.mrb[0].mxu0
  %v1134 = vpop.f32.mrb[0].mxu0
  %v1135 = vadd.f32 %v201, %v1134
  %v1136 = vpop.f32.mrb[0].mxu0
  %1137 = vmatprep.mubr.bf16.mxu0 0
  %1138 = vmatmul.mubr.bf16.gmra.mrb[0].mxu0 %v732
  %v1139 = vpop.f32.mrb[0].mxu0
  %v1140 = vadd.f32 %v201, %v1139
  %v1141 = vpop.f32.mrb[0].mxu0
  %v1142 = vpop.f32.mrb[0].mxu0
  %v1143 = vadd.f32 %v201, %v1142
  %v1144 = vpop.f32.mrb[0].mxu0
  %1145 = vmatprep.mubr.bf16.mxu0 0
  %1146 = vmatmul.mubr.bf16.gmra.mrb[0].mxu0 %v735
  %v1147 = vpop.f32.mrb[0].mxu0
  %v1148 = vadd.f32 %v201, %v1147
  %v1149 = vpop.f32.mrb[0].mxu0
  %v1150 = vpop.f32.mrb[0].mxu0
  %v1151 = vadd.f32 %v201, %v1150
  %v1152 = vpop.f32.mrb[0].mxu0
  %1153 = vmatprep.mubr.bf16.mxu0 0
  %1154 = vmatmul.mubr.bf16.gmra.mrb[0].mxu0 %v738
  %v1155 = vpop.f32.mrb[0].mxu0
  %v1156 = vadd.f32 %v201, %v1155
  %v1157 = vpop.f32.mrb[0].mxu0
  %v1158 = vpop.f32.mrb[0].mxu0
  %v1159 = vadd.f32 %v201, %v1158
  %v1160 = vpop.f32.mrb[0].mxu0
  %1161 = vmatprep.mubr.bf16.mxu0 0
  %1162 = vmatmul.mubr.bf16.gmra.mrb[0].mxu0 %v741
  %v1163 = vpop.f32.mrb[0].mxu0
  %v1164 = vadd.f32 %v201, %v1163
  %v1165 = vpop.f32.mrb[0].mxu0
  %v1166 = vpop.f32.mrb[0].mxu0
  %v1167 = vadd.f32 %v201, %v1166
  %v1168 = vpop.f32.mrb[0].mxu0
  %1169 = vmatprep.mubr.bf16.mxu0 0
  %1170 = vmatmul.mubr.bf16.gmra.mrb[0].mxu0 %v744
  %v1171 = vpop.f32.mrb[0].mxu0
  %v1172 = vadd.f32 %v201, %v1171
  %v1173 = vpop.f32.mrb[0].mxu0
  %v1174 = vpop.f32.mrb[0].mxu0
  %v1175 = vadd.f32 %v201, %v1174
  %v1176 = vpop.f32.mrb[0].mxu0
  %1177 = vmatprep.mubr.bf16.mxu0 0
  %1178 = vmatmul.mubr.bf16.gmra.mrb[0].mxu0 %v747
  %v1179 = vpop.f32.mrb[0].mxu0
  %v1180 = vadd.f32 %v201, %v1179
  %v1181 = vpop.f32.mrb[0].mxu0
  %v1182 = vpop.f32.mrb[0].mxu0
  %v1183 = vadd.f32 %v201, %v1182
  %v1184 = vpop.f32.mrb[0].mxu0
  %1185 = vmatprep.mubr.bf16.mxu0 0
  %1186 = vmatmul.mubr.bf16.gmra.mrb[0].mxu0 %v750
  %v1187 = vpop.f32.mrb[0].mxu0
  %v1188 = vadd.f32 %v201, %v1187
  %v1189 = vpop.f32.mrb[0].mxu0
  %v1190 = vpop.f32.mrb[0].mxu0
  %v1191 = vadd.f32 %v201, %v1190
  %v1192 = vpop.f32.mrb[0].mxu0
  %1193 = vmatprep.mubr.bf16.mxu0 0
  %1194 = vmatmul.mubr.bf16.gmra.mrb[0].mxu0 %v753
  %v1195 = vpop.f32.mrb[0].mxu0
  %v1196 = vadd.f32 %v201, %v1195
  %v1197 = vpop.f32.mrb[0].mxu0
  %v1198 = vpop.f32.mrb[0].mxu0
  %v1199 = vadd.f32 %v201, %v1198
  %v1200 = vpop.f32.mrb[0].mxu0
  %1201 = vmatprep.mubr.bf16.mxu0 0
  %1202 = vmatmul.mubr.bf16.gmra.mrb[0].mxu0 %v756
  %v1203 = vpop.f32.mrb[0].mxu0
  %v1204 = vadd.f32 %v201, %v1203
  %v1205 = vpop.f32.mrb[0].mxu0
  %v1206 = vpop.f32.mrb[0].mxu0
  %v1207 = vadd.f32 %v201, %v1206
  %v1208 = vpop.f32.mrb[0].mxu0
  %1209 = vmatprep.mubr.bf16.mxu0 0
  %1210 = vmatmul.mubr.bf16.gmra.mrb[0].mxu0 %v759
  %v1211 = vpop.f32.mrb[0].mxu0
  %v1212 = vadd.f32 %v201, %v1211
  %v1213 = vpop.f32.mrb[0].mxu0
  %v1214 = vpop.f32.mrb[0].mxu0
  %v1215 = vadd.f32 %v201, %v1214
  %v1216 = vpop.f32.mrb[0].mxu0
  %1217 = vmatprep.mubr.bf16.mxu0 0
  %1218 = vmatmul.mubr.bf16.gmra.mrb[0].mxu0 %v762
  %v1219 = vpop.f32.mrb[0].mxu0
  %v1220 = vadd.f32 %v201, %v1219
  %v1221 = vpop.f32.mrb[0].mxu0
  %v1222 = vpop.f32.mrb[0].mxu0
  %v1223 = vadd.f32 %v201, %v1222
  %v1224 = vpop.f32.mrb[0].mxu0
  %1225 = vmatprep.mubr.bf16.mxu0 0
  %1226 = vmatmul.mubr.bf16.gmra.mrb[0].mxu0 %v765
  %v1227 = vpop.f32.mrb[0].mxu0
  %v1228 = vadd.f32 %v201, %v1227
  %v1229 = vpop.f32.mrb[0].mxu0
  %v1230 = vpop.f32.mrb[0].mxu0
  %v1231 = vadd.f32 %v201, %v1230
  %v1232 = vpop.f32.mrb[0].mxu0
  %1233 = vmatprep.mubr.bf16.mxu0 0
  %1234 = vmatmul.mubr.bf16.gmra.mrb[0].mxu0 %v768
  %v1235 = vpop.f32.mrb[0].mxu0
  %v1236 = vadd.f32 %v201, %v1235
  %v1237 = vpop.f32.mrb[0].mxu0
  %v1238 = vpop.f32.mrb[0].mxu0
  %v1239 = vadd.f32 %v201, %v1238
  %v1240 = vpop.f32.mrb[0].mxu0
  %1241 = vmatprep.mubr.bf16.mxu0 0
  %1242 = vmatmul.mubr.bf16.gmra.mrb[0].mxu0 %v771
  %v1243 = vpop.f32.mrb[0].mxu0
  %v1244 = vadd.f32 %v201, %v1243
  %v1245 = vpop.f32.mrb[0].mxu0
  %v1246 = vpop.f32.mrb[0].mxu0
  %v1247 = vadd.f32 %v201, %v1246
  %v1248 = vpop.f32.mrb[0].mxu0
  %1249 = vmatprep.mubr.bf16.mxu0 0
  %1250 = vmatmul.mubr.bf16.gmra.mrb[0].mxu0 %v774
  %v1251 = vpop.f32.mrb[0].mxu0
  %v1252 = vadd.f32 %v201, %v1251
  %v1253 = vpop.f32.mrb[0].mxu0
  %v1254 = vpop.f32.mrb[0].mxu0
  %v1255 = vadd.f32 %v201, %v1254
  %v1256 = vpop.f32.mrb[0].mxu0
  %1257 = vmatprep.mubr.bf16.mxu0 0
  %1258 = vmatmul.mubr.bf16.gmra.mrb[0].mxu0 %v777
  %v1259 = vpop.f32.mrb[0].mxu0
  %v1260 = vadd.f32 %v201, %v1259
  %v1261 = vpop.f32.mrb[0].mxu0
  %v1262 = vpop.f32.mrb[0].mxu0
  %v1263 = vadd.f32 %v201, %v1262
  %v1264 = vpop.f32.mrb[0].mxu0
  %1265 = vmatprep.mubr.bf16.mxu0 0
  %1266 = vmatmul.mubr.bf16.gmra.mrb[0].mxu0 %v780
  %v1267 = vpop.f32.mrb[0].mxu0
  %v1268 = vadd.f32 %v201, %v1267
  %v1269 = vpop.f32.mrb[0].mxu0
  %v1270 = vpop.f32.mrb[0].mxu0
  %v1271 = vadd.f32 %v201, %v1270
  %v1272 = vpop.f32.mrb[0].mxu0
  %1273 = vmatprep.mubr.bf16.mxu0 0
  %1274 = vmatmul.mubr.bf16.gmra.mrb[0].mxu0 %v783
  %v1275 = vpop.f32.mrb[0].mxu0
  %v1276 = vadd.f32 %v201, %v1275
  %v1277 = vpop.f32.mrb[0].mxu0
  %v1278 = vpop.f32.mrb[0].mxu0
  %v1279 = vadd.f32 %v201, %v1278
  %v1280 = vpop.f32.mrb[0].mxu0
  %1281 = vmatprep.mubr.bf16.mxu0 0
  %1282 = vmatmul.mubr.bf16.gmra.mrb[0].mxu0 %v786
  %v1283 = vpop.f32.mrb[0].mxu0
  %v1284 = vadd.f32 %v201, %v1283
  %v1285 = vpop.f32.mrb[0].mxu0
  %v1286 = vpop.f32.mrb[0].mxu0
  %v1287 = vadd.f32 %v201, %v1286
  %v1288 = vpop.f32.mrb[0].mxu0
  %1289 = vmatprep.mubr.bf16.mxu0 0
  %1290 = vmatmul.mubr.bf16.gmra.mrb[0].mxu0 %v789
  %v1291 = vpop.f32.mrb[0].mxu0
  %v1292 = vadd.f32 %v201, %v1291
  %v1293 = vpop.f32.mrb[0].mxu0
  %v1294 = vpop.f32.mrb[0].mxu0
  %v1295 = vadd.f32 %v201, %v1294
  %v1296 = vpop.f32.mrb[0].mxu0
  %1297 = vmatprep.mubr.bf16.mxu0 0
  %1298 = vmatmul.mubr.bf16.gmra.mrb[0].mxu0 %v792
  %v1299 = vpop.f32.mrb[0].mxu0
  %v1300 = vadd.f32 %v201, %v1299
  %v1301 = vpop.f32.mrb[0].mxu0
  %v1302 = vpop.f32.mrb[0].mxu0
  %v1303 = vadd.f32 %v201, %v1302
  %v1304 = vpop.f32.mrb[0].mxu0
  %1305 = vmatprep.mubr.bf16.mxu0 0
  %1306 = vmatmul.mubr.bf16.gmra.mrb[0].mxu0 %v795
  %v1307 = vpop.f32.mrb[0].mxu0
  %v1308 = vadd.f32 %v201, %v1307
  %v1309 = vpop.f32.mrb[0].mxu0
  %v1310 = vpop.f32.mrb[0].mxu0
  %v1311 = vadd.f32 %v201, %v1310
  %v1312 = vpop.f32.mrb[0].mxu0
  %1313 = vmatprep.mubr.bf16.mxu0 0
  %1314 = vmatmul.mubr.bf16.gmra.mrb[0].mxu0 %v798
  %v1315 = vpop.f32.mrb[0].mxu0
  %v1316 = vadd.f32 %v201, %v1315
  %v1317 = vpop.f32.mrb[0].mxu0
  %v1318 = vpop.f32.mrb[0].mxu0
  %v1319 = vadd.f32 %v201, %v1318
  %v1320 = vpop.f32.mrb[0].mxu0
  %1321 = vmatprep.mubr.bf16.mxu0 0
  %1322 = vmatmul.mubr.bf16.gmra.mrb[0].mxu0 %v801
  %v1323 = vpop.f32.mrb[0].mxu0
  %v1324 = vadd.f32 %v201, %v1323
  %v1325 = vpop.f32.mrb[0].mxu0
  %v1326 = vpop.f32.mrb[0].mxu0
  %v1327 = vadd.f32 %v201, %v1326
  %v1328 = vpop.f32.mrb[0].mxu0
  %1329 = vmatprep.mubr.bf16.mxu0 0
  %1330 = vmatmul.mubr.bf16.gmra.mrb[0].mxu0 %v804
  %v1331 = vpop.f32.mrb[0].mxu0
  %v1332 = vadd.f32 %v201, %v1331
  %v1333 = vpop.f32.mrb[0].mxu0
  %v1334 = vpop.f32.mrb[0].mxu0
  %v1335 = vadd.f32 %v201, %v1334
  %v1336 = vpop.f32.mrb[0].mxu0
  %1337 = vmatprep.mubr.bf16.mxu0 0
  %1338 = vmatmul.mubr.bf16.gmra.mrb[0].mxu0 %v807
  %v1339 = vpop.f32.mrb[0].mxu0
  %v1340 = vadd.f32 %v201, %v1339
  %v1341 = vpop.f32.mrb[0].mxu0
  %v1342 = vpop.f32.mrb[0].mxu0
  %v1343 = vadd.f32 %v201, %v1342
  %v1344 = vpop.f32.mrb[0].mxu0
  %1345 = vmatprep.mubr.bf16.mxu0 0
  %1346 = vmatmul.mubr.bf16.gmra.mrb[0].mxu0 %v810
  %v1347 = vpop.f32.mrb[0].mxu0
  %v1348 = vadd.f32 %v201, %v1347
  %v1349 = vpop.f32.mrb[0].mxu0
  %v1350 = vpop.f32.mrb[0].mxu0
  %v1351 = vadd.f32 %v201, %v1350
  %v1352 = vpop.f32.mrb[0].mxu0
  %1353 = vmatprep.mubr.bf16.mxu0 0
  %1354 = vmatmul.mubr.bf16.gmra.mrb[0].mxu0 %v813
  %v1355 = vpop.f32.mrb[0].mxu0
  %v1356 = vadd.f32 %v201, %v1355
  %v1357 = vpop.f32.mrb[0].mxu0
  %v1358 = vpop.f32.mrb[0].mxu0
  %v1359 = vadd.f32 %v201, %v1358
  %v1360 = vpop.f32.mrb[0].mxu0
  %1361 = vmatprep.mubr.bf16.mxu0 0
  %1362 = vmatmul.mubr.bf16.gmra.mrb[0].mxu0 %v816
  %v1363 = vpop.f32.mrb[0].mxu0
  %v1364 = vadd.f32 %v201, %v1363
  %v1365 = vpop.f32.mrb[0].mxu0
  %v1366 = vpop.f32.mrb[0].mxu0
  %v1367 = vadd.f32 %v201, %v1366
  %v1368 = vpop.f32.mrb[0].mxu0
  %1369 = vmatprep.mubr.bf16.mxu0 0
  %1370 = vmatmul.mubr.bf16.gmra.mrb[0].mxu0 %v819
  %v1371 = vpop.f32.mrb[0].mxu0
  %v1372 = vadd.f32 %v201, %v1371
  %v1373 = vpop.f32.mrb[0].mxu0
  %v1374 = vpop.f32.mrb[0].mxu0
  %v1375 = vadd.f32 %v201, %v1374
  %v1376 = vpop.f32.mrb[0].mxu0
  %1377 = vmatprep.mubr.bf16.mxu0 0
  %1378 = vmatmul.mubr.bf16.gmra.mrb[0].mxu0 %v822
  %v1379 = vpop.f32.mrb[0].mxu0
  %v1380 = vadd.f32 %v201, %v1379
  %v1381 = vpop.f32.mrb[0].mxu0
  %v1382 = vpop.f32.mrb[0].mxu0
  %v1383 = vadd.f32 %v201, %v1382
  %v1384 = vpop.f32.mrb[0].mxu0
  %1385 = vmatprep.mubr.bf16.mxu0 0
  %1386 = vmatmul.mubr.bf16.gmra.mrb[0].mxu0 %v825
  %v1387 = vpop.f32.mrb[0].mxu0
  %v1388 = vadd.f32 %v201, %v1387
  %v1389 = vpop.f32.mrb[0].mxu0
  %v1390 = vpop.f32.mrb[0].mxu0
  %v1391 = vadd.f32 %v201, %v1390
  %v1392 = vpop.f32.mrb[0].mxu0
  %1393 = vmatprep.mubr.bf16.mxu0 0
  %1394 = vmatmul.mubr.bf16.gmra.mrb[0].mxu0 %v828
  %v1395 = vpop.f32.mrb[0].mxu0
  %v1396 = vadd.f32 %v201, %v1395
  %v1397 = vpop.f32.mrb[0].mxu0
  %v1398 = vpop.f32.mrb[0].mxu0
  %v1399 = vadd.f32 %v201, %v1398
  %v1400 = vpop.f32.mrb[0].mxu0
  %1401 = vmatprep.mubr.bf16.mxu0 0
  %1402 = vmatmul.mubr.bf16.gmra.mrb[0].mxu0 %v831
  %v1403 = vpop.f32.mrb[0].mxu0
  %v1404 = vadd.f32 %v201, %v1403
  %v1405 = vpop.f32.mrb[0].mxu0
  %v1406 = vpop.f32.mrb[0].mxu0
  %v1407 = vadd.f32 %v201, %v1406
  %v1408 = vpop.f32.mrb[0].mxu0
  %1409 = vmatprep.mubr.bf16.mxu0 0
  %1410 = vmatmul.mubr.bf16.gmra.mrb[0].mxu0 %v834
  %v1411 = vpop.f32.mrb[0].mxu0
  %v1412 = vadd.f32 %v201, %v1411
  %v1413 = vpop.f32.mrb[0].mxu0
  %v1414 = vpop.f32.mrb[0].mxu0
  %v1415 = vadd.f32 %v201, %v1414
  %v1416 = vpop.f32.mrb[0].mxu0
  %1417 = vmatprep.mubr.bf16.mxu0 0
  %1418 = vmatmul.mubr.bf16.gmra.mrb[0].mxu0 %v837
  %v1419 = vpop.f32.mrb[0].mxu0
  %v1420 = vadd.f32 %v201, %v1419
  %v1421 = vpop.f32.mrb[0].mxu0
  %v1422 = vpop.f32.mrb[0].mxu0
  %v1423 = vadd.f32 %v201, %v1422
  %v1424 = vpop.f32.mrb[0].mxu0
  %1425 = vmatprep.mubr.bf16.mxu0 0
  %1426 = vmatmul.mubr.bf16.gmra.mrb[0].mxu0 %v840
  %v1427 = vpop.f32.mrb[0].mxu0
  %v1428 = vadd.f32 %v201, %v1427
  %v1429 = vpop.f32.mrb[0].mxu0
  %v1430 = vpop.f32.mrb[0].mxu0
  %v1431 = vadd.f32 %v201, %v1430
  %v1432 = vpop.f32.mrb[0].mxu0
  %1433 = vmatprep.mubr.bf16.mxu0 0
  %1434 = vmatmul.mubr.bf16.gmra.mrb[0].mxu0 %v843
  %v1435 = vpop.f32.mrb[0].mxu0
  %v1436 = vadd.f32 %v201, %v1435
  %v1437 = vpop.f32.mrb[0].mxu0
  %v1438 = vpop.f32.mrb[0].mxu0
  %v1439 = vadd.f32 %v201, %v1438
  %v1440 = vpop.f32.mrb[0].mxu0
  %1441 = vmatprep.mubr.bf16.mxu0 0
  %1442 = vmatmul.mubr.bf16.gmra.mrb[0].mxu0 %v846
  %v1443 = vpop.f32.mrb[0].mxu0
  %v1444 = vadd.f32 %v201, %v1443
  %v1445 = vpop.f32.mrb[0].mxu0
  %v1446 = vpop.f32.mrb[0].mxu0
  %v1447 = vadd.f32 %v201, %v1446
  %v1448 = vpop.f32.mrb[0].mxu0
  %1449 = vmatprep.mubr.bf16.mxu0 0
  %1450 = vmatmul.mubr.bf16.gmra.mrb[0].mxu0 %v849
  %v1451 = vpop.f32.mrb[0].mxu0
  %v1452 = vadd.f32 %v201, %v1451
  %v1453 = vpop.f32.mrb[0].mxu0
  %v1454 = vpop.f32.mrb[0].mxu0
  %v1455 = vadd.f32 %v201, %v1454
  %v1456 = vpop.f32.mrb[0].mxu0
  %1457 = vmatprep.mubr.bf16.mxu0 0
  %1458 = vmatmul.mubr.bf16.gmra.mrb[0].mxu0 %v852
  %v1459 = vpop.f32.mrb[0].mxu0
  %v1460 = vadd.f32 %v201, %v1459
  %v1461 = vpop.f32.mrb[0].mxu0
  %v1462 = vpop.f32.mrb[0].mxu0
  %v1463 = vadd.f32 %v201, %v1462
  %v1464 = vpop.f32.mrb[0].mxu0
  %1465 = vmatprep.mubr.bf16.mxu0 0
  %1466 = vmatmul.mubr.bf16.gmra.mrb[0].mxu0 %v855
  %v1467 = vpop.f32.mrb[0].mxu0
  %v1468 = vadd.f32 %v201, %v1467
  %v1469 = vpop.f32.mrb[0].mxu0
  %v1470 = vpop.f32.mrb[0].mxu0
  %v1471 = vadd.f32 %v201, %v1470
  %v1472 = vpop.f32.mrb[0].mxu0
  %1473 = vmatprep.mubr.bf16.mxu0 0
  %1474 = vmatmul.mubr.bf16.gmra.mrb[0].mxu0 %v858
  %v1475 = vpop.f32.mrb[0].mxu0
  %v1476 = vadd.f32 %v201, %v1475
  %v1477 = vpop.f32.mrb[0].mxu0
  %v1478 = vpop.f32.mrb[0].mxu0
  %v1479 = vadd.f32 %v201, %v1478
  %v1480 = vpop.f32.mrb[0].mxu0
  %1481 = vmatprep.mubr.bf16.mxu0 0
  %1482 = vmatmul.mubr.bf16.gmra.mrb[0].mxu0 %v861
  %v1483 = vpop.f32.mrb[0].mxu0
  %v1484 = vadd.f32 %v201, %v1483
  %v1485 = vpop.f32.mrb[0].mxu0
  %v1486 = vpop.f32.mrb[0].mxu0
  %v1487 = vadd.f32 %v201, %v1486
  %v1488 = vpop.f32.mrb[0].mxu0
  %1489 = vmatprep.mubr.bf16.mxu0 0
  %1490 = vmatmul.mubr.bf16.gmra.mrb[0].mxu0 %v864
  %v1491 = vpop.f32.mrb[0].mxu0
  %v1492 = vadd.f32 %v201, %v1491
  %v1493 = vpop.f32.mrb[0].mxu0
  %v1494 = vpop.f32.mrb[0].mxu0
  %v1495 = vadd.f32 %v201, %v1494
  %v1496 = vpop.f32.mrb[0].mxu0
  %1497 = vmatprep.mubr.bf16.mxu0 0
  %1498 = vmatmul.mubr.bf16.gmra.mrb[0].mxu0 %v867
  %v1499 = vpop.f32.mrb[0].mxu0
  %v1500 = vadd.f32 %v201, %v1499
  %v1501 = vpop.f32.mrb[0].mxu0
  %v1502 = vpop.f32.mrb[0].mxu0
  %v1503 = vadd.f32 %v201, %v1502
  %v1504 = vpop.f32.mrb[0].mxu0
  %1505 = vmatprep.mubr.bf16.mxu0 0
  %1506 = vmatmul.mubr.bf16.gmra.mrb[0].mxu0 %v870
  %v1507 = vpop.f32.mrb[0].mxu0
  %v1508 = vadd.f32 %v201, %v1507
  %v1509 = vpop.f32.mrb[0].mxu0
  %v1510 = vpop.f32.mrb[0].mxu0
  %v1511 = vadd.f32 %v201, %v1510
  %v1512 = vpop.f32.mrb[0].mxu0
  %1513 = vmatprep.mubr.bf16.mxu0 0
  %1514 = vmatmul.mubr.bf16.gmra.mrb[0].mxu0 %v873
  %v1515 = vpop.f32.mrb[0].mxu0
  %v1516 = vadd.f32 %v201, %v1515
  %v1517 = vpop.f32.mrb[0].mxu0
  %v1518 = vpop.f32.mrb[0].mxu0
  %v1519 = vadd.f32 %v201, %v1518
  %v1520 = vpop.f32.mrb[0].mxu0
  %1521 = vmatprep.mubr.bf16.mxu0 0
  %1522 = vmatmul.mubr.bf16.gmra.mrb[0].mxu0 %v876
  %v1523 = vpop.f32.mrb[0].mxu0
  %v1524 = vadd.f32 %v201, %v1523
  %v1525 = vpop.f32.mrb[0].mxu0
  %v1526 = vpop.f32.mrb[0].mxu0
  %v1527 = vadd.f32 %v201, %v1526
  %v1528 = vpop.f32.mrb[0].mxu0
  %1529 = vmatprep.mubr.bf16.mxu0 0
  %1530 = vmatmul.mubr.bf16.gmra.mrb[0].mxu0 %v879
  %v1531 = vpop.f32.mrb[0].mxu0
  %v1532 = vadd.f32 %v201, %v1531
  %v1533 = vpop.f32.mrb[0].mxu0
  %v1534 = vpop.f32.mrb[0].mxu0
  %v1535 = vadd.f32 %v201, %v1534
  %v1536 = vpop.f32.mrb[0].mxu0
  %1537 = vmatprep.mubr.bf16.mxu0 0
  %1538 = vmatmul.mubr.bf16.gmra.mrb[0].mxu0 %v882
  %v1539 = vpop.f32.mrb[0].mxu0
  %v1540 = vadd.f32 %v201, %v1539
  %v1541 = vpop.f32.mrb[0].mxu0
  %v1542 = vpop.f32.mrb[0].mxu0
  %v1543 = vadd.f32 %v201, %v1542
  %v1544 = vpop.f32.mrb[0].mxu0
  %1545 = vmatprep.mubr.bf16.mxu0 0
  %1546 = vmatmul.mubr.bf16.gmra.mrb[0].mxu0 %v885
  %v1547 = vpop.f32.mrb[0].mxu0
  %v1548 = vadd.f32 %v201, %v1547
  %v1549 = vpop.f32.mrb[0].mxu0
  %v1550 = vpop.f32.mrb[0].mxu0
  %v1551 = vadd.f32 %v201, %v1550
  %v1552 = vpop.f32.mrb[0].mxu0
  %1553 = vmatprep.mubr.bf16.mxu0 0
  %1554 = vmatmul.mubr.bf16.gmra.mrb[0].mxu0 %v888
  %v1555 = vpop.f32.mrb[0].mxu0
  %v1556 = vadd.f32 %v201, %v1555
  %v1557 = vpop.f32.mrb[0].mxu0
  %v1558 = vpop.f32.mrb[0].mxu0
  %v1559 = vadd.f32 %v201, %v1558
  %v1560 = vpop.f32.mrb[0].mxu0
  %1561 = vmatprep.mubr.bf16.mxu0 0
  %1562 = vmatmul.mubr.bf16.gmra.mrb[0].mxu0 %v891
  %v1563 = vpop.f32.mrb[0].mxu0
  %v1564 = vadd.f32 %v201, %v1563
  %v1565 = vpop.f32.mrb[0].mxu0
  %v1566 = vpop.f32.mrb[0].mxu0
  %v1567 = vadd.f32 %v201, %v1566
  %v1568 = vpop.f32.mrb[0].mxu0
  %1569 = vmatprep.mubr.bf16.mxu0 0
  %1570 = vmatmul.mubr.bf16.gmra.mrb[0].mxu0 %v894
  %v1571 = vpop.f32.mrb[0].mxu0
  %v1572 = vadd.f32 %v201, %v1571
  %v1573 = vpop.f32.mrb[0].mxu0
  %v1574 = vpop.f32.mrb[0].mxu0
  %v1575 = vadd.f32 %v201, %v1574
  %v1576 = vpop.f32.mrb[0].mxu0
  %1577 = vmatprep.mubr.bf16.mxu0 0
  %1578 = vmatmul.mubr.bf16.gmra.mrb[0].mxu0 %v897
  %v1579 = vpop.f32.mrb[0].mxu0
  %v1580 = vadd.f32 %v201, %v1579
  %v1581 = vpop.f32.mrb[0].mxu0
  %v1582 = vpop.f32.mrb[0].mxu0
  %v1583 = vadd.f32 %v201, %v1582
  %v1584 = vpop.f32.mrb[0].mxu0
  %1585 = vmatprep.mubr.bf16.mxu0 0
  %1586 = vmatmul.mubr.bf16.gmra.mrb[0].mxu0 %v900
  %v1587 = vpop.f32.mrb[0].mxu0
  %v1588 = vadd.f32 %v201, %v1587
  %v1589 = vpop.f32.mrb[0].mxu0
  %v1590 = vpop.f32.mrb[0].mxu0
  %v1591 = vadd.f32 %v201, %v1590
  %v1592 = vpop.f32.mrb[0].mxu0
  %1593 = vmatprep.mubr.bf16.mxu0 0
  %1594 = vmatmul.mubr.bf16.gmra.mrb[0].mxu0 %v903
  %v1595 = vpop.f32.mrb[0].mxu0
  %v1596 = vadd.f32 %v201, %v1595
  %v1597 = vpop.f32.mrb[0].mxu0
  %v1598 = vpop.f32.mrb[0].mxu0
  %v1599 = vadd.f32 %v201, %v1598
  %v1600 = vpop.f32.mrb[0].mxu0
  %1601 = vmatprep.mubr.bf16.mxu0 0
  %1602 = vmatmul.mubr.bf16.gmra.mrb[0].mxu0 %v906
  %v1603 = vpop.f32.mrb[0].mxu0
  %v1604 = vadd.f32 %v201, %v1603
  %v1605 = vpop.f32.mrb[0].mxu0
  %v1606 = vpop.f32.mrb[0].mxu0
  %v1607 = vadd.f32 %v201, %v1606
  %v1608 = vpop.f32.mrb[0].mxu0
  %1609 = vmatprep.mubr.bf16.mxu0 0
  %1610 = vmatmul.mubr.bf16.gmra.mrb[0].mxu0 %v909
  %v1611 = vpop.f32.mrb[0].mxu0
  %v1612 = vadd.f32 %v201, %v1611
  %v1613 = vpop.f32.mrb[0].mxu0
  %v1614 = vpop.f32.mrb[0].mxu0
  %v1615 = vadd.f32 %v201, %v1614
  %v1616 = vpop.f32.mrb[0].mxu0
  %1617 = vmatprep.mubr.bf16.mxu0 0
  %1618 = vmatmul.mubr.bf16.gmra.mrb[0].mxu0 %v912
  %v1619 = vpop.f32.mrb[0].mxu0
  %v1620 = vadd.f32 %v201, %v1619
  %v1621 = vpop.f32.mrb[0].mxu0
  %v1622 = vpop.f32.mrb[0].mxu0
  %v1623 = vadd.f32 %v201, %v1622
  %v1624 = vpop.f32.mrb[0].mxu0
  %1625 = vmatprep.mubr.bf16.mxu0 0
  %1626 = vmatmul.mubr.bf16.gmra.mrb[0].mxu0 %v915
  %v1627 = vpop.f32.mrb[0].mxu0
  %v1628 = vadd.f32 %v201, %v1627
  %v1629 = vpop.f32.mrb[0].mxu0
  %v1630 = vpop.f32.mrb[0].mxu0
  %v1631 = vpop.f32.mrb[0].mxu0
  %1632 = vdwg.mxu0
  %v1633 = vmax.f32 %v956, 0.0
  %v1634 = vmax.f32 %v959, 0.0
  %v1635 = vmax.f32 %v964, 0.0
  %v1636 = vmax.f32 %v967, 0.0
  %v1637 = vmax.f32 %v972, 0.0
  %v1638 = vmax.f32 %v975, 0.0
  %v1639 = vmax.f32 %v980, 0.0
  %v1640 = vmax.f32 %v983, 0.0
  %v1641 = vmax.f32 %v988, 0.0
  %v1642 = vmax.f32 %v991, 0.0
  %v1643 = vmax.f32 %v996, 0.0
  %v1644 = vmax.f32 %v999, 0.0
  %v1645 = vmax.f32 %v1004, 0.0
  %v1646 = vmax.f32 %v1007, 0.0
  %v1647 = vmax.f32 %v1012, 0.0
  %v1648 = vmax.f32 %v1015, 0.0
  %v1649 = vmax.f32 %v1020, 0.0
  %v1650 = vmax.f32 %v1023, 0.0
  %v1651 = vmax.f32 %v1028, 0.0
  %v1652 = vmax.f32 %v1031, 0.0
  %v1653 = vmax.f32 %v1036, 0.0
  %v1654 = vmax.f32 %v1039, 0.0
  %v1655 = vmax.f32 %v1044, 0.0
  %v1656 = vmax.f32 %v1047, 0.0
  %v1657 = vmax.f32 %v1052, 0.0
  %v1658 = vmax.f32 %v1055, 0.0
  %v1659 = vmax.f32 %v1060, 0.0
  %v1660 = vmax.f32 %v1063, 0.0
  %v1661 = vmax.f32 %v1068, 0.0
  %v1662 = vmax.f32 %v1071, 0.0
  %v1663 = vmax.f32 %v1076, 0.0
  %v1664 = vmax.f32 %v1079, 0.0
  %v1665 = vmax.f32 %v1084, 0.0
  %v1666 = vmax.f32 %v1087, 0.0
  %v1667 = vmax.f32 %v1092, 0.0
  %v1668 = vmax.f32 %v1095, 0.0
  %v1669 = vmax.f32 %v1100, 0.0
  %v1670 = vmax.f32 %v1103, 0.0
  %v1671 = vmax.f32 %v1108, 0.0
  %v1672 = vmax.f32 %v1111, 0.0
  %v1673 = vmax.f32 %v1116, 0.0
  %v1674 = vmax.f32 %v1119, 0.0
  %v1675 = vmax.f32 %v1124, 0.0
  %v1676 = vmax.f32 %v1127, 0.0
  %v1677 = vmax.f32 %v1132, 0.0
  %v1678 = vmax.f32 %v1135, 0.0
  %v1679 = vmax.f32 %v1140, 0.0
  %v1680 = vmax.f32 %v1143, 0.0
  %v1681 = vmax.f32 %v1148, 0.0
  %v1682 = vmax.f32 %v1151, 0.0
  %v1683 = vmax.f32 %v1156, 0.0
  %v1684 = vmax.f32 %v1159, 0.0
  %v1685 = vmax.f32 %v1164, 0.0
  %v1686 = vmax.f32 %v1167, 0.0
  %v1687 = vmax.f32 %v1172, 0.0
  %v1688 = vmax.f32 %v1175, 0.0
  %v1689 = vmax.f32 %v1180, 0.0
  %v1690 = vmax.f32 %v1183, 0.0
  %v1691 = vmax.f32 %v1188, 0.0
  %v1692 = vmax.f32 %v1191, 0.0
  %v1693 = vmax.f32 %v1196, 0.0
  %v1694 = vmax.f32 %v1199, 0.0
  %v1695 = vmax.f32 %v1204, 0.0
  %v1696 = vmax.f32 %v1207, 0.0
  %v1697 = vmax.f32 %v1212, 0.0
  %v1698 = vmax.f32 %v1215, 0.0
  %v1699 = vmax.f32 %v1220, 0.0
  %v1700 = vmax.f32 %v1223, 0.0
  %v1701 = vmax.f32 %v1228, 0.0
  %v1702 = vmax.f32 %v1231, 0.0
  %v1703 = vmax.f32 %v1236, 0.0
  %v1704 = vmax.f32 %v1239, 0.0
  %v1705 = vmax.f32 %v1244, 0.0
  %v1706 = vmax.f32 %v1247, 0.0
  %v1707 = vmax.f32 %v1252, 0.0
  %v1708 = vmax.f32 %v1255, 0.0
  %v1709 = vmax.f32 %v1260, 0.0
  %v1710 = vmax.f32 %v1263, 0.0
  %v1711 = vmax.f32 %v1268, 0.0
  %v1712 = vmax.f32 %v1271, 0.0
  %v1713 = vmax.f32 %v1276, 0.0
  %v1714 = vmax.f32 %v1279, 0.0
  %v1715 = vmax.f32 %v1284, 0.0
  %v1716 = vmax.f32 %v1287, 0.0
  %v1717 = vmax.f32 %v1292, 0.0
  %v1718 = vmax.f32 %v1295, 0.0
  %v1719 = vmax.f32 %v1300, 0.0
  %v1720 = vmax.f32 %v1303, 0.0
  %v1721 = vmax.f32 %v1308, 0.0
  %v1722 = vmax.f32 %v1311, 0.0
  %v1723 = vmax.f32 %v1316, 0.0
  %v1724 = vmax.f32 %v1319, 0.0
  %v1725 = vmax.f32 %v1324, 0.0
  %v1726 = vmax.f32 %v1327, 0.0
  %v1727 = vmax.f32 %v1332, 0.0
  %v1728 = vmax.f32 %v1335, 0.0
  %v1729 = vmax.f32 %v1340, 0.0
  %v1730 = vmax.f32 %v1343, 0.0
  %v1731 = vmax.f32 %v1348, 0.0
  %v1732 = vmax.f32 %v1351, 0.0
  %v1733 = vmax.f32 %v1356, 0.0
  %v1734 = vmax.f32 %v1359, 0.0
  %v1735 = vmax.f32 %v1364, 0.0
  %v1736 = vmax.f32 %v1367, 0.0
  %v1737 = vmax.f32 %v1372, 0.0
  %v1738 = vmax.f32 %v1375, 0.0
  %v1739 = vmax.f32 %v1380, 0.0
  %v1740 = vmax.f32 %v1383, 0.0
  %v1741 = vmax.f32 %v1388, 0.0
  %v1742 = vmax.f32 %v1391, 0.0
  %v1743 = vmax.f32 %v1396, 0.0
  %v1744 = vmax.f32 %v1399, 0.0
  %v1745 = vmax.f32 %v1404, 0.0
  %v1746 = vmax.f32 %v1407, 0.0
  %v1747 = vmax.f32 %v1412, 0.0
  %v1748 = vmax.f32 %v1415, 0.0
  %v1749 = vmax.f32 %v1420, 0.0
  %v1750 = vmax.f32 %v1423, 0.0
  %v1751 = vmax.f32 %v1428, 0.0
  %v1752 = vmax.f32 %v1431, 0.0
  %v1753 = vmax.f32 %v1436, 0.0
  %v1754 = vmax.f32 %v1439, 0.0
  %v1755 = vmax.f32 %v1444, 0.0
  %v1756 = vmax.f32 %v1447, 0.0
  %v1757 = vmax.f32 %v1452, 0.0
  %v1758 = vmax.f32 %v1455, 0.0
  %v1759 = vmax.f32 %v1460, 0.0
  %v1760 = vmax.f32 %v1463, 0.0
  %v1761 = vmax.f32 %v1468, 0.0
  %v1762 = vmax.f32 %v1471, 0.0
  %v1763 = vmax.f32 %v1476, 0.0
  %v1764 = vmax.f32 %v1479, 0.0
  %v1765 = vmax.f32 %v1484, 0.0
  %v1766 = vmax.f32 %v1487, 0.0
  %v1767 = vmax.f32 %v1492, 0.0
  %v1768 = vmax.f32 %v1495, 0.0
  %v1769 = vmax.f32 %v1500, 0.0
  %v1770 = vmax.f32 %v1503, 0.0
  %v1771 = vmax.f32 %v1508, 0.0
  %v1772 = vmax.f32 %v1511, 0.0
  %v1773 = vmax.f32 %v1516, 0.0
  %v1774 = vmax.f32 %v1519, 0.0
  %v1775 = vmax.f32 %v1524, 0.0
  %v1776 = vmax.f32 %v1527, 0.0
  %v1777 = vmax.f32 %v1532, 0.0
  %v1778 = vmax.f32 %v1535, 0.0
  %v1779 = vmax.f32 %v1540, 0.0
  %v1780 = vmax.f32 %v1543, 0.0
  %v1781 = vmax.f32 %v1548, 0.0
  %v1782 = vmax.f32 %v1551, 0.0
  %v1783 = vmax.f32 %v1556, 0.0
  %v1784 = vmax.f32 %v1559, 0.0
  %v1785 = vmax.f32 %v1564, 0.0
  %v1786 = vmax.f32 %v1567, 0.0
  %v1787 = vmax.f32 %v1572, 0.0
  %v1788 = vmax.f32 %v1575, 0.0
  %v1789 = vmax.f32 %v1580, 0.0
  %v1790 = vmax.f32 %v1583, 0.0
  %v1791 = vmax.f32 %v1588, 0.0
  %v1792 = vmax.f32 %v1591, 0.0
  %v1793 = vmax.f32 %v1596, 0.0
  %v1794 = vmax.f32 %v1599, 0.0
  %v1795 = vmax.f32 %v1604, 0.0
  %v1796 = vmax.f32 %v1607, 0.0
  %v1797 = vmax.f32 %v1612, 0.0
  %v1798 = vmax.f32 %v1615, 0.0
  %v1799 = vmax.f32 %v1620, 0.0
  %v1800 = vmax.f32 %v1623, 0.0
  %v1801 = vmax.f32 %v1628, 0.0
  %vm1802 = vcmask 80896
  %1803 = vst.msk [vmem:[%s3] sm:$0xff] %vm1802, %v1633
  %1804 = vst.msk [vmem:[%s3 + $0x8] sm:$0xff] %vm1802, %v1634
  %1805 = vst.msk [vmem:[%s3 + $0x10] sm:$0xff] %vm1802, %v1635
  %1806 = vst.msk [vmem:[%s3 + $0x18] sm:$0xff] %vm1802, %v1636
  %1807 = vst.msk [vmem:[%s3 + $0x20] sm:$0xff] %vm1802, %v1637
  %1808 = vst.msk [vmem:[%s3 + $0x28] sm:$0xff] %vm1802, %v1638
  %1809 = vst.msk [vmem:[%s3 + $0x30] sm:$0xff] %vm1802, %v1639
  %1810 = vst.msk [vmem:[%s3 + $0x38] sm:$0xff] %vm1802, %v1640
  %1811 = vst.msk [vmem:[%s3 + $0x40] sm:$0xff] %vm1802, %v1641
  %1812 = vst.msk [vmem:[%s3 + $0x48] sm:$0xff] %vm1802, %v1642
  %1813 = vst.msk [vmem:[%s3 + $0x50] sm:$0xff] %vm1802, %v1643
  %1814 = vst.msk [vmem:[%s3 + $0x58] sm:$0xff] %vm1802, %v1644
  %1815 = vst.msk [vmem:[%s3 + $0x60] sm:$0xff] %vm1802, %v1645
  %1816 = vst.msk [vmem:[%s3 + $0x68] sm:$0xff] %vm1802, %v1646
  %1817 = vst.msk [vmem:[%s3 + $0x70] sm:$0xff] %vm1802, %v1647
  %1818 = vst.msk [vmem:[%s3 + $0x78] sm:$0xff] %vm1802, %v1648
  %1819 = vst.msk [vmem:[%s3 + $0x80] sm:$0xff] %vm1802, %v1649
  %1820 = vst.msk [vmem:[%s3 + $0x88] sm:$0xff] %vm1802, %v1650
  %1821 = vst.msk [vmem:[%s3 + $0x90] sm:$0xff] %vm1802, %v1651
  %1822 = vst.msk [vmem:[%s3 + $0x98] sm:$0xff] %vm1802, %v1652
  %1823 = vst.msk [vmem:[%s3 + $0xa0] sm:$0xff] %vm1802, %v1653
  %1824 = vst.msk [vmem:[%s3 + $0xa8] sm:$0xff] %vm1802, %v1654
  %1825 = vst.msk [vmem:[%s3 + $0xb0] sm:$0xff] %vm1802, %v1655
  %1826 = vst.msk [vmem:[%s3 + $0xb8] sm:$0xff] %vm1802, %v1656
  %1827 = vst.msk [vmem:[%s3 + $0xc0] sm:$0xff] %vm1802, %v1657
  %1828 = vst.msk [vmem:[%s3 + $0xc8] sm:$0xff] %vm1802, %v1658
  %1829 = vst.msk [vmem:[%s3 + $0xd0] sm:$0xff] %vm1802, %v1659
  %1830 = vst.msk [vmem:[%s3 + $0xd8] sm:$0xff] %vm1802, %v1660
  %1831 = vst.msk [vmem:[%s3 + $0xe0] sm:$0xff] %vm1802, %v1661
  %1832 = vst.msk [vmem:[%s3 + $0xe8] sm:$0xff] %vm1802, %v1662
  %1833 = vst.msk [vmem:[%s3 + $0xf0] sm:$0xff] %vm1802, %v1663
  %1834 = vst.msk [vmem:[%s3 + $0xf8] sm:$0xff] %vm1802, %v1664
  %1835 = vst.msk [vmem:[%s3 + $0x100] sm:$0xff] %vm1802, %v1665
  %1836 = vst.msk [vmem:[%s3 + $0x108] sm:$0xff] %vm1802, %v1666
  %1837 = vst.msk [vmem:[%s3 + $0x110] sm:$0xff] %vm1802, %v1667
  %1838 = vst.msk [vmem:[%s3 + $0x118] sm:$0xff] %vm1802, %v1668
  %1839 = vst.msk [vmem:[%s3 + $0x120] sm:$0xff] %vm1802, %v1669
  %1840 = vst.msk [vmem:[%s3 + $0x128] sm:$0xff] %vm1802, %v1670
  %1841 = vst.msk [vmem:[%s3 + $0x130] sm:$0xff] %vm1802, %v1671
  %1842 = vst.msk [vmem:[%s3 + $0x138] sm:$0xff] %vm1802, %v1672
  %1843 = vst.msk [vmem:[%s3 + $0x140] sm:$0xff] %vm1802, %v1673
  %1844 = vst.msk [vmem:[%s3 + $0x148] sm:$0xff] %vm1802, %v1674
  %1845 = vst.msk [vmem:[%s3 + $0x150] sm:$0xff] %vm1802, %v1675
  %1846 = vst.msk [vmem:[%s3 + $0x158] sm:$0xff] %vm1802, %v1676
  %1847 = vst.msk [vmem:[%s3 + $0x160] sm:$0xff] %vm1802, %v1677
  %1848 = vst.msk [vmem:[%s3 + $0x168] sm:$0xff] %vm1802, %v1678
  %1849 = vst.msk [vmem:[%s3 + $0x170] sm:$0xff] %vm1802, %v1679
  %1850 = vst.msk [vmem:[%s3 + $0x178] sm:$0xff] %vm1802, %v1680
  %1851 = vst.msk [vmem:[%s3 + $0x180] sm:$0xff] %vm1802, %v1681
  %1852 = vst.msk [vmem:[%s3 + $0x188] sm:$0xff] %vm1802, %v1682
  %1853 = vst.msk [vmem:[%s3 + $0x190] sm:$0xff] %vm1802, %v1683
  %1854 = vst.msk [vmem:[%s3 + $0x198] sm:$0xff] %vm1802, %v1684
  %1855 = vst.msk [vmem:[%s3 + $0x1a0] sm:$0xff] %vm1802, %v1685
  %1856 = vst.msk [vmem:[%s3 + $0x1a8] sm:$0xff] %vm1802, %v1686
  %1857 = vst.msk [vmem:[%s3 + $0x1b0] sm:$0xff] %vm1802, %v1687
  %1858 = vst.msk [vmem:[%s3 + $0x1b8] sm:$0xff] %vm1802, %v1688
  %1859 = vst.msk [vmem:[%s3 + $0x1c0] sm:$0xff] %vm1802, %v1689
  %1860 = vst.msk [vmem:[%s3 + $0x1c8] sm:$0xff] %vm1802, %v1690
  %1861 = vst.msk [vmem:[%s3 + $0x1d0] sm:$0xff] %vm1802, %v1691
  %1862 = vst.msk [vmem:[%s3 + $0x1d8] sm:$0xff] %vm1802, %v1692
  %1863 = vst.msk [vmem:[%s3 + $0x1e0] sm:$0xff] %vm1802, %v1693
  %1864 = vst.msk [vmem:[%s3 + $0x1e8] sm:$0xff] %vm1802, %v1694
  %1865 = vst.msk [vmem:[%s3 + $0x1f0] sm:$0xff] %vm1802, %v1695
  %1866 = vst.msk [vmem:[%s3 + $0x1f8] sm:$0xff] %vm1802, %v1696
  %1867 = vst.msk [vmem:[%s3 + $0x200] sm:$0xff] %vm1802, %v1697
  %1868 = vst.msk [vmem:[%s3 + $0x208] sm:$0xff] %vm1802, %v1698
  %1869 = vst.msk [vmem:[%s3 + $0x210] sm:$0xff] %vm1802, %v1699
  %1870 = vst.msk [vmem:[%s3 + $0x218] sm:$0xff] %vm1802, %v1700
  %1871 = vst.msk [vmem:[%s3 + $0x220] sm:$0xff] %vm1802, %v1701
  %1872 = vst.msk [vmem:[%s3 + $0x228] sm:$0xff] %vm1802, %v1702
  %1873 = vst.msk [vmem:[%s3 + $0x230] sm:$0xff] %vm1802, %v1703
  %1874 = vst.msk [vmem:[%s3 + $0x238] sm:$0xff] %vm1802, %v1704
  %1875 = vst.msk [vmem:[%s3 + $0x240] sm:$0xff] %vm1802, %v1705
  %1876 = vst.msk [vmem:[%s3 + $0x248] sm:$0xff] %vm1802, %v1706
  %1877 = vst.msk [vmem:[%s3 + $0x250] sm:$0xff] %vm1802, %v1707
  %1878 = vst.msk [vmem:[%s3 + $0x258] sm:$0xff] %vm1802, %v1708
  %1879 = vst.msk [vmem:[%s3 + $0x260] sm:$0xff] %vm1802, %v1709
  %1880 = vst.msk [vmem:[%s3 + $0x268] sm:$0xff] %vm1802, %v1710
  %1881 = vst.msk [vmem:[%s3 + $0x270] sm:$0xff] %vm1802, %v1711
  %1882 = vst.msk [vmem:[%s3 + $0x278] sm:$0xff] %vm1802, %v1712
  %1883 = vst.msk [vmem:[%s3 + $0x280] sm:$0xff] %vm1802, %v1713
  %1884 = vst.msk [vmem:[%s3 + $0x288] sm:$0xff] %vm1802, %v1714
  %1885 = vst.msk [vmem:[%s3 + $0x290] sm:$0xff] %vm1802, %v1715
  %1886 = vst.msk [vmem:[%s3 + $0x298] sm:$0xff] %vm1802, %v1716
  %1887 = vst.msk [vmem:[%s3 + $0x2a0] sm:$0xff] %vm1802, %v1717
  %1888 = vst.msk [vmem:[%s3 + $0x2a8] sm:$0xff] %vm1802, %v1718
  %1889 = vst.msk [vmem:[%s3 + $0x2b0] sm:$0xff] %vm1802, %v1719
  %1890 = vst.msk [vmem:[%s3 + $0x2b8] sm:$0xff] %vm1802, %v1720
  %1891 = vst.msk [vmem:[%s3 + $0x2c0] sm:$0xff] %vm1802, %v1721
  %1892 = vst.msk [vmem:[%s3 + $0x2c8] sm:$0xff] %vm1802, %v1722
  %1893 = vst.msk [vmem:[%s3 + $0x2d0] sm:$0xff] %vm1802, %v1723
  %1894 = vst.msk [vmem:[%s3 + $0x2d8] sm:$0xff] %vm1802, %v1724
  %1895 = vst.msk [vmem:[%s3 + $0x2e0] sm:$0xff] %vm1802, %v1725
  %1896 = vst.msk [vmem:[%s3 + $0x2e8] sm:$0xff] %vm1802, %v1726
  %1897 = vst.msk [vmem:[%s3 + $0x2f0] sm:$0xff] %vm1802, %v1727
  %1898 = vst.msk [vmem:[%s3 + $0x2f8] sm:$0xff] %vm1802, %v1728
  %1899 = vst.msk [vmem:[%s3 + $0x300] sm:$0xff] %vm1802, %v1729
  %1900 = vst.msk [vmem:[%s3 + $0x308] sm:$0xff] %vm1802, %v1730
  %1901 = vst.msk [vmem:[%s3 + $0x310] sm:$0xff] %vm1802, %v1731
  %1902 = vst.msk [vmem:[%s3 + $0x318] sm:$0xff] %vm1802, %v1732
  %1903 = vst.msk [vmem:[%s3 + $0x320] sm:$0xff] %vm1802, %v1733
  %1904 = vst.msk [vmem:[%s3 + $0x328] sm:$0xff] %vm1802, %v1734
  %1905 = vst.msk [vmem:[%s3 + $0x330] sm:$0xff] %vm1802, %v1735
  %1906 = vst.msk [vmem:[%s3 + $0x338] sm:$0xff] %vm1802, %v1736
  %1907 = vst.msk [vmem:[%s3 + $0x340] sm:$0xff] %vm1802, %v1737
  %1908 = vst.msk [vmem:[%s3 + $0x348] sm:$0xff] %vm1802, %v1738
  %1909 = vst.msk [vmem:[%s3 + $0x350] sm:$0xff] %vm1802, %v1739
  %1910 = vst.msk [vmem:[%s3 + $0x358] sm:$0xff] %vm1802, %v1740
  %1911 = vst.msk [vmem:[%s3 + $0x360] sm:$0xff] %vm1802, %v1741
  %1912 = vst.msk [vmem:[%s3 + $0x368] sm:$0xff] %vm1802, %v1742
  %1913 = vst.msk [vmem:[%s3 + $0x370] sm:$0xff] %vm1802, %v1743
  %1914 = vst.msk [vmem:[%s3 + $0x378] sm:$0xff] %vm1802, %v1744
  %1915 = vst.msk [vmem:[%s3 + $0x380] sm:$0xff] %vm1802, %v1745
  %1916 = vst.msk [vmem:[%s3 + $0x388] sm:$0xff] %vm1802, %v1746
  %1917 = vst.msk [vmem:[%s3 + $0x390] sm:$0xff] %vm1802, %v1747
  %1918 = vst.msk [vmem:[%s3 + $0x398] sm:$0xff] %vm1802, %v1748
  %1919 = vst.msk [vmem:[%s3 + $0x3a0] sm:$0xff] %vm1802, %v1749
  %1920 = vst.msk [vmem:[%s3 + $0x3a8] sm:$0xff] %vm1802, %v1750
  %1921 = vst.msk [vmem:[%s3 + $0x3b0] sm:$0xff] %vm1802, %v1751
  %1922 = vst.msk [vmem:[%s3 + $0x3b8] sm:$0xff] %vm1802, %v1752
  %1923 = vst.msk [vmem:[%s3 + $0x3c0] sm:$0xff] %vm1802, %v1753
  %1924 = vst.msk [vmem:[%s3 + $0x3c8] sm:$0xff] %vm1802, %v1754
  %1925 = vst.msk [vmem:[%s3 + $0x3d0] sm:$0xff] %vm1802, %v1755
  %1926 = vst.msk [vmem:[%s3 + $0x3d8] sm:$0xff] %vm1802, %v1756
  %1927 = vst.msk [vmem:[%s3 + $0x3e0] sm:$0xff] %vm1802, %v1757
  %1928 = vst.msk [vmem:[%s3 + $0x3e8] sm:$0xff] %vm1802, %v1758
  %1929 = vst.msk [vmem:[%s3 + $0x3f0] sm:$0xff] %vm1802, %v1759
  %1930 = vst.msk [vmem:[%s3 + $0x3f8] sm:$0xff] %vm1802, %v1760
  %1931 = vst.msk [vmem:[%s3 + $0x400] sm:$0xff] %vm1802, %v1761
  %1932 = vst.msk [vmem:[%s3 + $0x408] sm:$0xff] %vm1802, %v1762
  %1933 = vst.msk [vmem:[%s3 + $0x410] sm:$0xff] %vm1802, %v1763
  %1934 = vst.msk [vmem:[%s3 + $0x418] sm:$0xff] %vm1802, %v1764
  %1935 = vst.msk [vmem:[%s3 + $0x420] sm:$0xff] %vm1802, %v1765
  %1936 = vst.msk [vmem:[%s3 + $0x428] sm:$0xff] %vm1802, %v1766
  %1937 = vst.msk [vmem:[%s3 + $0x430] sm:$0xff] %vm1802, %v1767
  %1938 = vst.msk [vmem:[%s3 + $0x438] sm:$0xff] %vm1802, %v1768
  %1939 = vst.msk [vmem:[%s3 + $0x440] sm:$0xff] %vm1802, %v1769
  %1940 = vst.msk [vmem:[%s3 + $0x448] sm:$0xff] %vm1802, %v1770
  %1941 = vst.msk [vmem:[%s3 + $0x450] sm:$0xff] %vm1802, %v1771
  %1942 = vst.msk [vmem:[%s3 + $0x458] sm:$0xff] %vm1802, %v1772
  %1943 = vst.msk [vmem:[%s3 + $0x460] sm:$0xff] %vm1802, %v1773
  %1944 = vst.msk [vmem:[%s3 + $0x468] sm:$0xff] %vm1802, %v1774
  %1945 = vst.msk [vmem:[%s3 + $0x470] sm:$0xff] %vm1802, %v1775
  %1946 = vst.msk [vmem:[%s3 + $0x478] sm:$0xff] %vm1802, %v1776
  %1947 = vst.msk [vmem:[%s3 + $0x480] sm:$0xff] %vm1802, %v1777
  %1948 = vst.msk [vmem:[%s3 + $0x488] sm:$0xff] %vm1802, %v1778
  %1949 = vst.msk [vmem:[%s3 + $0x490] sm:$0xff] %vm1802, %v1779
  %1950 = vst.msk [vmem:[%s3 + $0x498] sm:$0xff] %vm1802, %v1780
  %1951 = vst.msk [vmem:[%s3 + $0x4a0] sm:$0xff] %vm1802, %v1781
  %1952 = vst.msk [vmem:[%s3 + $0x4a8] sm:$0xff] %vm1802, %v1782
  %1953 = vst.msk [vmem:[%s3 + $0x4b0] sm:$0xff] %vm1802, %v1783
  %1954 = vst.msk [vmem:[%s3 + $0x4b8] sm:$0xff] %vm1802, %v1784
  %1955 = vst.msk [vmem:[%s3 + $0x4c0] sm:$0xff] %vm1802, %v1785
  %1956 = vst.msk [vmem:[%s3 + $0x4c8] sm:$0xff] %vm1802, %v1786
  %1957 = vst.msk [vmem:[%s3 + $0x4d0] sm:$0xff] %vm1802, %v1787
  %1958 = vst.msk [vmem:[%s3 + $0x4d8] sm:$0xff] %vm1802, %v1788
  %1959 = vst.msk [vmem:[%s3 + $0x4e0] sm:$0xff] %vm1802, %v1789
  %1960 = vst.msk [vmem:[%s3 + $0x4e8] sm:$0xff] %vm1802, %v1790
  %1961 = vst.msk [vmem:[%s3 + $0x4f0] sm:$0xff] %vm1802, %v1791
  %1962 = vst.msk [vmem:[%s3 + $0x4f8] sm:$0xff] %vm1802, %v1792
  %1963 = vst.msk [vmem:[%s3 + $0x500] sm:$0xff] %vm1802, %v1793
  %1964 = vst.msk [vmem:[%s3 + $0x508] sm:$0xff] %vm1802, %v1794
  %1965 = vst.msk [vmem:[%s3 + $0x510] sm:$0xff] %vm1802, %v1795
  %1966 = vst.msk [vmem:[%s3 + $0x518] sm:$0xff] %vm1802, %v1796
  %1967 = vst.msk [vmem:[%s3 + $0x520] sm:$0xff] %vm1802, %v1797
  %1968 = vst.msk [vmem:[%s3 + $0x528] sm:$0xff] %vm1802, %v1798
  %1969 = vst.msk [vmem:[%s3 + $0x530] sm:$0xff] %vm1802, %v1799
  %1970 = vst.msk [vmem:[%s3 + $0x538] sm:$0xff] %vm1802, %v1800
  %1971 = vst.msk [vmem:[%s3 + $0x540] sm:$0xff] %vm1802, %v1801
  // Predicated region
  $region14: #{inference_network_forward.4} parent=0 // pred_check
    _
  $region15: #{inference_network_forward.4} parent=0 // pred_check_branch
    %1973 = sbr.rel (0) target = $region17
  $region16: #{inference_network_forward.4} parent=0 // pred_region
    _
  $region17: #{inference_network_forward.4} parent=0 // pred_fallthru
    _
  // Predicated region
  $region18: #{inference_network_forward.4} parent=0 // pred_check
    _
  $region19: #{inference_network_forward.4} parent=0 // pred_check_branch
    %1975 = sbr.rel (0) target = $region21
  $region20: #{inference_network_forward.4} parent=0 // pred_region
    _
  $region21: #{inference_network_forward.4} parent=0 // pred_fallthru
    _

// kernel: inference_network_forward.5
$region0: #{inference_network_forward.5}
  #allocation0 [shape = 'u32[]', space=smem, size = 0x4, offset = 0x4, fixed_abs, tag = 'smem constant byte address 0x4 - core index']
  #allocation1 [shape = 'u32[144,128]{1,0:T(1,128)}', space=vmem, size = 0x12000, scoped, tag = 'internal scratch']
  %s0 = inlined_call_operand.vmem [shape: f32[8,360], index: 0, kind: input, shape index: {}]
  %s1 = inlined_call_operand.vmem [shape: f32[8,64], index: 1, kind: input, shape index: {}]
  %s2 = inlined_call_operand.vmem [shape: f32[360,64], index: 2, kind: input, shape index: {}]
  %s3 = inlined_call_operand.vmem [shape: f32[1,64], index: 3, kind: input, shape index: {}]
  %s4 = inlined_call_operand.vmem [shape: f32[4,256], index: 4, kind: input, shape index: {}]
  %s5 = inlined_call_operand.vmem [shape: f32[256,128], index: 5, kind: input, shape index: {}]
  %s6 = inlined_call_operand.vmem [shape: f32[1,128], index: 6, kind: input, shape index: {}]
  %s7 = inlined_call_operand.vmem [shape: f32[128,32], index: 7, kind: input, shape index: {}]
  %s8 = inlined_call_operand.vmem [shape: f32[1,32], index: 8, kind: input, shape index: {}]
  %s9 = inlined_call_operand.vmem [shape: f32[4,128], index: 9, kind: input, shape index: {}]
  %s10 = inlined_call_operand.vmem [shape: f32[256,128], index: 10, kind: input, shape index: {}]
  %s11 = inlined_call_operand.vmem [shape: f32[1,128], index: 11, kind: input, shape index: {}]
  %s12 = inlined_call_operand.vmem [shape: f32[128,128], index: 12, kind: input, shape index: {}]
  %s13 = inlined_call_operand.vmem [shape: f32[1,128], index: 13, kind: input, shape index: {}]
  %s14 = inlined_call_operand.vmem [shape: f32[128,768], index: 14, kind: input, shape index: {}]
  %s15 = inlined_call_operand.vmem [shape: f32[1,768], index: 15, kind: input, shape index: {}]
  %s16 = inlined_call_operand.vmem [shape: f32[64,128], index: 16, kind: output, shape index: {0}]
  %s17 = inlined_call_operand.vmem [shape: f32[1,768], index: 17, kind: output, shape index: {1}]
  %s18 = inlined_call_operand.hbm [shape: f32[1,1], index: 18, kind: output, shape index: {2}]
  %s19 = inlined_call_operand.hbm [shape: f32[1,1], index: 19, kind: output, shape index: {3}]
  %s20 = inlined_call_operand.hbm [shape: f32[1,1], index: 20, kind: output, shape index: {4}]
  %21 = xla_tuple %s16, %s17, %s18, %s19, %s20
  %s22 = sld [smem:[#allocation0]]
  $region106: #{inference_network_forward.5} parent=0
    _
  %s24 = ssub.s32 1, %s22
  %s25 = scalar_select 0, %s24, %s22
  $region1: #{inference_network_forward.5} parent=0
    #allocation2 [shape = 'u8[512]{0}', space=vmem, size = 0x400, scoped, tag = 'output window, operand 2, single buffered']
    #allocation3 [shape = 's32[1]{0}', space=sflag, size = 0x4, scoped, tag = 'scoped memory for inference_network_forward.5']
    #allocation4 [shape = 'u8[512]{0}', space=vmem, size = 0x400, scoped, tag = 'output window, operand 3, single buffered']
    #allocation5 [shape = 's32[1]{0}', space=sflag, size = 0x4, scoped, tag = 'scoped memory for inference_network_forward.5']
    #allocation6 [shape = 'u8[512]{0}', space=vmem, size = 0x400, scoped, tag = 'output window, operand 4, single buffered']
    %26 = vsyncpa [#allocation3], 0
    %27 = vsyncpa [#allocation5], 0
    // Predicated region
    $region2: #{inference_network_forward.5} parent=1 // pred_check
      _
    $region3: #{inference_network_forward.5} parent=1 // pred_check_branch
      %29 = sbr.rel (0) target = $region5
    $region4: #{inference_network_forward.5} parent=1 // pred_region
      _
    $region5: #{inference_network_forward.5} parent=1 // pred_fallthru
      _
    // Predicated region
    $region6: #{inference_network_forward.5} parent=1 // pred_check
      _
    $region7: #{inference_network_forward.5} parent=1 // pred_check_branch
      %31 = sbr.rel (0) target = $region9
    $region8: #{inference_network_forward.5} parent=1 // pred_region
      _
    $region9: #{inference_network_forward.5} parent=1 // pred_fallthru
      _
    // Predicated region
    $region10: #{inference_network_forward.5} parent=1 // pred_check
      _
    $region11: #{inference_network_forward.5} parent=1 // pred_check_branch
      %33 = sbr.rel (0) target = $region13
    $region12: #{inference_network_forward.5} parent=1 // pred_region
      _
    $region13: #{inference_network_forward.5} parent=1 // pred_fallthru
      _
    // Predicated region
    $region14: #{inference_network_forward.5} parent=1 // pred_check
      _
    $region15: #{inference_network_forward.5} parent=1 // pred_check_branch
      %35 = sbr.rel (0) target = $region17
    $region16: #{inference_network_forward.5} parent=1 // pred_region
      _
    $region17: #{inference_network_forward.5} parent=1 // pred_fallthru
      _
    // Predicated region
    $region18: #{inference_network_forward.5} parent=1 // pred_check
      _
    $region19: #{inference_network_forward.5} parent=1 // pred_check_branch
      %37 = sbr.rel (0) target = $region21
    $region20: #{inference_network_forward.5} parent=1 // pred_region
      _
    $region21: #{inference_network_forward.5} parent=1 // pred_fallthru
      _
    // Predicated region
    $region22: #{inference_network_forward.5} parent=1 // pred_check
      _
    $region23: #{inference_network_forward.5} parent=1 // pred_check_branch
      %39 = sbr.rel (0) target = $region25
    $region24: #{inference_network_forward.5} parent=1 // pred_region
      _
    $region25: #{inference_network_forward.5} parent=1 // pred_fallthru
      _
    // Predicated region
    $region26: #{inference_network_forward.5} parent=1 // pred_check
      _
    $region27: #{inference_network_forward.5} parent=1 // pred_check_branch
      %41 = sbr.rel (0) target = $region29
    $region28: #{inference_network_forward.5} parent=1 // pred_region
      _
    $region29: #{inference_network_forward.5} parent=1 // pred_fallthru
      _
    // Predicated region
    $region30: #{inference_network_forward.5} parent=1 // pred_check
      _
    $region31: #{inference_network_forward.5} parent=1 // pred_check_branch
      %43 = sbr.rel (0) target = $region33
    $region32: #{inference_network_forward.5} parent=1 // pred_region
      _
    $region33: #{inference_network_forward.5} parent=1 // pred_fallthru
      _
    // Predicated region
    $region34: #{inference_network_forward.5} parent=1 // pred_check
      _
    $region35: #{inference_network_forward.5} parent=1 // pred_check_branch
      %45 = sbr.rel (0) target = $region37
    $region36: #{inference_network_forward.5} parent=1 // pred_region
      _
    $region37: #{inference_network_forward.5} parent=1 // pred_fallthru
      _
    // Predicated region
    $region38: #{inference_network_forward.5} parent=1 // pred_check
      _
    $region39: #{inference_network_forward.5} parent=1 // pred_check_branch
      %47 = sbr.rel (0) target = $region41
    $region40: #{inference_network_forward.5} parent=1 // pred_region
      _
    $region41: #{inference_network_forward.5} parent=1 // pred_fallthru
      _
    // Predicated region
    $region42: #{inference_network_forward.5} parent=1 // pred_check
      _
    $region43: #{inference_network_forward.5} parent=1 // pred_check_branch
      %49 = sbr.rel (0) target = $region45
    $region44: #{inference_network_forward.5} parent=1 // pred_region
      _
    $region45: #{inference_network_forward.5} parent=1 // pred_fallthru
      _
    // Predicated region
    $region46: #{inference_network_forward.5} parent=1 // pred_check
      _
    $region47: #{inference_network_forward.5} parent=1 // pred_check_branch
      %51 = sbr.rel (0) target = $region49
    $region48: #{inference_network_forward.5} parent=1 // pred_region
      _
    $region49: #{inference_network_forward.5} parent=1 // pred_fallthru
      _
    // Predicated region
    $region50: #{inference_network_forward.5} parent=1 // pred_check
      _
    $region51: #{inference_network_forward.5} parent=1 // pred_check_branch
      %53 = sbr.rel (0) target = $region53
    $region52: #{inference_network_forward.5} parent=1 // pred_region
      _
    $region53: #{inference_network_forward.5} parent=1 // pred_fallthru
      _
    // Predicated region
    $region54: #{inference_network_forward.5} parent=1 // pred_check
      _
    $region55: #{inference_network_forward.5} parent=1 // pred_check_branch
      %55 = sbr.rel (0) target = $region57
    $region56: #{inference_network_forward.5} parent=1 // pred_region
      _
    $region57: #{inference_network_forward.5} parent=1 // pred_fallthru
      _
    // Predicated region
    $region58: #{inference_network_forward.5} parent=1 // pred_check
      _
    $region59: #{inference_network_forward.5} parent=1 // pred_check_branch
      %57 = sbr.rel (0) target = $region61
    $region60: #{inference_network_forward.5} parent=1 // pred_region
      _
    $region61: #{inference_network_forward.5} parent=1 // pred_fallthru
      _
    // Predicated region
    $region62: #{inference_network_forward.5} parent=1 // pred_check
      _
    $region63: #{inference_network_forward.5} parent=1 // pred_check_branch
      %59 = sbr.rel (0) target = $region65
    $region64: #{inference_network_forward.5} parent=1 // pred_region
      _
    $region65: #{inference_network_forward.5} parent=1 // pred_fallthru
      _
    %v60 = vld [vmem:[%s0] sm:$0xff]
    %v61 = vld [vmem:[%s0 + $0x8] sm:$0xff]
    %v62 = vld [vmem:[%s0 + $0x10] sm:$0xff]
    %v63 = vld [vmem:[%s2] sm:$0xff]
    %v64 = vld [vmem:[%s2 + $0x8] sm:$0xff]
    %v65 = vld [vmem:[%s2 + $0x10] sm:$0xff]
    %v66 = vld [vmem:[%s2 + $0x18] sm:$0xff]
    %v67 = vld [vmem:[%s2 + $0x20] sm:$0xff]
    %v68 = vld [vmem:[%s2 + $0x28] sm:$0xff]
    %v69 = vld [vmem:[%s2 + $0x30] sm:$0xff]
    %v70 = vld [vmem:[%s2 + $0x38] sm:$0xff]
    %v71 = vld [vmem:[%s2 + $0x40] sm:$0xff]
    %v72 = vld [vmem:[%s2 + $0x48] sm:$0xff]
    %v73 = vld [vmem:[%s2 + $0x50] sm:$0xff]
    %v74 = vld [vmem:[%s2 + $0x58] sm:$0xff]
    %v75 = vld [vmem:[%s2 + $0x60] sm:$0xff]
    %v76 = vld [vmem:[%s2 + $0x68] sm:$0xff]
    %v77 = vld [vmem:[%s2 + $0x70] sm:$0xff]
    %v78 = vld [vmem:[%s2 + $0x78] sm:$0xff]
    %v79 = vld [vmem:[%s2 + $0x80] sm:$0xff]
    %v80 = vld [vmem:[%s2 + $0x88] sm:$0xff]
    %v81 = vld [vmem:[%s2 + $0x90] sm:$0xff]
    %v82 = vld [vmem:[%s2 + $0x98] sm:$0xff]
    %v83 = vld [vmem:[%s2 + $0xa0] sm:$0xff]
    %v84 = vld [vmem:[%s2 + $0xa8] sm:$0xff]
    %v85 = vld [vmem:[%s2 + $0xb0] sm:$0xff]
    %v86 = vld [vmem:[%s2 + $0xb8] sm:$0xff]
    %v87 = vld [vmem:[%s2 + $0xc0] sm:$0xff]
    %v88 = vld [vmem:[%s2 + $0xc8] sm:$0xff]
    %v89 = vld [vmem:[%s2 + $0xd0] sm:$0xff]
    %v90 = vld [vmem:[%s2 + $0xd8] sm:$0xff]
    %v91 = vld [vmem:[%s2 + $0xe0] sm:$0xff]
    %v92 = vld [vmem:[%s2 + $0xe8] sm:$0xff]
    %v93 = vld [vmem:[%s2 + $0xf0] sm:$0xff]
    %v94 = vld [vmem:[%s2 + $0xf8] sm:$0xff]
    %v95 = vld [vmem:[%s2 + $0x100] sm:$0xff]
    %v96 = vld [vmem:[%s2 + $0x108] sm:$0xff]
    %v97 = vld [vmem:[%s2 + $0x110] sm:$0xff]
    %v98 = vld [vmem:[%s2 + $0x118] sm:$0xff]
    %v99 = vld [vmem:[%s2 + $0x120] sm:$0xff]
    %v100 = vld [vmem:[%s2 + $0x128] sm:$0xff]
    %v101 = vld [vmem:[%s2 + $0x130] sm:$0xff]
    %v102 = vld [vmem:[%s2 + $0x138] sm:$0xff]
    %v103 = vld [vmem:[%s2 + $0x140] sm:$0xff]
    %v104 = vld [vmem:[%s2 + $0x148] sm:$0xff]
    %v105 = vld [vmem:[%s2 + $0x150] sm:$0xff]
    %v106 = vld [vmem:[%s2 + $0x158] sm:$0xff]
    %v107 = vld [vmem:[%s2 + $0x160] sm:$0xff]
    %v108 = vld [vmem:[%s3] sm:$0x1]
    %v110 = vlaneseq
    %v111 = vshrl.u32 %v110, 7
    %v112 = vsub.s32 0, %v111
    %v113 = vrot.slane %v108, %v112
    %vm115 = vcmask 850944
    %v117 = vsel %vm115, %v62, 0
    %119 = vmatprep.subr.mxu0 0.0
    %120 = vmatpush1.msra.mxu0 %v63
    %121 = vmatprep.subr.mxu0 0.0
    %122 = vmatpush1.msra.mxu0 %v64
    %123 = vmatprep.subr.mxu0 0.0
    %124 = vmatpush1.msra.mxu0 %v65
    %125 = vmatprep.subr.mxu0 0.0
    %126 = vmatpush1.msra.mxu0 %v66
    %127 = vmatprep.subr.mxu0 0.0
    %128 = vmatpush1.msra.mxu0 %v67
    %129 = vmatprep.subr.mxu0 0.0
    %130 = vmatpush1.msra.mxu0 %v68
    %131 = vmatprep.subr.mxu0 0.0
    %132 = vmatpush1.msra.mxu0 %v69
    %133 = vmatprep.subr.mxu0 0.0
    %134 = vmatpush1.msra.mxu0 %v70
    %135 = vmatprep.subr.mxu0 0.0
    %136 = vmatpush1.msra.mxu0 %v71
    %137 = vmatprep.subr.mxu0 0.0
    %138 = vmatpush1.msra.mxu0 %v72
    %139 = vmatprep.subr.mxu0 0.0
    %140 = vmatpush1.msra.mxu0 %v73
    %141 = vmatprep.subr.mxu0 0.0
    %142 = vmatpush1.msra.mxu0 %v74
    %143 = vmatprep.subr.mxu0 0.0
    %144 = vmatpush1.msra.mxu0 %v75
    %145 = vmatprep.subr.mxu0 0.0
    %146 = vmatpush1.msra.mxu0 %v76
    %147 = vmatprep.subr.mxu0 0.0
    %148 = vmatpush1.msra.mxu0 %v77
    %149 = vmatprep.subr.mxu0 0.0
    %150 = vmatpush1.msra.mxu0 %v78
    %151 = vmatprep.subr.mxu0 0.0
    %152 = vmatpush1.msra.mxu0 %v79
    %153 = vmatprep.subr.mxu0 0.0
    %154 = vmatpush1.msra.mxu0 %v80
    %155 = vmatprep.subr.mxu0 0.0
    %156 = vmatpush1.msra.mxu0 %v81
    %157 = vmatprep.subr.mxu0 0.0
    %158 = vmatpush1.msra.mxu0 %v82
    %159 = vmatprep.subr.mxu0 0.0
    %160 = vmatpush1.msra.mxu0 %v83
    %161 = vmatprep.subr.mxu0 0.0
    %162 = vmatpush1.msra.mxu0 %v84
    %163 = vmatprep.subr.mxu0 0.0
    %164 = vmatpush1.msra.mxu0 %v85
    %165 = vmatprep.subr.mxu0 0.0
    %166 = vmatpush1.msra.mxu0 %v86
    %167 = vmatprep.subr.mxu0 0.0
    %168 = vmatpush1.msra.mxu0 %v87
    %169 = vmatprep.subr.mxu0 0.0
    %170 = vmatpush1.msra.mxu0 %v88
    %171 = vmatprep.subr.mxu0 0.0
    %172 = vmatpush1.msra.mxu0 %v89
    %173 = vmatprep.subr.mxu0 0.0
    %174 = vmatpush1.msra.mxu0 %v90
    %175 = vmatprep.subr.mxu0 0.0
    %176 = vmatpush1.msra.mxu0 %v91
    %177 = vmatprep.subr.mxu0 0.0
    %178 = vmatpush1.msra.mxu0 %v92
    %179 = vmatprep.subr.mxu0 0.0
    %180 = vmatpush1.msra.mxu0 %v93
    %181 = vmatprep.subr.mxu0 0.0
    %182 = vmatpush1.msra.mxu0 %v94
    %183 = vmatprep.mubr.f32.mxu0 %v61
    %184 = vmatmul.mubr.f32.gmra.mrb[0].mxu0 %v60
    %v185 = vpop.f32.mrb[0].mxu0
    %v186 = vadd.f32 %v113, %v185
    %v187 = vpop.f32.mrb[0].mxu0
    %188 = vdwg.mxu0
    %189 = vmatprep.subr.mxu0 0.0
    %190 = vmatpush1.msra.mxu0 %v95
    %191 = vmatprep.subr.mxu0 0.0
    %192 = vmatpush1.msra.mxu0 %v96
    %193 = vmatprep.subr.mxu0 0.0
    %194 = vmatpush1.msra.mxu0 %v97
    %195 = vmatprep.subr.mxu0 0.0
    %196 = vmatpush1.msra.mxu0 %v98
    %197 = vmatprep.subr.mxu0 0.0
    %198 = vmatpush1.msra.mxu0 %v99
    %199 = vmatprep.subr.mxu0 0.0
    %200 = vmatpush1.msra.mxu0 %v100
    %201 = vmatprep.subr.mxu0 0.0
    %202 = vmatpush1.msra.mxu0 %v101
    %203 = vmatprep.subr.mxu0 0.0
    %204 = vmatpush1.msra.mxu0 %v102
    %205 = vmatprep.subr.mxu0 0.0
    %206 = vmatpush1.msra.mxu0 %v103
    %207 = vmatprep.subr.mxu0 0.0
    %208 = vmatpush1.msra.mxu0 %v104
    %209 = vmatprep.subr.mxu0 0.0
    %210 = vmatpush1.msra.mxu0 %v105
    %211 = vmatprep.subr.mxu0 0.0
    %212 = vmatpush1.msra.mxu0 %v106
    %213 = vmatprep.subr.mxu0 0.0
    %214 = vmatpush1.msra.mxu0 %v107
    %215 = vmatprep.subr.mxu0 0.0
    %216 = vmatpush1.msra.mxu0 0.0
    %217 = vmatprep.subr.mxu0 0.0
    %218 = vmatpush1.msra.mxu0 0.0
    %219 = vmatprep.subr.mxu0 0.0
    %220 = vmatpush1.msra.mxu0 0.0
    %221 = vmatprep.subr.mxu0 0.0
    %222 = vmatpush1.msra.mxu0 0.0
    %223 = vmatprep.subr.mxu0 0.0
    %224 = vmatpush1.msra.mxu0 0.0
    %225 = vmatprep.subr.mxu0 0.0
    %226 = vmatpush1.msra.mxu0 0.0
    %227 = vmatprep.subr.mxu0 0.0
    %228 = vmatpush1.msra.mxu0 0.0
    %229 = vmatprep.subr.mxu0 0.0
    %230 = vmatpush1.msra.mxu0 0.0
    %231 = vmatprep.subr.mxu0 0.0
    %232 = vmatpush1.msra.mxu0 0.0
    %233 = vmatprep.subr.mxu0 0.0
    %234 = vmatpush1.msra.mxu0 0.0
    %235 = vmatprep.subr.mxu0 0.0
    %236 = vmatpush1.msra.mxu0 0.0
    %237 = vmatprep.subr.mxu0 0.0
    %238 = vmatpush1.msra.mxu0 0.0
    %239 = vmatprep.subr.mxu0 0.0
    %240 = vmatpush1.msra.mxu0 0.0
    %241 = vmatprep.subr.mxu0 0.0
    %242 = vmatpush1.msra.mxu0 0.0
    %243 = vmatprep.subr.mxu0 0.0
    %244 = vmatpush1.msra.mxu0 0.0
    %245 = vmatprep.subr.mxu0 0.0
    %246 = vmatpush1.msra.mxu0 0.0
    %247 = vmatprep.subr.mxu0 0.0
    %248 = vmatpush1.msra.mxu0 0.0
    %249 = vmatprep.subr.mxu0 0.0
    %250 = vmatpush1.msra.mxu0 0.0
    %251 = vmatprep.subr.mxu0 0.0
    %252 = vmatpush1.msra.mxu0 0.0
    %253 = vmatprep.mubr.f32.mxu0 0.0
    %254 = vmatmul.mubr.f32.gmra.mrb[0].mxu0 %v117
    %v255 = vpop.f32.mrb[0].mxu0
    %v256 = vadd.f32 %v186, %v255
    %v257 = vpop.f32.mrb[0].mxu0
    %258 = vdwg.mxu0
    %v259 = vld [vmem:[%s1] sm:$0xff]
    %vm260 = vcmask 523264
    %v261 = vsel %vm260, %v259, 0.0
    %v262 = vrot.slane %v261, 4
    %v263 = vadd.f32 %v261, %v262
    %v264 = vrot.slane %v263, 2
    %v265 = vadd.f32 %v263, %v264
    %v266 = vrot.slane %v265, 1
    %v267 = vadd.f32 %v265, %v266
    %v268 = vsel %vm260, %v259, -inf
    %v269 = vrot.slane %v268, 4
    %v270 = vmax.f32 %v268, %v269
    %v271 = vrot.slane %v270, 2
    %v272 = vmax.f32 %v270, %v271
    %v273 = vrot.slane %v272, 1
    %v274 = vmax.f32 %v272, %v273
    %v275 = vlaneseq
    %v276 = vshrl.u32 %v275, 7
    %vm277 = vcmp.eq.f32.partialorder %v259, %v274
    %v278 = vsel %vm277, %v276, 8
    %v279 = vsel %vm260, %v278, 2147483647
    %v280 = vrot.slane %v279, 4
    %vm281 = vcmp.lt.s32.totalorder %v279, %v280
    %v282 = vsel %vm281, %v279, %v280
    %v283 = vrot.slane %v282, 2
    %vm284 = vcmp.lt.s32.totalorder %v282, %v283
    %v285 = vsel %vm284, %v282, %v283
    %v286 = vrot.slane %v285, 1
    %vm287 = vcmp.lt.s32.totalorder %v285, %v286
    %v288 = vsel %vm287, %v285, %v286
    %v289 = vadd.s32 %v276, 8
    %v290 = vadd.s32 %v276, 16
    %v291 = vadd.s32 %v276, 24
    %v292 = vadd.s32 %v276, 32
    %v293 = vadd.s32 %v276, 40
    %v294 = vadd.s32 %v276, 48
    %v295 = vadd.s32 %v276, 56
    %vm296 = vcmp.eq.s32.totalorder %v288, %v276
    %vm297 = vcmp.eq.s32.totalorder %v288, %v289
    %vm298 = vcmp.eq.s32.totalorder %v288, %v290
    %vm299 = vcmp.eq.s32.totalorder %v288, %v291
    %vm300 = vcmp.eq.s32.totalorder %v288, %v292
    %vm301 = vcmp.eq.s32.totalorder %v288, %v293
    %vm302 = vcmp.eq.s32.totalorder %v288, %v294
    %vm303 = vcmp.eq.s32.totalorder %v288, %v295
    %vm304 = vcmp.gt.f32.partialorder %v267, 0.0
    %v305 = vsel %vm304, 1, 0
    %vm306 = vcmp.eq.s32.totalorder %v305, 1
    %vm307 = vmand %vm296, %vm306
    %vm308 = vmand %vm297, %vm306
    %vm309 = vmand %vm298, %vm306
    %vm310 = vmand %vm299, %vm306
    %vm311 = vmand %vm300, %vm306
    %vm312 = vmand %vm301, %vm306
    %vm313 = vmand %vm302, %vm306
    %vm314 = vmand %vm303, %vm306
    %v315 = vsel %vm307, 1, 0
    %v316 = vsel %vm308, 1, 0
    %v317 = vsel %vm309, 1, 0
    %v318 = vsel %vm310, 1, 0
    %v319 = vsel %vm311, 1, 0
    %v320 = vsel %vm312, 1, 0
    %v321 = vsel %vm313, 1, 0
    %v322 = vsel %vm314, 1, 0
    %v323 = vcvt.s32.f32 %v315
    %v324 = vcvt.s32.f32 %v316
    %v325 = vcvt.s32.f32 %v317
    %v326 = vcvt.s32.f32 %v318
    %v327 = vcvt.s32.f32 %v319
    %v328 = vcvt.s32.f32 %v320
    %v329 = vcvt.s32.f32 %v321
    %v330 = vcvt.s32.f32 %v322
    %v331 = vsel %vm260, %v256, 0.0
    %v332 = vrot.slane %v331, 4
    %v333 = vadd.f32 %v331, %v332
    %v334 = vrot.slane %v333, 2
    %v335 = vadd.f32 %v333, %v334
    %v336 = vrot.slane %v335, 1
    %v337 = vadd.f32 %v335, %v336
    %v338 = vrcp.pop 8.0
    %v339 = vmul.f32 %v337, %v338
    %v340 = vsub.f32 %v256, %v339
    %v341 = vmul.f32 %v340, %v340
    %v342 = vsel %vm260, %v341, 0.0
    %v343 = vrot.slane %v342, 4
    %v344 = vadd.f32 %v342, %v343
    %v345 = vrot.slane %v344, 2
    %v346 = vadd.f32 %v344, %v345
    %v347 = vrot.slane %v346, 1
    %v348 = vadd.f32 %v346, %v347
    %v349 = vrcp.pop 7.0
    %v350 = vmul.f32 %v348, %v349
    %v351 = vmul.f32 %v323, %v339
    %v352 = vmul.f32 %v324, %v339
    %v353 = vmul.f32 %v325, %v339
    %v354 = vmul.f32 %v326, %v339
    %v355 = vmul.f32 %v327, %v339
    %v356 = vmul.f32 %v328, %v339
    %v357 = vmul.f32 %v329, %v339
    %v358 = vmul.f32 %v330, %v339
    %v359 = vmul.f32 %v323, %v350
    %v360 = vmul.f32 %v324, %v350
    %v361 = vmul.f32 %v325, %v350
    %v362 = vmul.f32 %v326, %v350
    %v363 = vmul.f32 %v327, %v350
    %v364 = vmul.f32 %v328, %v350
    %v365 = vmul.f32 %v329, %v350
    %v366 = vmul.f32 %v330, %v350
    %v367 = vmul.f32 %v323, %v267
    %v368 = vmul.f32 %v324, %v267
    %v369 = vmul.f32 %v325, %v267
    %v370 = vmul.f32 %v326, %v267
    %v371 = vmul.f32 %v327, %v267
    %v372 = vmul.f32 %v328, %v267
    %v373 = vmul.f32 %v329, %v267
    %v374 = vmul.f32 %v330, %v267
    %v375 = vsel %vm260, %v367, 0.0
    %376 = vadd.xlane.f32.xlu0 %v375
    %v377 = vpop.xlane.xlu0 %376
    %v378 = vsel %vm260, %v368, 0.0
    %379 = vadd.xlane.f32.xlu0 %v378
    %v380 = vpop.xlane.xlu0 %379
    %v381 = vsel %vm260, %v369, 0.0
    %382 = vadd.xlane.f32.xlu0 %v381
    %v383 = vpop.xlane.xlu0 %382
    %v384 = vsel %vm260, %v370, 0.0
    %385 = vadd.xlane.f32.xlu0 %v384
    %v386 = vpop.xlane.xlu0 %385
    %v387 = vsel %vm260, %v371, 0.0
    %388 = vadd.xlane.f32.xlu0 %v387
    %v389 = vpop.xlane.xlu0 %388
    %v390 = vsel %vm260, %v372, 0.0
    %391 = vadd.xlane.f32.xlu0 %v390
    %v392 = vpop.xlane.xlu0 %391
    %v393 = vsel %vm260, %v373, 0.0
    %394 = vadd.xlane.f32.xlu0 %v393
    %v395 = vpop.xlane.xlu0 %394
    %v396 = vsel %vm260, %v374, 0.0
    %397 = vadd.xlane.f32.xlu0 %v396
    %v398 = vpop.xlane.xlu0 %397
    %v399 = vsub.f32 %v377, 1.0
    %v400 = vsub.f32 %v380, 1.0
    %v401 = vsub.f32 %v383, 1.0
    %v402 = vsub.f32 %v386, 1.0
    %v403 = vsub.f32 %v389, 1.0
    %v404 = vsub.f32 %v392, 1.0
    %v405 = vsub.f32 %v395, 1.0
    %v406 = vsub.f32 %v398, 1.0
    %v407 = vld [vmem:[%s4] sm:$0xff]
    %416 = vrot.lane.b32.xlu0 %v351, 64
    %v417 = vpop.permute.xlu0 %416
    %418 = vrot.lane.b32.xlu0 %v352, 64
    %v419 = vpop.permute.xlu0 %418
    %420 = vrot.lane.b32.xlu0 %v353, 64
    %v421 = vpop.permute.xlu0 %420
    %422 = vrot.lane.b32.xlu0 %v354, 64
    %v423 = vpop.permute.xlu0 %422
    %424 = vrot.lane.b32.xlu0 %v355, 64
    %v425 = vpop.permute.xlu0 %424
    %426 = vrot.lane.b32.xlu0 %v356, 64
    %v427 = vpop.permute.xlu0 %426
    %428 = vrot.lane.b32.xlu0 %v357, 64
    %v429 = vpop.permute.xlu0 %428
    %430 = vrot.lane.b32.xlu0 %v358, 64
    %v431 = vpop.permute.xlu0 %430
    %v440 = vsel %vm260, %v351, %v417
    %v441 = vsel %vm260, %v352, %v419
    %v442 = vsel %vm260, %v353, %v421
    %v443 = vsel %vm260, %v354, %v423
    %v444 = vsel %vm260, %v355, %v425
    %v445 = vsel %vm260, %v356, %v427
    %v446 = vsel %vm260, %v357, %v429
    %v447 = vsel %vm260, %v358, %v431
    %456 = vrot.lane.b32.xlu0 %v359, 64
    %v457 = vpop.permute.xlu0 %456
    %458 = vrot.lane.b32.xlu0 %v360, 64
    %v459 = vpop.permute.xlu0 %458
    %460 = vrot.lane.b32.xlu0 %v361, 64
    %v461 = vpop.permute.xlu0 %460
    %462 = vrot.lane.b32.xlu0 %v362, 64
    %v463 = vpop.permute.xlu0 %462
    %464 = vrot.lane.b32.xlu0 %v363, 64
    %v465 = vpop.permute.xlu0 %464
    %466 = vrot.lane.b32.xlu0 %v364, 64
    %v467 = vpop.permute.xlu0 %466
    %468 = vrot.lane.b32.xlu0 %v365, 64
    %v469 = vpop.permute.xlu0 %468
    %470 = vrot.lane.b32.xlu0 %v366, 64
    %v471 = vpop.permute.xlu0 %470
    %v480 = vsel %vm260, %v359, %v457
    %v481 = vsel %vm260, %v360, %v459
    %v482 = vsel %vm260, %v361, %v461
    %v483 = vsel %vm260, %v362, %v463
    %v484 = vsel %vm260, %v363, %v465
    %v485 = vsel %vm260, %v364, %v467
    %v486 = vsel %vm260, %v365, %v469
    %v487 = vsel %vm260, %v366, %v471
    %v489 = vlaneseq
    %v490 = vshrl.u32 %v489, 7
    %v491 = vsub.s32 0, %v490
    %v492 = vrot.slane %v407, %v491
    %v493 = vlaneseq
    %v494 = vshrl.u32 %v493, 7
    %v495 = vsub.s32 4, %v494
    %v496 = vrot.slane %v407, %v495
    %v499 = vlaneseq
    %v500 = vshrl.u32 %v499, 7
    %v501 = vsub.s32 0, %v500
    %v502 = vrot.slane %v492, %v501
    %v503 = vlaneseq
    %v504 = vshrl.u32 %v503, 7
    %v505 = vsub.s32 0, %v504
    %v506 = vrot.slane %v496, %v505
    %v507 = vmul.f32 %v440, %v502
    %v508 = vmul.f32 %v440, %v506
    %v509 = vmul.f32 %v441, %v502
    %v510 = vmul.f32 %v441, %v506
    %v511 = vmul.f32 %v442, %v502
    %v512 = vmul.f32 %v442, %v506
    %v513 = vmul.f32 %v443, %v502
    %v514 = vmul.f32 %v443, %v506
    %v515 = vmul.f32 %v444, %v502
    %v516 = vmul.f32 %v444, %v506
    %v517 = vmul.f32 %v445, %v502
    %v518 = vmul.f32 %v445, %v506
    %v519 = vmul.f32 %v446, %v502
    %v520 = vmul.f32 %v446, %v506
    %v521 = vmul.f32 %v447, %v502
    %v522 = vmul.f32 %v447, %v506
    %v523 = vlaneseq
    %v524 = vshrl.u32 %v523, 7
    %v525 = vsub.s32 1, %v524
    %v526 = vrot.slane %v407, %v525
    %v527 = vlaneseq
    %v528 = vshrl.u32 %v527, 7
    %v529 = vsub.s32 5, %v528
    %v530 = vrot.slane %v407, %v529
    %v533 = vlaneseq
    %v534 = vshrl.u32 %v533, 7
    %v535 = vsub.s32 1, %v534
    %v536 = vrot.slane %v526, %v535
    %v537 = vlaneseq
    %v538 = vshrl.u32 %v537, 7
    %v539 = vsub.s32 1, %v538
    %v540 = vrot.slane %v530, %v539
    %v541 = vmul.f32 %v480, %v536
    %v542 = vmul.f32 %v480, %v540
    %v543 = vmul.f32 %v481, %v536
    %v544 = vmul.f32 %v481, %v540
    %v545 = vmul.f32 %v482, %v536
    %v546 = vmul.f32 %v482, %v540
    %v547 = vmul.f32 %v483, %v536
    %v548 = vmul.f32 %v483, %v540
    %v549 = vmul.f32 %v484, %v536
    %v550 = vmul.f32 %v484, %v540
    %v551 = vmul.f32 %v485, %v536
    %v552 = vmul.f32 %v485, %v540
    %v553 = vmul.f32 %v486, %v536
    %v554 = vmul.f32 %v486, %v540
    %v555 = vmul.f32 %v487, %v536
    %v556 = vmul.f32 %v487, %v540
    %v557 = vadd.f32 %v507, %v541
    %v558 = vadd.f32 %v508, %v542
    %v559 = vadd.f32 %v509, %v543
    %v560 = vadd.f32 %v510, %v544
    %v561 = vadd.f32 %v511, %v545
    %v562 = vadd.f32 %v512, %v546
    %v563 = vadd.f32 %v513, %v547
    %v564 = vadd.f32 %v514, %v548
    %v565 = vadd.f32 %v515, %v549
    %v566 = vadd.f32 %v516, %v550
    %v567 = vadd.f32 %v517, %v551
    %v568 = vadd.f32 %v518, %v552
    %v569 = vadd.f32 %v519, %v553
    %v570 = vadd.f32 %v520, %v554
    %v571 = vadd.f32 %v521, %v555
    %v572 = vadd.f32 %v522, %v556
    %v573 = vlaneseq
    %v574 = vshrl.u32 %v573, 7
    %v575 = vsub.s32 2, %v574
    %v576 = vrot.slane %v407, %v575
    %v577 = vlaneseq
    %v578 = vshrl.u32 %v577, 7
    %v579 = vsub.s32 6, %v578
    %v580 = vrot.slane %v407, %v579
    %v583 = vlaneseq
    %v584 = vshrl.u32 %v583, 7
    %v585 = vsub.s32 2, %v584
    %v586 = vrot.slane %v576, %v585
    %v587 = vlaneseq
    %v588 = vshrl.u32 %v587, 7
    %v589 = vsub.s32 2, %v588
    %v590 = vrot.slane %v580, %v589
    %v591 = vmul.f32 %v399, %v586
    %v592 = vmul.f32 %v399, %v590
    %v593 = vmul.f32 %v400, %v586
    %v594 = vmul.f32 %v400, %v590
    %v595 = vmul.f32 %v401, %v586
    %v596 = vmul.f32 %v401, %v590
    %v597 = vmul.f32 %v402, %v586
    %v598 = vmul.f32 %v402, %v590
    %v599 = vmul.f32 %v403, %v586
    %v600 = vmul.f32 %v403, %v590
    %v601 = vmul.f32 %v404, %v586
    %v602 = vmul.f32 %v404, %v590
    %v603 = vmul.f32 %v405, %v586
    %v604 = vmul.f32 %v405, %v590
    %v605 = vmul.f32 %v406, %v586
    %v606 = vmul.f32 %v406, %v590
    %v607 = vadd.f32 %v557, %v591
    %v608 = vadd.f32 %v558, %v592
    %v609 = vadd.f32 %v559, %v593
    %v610 = vadd.f32 %v560, %v594
    %v611 = vadd.f32 %v561, %v595
    %v612 = vadd.f32 %v562, %v596
    %v613 = vadd.f32 %v563, %v597
    %v614 = vadd.f32 %v564, %v598
    %v615 = vadd.f32 %v565, %v599
    %v616 = vadd.f32 %v566, %v600
    %v617 = vadd.f32 %v567, %v601
    %v618 = vadd.f32 %v568, %v602
    %v619 = vadd.f32 %v569, %v603
    %v620 = vadd.f32 %v570, %v604
    %v621 = vadd.f32 %v571, %v605
    %v622 = vadd.f32 %v572, %v606
    %v623 = vlaneseq
    %v624 = vshrl.u32 %v623, 7
    %v625 = vsub.s32 3, %v624
    %v626 = vrot.slane %v407, %v625
    %v627 = vlaneseq
    %v628 = vshrl.u32 %v627, 7
    %v629 = vsub.s32 7, %v628
    %v630 = vrot.slane %v407, %v629
    %v633 = vlaneseq
    %v634 = vshrl.u32 %v633, 7
    %v635 = vsub.s32 3, %v634
    %v636 = vrot.slane %v626, %v635
    %v637 = vlaneseq
    %v638 = vshrl.u32 %v637, 7
    %v639 = vsub.s32 3, %v638
    %v640 = vrot.slane %v630, %v639
    %v641 = vadd.f32 %v607, %v636
    %v642 = vadd.f32 %v608, %v640
    %v643 = vadd.f32 %v609, %v636
    %v644 = vadd.f32 %v610, %v640
    %v645 = vadd.f32 %v611, %v636
    %v646 = vadd.f32 %v612, %v640
    %v647 = vadd.f32 %v613, %v636
    %v648 = vadd.f32 %v614, %v640
    %v649 = vadd.f32 %v615, %v636
    %v650 = vadd.f32 %v616, %v640
    %v651 = vadd.f32 %v617, %v636
    %v652 = vadd.f32 %v618, %v640
    %v653 = vadd.f32 %v619, %v636
    %v654 = vadd.f32 %v620, %v640
    %v655 = vadd.f32 %v621, %v636
    %v656 = vadd.f32 %v622, %v640
    %v657 = vmax.f32 %v641, 0.0
    %v658 = vmax.f32 %v642, 0.0
    %v659 = vmax.f32 %v643, 0.0
    %v660 = vmax.f32 %v644, 0.0
    %v661 = vmax.f32 %v645, 0.0
    %v662 = vmax.f32 %v646, 0.0
    %v663 = vmax.f32 %v647, 0.0
    %v664 = vmax.f32 %v648, 0.0
    %v665 = vmax.f32 %v649, 0.0
    %v666 = vmax.f32 %v650, 0.0
    %v667 = vmax.f32 %v651, 0.0
    %v668 = vmax.f32 %v652, 0.0
    %v669 = vmax.f32 %v653, 0.0
    %v670 = vmax.f32 %v654, 0.0
    %v671 = vmax.f32 %v655, 0.0
    %v672 = vmax.f32 %v656, 0.0
    %v673 = vld [vmem:[%s5] sm:$0xff]
    %v674 = vld [vmem:[%s5 + $0x8] sm:$0xff]
    %v675 = vld [vmem:[%s5 + $0x10] sm:$0xff]
    %v676 = vld [vmem:[%s5 + $0x18] sm:$0xff]
    %v677 = vld [vmem:[%s5 + $0x20] sm:$0xff]
    %v678 = vld [vmem:[%s5 + $0x28] sm:$0xff]
    %v679 = vld [vmem:[%s5 + $0x30] sm:$0xff]
    %v680 = vld [vmem:[%s5 + $0x38] sm:$0xff]
    %v681 = vld [vmem:[%s5 + $0x40] sm:$0xff]
    %v682 = vld [vmem:[%s5 + $0x48] sm:$0xff]
    %v683 = vld [vmem:[%s5 + $0x50] sm:$0xff]
    %v684 = vld [vmem:[%s5 + $0x58] sm:$0xff]
    %v685 = vld [vmem:[%s5 + $0x60] sm:$0xff]
    %v686 = vld [vmem:[%s5 + $0x68] sm:$0xff]
    %v687 = vld [vmem:[%s5 + $0x70] sm:$0xff]
    %v688 = vld [vmem:[%s5 + $0x78] sm:$0xff]
    %v689 = vld [vmem:[%s5 + $0x80] sm:$0xff]
    %v690 = vld [vmem:[%s5 + $0x88] sm:$0xff]
    %v691 = vld [vmem:[%s5 + $0x90] sm:$0xff]
    %v692 = vld [vmem:[%s5 + $0x98] sm:$0xff]
    %v693 = vld [vmem:[%s5 + $0xa0] sm:$0xff]
    %v694 = vld [vmem:[%s5 + $0xa8] sm:$0xff]
    %v695 = vld [vmem:[%s5 + $0xb0] sm:$0xff]
    %v696 = vld [vmem:[%s5 + $0xb8] sm:$0xff]
    %v697 = vld [vmem:[%s5 + $0xc0] sm:$0xff]
    %v698 = vld [vmem:[%s5 + $0xc8] sm:$0xff]
    %v699 = vld [vmem:[%s5 + $0xd0] sm:$0xff]
    %v700 = vld [vmem:[%s5 + $0xd8] sm:$0xff]
    %v701 = vld [vmem:[%s5 + $0xe0] sm:$0xff]
    %v702 = vld [vmem:[%s5 + $0xe8] sm:$0xff]
    %v703 = vld [vmem:[%s5 + $0xf0] sm:$0xff]
    %v704 = vld [vmem:[%s5 + $0xf8] sm:$0xff]
    %v705 = vld [vmem:[%s6] sm:$0x1]
    %v707 = vlaneseq
    %v708 = vshrl.u32 %v707, 7
    %v709 = vsub.s32 0, %v708
    %v710 = vrot.slane %v705, %v709
    %712 = vmatprep.subr.mxu0 0.0
    %713 = vmatpush1.msra.mxu0 %v673
    %714 = vmatprep.subr.mxu0 0.0
    %715 = vmatpush1.msra.mxu0 %v674
    %716 = vmatprep.subr.mxu0 0.0
    %717 = vmatpush1.msra.mxu0 %v675
    %718 = vmatprep.subr.mxu0 0.0
    %719 = vmatpush1.msra.mxu0 %v676
    %720 = vmatprep.subr.mxu0 0.0
    %721 = vmatpush1.msra.mxu0 %v677
    %722 = vmatprep.subr.mxu0 0.0
    %723 = vmatpush1.msra.mxu0 %v678
    %724 = vmatprep.subr.mxu0 0.0
    %725 = vmatpush1.msra.mxu0 %v679
    %726 = vmatprep.subr.mxu0 0.0
    %727 = vmatpush1.msra.mxu0 %v680
    %728 = vmatprep.subr.mxu0 0.0
    %729 = vmatpush1.msra.mxu0 %v681
    %730 = vmatprep.subr.mxu0 0.0
    %731 = vmatpush1.msra.mxu0 %v682
    %732 = vmatprep.subr.mxu0 0.0
    %733 = vmatpush1.msra.mxu0 %v683
    %734 = vmatprep.subr.mxu0 0.0
    %735 = vmatpush1.msra.mxu0 %v684
    %736 = vmatprep.subr.mxu0 0.0
    %737 = vmatpush1.msra.mxu0 %v685
    %738 = vmatprep.subr.mxu0 0.0
    %739 = vmatpush1.msra.mxu0 %v686
    %740 = vmatprep.subr.mxu0 0.0
    %741 = vmatpush1.msra.mxu0 %v687
    %742 = vmatprep.subr.mxu0 0.0
    %743 = vmatpush1.msra.mxu0 %v688
    %744 = vmatprep.subr.mxu0 0.0
    %745 = vmatpush1.msra.mxu0 %v689
    %746 = vmatprep.subr.mxu0 0.0
    %747 = vmatpush1.msra.mxu0 %v690
    %748 = vmatprep.subr.mxu0 0.0
    %749 = vmatpush1.msra.mxu0 %v691
    %750 = vmatprep.subr.mxu0 0.0
    %751 = vmatpush1.msra.mxu0 %v692
    %752 = vmatprep.subr.mxu0 0.0
    %753 = vmatpush1.msra.mxu0 %v693
    %754 = vmatprep.subr.mxu0 0.0
    %755 = vmatpush1.msra.mxu0 %v694
    %756 = vmatprep.subr.mxu0 0.0
    %757 = vmatpush1.msra.mxu0 %v695
    %758 = vmatprep.subr.mxu0 0.0
    %759 = vmatpush1.msra.mxu0 %v696
    %760 = vmatprep.subr.mxu0 0.0
    %761 = vmatpush1.msra.mxu0 %v697
    %762 = vmatprep.subr.mxu0 0.0
    %763 = vmatpush1.msra.mxu0 %v698
    %764 = vmatprep.subr.mxu0 0.0
    %765 = vmatpush1.msra.mxu0 %v699
    %766 = vmatprep.subr.mxu0 0.0
    %767 = vmatpush1.msra.mxu0 %v700
    %768 = vmatprep.subr.mxu0 0.0
    %769 = vmatpush1.msra.mxu0 %v701
    %770 = vmatprep.subr.mxu0 0.0
    %771 = vmatpush1.msra.mxu0 %v702
    %772 = vmatprep.subr.mxu0 0.0
    %773 = vmatpush1.msra.mxu0 %v703
    %774 = vmatprep.subr.mxu0 0.0
    %775 = vmatpush1.msra.mxu0 %v704
    %776 = vmatprep.mubr.f32.mxu0 %v658
    %777 = vmatmul.mubr.f32.gmra.mrb[0].mxu0 %v657
    %v778 = vpop.f32.mrb[0].mxu0
    %v779 = vadd.f32 %v710, %v778
    %v780 = vpop.f32.mrb[0].mxu0
    %781 = vmatprep.mubr.f32.mxu0 %v660
    %782 = vmatmul.mubr.f32.gmra.mrb[0].mxu0 %v659
    %v783 = vpop.f32.mrb[0].mxu0
    %v784 = vadd.f32 %v710, %v783
    %v785 = vpop.f32.mrb[0].mxu0
    %786 = vmatprep.mubr.f32.mxu0 %v662
    %787 = vmatmul.mubr.f32.gmra.mrb[0].mxu0 %v661
    %v788 = vpop.f32.mrb[0].mxu0
    %v789 = vadd.f32 %v710, %v788
    %v790 = vpop.f32.mrb[0].mxu0
    %791 = vmatprep.mubr.f32.mxu0 %v664
    %792 = vmatmul.mubr.f32.gmra.mrb[0].mxu0 %v663
    %v793 = vpop.f32.mrb[0].mxu0
    %v794 = vadd.f32 %v710, %v793
    %v795 = vpop.f32.mrb[0].mxu0
    %796 = vmatprep.mubr.f32.mxu0 %v666
    %797 = vmatmul.mubr.f32.gmra.mrb[0].mxu0 %v665
    %v798 = vpop.f32.mrb[0].mxu0
    %v799 = vadd.f32 %v710, %v798
    %v800 = vpop.f32.mrb[0].mxu0
    %801 = vmatprep.mubr.f32.mxu0 %v668
    %802 = vmatmul.mubr.f32.gmra.mrb[0].mxu0 %v667
    %v803 = vpop.f32.mrb[0].mxu0
    %v804 = vadd.f32 %v710, %v803
    %v805 = vpop.f32.mrb[0].mxu0
    %806 = vmatprep.mubr.f32.mxu0 %v670
    %807 = vmatmul.mubr.f32.gmra.mrb[0].mxu0 %v669
    %v808 = vpop.f32.mrb[0].mxu0
    %v809 = vadd.f32 %v710, %v808
    %v810 = vpop.f32.mrb[0].mxu0
    %811 = vmatprep.mubr.f32.mxu0 %v672
    %812 = vmatmul.mubr.f32.gmra.mrb[0].mxu0 %v671
    %v813 = vpop.f32.mrb[0].mxu0
    %v814 = vadd.f32 %v710, %v813
    %v815 = vpop.f32.mrb[0].mxu0
    %816 = vdwg.mxu0
    %v817 = vmax.f32 %v779, 0.0
    %v818 = vmax.f32 %v784, 0.0
    %v819 = vmax.f32 %v789, 0.0
    %v820 = vmax.f32 %v794, 0.0
    %v821 = vmax.f32 %v799, 0.0
    %v822 = vmax.f32 %v804, 0.0
    %v823 = vmax.f32 %v809, 0.0
    %v824 = vmax.f32 %v814, 0.0
    %v825 = vld [vmem:[%s7] sm:$0xff]
    %v826 = vld [vmem:[%s7 + $0x8] sm:$0xff]
    %v827 = vld [vmem:[%s7 + $0x10] sm:$0xff]
    %v828 = vld [vmem:[%s7 + $0x18] sm:$0xff]
    %v829 = vld [vmem:[%s7 + $0x20] sm:$0xff]
    %v830 = vld [vmem:[%s7 + $0x28] sm:$0xff]
    %v831 = vld [vmem:[%s7 + $0x30] sm:$0xff]
    %v832 = vld [vmem:[%s7 + $0x38] sm:$0xff]
    %v833 = vld [vmem:[%s7 + $0x40] sm:$0xff]
    %v834 = vld [vmem:[%s7 + $0x48] sm:$0xff]
    %v835 = vld [vmem:[%s7 + $0x50] sm:$0xff]
    %v836 = vld [vmem:[%s7 + $0x58] sm:$0xff]
    %v837 = vld [vmem:[%s7 + $0x60] sm:$0xff]
    %v838 = vld [vmem:[%s7 + $0x68] sm:$0xff]
    %v839 = vld [vmem:[%s7 + $0x70] sm:$0xff]
    %v840 = vld [vmem:[%s7 + $0x78] sm:$0xff]
    %v841 = vld [vmem:[%s8] sm:$0x1]
    %v843 = vlaneseq
    %v844 = vshrl.u32 %v843, 7
    %v845 = vsub.s32 0, %v844
    %v846 = vrot.slane %v841, %v845
    %848 = vmatprep.subr.mxu0 0.0
    %849 = vmatpush1.msra.mxu0 %v825
    %850 = vmatprep.subr.mxu0 0.0
    %851 = vmatpush1.msra.mxu0 %v826
    %852 = vmatprep.subr.mxu0 0.0
    %853 = vmatpush1.msra.mxu0 %v827
    %854 = vmatprep.subr.mxu0 0.0
    %855 = vmatpush1.msra.mxu0 %v828
    %856 = vmatprep.subr.mxu0 0.0
    %857 = vmatpush1.msra.mxu0 %v829
    %858 = vmatprep.subr.mxu0 0.0
    %859 = vmatpush1.msra.mxu0 %v830
    %860 = vmatprep.subr.mxu0 0.0
    %861 = vmatpush1.msra.mxu0 %v831
    %862 = vmatprep.subr.mxu0 0.0
    %863 = vmatpush1.msra.mxu0 %v832
    %864 = vmatprep.subr.mxu0 0.0
    %865 = vmatpush1.msra.mxu0 %v833
    %866 = vmatprep.subr.mxu0 0.0
    %867 = vmatpush1.msra.mxu0 %v834
    %868 = vmatprep.subr.mxu0 0.0
    %869 = vmatpush1.msra.mxu0 %v835
    %870 = vmatprep.subr.mxu0 0.0
    %871 = vmatpush1.msra.mxu0 %v836
    %872 = vmatprep.subr.mxu0 0.0
    %873 = vmatpush1.msra.mxu0 %v837
    %874 = vmatprep.subr.mxu0 0.0
    %875 = vmatpush1.msra.mxu0 %v838
    %876 = vmatprep.subr.mxu0 0.0
    %877 = vmatpush1.msra.mxu0 %v839
    %878 = vmatprep.subr.mxu0 0.0
    %879 = vmatpush1.msra.mxu0 %v840
    %880 = vmatprep.subr.mxu0 0.0
    %881 = vmatpush1.msra.mxu0 0.0
    %882 = vmatprep.subr.mxu0 0.0
    %883 = vmatpush1.msra.mxu0 0.0
    %884 = vmatprep.subr.mxu0 0.0
    %885 = vmatpush1.msra.mxu0 0.0
    %886 = vmatprep.subr.mxu0 0.0
    %887 = vmatpush1.msra.mxu0 0.0
    %888 = vmatprep.subr.mxu0 0.0
    %889 = vmatpush1.msra.mxu0 0.0
    %890 = vmatprep.subr.mxu0 0.0
    %891 = vmatpush1.msra.mxu0 0.0
    %892 = vmatprep.subr.mxu0 0.0
    %893 = vmatpush1.msra.mxu0 0.0
    %894 = vmatprep.subr.mxu0 0.0
    %895 = vmatpush1.msra.mxu0 0.0
    %896 = vmatprep.subr.mxu0 0.0
    %897 = vmatpush1.msra.mxu0 0.0
    %898 = vmatprep.subr.mxu0 0.0
    %899 = vmatpush1.msra.mxu0 0.0
    %900 = vmatprep.subr.mxu0 0.0
    %901 = vmatpush1.msra.mxu0 0.0
    %902 = vmatprep.subr.mxu0 0.0
    %903 = vmatpush1.msra.mxu0 0.0
    %904 = vmatprep.subr.mxu0 0.0
    %905 = vmatpush1.msra.mxu0 0.0
    %906 = vmatprep.subr.mxu0 0.0
    %907 = vmatpush1.msra.mxu0 0.0
    %908 = vmatprep.subr.mxu0 0.0
    %909 = vmatpush1.msra.mxu0 0.0
    %910 = vmatprep.subr.mxu0 0.0
    %911 = vmatpush1.msra.mxu0 0.0
    %912 = vmatprep.mubr.f32.mxu0 0.0
    %913 = vmatmul.mubr.f32.gmra.mrb[0].mxu0 %v817
    %v914 = vpop.f32.mrb[0].mxu0
    %v915 = vadd.f32 %v846, %v914
    %v916 = vpop.f32.mrb[0].mxu0
    %917 = vmatprep.mubr.f32.mxu0 0.0
    %918 = vmatmul.mubr.f32.gmra.mrb[0].mxu0 %v818
    %v919 = vpop.f32.mrb[0].mxu0
    %v920 = vadd.f32 %v846, %v919
    %v921 = vpop.f32.mrb[0].mxu0
    %922 = vmatprep.mubr.f32.mxu0 0.0
    %923 = vmatmul.mubr.f32.gmra.mrb[0].mxu0 %v819
    %v924 = vpop.f32.mrb[0].mxu0
    %v925 = vadd.f32 %v846, %v924
    %v926 = vpop.f32.mrb[0].mxu0
    %927 = vmatprep.mubr.f32.mxu0 0.0
    %928 = vmatmul.mubr.f32.gmra.mrb[0].mxu0 %v820
    %v929 = vpop.f32.mrb[0].mxu0
    %v930 = vadd.f32 %v846, %v929
    %v931 = vpop.f32.mrb[0].mxu0
    %932 = vmatprep.mubr.f32.mxu0 0.0
    %933 = vmatmul.mubr.f32.gmra.mrb[0].mxu0 %v821
    %v934 = vpop.f32.mrb[0].mxu0
    %v935 = vadd.f32 %v846, %v934
    %v936 = vpop.f32.mrb[0].mxu0
    %937 = vmatprep.mubr.f32.mxu0 0.0
    %938 = vmatmul.mubr.f32.gmra.mrb[0].mxu0 %v822
    %v939 = vpop.f32.mrb[0].mxu0
    %v940 = vadd.f32 %v846, %v939
    %v941 = vpop.f32.mrb[0].mxu0
    %942 = vmatprep.mubr.f32.mxu0 0.0
    %943 = vmatmul.mubr.f32.gmra.mrb[0].mxu0 %v823
    %v944 = vpop.f32.mrb[0].mxu0
    %v945 = vadd.f32 %v846, %v944
    %v946 = vpop.f32.mrb[0].mxu0
    %947 = vmatprep.mubr.f32.mxu0 0.0
    %948 = vmatmul.mubr.f32.gmra.mrb[0].mxu0 %v824
    %v949 = vpop.f32.mrb[0].mxu0
    %v950 = vadd.f32 %v846, %v949
    %v951 = vpop.f32.mrb[0].mxu0
    %952 = vdwg.mxu0
    %vm953 = vcmask 261120
    %v954 = vsel %vm953, %v915, 0.0
    %v955 = vsel %vm953, %v920, 0.0
    %v956 = vadd.f32 %v954, %v955
    %v957 = vsel %vm953, %v925, 0.0
    %v958 = vadd.f32 %v956, %v957
    %v959 = vsel %vm953, %v930, 0.0
    %v960 = vadd.f32 %v958, %v959
    %v961 = vsel %vm953, %v935, 0.0
    %v962 = vadd.f32 %v960, %v961
    %v963 = vsel %vm953, %v940, 0.0
    %v964 = vadd.f32 %v962, %v963
    %v965 = vsel %vm953, %v945, 0.0
    %v966 = vadd.f32 %v964, %v965
    %v967 = vsel %vm953, %v950, 0.0
    %v968 = vadd.f32 %v966, %v967
    %v969 = vrot.slane %v968, 4
    %v970 = vadd.f32 %v968, %v969
    %v971 = vrot.slane %v970, 2
    %v972 = vadd.f32 %v970, %v971
    %v973 = vrot.slane %v972, 1
    %v974 = vadd.f32 %v972, %v973
    %v975 = vrcp.pop 64.0
    %v976 = vmul.f32 %v974, %v975
    %v977 = vsub.f32 %v915, %v976
    %v978 = vsub.f32 %v920, %v976
    %v979 = vsub.f32 %v925, %v976
    %v980 = vsub.f32 %v930, %v976
    %v981 = vsub.f32 %v935, %v976
    %v982 = vsub.f32 %v940, %v976
    %v983 = vsub.f32 %v945, %v976
    %v984 = vsub.f32 %v950, %v976
    %v985 = vmul.f32 %v977, %v977
    %v986 = vmul.f32 %v978, %v978
    %v987 = vmul.f32 %v979, %v979
    %v988 = vmul.f32 %v980, %v980
    %v989 = vmul.f32 %v981, %v981
    %v990 = vmul.f32 %v982, %v982
    %v991 = vmul.f32 %v983, %v983
    %v992 = vmul.f32 %v984, %v984
    %v993 = vsel %vm953, %v985, 0.0
    %v994 = vsel %vm953, %v986, 0.0
    %v995 = vadd.f32 %v993, %v994
    %v996 = vsel %vm953, %v987, 0.0
    %v997 = vadd.f32 %v995, %v996
    %v998 = vsel %vm953, %v988, 0.0
    %v999 = vadd.f32 %v997, %v998
    %v1000 = vsel %vm953, %v989, 0.0
    %v1001 = vadd.f32 %v999, %v1000
    %v1002 = vsel %vm953, %v990, 0.0
    %v1003 = vadd.f32 %v1001, %v1002
    %v1004 = vsel %vm953, %v991, 0.0
    %v1005 = vadd.f32 %v1003, %v1004
    %v1006 = vsel %vm953, %v992, 0.0
    %v1007 = vadd.f32 %v1005, %v1006
    %v1008 = vrot.slane %v1007, 4
    %v1009 = vadd.f32 %v1007, %v1008
    %v1010 = vrot.slane %v1009, 2
    %v1011 = vadd.f32 %v1009, %v1010
    %v1012 = vrot.slane %v1011, 1
    %v1013 = vadd.f32 %v1011, %v1012
    %v1014 = vrcp.pop 63.0
    %v1015 = vmul.f32 %v1013, %v1014
    %vm1016 = vcmask 7168
    %v1017 = vsel %vm1016, %v399, 0.0
    %v1018 = vsel %vm1016, %v400, 0.0
    %v1019 = vadd.f32 %v1017, %v1018
    %v1020 = vsel %vm1016, %v401, 0.0
    %v1021 = vadd.f32 %v1019, %v1020
    %v1022 = vsel %vm1016, %v402, 0.0
    %v1023 = vadd.f32 %v1021, %v1022
    %v1024 = vsel %vm1016, %v403, 0.0
    %v1025 = vadd.f32 %v1023, %v1024
    %v1026 = vsel %vm1016, %v404, 0.0
    %v1027 = vadd.f32 %v1025, %v1026
    %v1028 = vsel %vm1016, %v405, 0.0
    %v1029 = vadd.f32 %v1027, %v1028
    %v1030 = vsel %vm1016, %v406, 0.0
    %v1031 = vadd.f32 %v1029, %v1030
    %1032 = vadd.xlane.f32.xlu0 %v1031
    %v1033 = vpop.xlane.xlu0 %1032
    %v1034 = vrot.slane %v1033, 4
    %v1035 = vadd.f32 %v1033, %v1034
    %v1036 = vrot.slane %v1035, 2
    %v1037 = vadd.f32 %v1035, %v1036
    %v1038 = vrot.slane %v1037, 1
    %v1039 = vadd.f32 %v1037, %v1038
    %s1040 = vtos %v1039
    %v1041 = vld [vmem:[%s9] sm:$0xf]
    %1043 = vrot.lane.b32.xlu0 %v976, 32
    %v1044 = vpop.permute.xlu0 %1043
    %1046 = vrot.lane.b32.xlu0 %v976, 64
    %v1047 = vpop.permute.xlu0 %1046
    %1049 = vrot.lane.b32.xlu0 %v976, 96
    %v1050 = vpop.permute.xlu0 %1049
    %v1052 = vsel %vm953, %v976, %v1044
    %v1053 = vsel %vm260, %v1052, %v1047
    %vm1054 = vcmask 785408
    %v1055 = vsel %vm1054, %v1053, %v1050
    %v1056 = vmul.f32 %v1055, %v1041
    %1058 = vrot.lane.b32.xlu0 %v1015, 32
    %v1059 = vpop.permute.xlu0 %1058
    %1061 = vrot.lane.b32.xlu0 %v1015, 64
    %v1062 = vpop.permute.xlu0 %1061
    %1064 = vrot.lane.b32.xlu0 %v1015, 96
    %v1065 = vpop.permute.xlu0 %1064
    %v1067 = vsel %vm953, %v1015, %v1059
    %v1068 = vsel %vm260, %v1067, %v1062
    %v1069 = vsel %vm1054, %v1068, %v1065
    %v1071 = vrot.slane %v1041, 1
    %v1073 = vmul.f32 %v1069, %v1071
    %v1074 = vadd.f32 %v1056, %v1073
    %v1075 = vstv %s1040
    %v1076 = vmul.f32 %v1075, %v1041
    %v1078 = vrot.slane %v1076, 2
    %v1080 = vadd.f32 %v1074, %v1078
    %v1081 = vrot.slane %v1041, 3
    %v1083 = vadd.f32 %v1080, %v1081
    %v1084 = vmax.f32 %v1083, 0.0
    %v1085 = vld [vmem:[%s10] sm:$0xff]
    %v1086 = vld [vmem:[%s10 + $0x8] sm:$0xff]
    %v1087 = vld [vmem:[%s10 + $0x10] sm:$0xff]
    %v1088 = vld [vmem:[%s10 + $0x18] sm:$0xff]
    %v1089 = vld [vmem:[%s10 + $0x20] sm:$0xff]
    %v1090 = vld [vmem:[%s10 + $0x28] sm:$0xff]
    %v1091 = vld [vmem:[%s10 + $0x30] sm:$0xff]
    %v1092 = vld [vmem:[%s10 + $0x38] sm:$0xff]
    %v1093 = vld [vmem:[%s10 + $0x40] sm:$0xff]
    %v1094 = vld [vmem:[%s10 + $0x48] sm:$0xff]
    %v1095 = vld [vmem:[%s10 + $0x50] sm:$0xff]
    %v1096 = vld [vmem:[%s10 + $0x58] sm:$0xff]
    %v1097 = vld [vmem:[%s10 + $0x60] sm:$0xff]
    %v1098 = vld [vmem:[%s10 + $0x68] sm:$0xff]
    %v1099 = vld [vmem:[%s10 + $0x70] sm:$0xff]
    %v1100 = vld [vmem:[%s10 + $0x78] sm:$0xff]
    %v1101 = vld [vmem:[%s10 + $0x80] sm:$0xff]
    %v1102 = vld [vmem:[%s10 + $0x88] sm:$0xff]
    %v1103 = vld [vmem:[%s10 + $0x90] sm:$0xff]
    %v1104 = vld [vmem:[%s10 + $0x98] sm:$0xff]
    %v1105 = vld [vmem:[%s10 + $0xa0] sm:$0xff]
    %v1106 = vld [vmem:[%s10 + $0xa8] sm:$0xff]
    %v1107 = vld [vmem:[%s10 + $0xb0] sm:$0xff]
    %v1108 = vld [vmem:[%s10 + $0xb8] sm:$0xff]
    %v1109 = vld [vmem:[%s10 + $0xc0] sm:$0xff]
    %v1110 = vld [vmem:[%s10 + $0xc8] sm:$0xff]
    %v1111 = vld [vmem:[%s10 + $0xd0] sm:$0xff]
    %v1112 = vld [vmem:[%s10 + $0xd8] sm:$0xff]
    %v1113 = vld [vmem:[%s10 + $0xe0] sm:$0xff]
    %v1114 = vld [vmem:[%s10 + $0xe8] sm:$0xff]
    %v1115 = vld [vmem:[%s10 + $0xf0] sm:$0xff]
    %v1116 = vld [vmem:[%s10 + $0xf8] sm:$0xff]
    %v1117 = vld [vmem:[%s11] sm:$0x1]
    %v1119 = vlaneseq
    %v1120 = vshrl.u32 %v1119, 7
    %v1121 = vsub.s32 0, %v1120
    %v1122 = vrot.slane %v1117, %v1121
    %1124 = vmatprep.subr.mxu0 0.0
    %1125 = vmatpush1.msra.mxu0 %v1085
    %1126 = vmatprep.subr.mxu0 0.0
    %1127 = vmatpush1.msra.mxu0 %v1086
    %1128 = vmatprep.subr.mxu0 0.0
    %1129 = vmatpush1.msra.mxu0 %v1087
    %1130 = vmatprep.subr.mxu0 0.0
    %1131 = vmatpush1.msra.mxu0 %v1088
    %1132 = vmatprep.subr.mxu0 0.0
    %1133 = vmatpush1.msra.mxu0 %v1089
    %1134 = vmatprep.subr.mxu0 0.0
    %1135 = vmatpush1.msra.mxu0 %v1090
    %1136 = vmatprep.subr.mxu0 0.0
    %1137 = vmatpush1.msra.mxu0 %v1091
    %1138 = vmatprep.subr.mxu0 0.0
    %1139 = vmatpush1.msra.mxu0 %v1092
    %1140 = vmatprep.subr.mxu0 0.0
    %1141 = vmatpush1.msra.mxu0 %v1093
    %1142 = vmatprep.subr.mxu0 0.0
    %1143 = vmatpush1.msra.mxu0 %v1094
    %1144 = vmatprep.subr.mxu0 0.0
    %1145 = vmatpush1.msra.mxu0 %v1095
    %1146 = vmatprep.subr.mxu0 0.0
    %1147 = vmatpush1.msra.mxu0 %v1096
    %1148 = vmatprep.subr.mxu0 0.0
    %1149 = vmatpush1.msra.mxu0 %v1097
    %1150 = vmatprep.subr.mxu0 0.0
    %1151 = vmatpush1.msra.mxu0 %v1098
    %1152 = vmatprep.subr.mxu0 0.0
    %1153 = vmatpush1.msra.mxu0 %v1099
    %1154 = vmatprep.subr.mxu0 0.0
    %1155 = vmatpush1.msra.mxu0 %v1100
    %1156 = vmatprep.subr.mxu0 0.0
    %1157 = vmatpush1.msra.mxu0 %v1101
    %1158 = vmatprep.subr.mxu0 0.0
    %1159 = vmatpush1.msra.mxu0 %v1102
    %1160 = vmatprep.subr.mxu0 0.0
    %1161 = vmatpush1.msra.mxu0 %v1103
    %1162 = vmatprep.subr.mxu0 0.0
    %1163 = vmatpush1.msra.mxu0 %v1104
    %1164 = vmatprep.subr.mxu0 0.0
    %1165 = vmatpush1.msra.mxu0 %v1105
    %1166 = vmatprep.subr.mxu0 0.0
    %1167 = vmatpush1.msra.mxu0 %v1106
    %1168 = vmatprep.subr.mxu0 0.0
    %1169 = vmatpush1.msra.mxu0 %v1107
    %1170 = vmatprep.subr.mxu0 0.0
    %1171 = vmatpush1.msra.mxu0 %v1108
    %1172 = vmatprep.subr.mxu0 0.0
    %1173 = vmatpush1.msra.mxu0 %v1109
    %1174 = vmatprep.subr.mxu0 0.0
    %1175 = vmatpush1.msra.mxu0 %v1110
    %1176 = vmatprep.subr.mxu0 0.0
    %1177 = vmatpush1.msra.mxu0 %v1111
    %1178 = vmatprep.subr.mxu0 0.0
    %1179 = vmatpush1.msra.mxu0 %v1112
    %1180 = vmatprep.subr.mxu0 0.0
    %1181 = vmatpush1.msra.mxu0 %v1113
    %1182 = vmatprep.subr.mxu0 0.0
    %1183 = vmatpush1.msra.mxu0 %v1114
    %1184 = vmatprep.subr.mxu0 0.0
    %1185 = vmatpush1.msra.mxu0 %v1115
    %1186 = vmatprep.subr.mxu0 0.0
    %1187 = vmatpush1.msra.mxu0 %v1116
    %1188 = vmatprep.mubr.f32.mxu0 %v658
    %1189 = vmatmul.mubr.f32.gmra.mrb[0].mxu0 %v657
    %v1190 = vpop.f32.mrb[0].mxu0
    %v1191 = vadd.f32 %v1122, %v1190
    %v1192 = vpop.f32.mrb[0].mxu0
    %1193 = vmatprep.mubr.f32.mxu0 %v660
    %1194 = vmatmul.mubr.f32.gmra.mrb[0].mxu0 %v659
    %v1195 = vpop.f32.mrb[0].mxu0
    %v1196 = vadd.f32 %v1122, %v1195
    %v1197 = vpop.f32.mrb[0].mxu0
    %1198 = vmatprep.mubr.f32.mxu0 %v662
    %1199 = vmatmul.mubr.f32.gmra.mrb[0].mxu0 %v661
    %v1200 = vpop.f32.mrb[0].mxu0
    %v1201 = vadd.f32 %v1122, %v1200
    %v1202 = vpop.f32.mrb[0].mxu0
    %1203 = vmatprep.mubr.f32.mxu0 %v664
    %1204 = vmatmul.mubr.f32.gmra.mrb[0].mxu0 %v663
    %v1205 = vpop.f32.mrb[0].mxu0
    %v1206 = vadd.f32 %v1122, %v1205
    %v1207 = vpop.f32.mrb[0].mxu0
    %1208 = vmatprep.mubr.f32.mxu0 %v666
    %1209 = vmatmul.mubr.f32.gmra.mrb[0].mxu0 %v665
    %v1210 = vpop.f32.mrb[0].mxu0
    %v1211 = vadd.f32 %v1122, %v1210
    %v1212 = vpop.f32.mrb[0].mxu0
    %1213 = vmatprep.mubr.f32.mxu0 %v668
    %1214 = vmatmul.mubr.f32.gmra.mrb[0].mxu0 %v667
    %v1215 = vpop.f32.mrb[0].mxu0
    %v1216 = vadd.f32 %v1122, %v1215
    %v1217 = vpop.f32.mrb[0].mxu0
    %1218 = vmatprep.mubr.f32.mxu0 %v670
    %1219 = vmatmul.mubr.f32.gmra.mrb[0].mxu0 %v669
    %v1220 = vpop.f32.mrb[0].mxu0
    %v1221 = vadd.f32 %v1122, %v1220
    %v1222 = vpop.f32.mrb[0].mxu0
    %1223 = vmatprep.mubr.f32.mxu0 %v672
    %1224 = vmatmul.mubr.f32.gmra.mrb[0].mxu0 %v671
    %v1225 = vpop.f32.mrb[0].mxu0
    %v1226 = vadd.f32 %v1122, %v1225
    %v1227 = vpop.f32.mrb[0].mxu0
    %1228 = vdwg.mxu0
    %v1229 = vmax.f32 %v1191, 0.0
    %v1230 = vmax.f32 %v1196, 0.0
    %v1231 = vmax.f32 %v1201, 0.0
    %v1232 = vmax.f32 %v1206, 0.0
    %v1233 = vmax.f32 %v1211, 0.0
    %v1234 = vmax.f32 %v1216, 0.0
    %v1235 = vmax.f32 %v1221, 0.0
    %v1236 = vmax.f32 %v1226, 0.0
    %1237 = vst [vmem:[%s16] sm:$0xff] %v1229
    %1238 = vst [vmem:[%s16 + $0x8] sm:$0xff] %v1230
    %1239 = vst [vmem:[%s16 + $0x10] sm:$0xff] %v1231
    %1240 = vst [vmem:[%s16 + $0x18] sm:$0xff] %v1232
    %1241 = vst [vmem:[%s16 + $0x20] sm:$0xff] %v1233
    %1242 = vst [vmem:[%s16 + $0x28] sm:$0xff] %v1234
    %1243 = vst [vmem:[%s16 + $0x30] sm:$0xff] %v1235
    %1244 = vst [vmem:[%s16 + $0x38] sm:$0xff] %v1236
    %v1245 = vlaneseq
    %v1246 = vshrl.u32 %v1245, 7
    %v1247 = vsub.s32 0, %v1246
    %v1248 = vrot.slane %v1084, %v1247
    %v1249 = vld [vmem:[%s12] sm:$0xff]
    %v1250 = vld [vmem:[%s12 + $0x8] sm:$0xff]
    %v1251 = vld [vmem:[%s12 + $0x10] sm:$0xff]
    %v1252 = vld [vmem:[%s12 + $0x18] sm:$0xff]
    %v1253 = vld [vmem:[%s12 + $0x20] sm:$0xff]
    %v1254 = vld [vmem:[%s12 + $0x28] sm:$0xff]
    %v1255 = vld [vmem:[%s12 + $0x30] sm:$0xff]
    %v1256 = vld [vmem:[%s12 + $0x38] sm:$0xff]
    %v1257 = vld [vmem:[%s12 + $0x40] sm:$0xff]
    %v1258 = vld [vmem:[%s12 + $0x48] sm:$0xff]
    %v1259 = vld [vmem:[%s12 + $0x50] sm:$0xff]
    %v1260 = vld [vmem:[%s12 + $0x58] sm:$0xff]
    %v1261 = vld [vmem:[%s12 + $0x60] sm:$0xff]
    %v1262 = vld [vmem:[%s12 + $0x68] sm:$0xff]
    %v1263 = vld [vmem:[%s12 + $0x70] sm:$0xff]
    %v1264 = vld [vmem:[%s12 + $0x78] sm:$0xff]
    %v1265 = vld [vmem:[%s13] sm:$0x1]
    %v1267 = vlaneseq
    %v1268 = vshrl.u32 %v1267, 7
    %v1269 = vsub.s32 0, %v1268
    %v1270 = vrot.slane %v1265, %v1269
    %1272 = vmatprep.subr.mxu0 0.0
    %1273 = vmatpush1.msra.mxu0 %v1249
    %1274 = vmatprep.subr.mxu0 0.0
    %1275 = vmatpush1.msra.mxu0 %v1250
    %1276 = vmatprep.subr.mxu0 0.0
    %1277 = vmatpush1.msra.mxu0 %v1251
    %1278 = vmatprep.subr.mxu0 0.0
    %1279 = vmatpush1.msra.mxu0 %v1252
    %1280 = vmatprep.subr.mxu0 0.0
    %1281 = vmatpush1.msra.mxu0 %v1253
    %1282 = vmatprep.subr.mxu0 0.0
    %1283 = vmatpush1.msra.mxu0 %v1254
    %1284 = vmatprep.subr.mxu0 0.0
    %1285 = vmatpush1.msra.mxu0 %v1255
    %1286 = vmatprep.subr.mxu0 0.0
    %1287 = vmatpush1.msra.mxu0 %v1256
    %1288 = vmatprep.subr.mxu0 0.0
    %1289 = vmatpush1.msra.mxu0 %v1257
    %1290 = vmatprep.subr.mxu0 0.0
    %1291 = vmatpush1.msra.mxu0 %v1258
    %1292 = vmatprep.subr.mxu0 0.0
    %1293 = vmatpush1.msra.mxu0 %v1259
    %1294 = vmatprep.subr.mxu0 0.0
    %1295 = vmatpush1.msra.mxu0 %v1260
    %1296 = vmatprep.subr.mxu0 0.0
    %1297 = vmatpush1.msra.mxu0 %v1261
    %1298 = vmatprep.subr.mxu0 0.0
    %1299 = vmatpush1.msra.mxu0 %v1262
    %1300 = vmatprep.subr.mxu0 0.0
    %1301 = vmatpush1.msra.mxu0 %v1263
    %1302 = vmatprep.subr.mxu0 0.0
    %1303 = vmatpush1.msra.mxu0 %v1264
    %1304 = vmatprep.subr.mxu0 0.0
    %1305 = vmatpush1.msra.mxu0 0.0
    %1306 = vmatprep.subr.mxu0 0.0
    %1307 = vmatpush1.msra.mxu0 0.0
    %1308 = vmatprep.subr.mxu0 0.0
    %1309 = vmatpush1.msra.mxu0 0.0
    %1310 = vmatprep.subr.mxu0 0.0
    %1311 = vmatpush1.msra.mxu0 0.0
    %1312 = vmatprep.subr.mxu0 0.0
    %1313 = vmatpush1.msra.mxu0 0.0
    %1314 = vmatprep.subr.mxu0 0.0
    %1315 = vmatpush1.msra.mxu0 0.0
    %1316 = vmatprep.subr.mxu0 0.0
    %1317 = vmatpush1.msra.mxu0 0.0
    %1318 = vmatprep.subr.mxu0 0.0
    %1319 = vmatpush1.msra.mxu0 0.0
    %1320 = vmatprep.subr.mxu0 0.0
    %1321 = vmatpush1.msra.mxu0 0.0
    %1322 = vmatprep.subr.mxu0 0.0
    %1323 = vmatpush1.msra.mxu0 0.0
    %1324 = vmatprep.subr.mxu0 0.0
    %1325 = vmatpush1.msra.mxu0 0.0
    %1326 = vmatprep.subr.mxu0 0.0
    %1327 = vmatpush1.msra.mxu0 0.0
    %1328 = vmatprep.subr.mxu0 0.0
    %1329 = vmatpush1.msra.mxu0 0.0
    %1330 = vmatprep.subr.mxu0 0.0
    %1331 = vmatpush1.msra.mxu0 0.0
    %1332 = vmatprep.subr.mxu0 0.0
    %1333 = vmatpush1.msra.mxu0 0.0
    %1334 = vmatprep.subr.mxu0 0.0
    %1335 = vmatpush1.msra.mxu0 0.0
    %1336 = vmatprep.mubr.f32.mxu0 0.0
    %1337 = vmatmul.mubr.f32.gmra.mrb[0].mxu0 %v1248
    %v1338 = vpop.f32.mrb[0].mxu0
    %v1339 = vadd.f32 %v1270, %v1338
    %v1340 = vpop.f32.mrb[0].mxu0
    %1341 = vdwg.mxu0
    %v1342 = vmax.f32 %v1339, 0.0
    %v1343 = vld [vmem:[%s14] sm:$0xff]
    %v1344 = vld [vmem:[%s14 + $0x8] sm:$0xff]
    %v1345 = vld [vmem:[%s14 + $0x10] sm:$0xff]
    %v1346 = vld [vmem:[%s14 + $0x18] sm:$0xff]
    %v1347 = vld [vmem:[%s14 + $0x20] sm:$0xff]
    %v1348 = vld [vmem:[%s14 + $0x28] sm:$0xff]
    %v1349 = vld [vmem:[%s14 + $0x30] sm:$0xff]
    %v1350 = vld [vmem:[%s14 + $0x38] sm:$0xff]
    %v1351 = vld [vmem:[%s14 + $0x40] sm:$0xff]
    %v1352 = vld [vmem:[%s14 + $0x48] sm:$0xff]
    %v1353 = vld [vmem:[%s14 + $0x50] sm:$0xff]
    %v1354 = vld [vmem:[%s14 + $0x58] sm:$0xff]
    %v1355 = vld [vmem:[%s14 + $0x60] sm:$0xff]
    %v1356 = vld [vmem:[%s14 + $0x68] sm:$0xff]
    %v1357 = vld [vmem:[%s14 + $0x70] sm:$0xff]
    %v1358 = vld [vmem:[%s14 + $0x78] sm:$0xff]
    %v1359 = vld [vmem:[%s14 + $0x80] sm:$0xff]
    %v1360 = vld [vmem:[%s14 + $0x88] sm:$0xff]
    %v1361 = vld [vmem:[%s14 + $0x90] sm:$0xff]
    %v1362 = vld [vmem:[%s14 + $0x98] sm:$0xff]
    %v1363 = vld [vmem:[%s14 + $0xa0] sm:$0xff]
    %v1364 = vld [vmem:[%s14 + $0xa8] sm:$0xff]
    %v1365 = vld [vmem:[%s14 + $0xb0] sm:$0xff]
    %v1366 = vld [vmem:[%s14 + $0xb8] sm:$0xff]
    %v1367 = vld [vmem:[%s14 + $0xc0] sm:$0xff]
    %v1368 = vld [vmem:[%s14 + $0xc8] sm:$0xff]
    %v1369 = vld [vmem:[%s14 + $0xd0] sm:$0xff]
    %v1370 = vld [vmem:[%s14 + $0xd8] sm:$0xff]
    %v1371 = vld [vmem:[%s14 + $0xe0] sm:$0xff]
    %v1372 = vld [vmem:[%s14 + $0xe8] sm:$0xff]
    %v1373 = vld [vmem:[%s14 + $0xf0] sm:$0xff]
    %v1374 = vld [vmem:[%s14 + $0xf8] sm:$0xff]
    %v1375 = vld [vmem:[%s14 + $0x100] sm:$0xff]
    %v1376 = vld [vmem:[%s14 + $0x108] sm:$0xff]
    %v1377 = vld [vmem:[%s14 + $0x110] sm:$0xff]
    %v1378 = vld [vmem:[%s14 + $0x118] sm:$0xff]
    %v1379 = vld [vmem:[%s14 + $0x120] sm:$0xff]
    %v1380 = vld [vmem:[%s14 + $0x128] sm:$0xff]
    %v1381 = vld [vmem:[%s14 + $0x130] sm:$0xff]
    %v1382 = vld [vmem:[%s14 + $0x138] sm:$0xff]
    %v1383 = vld [vmem:[%s14 + $0x140] sm:$0xff]
    %v1384 = vld [vmem:[%s14 + $0x148] sm:$0xff]
    %v1385 = vld [vmem:[%s14 + $0x150] sm:$0xff]
    %v1386 = vld [vmem:[%s14 + $0x158] sm:$0xff]
    %v1387 = vld [vmem:[%s14 + $0x160] sm:$0xff]
    %v1388 = vld [vmem:[%s14 + $0x168] sm:$0xff]
    %v1389 = vld [vmem:[%s14 + $0x170] sm:$0xff]
    %v1390 = vld [vmem:[%s14 + $0x178] sm:$0xff]
    %v1391 = vld [vmem:[%s14 + $0x180] sm:$0xff]
    %v1392 = vld [vmem:[%s14 + $0x188] sm:$0xff]
    %v1393 = vld [vmem:[%s14 + $0x190] sm:$0xff]
    %v1394 = vld [vmem:[%s14 + $0x198] sm:$0xff]
    %v1395 = vld [vmem:[%s14 + $0x1a0] sm:$0xff]
    %v1396 = vld [vmem:[%s14 + $0x1a8] sm:$0xff]
    %v1397 = vld [vmem:[%s14 + $0x1b0] sm:$0xff]
    %v1398 = vld [vmem:[%s14 + $0x1b8] sm:$0xff]
    %v1399 = vld [vmem:[%s14 + $0x1c0] sm:$0xff]
    %v1400 = vld [vmem:[%s14 + $0x1c8] sm:$0xff]
    %v1401 = vld [vmem:[%s14 + $0x1d0] sm:$0xff]
    %v1402 = vld [vmem:[%s14 + $0x1d8] sm:$0xff]
    %v1403 = vld [vmem:[%s14 + $0x1e0] sm:$0xff]
    %v1404 = vld [vmem:[%s14 + $0x1e8] sm:$0xff]
    %v1405 = vld [vmem:[%s14 + $0x1f0] sm:$0xff]
    %v1406 = vld [vmem:[%s14 + $0x1f8] sm:$0xff]
    %v1407 = vld [vmem:[%s14 + $0x200] sm:$0xff]
    %v1408 = vld [vmem:[%s14 + $0x208] sm:$0xff]
    %v1409 = vld [vmem:[%s14 + $0x210] sm:$0xff]
    %v1410 = vld [vmem:[%s14 + $0x218] sm:$0xff]
    %v1411 = vld [vmem:[%s14 + $0x220] sm:$0xff]
    %v1412 = vld [vmem:[%s14 + $0x228] sm:$0xff]
    %v1413 = vld [vmem:[%s14 + $0x230] sm:$0xff]
    %v1414 = vld [vmem:[%s14 + $0x238] sm:$0xff]
    %v1415 = vld [vmem:[%s14 + $0x240] sm:$0xff]
    %v1416 = vld [vmem:[%s14 + $0x248] sm:$0xff]
    %v1417 = vld [vmem:[%s14 + $0x250] sm:$0xff]
    %v1418 = vld [vmem:[%s14 + $0x258] sm:$0xff]
    %v1419 = vld [vmem:[%s14 + $0x260] sm:$0xff]
    %v1420 = vld [vmem:[%s14 + $0x268] sm:$0xff]
    %v1421 = vld [vmem:[%s14 + $0x270] sm:$0xff]
    %v1422 = vld [vmem:[%s14 + $0x278] sm:$0xff]
    %v1423 = vld [vmem:[%s14 + $0x280] sm:$0xff]
    %v1424 = vld [vmem:[%s14 + $0x288] sm:$0xff]
    %v1425 = vld [vmem:[%s14 + $0x290] sm:$0xff]
    %v1426 = vld [vmem:[%s14 + $0x298] sm:$0xff]
    %v1427 = vld [vmem:[%s14 + $0x2a0] sm:$0xff]
    %v1428 = vld [vmem:[%s14 + $0x2a8] sm:$0xff]
    %v1429 = vld [vmem:[%s14 + $0x2b0] sm:$0xff]
    %v1430 = vld [vmem:[%s14 + $0x2b8] sm:$0xff]
    %v1431 = vld [vmem:[%s14 + $0x2c0] sm:$0xff]
    %v1432 = vld [vmem:[%s14 + $0x2c8] sm:$0xff]
    %v1433 = vld [vmem:[%s14 + $0x2d0] sm:$0xff]
    %v1434 = vld [vmem:[%s14 + $0x2d8] sm:$0xff]
    %v1435 = vld [vmem:[%s14 + $0x2e0] sm:$0xff]
    %v1436 = vld [vmem:[%s14 + $0x2e8] sm:$0xff]
    %v1437 = vld [vmem:[%s14 + $0x2f0] sm:$0xff]
    %v1438 = vld [vmem:[%s14 + $0x2f8] sm:$0xff]
    %v1439 = vld [vmem:[%s15] sm:$0x3f]
    %v1441 = vlaneseq
    %v1442 = vshrl.u32 %v1441, 7
    %v1443 = vsub.s32 0, %v1442
    %v1444 = vrot.slane %v1439, %v1443
    %v1445 = vlaneseq
    %v1446 = vshrl.u32 %v1445, 7
    %v1447 = vsub.s32 1, %v1446
    %v1448 = vrot.slane %v1439, %v1447
    %v1449 = vlaneseq
    %v1450 = vshrl.u32 %v1449, 7
    %v1451 = vsub.s32 2, %v1450
    %v1452 = vrot.slane %v1439, %v1451
    %v1453 = vlaneseq
    %v1454 = vshrl.u32 %v1453, 7
    %v1455 = vsub.s32 3, %v1454
    %v1456 = vrot.slane %v1439, %v1455
    %v1457 = vlaneseq
    %v1458 = vshrl.u32 %v1457, 7
    %v1459 = vsub.s32 4, %v1458
    %v1460 = vrot.slane %v1439, %v1459
    %v1461 = vlaneseq
    %v1462 = vshrl.u32 %v1461, 7
    %v1463 = vsub.s32 5, %v1462
    %v1464 = vrot.slane %v1439, %v1463
    %1471 = vmatprep.subr.mxu0 %v1344
    %1472 = vmatpush1.msra.mxu0 %v1343
    %1473 = vmatprep.subr.mxu0 %v1350
    %1474 = vmatpush1.msra.mxu0 %v1349
    %1475 = vmatprep.subr.mxu0 %v1356
    %1476 = vmatpush1.msra.mxu0 %v1355
    %1477 = vmatprep.subr.mxu0 %v1362
    %1478 = vmatpush1.msra.mxu0 %v1361
    %1479 = vmatprep.subr.mxu0 %v1368
    %1480 = vmatpush1.msra.mxu0 %v1367
    %1481 = vmatprep.subr.mxu0 %v1374
    %1482 = vmatpush1.msra.mxu0 %v1373
    %1483 = vmatprep.subr.mxu0 %v1380
    %1484 = vmatpush1.msra.mxu0 %v1379
    %1485 = vmatprep.subr.mxu0 %v1386
    %1486 = vmatpush1.msra.mxu0 %v1385
    %1487 = vmatprep.subr.mxu0 %v1392
    %1488 = vmatpush1.msra.mxu0 %v1391
    %1489 = vmatprep.subr.mxu0 %v1398
    %1490 = vmatpush1.msra.mxu0 %v1397
    %1491 = vmatprep.subr.mxu0 %v1404
    %1492 = vmatpush1.msra.mxu0 %v1403
    %1493 = vmatprep.subr.mxu0 %v1410
    %1494 = vmatpush1.msra.mxu0 %v1409
    %1495 = vmatprep.subr.mxu0 %v1416
    %1496 = vmatpush1.msra.mxu0 %v1415
    %1497 = vmatprep.subr.mxu0 %v1422
    %1498 = vmatpush1.msra.mxu0 %v1421
    %1499 = vmatprep.subr.mxu0 %v1428
    %1500 = vmatpush1.msra.mxu0 %v1427
    %1501 = vmatprep.subr.mxu0 %v1434
    %1502 = vmatpush1.msra.mxu0 %v1433
    %1503 = vmatprep.subr.mxu0 0.0
    %1504 = vmatpush1.msra.mxu0 0.0
    %1505 = vmatprep.subr.mxu0 0.0
    %1506 = vmatpush1.msra.mxu0 0.0
    %1507 = vmatprep.subr.mxu0 0.0
    %1508 = vmatpush1.msra.mxu0 0.0
    %1509 = vmatprep.subr.mxu0 0.0
    %1510 = vmatpush1.msra.mxu0 0.0
    %1511 = vmatprep.subr.mxu0 0.0
    %1512 = vmatpush1.msra.mxu0 0.0
    %1513 = vmatprep.subr.mxu0 0.0
    %1514 = vmatpush1.msra.mxu0 0.0
    %1515 = vmatprep.subr.mxu0 0.0
    %1516 = vmatpush1.msra.mxu0 0.0
    %1517 = vmatprep.subr.mxu0 0.0
    %1518 = vmatpush1.msra.mxu0 0.0
    %1519 = vmatprep.subr.mxu0 0.0
    %1520 = vmatpush1.msra.mxu0 0.0
    %1521 = vmatprep.subr.mxu0 0.0
    %1522 = vmatpush1.msra.mxu0 0.0
    %1523 = vmatprep.subr.mxu0 0.0
    %1524 = vmatpush1.msra.mxu0 0.0
    %1525 = vmatprep.subr.mxu0 0.0
    %1526 = vmatpush1.msra.mxu0 0.0
    %1527 = vmatprep.subr.mxu0 0.0
    %1528 = vmatpush1.msra.mxu0 0.0
    %1529 = vmatprep.subr.mxu0 0.0
    %1530 = vmatpush1.msra.mxu0 0.0
    %1531 = vmatprep.subr.mxu0 0.0
    %1532 = vmatpush1.msra.mxu0 0.0
    %1533 = vmatprep.subr.mxu0 0.0
    %1534 = vmatpush1.msra.mxu0 0.0
    %1535 = vmatprep.mubr.f32.mxu0 0.0
    %1536 = vmatmul.mubr.f32.gmra.mrb[0].mxu0 %v1342
    %v1537 = vpop.f32.mrb[0].mxu0
    %v1538 = vadd.f32 %v1444, %v1537
    %v1539 = vpop.f32.mrb[0].mxu0
    %v1540 = vadd.f32 %v1448, %v1539
    %1541 = vdwg.mxu0
    %1542 = vmatprep.subr.mxu0 %v1346
    %1543 = vmatpush1.msra.mxu0 %v1345
    %1544 = vmatprep.subr.mxu0 %v1352
    %1545 = vmatpush1.msra.mxu0 %v1351
    %1546 = vmatprep.subr.mxu0 %v1358
    %1547 = vmatpush1.msra.mxu0 %v1357
    %1548 = vmatprep.subr.mxu0 %v1364
    %1549 = vmatpush1.msra.mxu0 %v1363
    %1550 = vmatprep.subr.mxu0 %v1370
    %1551 = vmatpush1.msra.mxu0 %v1369
    %1552 = vmatprep.subr.mxu0 %v1376
    %1553 = vmatpush1.msra.mxu0 %v1375
    %1554 = vmatprep.subr.mxu0 %v1382
    %1555 = vmatpush1.msra.mxu0 %v1381
    %1556 = vmatprep.subr.mxu0 %v1388
    %1557 = vmatpush1.msra.mxu0 %v1387
    %1558 = vmatprep.subr.mxu0 %v1394
    %1559 = vmatpush1.msra.mxu0 %v1393
    %1560 = vmatprep.subr.mxu0 %v1400
    %1561 = vmatpush1.msra.mxu0 %v1399
    %1562 = vmatprep.subr.mxu0 %v1406
    %1563 = vmatpush1.msra.mxu0 %v1405
    %1564 = vmatprep.subr.mxu0 %v1412
    %1565 = vmatpush1.msra.mxu0 %v1411
    %1566 = vmatprep.subr.mxu0 %v1418
    %1567 = vmatpush1.msra.mxu0 %v1417
    %1568 = vmatprep.subr.mxu0 %v1424
    %1569 = vmatpush1.msra.mxu0 %v1423
    %1570 = vmatprep.subr.mxu0 %v1430
    %1571 = vmatpush1.msra.mxu0 %v1429
    %1572 = vmatprep.subr.mxu0 %v1436
    %1573 = vmatpush1.msra.mxu0 %v1435
    %1574 = vmatprep.subr.mxu0 0.0
    %1575 = vmatpush1.msra.mxu0 0.0
    %1576 = vmatprep.subr.mxu0 0.0
    %1577 = vmatpush1.msra.mxu0 0.0
    %1578 = vmatprep.subr.mxu0 0.0
    %1579 = vmatpush1.msra.mxu0 0.0
    %1580 = vmatprep.subr.mxu0 0.0
    %1581 = vmatpush1.msra.mxu0 0.0
    %1582 = vmatprep.subr.mxu0 0.0
    %1583 = vmatpush1.msra.mxu0 0.0
    %1584 = vmatprep.subr.mxu0 0.0
    %1585 = vmatpush1.msra.mxu0 0.0
    %1586 = vmatprep.subr.mxu0 0.0
    %1587 = vmatpush1.msra.mxu0 0.0
    %1588 = vmatprep.subr.mxu0 0.0
    %1589 = vmatpush1.msra.mxu0 0.0
    %1590 = vmatprep.subr.mxu0 0.0
    %1591 = vmatpush1.msra.mxu0 0.0
    %1592 = vmatprep.subr.mxu0 0.0
    %1593 = vmatpush1.msra.mxu0 0.0
    %1594 = vmatprep.subr.mxu0 0.0
    %1595 = vmatpush1.msra.mxu0 0.0
    %1596 = vmatprep.subr.mxu0 0.0
    %1597 = vmatpush1.msra.mxu0 0.0
    %1598 = vmatprep.subr.mxu0 0.0
    %1599 = vmatpush1.msra.mxu0 0.0
    %1600 = vmatprep.subr.mxu0 0.0
    %1601 = vmatpush1.msra.mxu0 0.0
    %1602 = vmatprep.subr.mxu0 0.0
    %1603 = vmatpush1.msra.mxu0 0.0
    %1604 = vmatprep.subr.mxu0 0.0
    %1605 = vmatpush1.msra.mxu0 0.0
    %1606 = vmatprep.mubr.f32.mxu0 0.0
    %1607 = vmatmul.mubr.f32.gmra.mrb[0].mxu0 %v1342
    %v1608 = vpop.f32.mrb[0].mxu0
    %v1609 = vadd.f32 %v1452, %v1608
    %v1610 = vpop.f32.mrb[0].mxu0
    %v1611 = vadd.f32 %v1456, %v1610
    %1612 = vdwg.mxu0
    %1613 = vmatprep.subr.mxu0 %v1348
    %1614 = vmatpush1.msra.mxu0 %v1347
    %1615 = vmatprep.subr.mxu0 %v1354
    %1616 = vmatpush1.msra.mxu0 %v1353
    %1617 = vmatprep.subr.mxu0 %v1360
    %1618 = vmatpush1.msra.mxu0 %v1359
    %1619 = vmatprep.subr.mxu0 %v1366
    %1620 = vmatpush1.msra.mxu0 %v1365
    %1621 = vmatprep.subr.mxu0 %v1372
    %1622 = vmatpush1.msra.mxu0 %v1371
    %1623 = vmatprep.subr.mxu0 %v1378
    %1624 = vmatpush1.msra.mxu0 %v1377
    %1625 = vmatprep.subr.mxu0 %v1384
    %1626 = vmatpush1.msra.mxu0 %v1383
    %1627 = vmatprep.subr.mxu0 %v1390
    %1628 = vmatpush1.msra.mxu0 %v1389
    %1629 = vmatprep.subr.mxu0 %v1396
    %1630 = vmatpush1.msra.mxu0 %v1395
    %1631 = vmatprep.subr.mxu0 %v1402
    %1632 = vmatpush1.msra.mxu0 %v1401
    %1633 = vmatprep.subr.mxu0 %v1408
    %1634 = vmatpush1.msra.mxu0 %v1407
    %1635 = vmatprep.subr.mxu0 %v1414
    %1636 = vmatpush1.msra.mxu0 %v1413
    %1637 = vmatprep.subr.mxu0 %v1420
    %1638 = vmatpush1.msra.mxu0 %v1419
    %1639 = vmatprep.subr.mxu0 %v1426
    %1640 = vmatpush1.msra.mxu0 %v1425
    %1641 = vmatprep.subr.mxu0 %v1432
    %1642 = vmatpush1.msra.mxu0 %v1431
    %1643 = vmatprep.subr.mxu0 %v1438
    %1644 = vmatpush1.msra.mxu0 %v1437
    %1645 = vmatprep.subr.mxu0 0.0
    %1646 = vmatpush1.msra.mxu0 0.0
    %1647 = vmatprep.subr.mxu0 0.0
    %1648 = vmatpush1.msra.mxu0 0.0
    %1649 = vmatprep.subr.mxu0 0.0
    %1650 = vmatpush1.msra.mxu0 0.0
    %1651 = vmatprep.subr.mxu0 0.0
    %1652 = vmatpush1.msra.mxu0 0.0
    %1653 = vmatprep.subr.mxu0 0.0
    %1654 = vmatpush1.msra.mxu0 0.0
    %1655 = vmatprep.subr.mxu0 0.0
    %1656 = vmatpush1.msra.mxu0 0.0
    %1657 = vmatprep.subr.mxu0 0.0
    %1658 = vmatpush1.msra.mxu0 0.0
    %1659 = vmatprep.subr.mxu0 0.0
    %1660 = vmatpush1.msra.mxu0 0.0
    %1661 = vmatprep.subr.mxu0 0.0
    %1662 = vmatpush1.msra.mxu0 0.0
    %1663 = vmatprep.subr.mxu0 0.0
    %1664 = vmatpush1.msra.mxu0 0.0
    %1665 = vmatprep.subr.mxu0 0.0
    %1666 = vmatpush1.msra.mxu0 0.0
    %1667 = vmatprep.subr.mxu0 0.0
    %1668 = vmatpush1.msra.mxu0 0.0
    %1669 = vmatprep.subr.mxu0 0.0
    %1670 = vmatpush1.msra.mxu0 0.0
    %1671 = vmatprep.subr.mxu0 0.0
    %1672 = vmatpush1.msra.mxu0 0.0
    %1673 = vmatprep.subr.mxu0 0.0
    %1674 = vmatpush1.msra.mxu0 0.0
    %1675 = vmatprep.subr.mxu0 0.0
    %1676 = vmatpush1.msra.mxu0 0.0
    %1677 = vmatprep.mubr.f32.mxu0 0.0
    %1678 = vmatmul.mubr.f32.gmra.mrb[0].mxu0 %v1342
    %v1679 = vpop.f32.mrb[0].mxu0
    %v1680 = vadd.f32 %v1460, %v1679
    %v1681 = vpop.f32.mrb[0].mxu0
    %v1682 = vadd.f32 %v1464, %v1681
    %1683 = vdwg.mxu0
    %v1684 = vmax.f32 %v1538, 0.0
    %v1685 = vmax.f32 %v1540, 0.0
    %v1686 = vmax.f32 %v1609, 0.0
    %v1687 = vmax.f32 %v1611, 0.0
    %v1688 = vmax.f32 %v1680, 0.0
    %v1689 = vmax.f32 %v1682, 0.0
    %v1696 = vcombine.low %v1684, %v1685
    %v1697 = vcombine.low %v1686, %v1687
    %v1698 = vcombine.low %v1688, %v1689
    %v1700 = vunpack.c.l.s4 1966171168
    %v1701 = vunpack.c.0.s8 %v1700
    %v1702 = vlaneseq
    %v1703 = vshrl.u32 %v1702, 7
    %v1704 = vsub.s32 %v1701, %v1703
    %v1705 = vrot.slane %v1696, %v1704
    %v1707 = vunpack.c.l.s4 1966171168
    %v1708 = vunpack.c.0.s8 %v1707
    %v1709 = vlaneseq
    %v1710 = vshrl.u32 %v1709, 7
    %v1711 = vsub.s32 %v1708, %v1710
    %v1712 = vrot.slane %v1697, %v1711
    %v1714 = vunpack.c.l.s4 1966171168
    %v1715 = vunpack.c.0.s8 %v1714
    %v1716 = vlaneseq
    %v1717 = vshrl.u32 %v1716, 7
    %v1718 = vsub.s32 %v1715, %v1717
    %v1719 = vrot.slane %v1698, %v1718
    %v1720 = vcombine.low %v1705, %v1712
    %v1722 = vunpack.c.l.s4 1966171168
    %v1723 = vunpack.c.0.s8 %v1722
    %v1724 = vlaneseq
    %v1725 = vshrl.u32 %v1724, 7
    %v1726 = vsub.s32 %v1723, %v1725
    %v1727 = vrot.slane %v1720, %v1726
    %v1729 = vunpack.c.l.s4 1966171168
    %v1730 = vunpack.c.0.s8 %v1729
    %v1731 = vlaneseq
    %v1732 = vshrl.u32 %v1731, 7
    %v1733 = vsub.s32 %v1730, %v1732
    %v1734 = vrot.slane %v1719, %v1733
    %v1735 = vcombine.low %v1727, %v1734
    %v1737 = vlaneseq
    %vm1738 = vcmp.ge.s32.totalorder %v1737, 0
    %vm1739 = vcmp.lt.s32.totalorder %v1737, 768
    %vm1740 = vmand %vm1738, %vm1739
    %1741 = vst.msk [vmem:[%s17] sm:$0x3f] %vm1740, %v1735
    %v1742 = vsub.f32 0.0, %v1229
    %v1743 = vsub.f32 0.0, %v1230
    %v1744 = vsub.f32 0.0, %v1231
    %v1745 = vsub.f32 0.0, %v1232
    %v1746 = vsub.f32 0.0, %v1233
    %v1747 = vsub.f32 0.0, %v1234
    %v1748 = vsub.f32 0.0, %v1235
    %v1749 = vsub.f32 0.0, %v1236
    %v1750 = vmul.f32 %v1742, 1.442695
    %v1751 = vpow.pop %v1750
    %v1752 = vmul.f32 %v1743, 1.442695
    %v1753 = vpow.pop %v1752
    %v1754 = vmul.f32 %v1744, 1.442695
    %v1755 = vpow.pop %v1754
    %v1756 = vmul.f32 %v1745, 1.442695
    %v1757 = vpow.pop %v1756
    %v1758 = vmul.f32 %v1746, 1.442695
    %v1759 = vpow.pop %v1758
    %v1760 = vmul.f32 %v1747, 1.442695
    %v1761 = vpow.pop %v1760
    %v1762 = vmul.f32 %v1748, 1.442695
    %v1763 = vpow.pop %v1762
    %v1764 = vmul.f32 %v1749, 1.442695
    %v1765 = vpow.pop %v1764
    %v1766 = vadd.f32 %v1751, 1.0
    %v1767 = vlog2.pop %v1766
    %v1768 = vmul.f32 %v1767, 0.6931472
    %v1769 = vmul.f32 -0.5, %v1751
    %v1770 = vadd.f32 %v1769, 1.0
    %v1771 = vmul.f32 %v1770, %v1751
    %v1772 = vand.u32 2147483647, %v1751
    %vm1773 = vcmp.lt.f32.partialorder %v1772, 0.0004427343
    %v1774 = vsel %vm1773, %v1771, %v1768
    %v1775 = vadd.f32 %v1753, 1.0
    %v1776 = vlog2.pop %v1775
    %v1777 = vmul.f32 %v1776, 0.6931472
    %v1778 = vmul.f32 -0.5, %v1753
    %v1779 = vadd.f32 %v1778, 1.0
    %v1780 = vmul.f32 %v1779, %v1753
    %v1781 = vand.u32 2147483647, %v1753
    %vm1782 = vcmp.lt.f32.partialorder %v1781, 0.0004427343
    %v1783 = vsel %vm1782, %v1780, %v1777
    %v1784 = vadd.f32 %v1755, 1.0
    %v1785 = vlog2.pop %v1784
    %v1786 = vmul.f32 %v1785, 0.6931472
    %v1787 = vmul.f32 -0.5, %v1755
    %v1788 = vadd.f32 %v1787, 1.0
    %v1789 = vmul.f32 %v1788, %v1755
    %v1790 = vand.u32 2147483647, %v1755
    %vm1791 = vcmp.lt.f32.partialorder %v1790, 0.0004427343
    %v1792 = vsel %vm1791, %v1789, %v1786
    %v1793 = vadd.f32 %v1757, 1.0
    %v1794 = vlog2.pop %v1793
    %v1795 = vmul.f32 %v1794, 0.6931472
    %v1796 = vmul.f32 -0.5, %v1757
    %v1797 = vadd.f32 %v1796, 1.0
    %v1798 = vmul.f32 %v1797, %v1757
    %v1799 = vand.u32 2147483647, %v1757
    %vm1800 = vcmp.lt.f32.partialorder %v1799, 0.0004427343
    %v1801 = vsel %vm1800, %v1798, %v1795
    %v1802 = vadd.f32 %v1759, 1.0
    %v1803 = vlog2.pop %v1802
    %v1804 = vmul.f32 %v1803, 0.6931472
    %v1805 = vmul.f32 -0.5, %v1759
    %v1806 = vadd.f32 %v1805, 1.0
    %v1807 = vmul.f32 %v1806, %v1759
    %v1808 = vand.u32 2147483647, %v1759
    %vm1809 = vcmp.lt.f32.partialorder %v1808, 0.0004427343
    %v1810 = vsel %vm1809, %v1807, %v1804
    %v1811 = vadd.f32 %v1761, 1.0
    %v1812 = vlog2.pop %v1811
    %v1813 = vmul.f32 %v1812, 0.6931472
    %v1814 = vmul.f32 -0.5, %v1761
    %v1815 = vadd.f32 %v1814, 1.0
    %v1816 = vmul.f32 %v1815, %v1761
    %v1817 = vand.u32 2147483647, %v1761
    %vm1818 = vcmp.lt.f32.partialorder %v1817, 0.0004427343
    %v1819 = vsel %vm1818, %v1816, %v1813
    %v1820 = vadd.f32 %v1763, 1.0
    %v1821 = vlog2.pop %v1820
    %v1822 = vmul.f32 %v1821, 0.6931472
    %v1823 = vmul.f32 -0.5, %v1763
    %v1824 = vadd.f32 %v1823, 1.0
    %v1825 = vmul.f32 %v1824, %v1763
    %v1826 = vand.u32 2147483647, %v1763
    %vm1827 = vcmp.lt.f32.partialorder %v1826, 0.0004427343
    %v1828 = vsel %vm1827, %v1825, %v1822
    %v1829 = vadd.f32 %v1765, 1.0
    %v1830 = vlog2.pop %v1829
    %v1831 = vmul.f32 %v1830, 0.6931472
    %v1832 = vmul.f32 -0.5, %v1765
    %v1833 = vadd.f32 %v1832, 1.0
    %v1834 = vmul.f32 %v1833, %v1765
    %v1835 = vand.u32 2147483647, %v1765
    %vm1836 = vcmp.lt.f32.partialorder %v1835, 0.0004427343
    %v1837 = vsel %vm1836, %v1834, %v1831
    %v1838 = vadd.f32 %v1229, %v1774
    %v1839 = vadd.f32 %v1230, %v1783
    %v1840 = vadd.f32 %v1231, %v1792
    %v1841 = vadd.f32 %v1232, %v1801
    %v1842 = vadd.f32 %v1233, %v1810
    %v1843 = vadd.f32 %v1234, %v1819
    %v1844 = vadd.f32 %v1235, %v1828
    %v1845 = vadd.f32 %v1236, %v1837
    %v1846 = vlog2.pop %v1838
    %v1847 = vmul.f32 %v1846, 0.6931472
    %v1848 = vlog2.pop %v1839
    %v1849 = vmul.f32 %v1848, 0.6931472
    %v1850 = vlog2.pop %v1840
    %v1851 = vmul.f32 %v1850, 0.6931472
    %v1852 = vlog2.pop %v1841
    %v1853 = vmul.f32 %v1852, 0.6931472
    %v1854 = vlog2.pop %v1842
    %v1855 = vmul.f32 %v1854, 0.6931472
    %v1856 = vlog2.pop %v1843
    %v1857 = vmul.f32 %v1856, 0.6931472
    %v1858 = vlog2.pop %v1844
    %v1859 = vmul.f32 %v1858, 0.6931472
    %v1860 = vlog2.pop %v1845
    %v1861 = vmul.f32 %v1860, 0.6931472
    %v1862 = vsub.f32 0.0, %v1847
    %v1863 = vsub.f32 0.0, %v1849
    %v1864 = vsub.f32 0.0, %v1851
    %v1865 = vsub.f32 0.0, %v1853
    %v1866 = vsub.f32 0.0, %v1855
    %v1867 = vsub.f32 0.0, %v1857
    %v1868 = vsub.f32 0.0, %v1859
    %v1869 = vsub.f32 0.0, %v1861
    %v1870 = vmul.f32 %v1838, %v1838
    %v1871 = vmul.f32 %v1839, %v1839
    %v1872 = vmul.f32 %v1840, %v1840
    %v1873 = vmul.f32 %v1841, %v1841
    %v1874 = vmul.f32 %v1842, %v1842
    %v1875 = vmul.f32 %v1843, %v1843
    %v1876 = vmul.f32 %v1844, %v1844
    %v1877 = vmul.f32 %v1845, %v1845
    %v1878 = vmul.f32 %v1229, %v1229
    %v1879 = vmul.f32 %v1230, %v1230
    %v1880 = vmul.f32 %v1231, %v1231
    %v1881 = vmul.f32 %v1232, %v1232
    %v1882 = vmul.f32 %v1233, %v1233
    %v1883 = vmul.f32 %v1234, %v1234
    %v1884 = vmul.f32 %v1235, %v1235
    %v1885 = vmul.f32 %v1236, %v1236
    %1894 = vrot.lane.b32.xlu0 %v1878, 1
    %v1895 = vpop.permute.xlu0 %1894
    %1896 = vrot.lane.b32.xlu0 %v1879, 1
    %v1897 = vpop.permute.xlu0 %1896
    %1898 = vrot.lane.b32.xlu0 %v1880, 1
    %v1899 = vpop.permute.xlu0 %1898
    %1900 = vrot.lane.b32.xlu0 %v1881, 1
    %v1901 = vpop.permute.xlu0 %1900
    %1902 = vrot.lane.b32.xlu0 %v1882, 1
    %v1903 = vpop.permute.xlu0 %1902
    %1904 = vrot.lane.b32.xlu0 %v1883, 1
    %v1905 = vpop.permute.xlu0 %1904
    %1906 = vrot.lane.b32.xlu0 %v1884, 1
    %v1907 = vpop.permute.xlu0 %1906
    %1908 = vrot.lane.b32.xlu0 %v1885, 1
    %v1909 = vpop.permute.xlu0 %1908
    %v1918 = vadd.f32 %v1870, %v1895
    %v1919 = vadd.f32 %v1871, %v1897
    %v1920 = vadd.f32 %v1872, %v1899
    %v1921 = vadd.f32 %v1873, %v1901
    %v1922 = vadd.f32 %v1874, %v1903
    %v1923 = vadd.f32 %v1875, %v1905
    %v1924 = vadd.f32 %v1876, %v1907
    %v1925 = vadd.f32 %v1877, %v1909
    %v1926 = vsub.f32 %v1918, 1.0
    %v1927 = vsub.f32 %v1919, 1.0
    %v1928 = vsub.f32 %v1920, 1.0
    %v1929 = vsub.f32 %v1921, 1.0
    %v1930 = vsub.f32 %v1922, 1.0
    %v1931 = vsub.f32 %v1923, 1.0
    %v1932 = vsub.f32 %v1924, 1.0
    %v1933 = vsub.f32 %v1925, 1.0
    %v1934 = vmul.f32 %v1926, 0.5
    %v1935 = vmul.f32 %v1927, 0.5
    %v1936 = vmul.f32 %v1928, 0.5
    %v1937 = vmul.f32 %v1929, 0.5
    %v1938 = vmul.f32 %v1930, 0.5
    %v1939 = vmul.f32 %v1931, 0.5
    %v1940 = vmul.f32 %v1932, 0.5
    %v1941 = vmul.f32 %v1933, 0.5
    %v1942 = vadd.f32 %v1862, %v1934
    %v1943 = vadd.f32 %v1863, %v1935
    %v1944 = vadd.f32 %v1864, %v1936
    %v1945 = vadd.f32 %v1865, %v1937
    %v1946 = vadd.f32 %v1866, %v1938
    %v1947 = vadd.f32 %v1867, %v1939
    %v1948 = vadd.f32 %v1868, %v1940
    %v1949 = vadd.f32 %v1869, %v1941
    %vm1950 = vcmask 15368
    %v1951 = vsel %vm1950, %v1942, 0.0
    %v1952 = vsel %vm1950, %v1943, 0.0
    %v1953 = vadd.f32 %v1951, %v1952
    %v1954 = vsel %vm1950, %v1944, 0.0
    %v1955 = vadd.f32 %v1953, %v1954
    %v1956 = vsel %vm1950, %v1945, 0.0
    %v1957 = vadd.f32 %v1955, %v1956
    %v1958 = vsel %vm1950, %v1946, 0.0
    %v1959 = vadd.f32 %v1957, %v1958
    %v1960 = vsel %vm1950, %v1947, 0.0
    %v1961 = vadd.f32 %v1959, %v1960
    %v1962 = vsel %vm1950, %v1948, 0.0
    %v1963 = vadd.f32 %v1961, %v1962
    %v1964 = vsel %vm1950, %v1949, 0.0
    %v1965 = vadd.f32 %v1963, %v1964
    %v1966 = vrot.slane %v1965, 4
    %v1967 = vadd.f32 %v1965, %v1966
    %v1968 = vrot.slane %v1967, 2
    %v1969 = vadd.f32 %v1967, %v1968
    %v1970 = vrot.slane %v1969, 1
    %v1971 = vadd.f32 %v1969, %v1970
    %1973 = vrot.lane.b32.xlu0 %v1971, 127
    %v1974 = vpop.permute.xlu0 %1973
    %vm1976 = vcmask 0
    %1977 = vst.msk [vmem:[#allocation2] sm:$0x1] %vm1976, %v1974
    %v1978 = vsub.f32 0.0, %v1685
    %v1979 = vmul.f32 %v1978, 1.442695
    %v1980 = vpow.pop %v1979
    %v1981 = vadd.f32 %v1980, 1.0
    %v1982 = vlog2.pop %v1981
    %v1983 = vmul.f32 %v1982, 0.6931472
    %v1984 = vmul.f32 -0.5, %v1980
    %v1985 = vadd.f32 %v1984, 1.0
    %v1986 = vmul.f32 %v1985, %v1980
    %v1987 = vand.u32 2147483647, %v1980
    %vm1988 = vcmp.lt.f32.partialorder %v1987, 0.0004427343
    %v1989 = vsel %vm1988, %v1986, %v1983
    %v1990 = vadd.f32 %v1685, %v1989
    %v1991 = vlog2.pop %v1990
    %v1992 = vmul.f32 %v1991, 0.6931472
    %v1993 = vsub.f32 0.0, %v1992
    %v1994 = vmul.f32 %v1990, %v1990
    %v1995 = vmul.f32 %v1684, %v1684
    %v1996 = vadd.f32 %v1994, %v1995
    %v1997 = vsub.f32 %v1996, 1.0
    %v1998 = vmul.f32 %v1997, 0.5
    %v1999 = vadd.f32 %v1993, %v1998
    %v2000 = vlaneseq
    %v2001 = vand.u32 %v2000, 127
    %vm2002 = vcmp.lt.s32.totalorder %v2001, 5
    %v2003 = vsel %vm2002, %v1999, 0.0
    %vm2004 = vcmask 1040384
    %v2005 = vsel %vm2004, %v2003, 0.0
    %2006 = vadd.xlane.f32.xlu0 %v2005
    %v2007 = vpop.xlane.xlu0 %2006
    %2008 = vst.msk [vmem:[#allocation4] sm:$0x1] %vm1976, %v2007
    %v2009 = vsub.f32 0.0, %v1688
    %v2010 = vsub.f32 0.0, %v1689
    %v2011 = vmul.f32 %v2009, 1.442695
    %v2012 = vpow.pop %v2011
    %v2013 = vmul.f32 %v2010, 1.442695
    %v2014 = vpow.pop %v2013
    %v2015 = vadd.f32 %v2012, 1.0
    %v2016 = vlog2.pop %v2015
    %v2017 = vmul.f32 %v2016, 0.6931472
    %v2018 = vmul.f32 -0.5, %v2012
    %v2019 = vadd.f32 %v2018, 1.0
    %v2020 = vmul.f32 %v2019, %v2012
    %v2021 = vand.u32 2147483647, %v2012
    %vm2022 = vcmp.lt.f32.partialorder %v2021, 0.0004427343
    %v2023 = vsel %vm2022, %v2020, %v2017
    %v2024 = vadd.f32 %v2014, 1.0
    %v2025 = vlog2.pop %v2024
    %v2026 = vmul.f32 %v2025, 0.6931472
    %v2027 = vmul.f32 -0.5, %v2014
    %v2028 = vadd.f32 %v2027, 1.0
    %v2029 = vmul.f32 %v2028, %v2014
    %v2030 = vand.u32 2147483647, %v2014
    %vm2031 = vcmp.lt.f32.partialorder %v2030, 0.0004427343
    %v2032 = vsel %vm2031, %v2029, %v2026
    %v2033 = vadd.f32 %v1688, %v2023
    %v2034 = vadd.f32 %v1689, %v2032
    %v2035 = vlog2.pop %v2033
    %v2036 = vmul.f32 %v2035, 0.6931472
    %v2037 = vlog2.pop %v2034
    %v2038 = vmul.f32 %v2037, 0.6931472
    %v2039 = vsub.f32 0.0, %v2036
    %v2040 = vsub.f32 0.0, %v2038
    %v2041 = vmul.f32 %v2033, %v2033
    %v2042 = vmul.f32 %v2034, %v2034
    %v2043 = vmul.f32 %v1686, %v1686
    %v2044 = vmul.f32 %v1687, %v1687
    %v2045 = vadd.f32 %v2041, %v2043
    %v2046 = vadd.f32 %v2042, %v2044
    %v2047 = vsub.f32 %v2045, 1.0
    %v2048 = vsub.f32 %v2046, 1.0
    %v2049 = vmul.f32 %v2047, 0.5
    %v2050 = vmul.f32 %v2048, 0.5
    %v2051 = vadd.f32 %v2039, %v2049
    %v2052 = vadd.f32 %v2040, %v2050
    %v2053 = vsel %vm2004, %v2051, 0.0
    %v2054 = vsel %vm2004, %v2052, 0.0
    %v2055 = vadd.f32 %v2053, %v2054
    %2056 = vadd.xlane.f32.xlu0 %v2055
    %v2057 = vpop.xlane.xlu0 %2056
    %2058 = vst.msk [vmem:[#allocation6] sm:$0x1] %vm1976, %v2057
    // Predicated region
    $region66: #{inference_network_forward.5} parent=1 // pred_check
      _
    $region67: #{inference_network_forward.5} parent=1 // pred_check_branch
      %2060 = sbr.rel (0) target = $region69
    $region68: #{inference_network_forward.5} parent=1 // pred_region
      _
    $region69: #{inference_network_forward.5} parent=1 // pred_fallthru
      _
    // Predicated region
    $region70: #{inference_network_forward.5} parent=1 // pred_check
      _
    $region71: #{inference_network_forward.5} parent=1 // pred_check_branch
      %2062 = sbr.rel (0) target = $region73
    $region72: #{inference_network_forward.5} parent=1 // pred_region
      _
    $region73: #{inference_network_forward.5} parent=1 // pred_fallthru
      _
    // Predicated region
    $region74: #{inference_network_forward.5} parent=1 // pred_check
      _
    $region75: #{inference_network_forward.5} parent=1 // pred_check_branch
      %2064 = sbr.rel (0) target = $region77
    $region76: #{inference_network_forward.5} parent=1 // pred_region
      %s2066 = ssub.s32 16, 16
      %2067 = vsyncadd [#allocation3], %s2066
      %s2069 = sshll.u32 [#allocation2], 4
      %s2070 = int_to_ptr.vmem [resolvable:$true] %s2069
      %2072 = dma.vmem_to_hbm [thread:$0]  %s2070, 16, %s18, [#allocation3]
    $region77: #{inference_network_forward.5} parent=1 // pred_fallthru
      _
    // Predicated region
    $region78: #{inference_network_forward.5} parent=1 // pred_check
      _
    $region79: #{inference_network_forward.5} parent=1 // pred_check_branch
      %2074 = sbr.rel (0) target = $region81
    $region80: #{inference_network_forward.5} parent=1 // pred_region
      %s2076 = ssub.s32 16, 16
      %2077 = vsyncadd [#allocation5], %s2076
      %s2079 = sshll.u32 [#allocation4], 4
      %s2080 = int_to_ptr.vmem [resolvable:$true] %s2079
      %2082 = dma.vmem_to_hbm [thread:$0]  %s2080, 16, %s19, [#allocation5]
    $region81: #{inference_network_forward.5} parent=1 // pred_fallthru
      _
    // Predicated region
    $region82: #{inference_network_forward.5} parent=1 // pred_check
      _
    $region83: #{inference_network_forward.5} parent=1 // pred_check_branch
      %2084 = sbr.rel (0) target = $region85
    $region84: #{inference_network_forward.5} parent=1 // pred_region
      %s2086 = ssub.s32 16, 16
      %2087 = vsyncadd [#allocation5], %s2086
      %s2089 = sshll.u32 [#allocation6], 4
      %s2090 = int_to_ptr.vmem [resolvable:$true] %s2089
      %2092 = dma.vmem_to_hbm [thread:$0]  %s2090, 16, %s20, [#allocation5]
    $region85: #{inference_network_forward.5} parent=1 // pred_fallthru
      _
    // Predicated region
    $region86: #{inference_network_forward.5} parent=1 // pred_check
      _
    $region87: #{inference_network_forward.5} parent=1 // pred_check_branch
      %2094 = sbr.rel (0) target = $region89
    $region88: #{inference_network_forward.5} parent=1 // pred_region
      _
    $region89: #{inference_network_forward.5} parent=1 // pred_fallthru
      _
    // Predicated region
    $region90: #{inference_network_forward.5} parent=1 // pred_check
      _
    $region91: #{inference_network_forward.5} parent=1 // pred_check_branch
      %2096 = sbr.rel (0) target = $region93
    $region92: #{inference_network_forward.5} parent=1 // pred_region
      _
    $region93: #{inference_network_forward.5} parent=1 // pred_fallthru
      _
    // Predicated region
    $region94: #{inference_network_forward.5} parent=1 // pred_check
      _
    $region95: #{inference_network_forward.5} parent=1 // pred_check_branch
      %2098 = sbr.rel (0) target = $region97
    $region96: #{inference_network_forward.5} parent=1 // pred_region
      %2099 = dma.done [#allocation3], 16
    $region97: #{inference_network_forward.5} parent=1 // pred_fallthru
      _
    // Predicated region
    $region98: #{inference_network_forward.5} parent=1 // pred_check
      _
    $region99: #{inference_network_forward.5} parent=1 // pred_check_branch
      %2101 = sbr.rel (0) target = $region101
    $region100: #{inference_network_forward.5} parent=1 // pred_region
      %2102 = dma.done [#allocation5], 16
    $region101: #{inference_network_forward.5} parent=1 // pred_fallthru
      _
    // Predicated region
    $region102: #{inference_network_forward.5} parent=1 // pred_check
      _
    $region103: #{inference_network_forward.5} parent=1 // pred_check_branch
      %2104 = sbr.rel (0) target = $region105
    $region104: #{inference_network_forward.5} parent=1 // pred_region
      %2105 = dma.done [#allocation5], 16
    $region105: #{inference_network_forward.5} parent=1 // pred_fallthru
      _
    %2106 = vsyncpa [#allocation3], 1
    %2107 = vsyncpa [#allocation5], 1

</llo_original>
